<compile_context>
chip_gen: v6e
topology: v6e:2x2x1
jax: 0.10.0
libtpu: 0.0.40
codegen_flags: <defaults>
</compile_context>

<pallas_src>
import math
import functools

import jax
import jax.numpy as jnp
from jax.experimental import pallas as pl
from jax.experimental.pallas import tpu as pltpu


def _gelu_exact(x):
    # torch._C._nn.gelu default = exact erf-based gelu
    return 0.5 * x * (1.0 + jax.lax.erf(x * (1.0 / math.sqrt(2.0))))


def gelu_linear_kernel(x_ref, w_ref, b_ref, o_ref):
    # grid = (N // tn, K // tk); reduction axis (k) is last.
    k = pl.program_id(1)

    @pl.when(k == 0)
    def _():
        # Initialize the resident f32 output block with the bias.
        o_ref[...] = jnp.broadcast_to(b_ref[...], o_ref.shape)

    # GELU in f32 (x arrives untruncated), bf16 operands into the MXU with
    # f32 accumulation directly into the output block.
    a = _gelu_exact(x_ref[...]).astype(jnp.bfloat16)
    o_ref[...] += jnp.dot(a, w_ref[...], preferred_element_type=jnp.float32)


def prepare_weights(w, b):
    """One-time prep (hoisted out of the hot path): torch-layout [N, K] weight
    -> pre-transposed [K, N] bf16; bias -> [1, N] f32."""
    wt = jnp.asarray(w).T.astype(jnp.bfloat16)              # [K, N]
    b2d = jnp.asarray(b, dtype=jnp.float32).reshape(1, -1)  # [1, N]
    return wt, b2d


def _num_tensorcores():
    try:
        kind = jax.devices()[0].device_kind.lower()
    except Exception:
        return 1
    # v7x exposes two TensorCores per chip; v5e/v6e are single-core.
    return 2 if "v7" in kind else 1


@functools.partial(jax.jit, static_argnames=("tn", "tk"))
def _fused_fwd(x, wt, b2d, *, tn, tk):
    B, S, K = x.shape
    N = wt.shape[1]
    M = B * S

    x2d = x.reshape(M, K)  # layout-preserving, free

    out = pl.pallas_call(
        gelu_linear_kernel,
        out_shape=jax.ShapeDtypeStruct((M, N), jnp.float32),
        grid_spec=pltpu.PrefetchScalarGridSpec(
            num_scalar_prefetch=0,
            grid=(N // tn, K // tk),
            in_specs=[
                pl.BlockSpec((M, tk), lambda j, k: (0, k)),    # f32 activations
                pl.BlockSpec((tk, tn), lambda j, k: (k, j)),   # bf16 weight [K, N]
                pl.BlockSpec((1, tn), lambda j, k: (0, j)),    # f32 bias
            ],
            out_specs=pl.BlockSpec((M, tn), lambda j, k: (0, j)),
        ),
        compiler_params=pltpu.CompilerParams(
            dimension_semantics=("parallel", "arbitrary")
        ),
    )(x2d, wt, b2d)

    return out.reshape(B, S, N)


def gelu_linear_dropout(x, wt, b2d, *, tn=None, tk=768):
    """x: [B, S, K] f32; wt: [K, N] bf16 (pre-transposed); b2d: [1, N] f32."""
    K = x.shape[-1]
    N = wt.shape[1]

    if tn is None:
        # Split N across the two TensorCores on v7x; otherwise one N block so
        # the weight is streamed from HBM exactly once on v5e/v6e.
        half = N // 2
        tn = half if (_num_tensorcores() >= 2 and half % 128 == 0) else N
    if N % tn != 0 or tn % 128 != 0:
        tn = N
    if K % tk != 0:
        tk = K

    out = _fused_fwd(x, wt, b2d, tn=tn, tk=tk)
    # Dropout(p=0.1) in eval mode is the identity.
    return out


if __name__ == "__main__":
    B, S, K, N = 1, 384, 3072, 768

    key = jax.random.PRNGKey(0)
    kx, kw, kb = jax.random.split(key, 3)

    x = jax.random.normal(kx, (B, S, K), dtype=jnp.float32)
    # Deterministic init mimicking nn.Linear's uniform(-1/sqrt(K), 1/sqrt(K))
    bound = 1.0 / math.sqrt(K)
    w = jax.random.uniform(kw, (N, K), minval=-bound, maxval=bound, dtype=jnp.float32)
    b = jax.random.uniform(kb, (N,), minval=-bound, maxval=bound, dtype=jnp.float32)

    # One-time weight preparation (not in the per-call path).
    wt, b2d = jax.block_until_ready(prepare_weights(w, b))

    out = gelu_linear_dropout(x, wt, b2d)
    out = jax.block_until_ready(out)

    # Reference check in plain f32 JAX (tolerance covers bf16 MXU operands).
    ref = _gelu_exact(x.reshape(B * S, K)) @ w.T + b
    ref = ref.reshape(B, S, N)
    assert jnp.allclose(out, ref, atol=5e-2, rtol=5e-2), "mismatch vs reference"

    print("KERNEL_OK")
</pallas_src>

<mosaic_0001>
module attributes {stable_mosaic.version = 11 : i64} {
  func.func @gelu_linear_kernel(%arg0: i32, %arg1: i32, %arg2: memref<384x768xf32, #tpu.memory_space<vmem>>, %arg3: memref<768x768xbf16, #tpu.memory_space<vmem>>, %arg4: memref<1x768xf32, #tpu.memory_space<vmem>>, %arg5: memref<384x768xf32, #tpu.memory_space<vmem>>) attributes {dimension_semantics = [#tpu.dimension_semantics<parallel>, #tpu.dimension_semantics<arbitrary>], iteration_bounds = array<i64: 1, 4>, scalar_prefetch = 0 : i64, scratch_operands = 0 : i64, tpu.core_type = #tpu.core_type<tc>, window_params = [{transform_indices = @transform_0, window_bounds = array<i64: 384, 768>}, {transform_indices = @transform_1, window_bounds = array<i64: 768, 768>}, {transform_indices = @transform_2, window_bounds = array<i64: 1, 768>}, {transform_indices = @transform_3, window_bounds = array<i64: 384, 768>}]} {
    %c0_i32 = arith.constant 0 : i32
    %0 = arith.cmpi eq, %arg1, %c0_i32 : i32
    %1 = arith.extui %0 : i1 to i32
    %c0_i32_0 = arith.constant 0 : i32
    %2 = arith.cmpi ne, %1, %c0_i32_0 : i32
    scf.if %2 {
      %c0_11 = arith.constant 0 : index
      %c0_12 = arith.constant 0 : index
      %18 = vector.load %arg4[%c0_11, %c0_12] : memref<1x768xf32, #tpu.memory_space<vmem>>, vector<1x768xf32>
      %19 = vector.shape_cast %18 : vector<1x768xf32> to vector<1x768xf32>
      %20 = vector.broadcast %19 : vector<1x768xf32> to vector<384x768xf32>
      %c0_13 = arith.constant 0 : index
      %c0_14 = arith.constant 0 : index
      %21 = vector.load %arg5[%c0_13, %c0_14] : memref<384x768xf32, #tpu.memory_space<vmem>>, vector<384x768xf32>
      tpu.vector_store %arg5[%c0_13, %c0_14], %20 {strides = array<i32>} : memref<384x768xf32, #tpu.memory_space<vmem>>, vector<384x768xf32>,
    } else {
    }
    %c0 = arith.constant 0 : index
    %c0_1 = arith.constant 0 : index
    %3 = vector.load %arg2[%c0, %c0_1] : memref<384x768xf32, #tpu.memory_space<vmem>>, vector<384x768xf32>
    %cst = arith.constant 5.000000e-01 : f32
    %4 = vector.broadcast %cst : f32 to vector<384x768xf32>
    %5 = arith.mulf %4, %3 : vector<384x768xf32>
    %cst_2 = arith.constant 0.707106769 : f32
    %6 = vector.broadcast %cst_2 : f32 to vector<384x768xf32>
    %7 = arith.mulf %3, %6 : vector<384x768xf32>
    %8 = math.erf %7 : vector<384x768xf32>
    %cst_3 = arith.constant 1.000000e+00 : f32
    %9 = vector.broadcast %cst_3 : f32 to vector<384x768xf32>
    %10 = arith.addf %9, %8 : vector<384x768xf32>
    %11 = arith.mulf %5, %10 : vector<384x768xf32>
    %12 = arith.truncf %11 : vector<384x768xf32> to vector<384x768xbf16>
    %c0_4 = arith.constant 0 : index
    %c0_5 = arith.constant 0 : index
    %13 = vector.load %arg5[%c0_4, %c0_5] : memref<384x768xf32, #tpu.memory_space<vmem>>, vector<384x768xf32>
    %c0_6 = arith.constant 0 : index
    %c0_7 = arith.constant 0 : index
    %14 = vector.load %arg3[%c0_6, %c0_7] : memref<768x768xbf16, #tpu.memory_space<vmem>>, vector<768x768xbf16>
    %cst_8 = arith.constant dense<0.000000e+00> : vector<384x768xf32>
    %15 = tpu.matmul %12, %14, %cst_8 {dimension_numbers = #tpu.dot_dimension_numbers<[1], [0], [0], [1], [0, 0, 1, 1], [], []>} : vector<384x768xbf16>, vector<768x768xbf16>, vector<384x768xf32> -> vector<384x768xf32>
    %16 = arith.addf %13, %15 : vector<384x768xf32>
    %c0_9 = arith.constant 0 : index
    %c0_10 = arith.constant 0 : index
    %17 = vector.load %arg5[%c0_9, %c0_10] : memref<384x768xf32, #tpu.memory_space<vmem>>, vector<384x768xf32>
    tpu.vector_store %arg5[%c0_9, %c0_10], %16 {strides = array<i32>} : memref<384x768xf32, #tpu.memory_space<vmem>>, vector<384x768xf32>,
    return
  }
  func.func @transform_0(%arg0: i32, %arg1: i32) -> (i32, i32) {
    %c0_i32 = arith.constant 0 : i32
    %c0_i32_0 = arith.constant 0 : i32
    return %c0_i32, %arg1 : i32, i32
  }
  func.func @transform_1(%arg0: i32, %arg1: i32) -> (i32, i32) {
    %c0_i32 = arith.constant 0 : i32
    return %arg1, %arg0 : i32, i32
  }
  func.func @transform_2(%arg0: i32, %arg1: i32) -> (i32, i32) {
    %c0_i32 = arith.constant 0 : i32
    %c0_i32_0 = arith.constant 0 : i32
    return %c0_i32, %arg0 : i32, i32
  }
  func.func @transform_3(%arg0: i32, %arg1: i32) -> (i32, i32) {
    %c0_i32 = arith.constant 0 : i32
    %c0_i32_0 = arith.constant 0 : i32
    return %c0_i32, %arg0 : i32, i32
  }
}

</mosaic_0001>

<llo_original>
// kernel: _fused_fwd.1
$region0: #{_fused_fwd.1}
  #allocation0 [shape = 'u32[]', space=smem, size = 0x4, offset = 0x4, fixed_abs, tag = 'smem constant byte address 0x4 - core index']
  #allocation1 [shape = 'u32[144,128]{1,0:T(1,128)}', space=vmem, size = 0x12000, scoped, tag = 'internal scratch']
  %s0 = inlined_call_operand.hbm [shape: f32[384,3072], index: 0, kind: input, shape index: {}]
  %s1 = inlined_call_operand.hbm [shape: bf16[3072,768], index: 1, kind: input, shape index: {}]
  %s2 = inlined_call_operand.hbm [shape: f32[1,768], index: 2, kind: input, shape index: {}]
  %s3 = inlined_call_operand.hbm [shape: f32[384,768], index: 3, kind: output, shape index: {}]
  %s4 = sld [smem:[#allocation0]]
  $region61: #{_fused_fwd.1} parent=0
    _
  %s6 = ssub.s32 1, %s4
  %s7 = scalar_select 0, %s6, %s4
  $region1: #{_fused_fwd.1} parent=0
    #allocation2 [shape = 'u8[2359296]{0}', space=vmem, size = 0x240000, scoped, tag = 'input window, operand 0']
    #allocation3 [shape = 's32[2]{0}', space=sflag, size = 0x8, scoped, tag = 'scoped memory for _fused_fwd.1']
    #allocation4 [shape = 's32[2]{0}', space=sflag, size = 0x8, scoped, tag = 'scoped memory for _fused_fwd.1']
    #allocation5 [shape = 'u8[2359296]{0}', space=vmem, size = 0x240000, scoped, tag = 'input window, operand 1']
    #allocation6 [shape = 's32[2]{0}', space=sflag, size = 0x8, scoped, tag = 'scoped memory for _fused_fwd.1']
    #allocation7 [shape = 'u8[3072]{0}', space=vmem, size = 0xc00, scoped, tag = 'input window, operand 2, single buffered']
    #allocation8 [shape = 'u8[1179648]{0}', space=vmem, size = 0x120000, scoped, tag = 'output window, operand 0, single buffered']
    %8 = vsyncpa [#allocation3], 0
    %s9 = scalar_lea.sflag [#allocation3], 1
    %10 = vsyncpa %s9, 0
    %11 = vsyncpa [#allocation6], 0
    %s12 = scalar_lea.sflag [#allocation6], 1
    %13 = vsyncpa %s12, 0
    %14 = vsyncpa [#allocation4], 0
    loop: start=0, step=1, limit=6
    $region2: #{_fused_fwd.1} parent=1 // loop_pre_header
      _
    $region3: #{_fused_fwd.1} parent=1 // loop_header
      %s16 = sphi 0, %s20
      %p17 = scmp.ge.s32.totalorder %s16, 6
      %s23 = sphi 0, %s35
      %s24 = sphi 0, %s31
      %s25 = sphi 0, %s23
      %s26 = sphi 0, %s24
      %s27 = sphi 0, %s25
      %s28 = sphi 0, %s26
      %s38 = sphi 0, %s40
      %s41 = sphi 0, %s38
      %s42 = sphi 0, %s41
      %s58 = sphi 0, %s42
      %s66 = sphi 0, %s68
      %s69 = sphi 0, %s66
      %s70 = sphi 0, %s69
      %s86 = sphi 0, %s70
      %s92 = sphi 0, %s94
      %s95 = sphi 0, %s92
      %s96 = sphi 0, %s95
      %s112 = sphi 0, %s96
      %s118 = sphi 0, %s120
      %s121 = sphi 0, %s118
      %s122 = sphi 0, %s121
      %s138 = sphi 0, %s122
    $region4: #{_fused_fwd.1} parent=1 // loop_header_branch
      %19 = sbr.rel (%p17) target = $region8
    $region5: #{_fused_fwd.1} parent=1 // loop_body
      %s21 = ssub.s32 %s16, 1
      %s22 = ssub.s32 %s16, 2
      %s29 = sadd.s32 1, %s24
      %p30 = scmp.ge.s32.totalorder %s29, 4
      %s31 = scalar_select %p30, 0, %s29
      %s32 = sadd.s32 1, %s23
      %s33 = scalar_select %p30, %s32, %s23
      %p34 = scmp.ge.s32.totalorder %s33, 1
      %s35 = scalar_select %p34, 0, %s33
      %s36 = ssub.s32 %s24, %s31
      %p37 = scmp.eq.s32.totalorder %s36, 0
      %s39 = sadd.s32 %s38, 1
      %s40 = scalar_select %p37, %s38, %s39
      %p43 = pneg %p37
      %p44 = scmp.eq.s32.totalorder %s16, 3
      %p45 = por %p43, %p44
      %p46 = scmp.ne.s32.totalorder %s38, %s41
      %p47 = scmp.eq.s32.totalorder %s16, 0
      %p48 = por %p46, %p47
      %p49 = scmp.ne.s32.totalorder %s38, %s41
      %p50 = scmp.eq.s32.totalorder %s21, 3
      %p51 = por %p49, %p50
      %p52 = scmp.ne.s32.totalorder %s41, %s42
      %p53 = scmp.eq.s32.totalorder %s21, 0
      %p54 = por %p52, %p53
      %p55 = scmp.ne.s32.totalorder %s41, %s42
      %p56 = scmp.eq.s32.totalorder %s22, 3
      %p57 = por %p55, %p56
      %p59 = scmp.ne.s32.totalorder %s42, %s58
      %p60 = scmp.eq.s32.totalorder %s22, 0
      %p61 = por %p59, %p60
      %s62 = ssub.s32 %s24, %s31
      %s63 = ssub.s32 %s23, %s35
      %s64 = sor.u32 %s62, %s63
      %p65 = scmp.eq.s32.totalorder %s64, 0
      %s67 = sadd.s32 %s66, 1
      %s68 = scalar_select %p65, %s66, %s67
      %p71 = pneg %p65
      %p72 = scmp.eq.s32.totalorder %s16, 3
      %p73 = por %p71, %p72
      %p74 = scmp.ne.s32.totalorder %s66, %s69
      %p75 = scmp.eq.s32.totalorder %s16, 0
      %p76 = por %p74, %p75
      %p77 = scmp.ne.s32.totalorder %s66, %s69
      %p78 = scmp.eq.s32.totalorder %s21, 3
      %p79 = por %p77, %p78
      %p80 = scmp.ne.s32.totalorder %s69, %s70
      %p81 = scmp.eq.s32.totalorder %s21, 0
      %p82 = por %p80, %p81
      %p83 = scmp.ne.s32.totalorder %s69, %s70
      %p84 = scmp.eq.s32.totalorder %s22, 3
      %p85 = por %p83, %p84
      %p87 = scmp.ne.s32.totalorder %s70, %s86
      %p88 = scmp.eq.s32.totalorder %s22, 0
      %p89 = por %p87, %p88
      %s90 = ssub.s32 %s23, %s35
      %p91 = scmp.eq.s32.totalorder %s90, 0
      %s93 = sadd.s32 %s92, 1
      %s94 = scalar_select %p91, %s92, %s93
      %p97 = pneg %p91
      %p98 = scmp.eq.s32.totalorder %s16, 3
      %p99 = por %p97, %p98
      %p100 = scmp.ne.s32.totalorder %s92, %s95
      %p101 = scmp.eq.s32.totalorder %s16, 0
      %p102 = por %p100, %p101
      %p103 = scmp.ne.s32.totalorder %s92, %s95
      %p104 = scmp.eq.s32.totalorder %s21, 3
      %p105 = por %p103, %p104
      %p106 = scmp.ne.s32.totalorder %s95, %s96
      %p107 = scmp.eq.s32.totalorder %s21, 0
      %p108 = por %p106, %p107
      %p109 = scmp.ne.s32.totalorder %s95, %s96
      %p110 = scmp.eq.s32.totalorder %s22, 3
      %p111 = por %p109, %p110
      %p113 = scmp.ne.s32.totalorder %s96, %s112
      %p114 = scmp.eq.s32.totalorder %s22, 0
      %p115 = por %p113, %p114
      %s116 = ssub.s32 %s23, %s35
      %p117 = scmp.eq.s32.totalorder %s116, 0
      %s119 = sadd.s32 %s118, 1
      %s120 = scalar_select %p117, %s118, %s119
      %p123 = pneg %p117
      %p124 = scmp.eq.s32.totalorder %s16, 3
      %p125 = por %p123, %p124
      %p126 = scmp.ne.s32.totalorder %s118, %s121
      %p127 = scmp.eq.s32.totalorder %s16, 0
      %p128 = por %p126, %p127
      %p129 = scmp.ne.s32.totalorder %s118, %s121
      %p130 = scmp.eq.s32.totalorder %s21, 3
      %p131 = por %p129, %p130
      %p132 = scmp.ne.s32.totalorder %s121, %s122
      %p133 = scmp.eq.s32.totalorder %s21, 0
      %p134 = por %p132, %p133
      %p135 = scmp.ne.s32.totalorder %s121, %s122
      %p136 = scmp.eq.s32.totalorder %s22, 3
      %p137 = por %p135, %p136
      %p139 = scmp.ne.s32.totalorder %s122, %s138
      %p140 = scmp.eq.s32.totalorder %s22, 0
      %p141 = por %p139, %p140
      %p142 = scmp.le.s32.totalorder 1, %s16
      %p143 = scmp.lt.s32.totalorder %s16, 5
      %p144 = pnand %p142, %p143
      %p145 = pneg %p144
      // Predicated region
      $region9: #{_fused_fwd.1} parent=5 // pred_check
        _
      $region10: #{_fused_fwd.1} parent=5 // pred_check_branch
        %147 = sbr.rel (%p144) target = $region12
      $region11: #{_fused_fwd.1} parent=5 // pred_region
        %s148 = ssub.s32 %s16, 1
        // Predicated region
        $region13: #{_fused_fwd.1} parent=11 // pred_check
          %p149 = pneg %p108
        $region14: #{_fused_fwd.1} parent=11 // pred_check_branch
          %151 = sbr.rel (%p149) target = $region16
        $region15: #{_fused_fwd.1} parent=11 // pred_region
          %s152 = smul.u32 6, %s25
          %s154 = ssub.s32 96, 96
          %155 = vsyncadd [#allocation6], %s154
          %s156 = smul.addr %s152, 16
          %s157 = scalar_lea.hbm %s2, %s156
          %s159 = sshll.u32 [#allocation7], 4
          %s160 = int_to_ptr.vmem [resolvable:$true] %s159
          %162 = dma.hbm_to_vmem [thread:$0]  %s157, 96, %s160, [#allocation6]
        $region16: #{_fused_fwd.1} parent=11 // pred_fallthru
          _
      $region12: #{_fused_fwd.1} parent=5 // pred_fallthru
        _
      %p163 = scmp.lt.s32.totalorder %s16, 4
      // Predicated region
      $region17: #{_fused_fwd.1} parent=5 // pred_check
        %p164 = pneg %p163
      $region18: #{_fused_fwd.1} parent=5 // pred_check_branch
        %166 = sbr.rel (%p164) target = $region20
      $region19: #{_fused_fwd.1} parent=5 // pred_region
        // Predicated region
        $region21: #{_fused_fwd.1} parent=19 // pred_check
          %p167 = pneg %p48
        $region22: #{_fused_fwd.1} parent=19 // pred_check_branch
          %169 = sbr.rel (%p167) target = $region24
        $region23: #{_fused_fwd.1} parent=19 // pred_region
          %s170 = sand.u32 %s38, 1
          %s171 = scalar_lea.sflag [#allocation3], %s170
          %s172 = sand.u32 %s38, 1
          %s173 = smul.addr %s172, 2304
          %s174 = scalar_lea.vmem [#allocation2], %s173
          %s175 = smul.u32 6, %s24
          %s177 = ssub.s32 36864, 36864
          %178 = vsyncadd %s171, %s177
          %s179 = smul.addr %s175, 128
          %s180 = scalar_lea.hbm %s0, %s179
          %s181 = sshll.u32 %s174, 4
          %s182 = int_to_ptr.vmem [resolvable:$true] %s181
          %187 = dma.hbm_to_vmem [thread:$0]  %s180, 36864, %s182, %s171, 3072, 768, 48
        $region24: #{_fused_fwd.1} parent=19 // pred_fallthru
          _
        // Predicated region
        $region25: #{_fused_fwd.1} parent=19 // pred_check
          %p188 = pneg %p76
        $region26: #{_fused_fwd.1} parent=19 // pred_check_branch
          %190 = sbr.rel (%p188) target = $region28
        $region27: #{_fused_fwd.1} parent=19 // pred_region
          %s191 = sand.u32 %s16, 1
          %s192 = scalar_lea.sflag [#allocation6], %s191
          %s193 = sand.u32 %s66, 1
          %s194 = smul.addr %s193, 2304
          %s195 = scalar_lea.vmem [#allocation5], %s194
          %s196 = smul.u32 96, %s24
          %s197 = smul.u32 6, %s23
          %s199 = ssub.s32 36864, 36864
          %200 = vsyncadd %s192, %s199
          %s201 = smul.addr %s196, 6
          %s202 = sadd.s32 %s197, %s201
          %s203 = smul.addr %s202, 64
          %s204 = scalar_lea.hbm %s1, %s203
          %s205 = sshll.u32 %s195, 4
          %s206 = int_to_ptr.vmem [resolvable:$true] %s205
          %211 = dma.hbm_to_vmem [thread:$0]  %s204, 36864, %s206, %s192, 384, 384, 24
        $region28: #{_fused_fwd.1} parent=19 // pred_fallthru
          _
      $region20: #{_fused_fwd.1} parent=5 // pred_fallthru
        _
      %p212 = scmp.le.s32.totalorder 1, %s16
      %p213 = scmp.lt.s32.totalorder %s16, 5
      %p214 = pnand %p212, %p213
      %p215 = pneg %p214
      // Predicated region
      $region29: #{_fused_fwd.1} parent=5 // pred_check
        _
      $region30: #{_fused_fwd.1} parent=5 // pred_check_branch
        %217 = sbr.rel (%p214) target = $region32
      $region31: #{_fused_fwd.1} parent=5 // pred_region
        %s218 = ssub.s32 %s16, 1
        %s219 = sand.u32 %s41, 1
        %s220 = scalar_lea.sflag [#allocation3], %s219
        %s221 = sand.u32 %s41, 1
        %s222 = smul.addr %s221, 2304
        %s223 = scalar_lea.vmem [#allocation2], %s222
        // Predicated region
        $region33: #{_fused_fwd.1} parent=31 // pred_check
          %p224 = pneg %p54
        $region34: #{_fused_fwd.1} parent=31 // pred_check_branch
          %226 = sbr.rel (%p224) target = $region36
        $region35: #{_fused_fwd.1} parent=31 // pred_region
          %227 = dma.done %s220, 36864
        $region36: #{_fused_fwd.1} parent=31 // pred_fallthru
          _
        %s228 = sand.u32 %s21, 1
        %s229 = scalar_lea.sflag [#allocation6], %s228
        %s230 = sand.u32 %s69, 1
        %s231 = smul.addr %s230, 2304
        %s232 = scalar_lea.vmem [#allocation5], %s231
        // Predicated region
        $region37: #{_fused_fwd.1} parent=31 // pred_check
          %p233 = pneg %p82
        $region38: #{_fused_fwd.1} parent=31 // pred_check_branch
          %235 = sbr.rel (%p233) target = $region40
        $region39: #{_fused_fwd.1} parent=31 // pred_region
          %236 = dma.done %s229, 36864
        $region40: #{_fused_fwd.1} parent=31 // pred_fallthru
          _
        // Predicated region
        $region41: #{_fused_fwd.1} parent=31 // pred_check
          %p237 = pneg %p108
        $region42: #{_fused_fwd.1} parent=31 // pred_check_branch
          %239 = sbr.rel (%p237) target = $region44
        $region43: #{_fused_fwd.1} parent=31 // pred_region
          %240 = dma.done [#allocation6], 96
        $region44: #{_fused_fwd.1} parent=31 // pred_fallthru
          _
        %s241 = sand.u32 %s41, 1
        %s242 = scalar_lea.sflag [#allocation3], %s241
        %s243 = sand.u32 %s41, 1
        %s244 = smul.addr %s243, 2304
        %s245 = scalar_lea.vmem [#allocation2], %s244
        %p246 = pneg %p54
        %p247 = pneg %p51
        %s248 = sand.u32 %s21, 1
        %s249 = scalar_lea.sflag [#allocation6], %s248
        %s250 = sand.u32 %s69, 1
        %s251 = smul.addr %s250, 2304
        %s252 = scalar_lea.vmem [#allocation5], %s251
        %p253 = pneg %p82
        %p254 = pneg %p79
        %p255 = pneg %p108
        %p256 = pneg %p105
        %p257 = pneg %p134
        %p258 = pneg %p131
        %s259 = smul.u32 6, %s26
        %s260 = smul.u32 96, %s26
        %s261 = smul.u32 6, %s25
        %s262 = smul.u32 6, %s25
        %s263 = smul.u32 6, %s25
        %p264 = scmp.eq.s32.totalorder %s26, 0
        // Predicated region
        $region45: #{_fused_fwd.1} parent=31 // pred_check
          %p265 = pneg %p264
        $region46: #{_fused_fwd.1} parent=31 // pred_check_branch
          %267 = sbr.rel (%p265) target = $region48
        $region47: #{_fused_fwd.1} parent=31 // pred_region
          %v268 = vld [vmem:[#allocation7] sm:$0x3f]
          %v270 = vlaneseq
          %v271 = vshrl.u32 %v270, 7
          %v272 = vsub.s32 0, %v271
          %v273 = vrot.slane %v268, %v272
          %v274 = vlaneseq
          %v275 = vshrl.u32 %v274, 7
          %v276 = vsub.s32 1, %v275
          %v277 = vrot.slane %v268, %v276
          %v278 = vlaneseq
          %v279 = vshrl.u32 %v278, 7
          %v280 = vsub.s32 2, %v279
          %v281 = vrot.slane %v268, %v280
          %v282 = vlaneseq
          %v283 = vshrl.u32 %v282, 7
          %v284 = vsub.s32 3, %v283
          %v285 = vrot.slane %v268, %v284
          %v286 = vlaneseq
          %v287 = vshrl.u32 %v286, 7
          %v288 = vsub.s32 4, %v287
          %v289 = vrot.slane %v268, %v288
          %v290 = vlaneseq
          %v291 = vshrl.u32 %v290, 7
          %v292 = vsub.s32 5, %v291
          %v293 = vrot.slane %v268, %v292
          %300 = vst [vmem:[#allocation8] sm:$0xff] %v273
          %301 = vst [vmem:[#allocation8 + $0x8] sm:$0xff] %v277
          %302 = vst [vmem:[#allocation8 + $0x10] sm:$0xff] %v281
          %303 = vst [vmem:[#allocation8 + $0x18] sm:$0xff] %v285
          %304 = vst [vmem:[#allocation8 + $0x20] sm:$0xff] %v289
          %305 = vst [vmem:[#allocation8 + $0x28] sm:$0xff] %v293
          %306 = vst [vmem:[#allocation8 + $0x30] sm:$0xff] %v273
          %307 = vst [vmem:[#allocation8 + $0x38] sm:$0xff] %v277
          %308 = vst [vmem:[#allocation8 + $0x40] sm:$0xff] %v281
          %309 = vst [vmem:[#allocation8 + $0x48] sm:$0xff] %v285
          %310 = vst [vmem:[#allocation8 + $0x50] sm:$0xff] %v289
          %311 = vst [vmem:[#allocation8 + $0x58] sm:$0xff] %v293
          %312 = vst [vmem:[#allocation8 + $0x60] sm:$0xff] %v273
          %313 = vst [vmem:[#allocation8 + $0x68] sm:$0xff] %v277
          %314 = vst [vmem:[#allocation8 + $0x70] sm:$0xff] %v281
          %315 = vst [vmem:[#allocation8 + $0x78] sm:$0xff] %v285
          %316 = vst [vmem:[#allocation8 + $0x80] sm:$0xff] %v289
          %317 = vst [vmem:[#allocation8 + $0x88] sm:$0xff] %v293
          %318 = vst [vmem:[#allocation8 + $0x90] sm:$0xff] %v273
          %319 = vst [vmem:[#allocation8 + $0x98] sm:$0xff] %v277
          %320 = vst [vmem:[#allocation8 + $0xa0] sm:$0xff] %v281
          %321 = vst [vmem:[#allocation8 + $0xa8] sm:$0xff] %v285
          %322 = vst [vmem:[#allocation8 + $0xb0] sm:$0xff] %v289
          %323 = vst [vmem:[#allocation8 + $0xb8] sm:$0xff] %v293
          %324 = vst [vmem:[#allocation8 + $0xc0] sm:$0xff] %v273
          %325 = vst [vmem:[#allocation8 + $0xc8] sm:$0xff] %v277
          %326 = vst [vmem:[#allocation8 + $0xd0] sm:$0xff] %v281
          %327 = vst [vmem:[#allocation8 + $0xd8] sm:$0xff] %v285
          %328 = vst [vmem:[#allocation8 + $0xe0] sm:$0xff] %v289
          %329 = vst [vmem:[#allocation8 + $0xe8] sm:$0xff] %v293
          %330 = vst [vmem:[#allocation8 + $0xf0] sm:$0xff] %v273
          %331 = vst [vmem:[#allocation8 + $0xf8] sm:$0xff] %v277
          %332 = vst [vmem:[#allocation8 + $0x100] sm:$0xff] %v281
          %333 = vst [vmem:[#allocation8 + $0x108] sm:$0xff] %v285
          %334 = vst [vmem:[#allocation8 + $0x110] sm:$0xff] %v289
          %335 = vst [vmem:[#allocation8 + $0x118] sm:$0xff] %v293
          %336 = vst [vmem:[#allocation8 + $0x120] sm:$0xff] %v273
          %337 = vst [vmem:[#allocation8 + $0x128] sm:$0xff] %v277
          %338 = vst [vmem:[#allocation8 + $0x130] sm:$0xff] %v281
          %339 = vst [vmem:[#allocation8 + $0x138] sm:$0xff] %v285
          %340 = vst [vmem:[#allocation8 + $0x140] sm:$0xff] %v289
          %341 = vst [vmem:[#allocation8 + $0x148] sm:$0xff] %v293
          %342 = vst [vmem:[#allocation8 + $0x150] sm:$0xff] %v273
          %343 = vst [vmem:[#allocation8 + $0x158] sm:$0xff] %v277
          %344 = vst [vmem:[#allocation8 + $0x160] sm:$0xff] %v281
          %345 = vst [vmem:[#allocation8 + $0x168] sm:$0xff] %v285
          %346 = vst [vmem:[#allocation8 + $0x170] sm:$0xff] %v289
          %347 = vst [vmem:[#allocation8 + $0x178] sm:$0xff] %v293
          %348 = vst [vmem:[#allocation8 + $0x180] sm:$0xff] %v273
          %349 = vst [vmem:[#allocation8 + $0x188] sm:$0xff] %v277
          %350 = vst [vmem:[#allocation8 + $0x190] sm:$0xff] %v281
          %351 = vst [vmem:[#allocation8 + $0x198] sm:$0xff] %v285
          %352 = vst [vmem:[#allocation8 + $0x1a0] sm:$0xff] %v289
          %353 = vst [vmem:[#allocation8 + $0x1a8] sm:$0xff] %v293
          %354 = vst [vmem:[#allocation8 + $0x1b0] sm:$0xff] %v273
          %355 = vst [vmem:[#allocation8 + $0x1b8] sm:$0xff] %v277
          %356 = vst [vmem:[#allocation8 + $0x1c0] sm:$0xff] %v281
          %357 = vst [vmem:[#allocation8 + $0x1c8] sm:$0xff] %v285
          %358 = vst [vmem:[#allocation8 + $0x1d0] sm:$0xff] %v289
          %359 = vst [vmem:[#allocation8 + $0x1d8] sm:$0xff] %v293
          %360 = vst [vmem:[#allocation8 + $0x1e0] sm:$0xff] %v273
          %361 = vst [vmem:[#allocation8 + $0x1e8] sm:$0xff] %v277
          %362 = vst [vmem:[#allocation8 + $0x1f0] sm:$0xff] %v281
          %363 = vst [vmem:[#allocation8 + $0x1f8] sm:$0xff] %v285
          %364 = vst [vmem:[#allocation8 + $0x200] sm:$0xff] %v289
          %365 = vst [vmem:[#allocation8 + $0x208] sm:$0xff] %v293
          %366 = vst [vmem:[#allocation8 + $0x210] sm:$0xff] %v273
          %367 = vst [vmem:[#allocation8 + $0x218] sm:$0xff] %v277
          %368 = vst [vmem:[#allocation8 + $0x220] sm:$0xff] %v281
          %369 = vst [vmem:[#allocation8 + $0x228] sm:$0xff] %v285
          %370 = vst [vmem:[#allocation8 + $0x230] sm:$0xff] %v289
          %371 = vst [vmem:[#allocation8 + $0x238] sm:$0xff] %v293
          %372 = vst [vmem:[#allocation8 + $0x240] sm:$0xff] %v273
          %373 = vst [vmem:[#allocation8 + $0x248] sm:$0xff] %v277
          %374 = vst [vmem:[#allocation8 + $0x250] sm:$0xff] %v281
          %375 = vst [vmem:[#allocation8 + $0x258] sm:$0xff] %v285
          %376 = vst [vmem:[#allocation8 + $0x260] sm:$0xff] %v289
          %377 = vst [vmem:[#allocation8 + $0x268] sm:$0xff] %v293
          %378 = vst [vmem:[#allocation8 + $0x270] sm:$0xff] %v273
          %379 = vst [vmem:[#allocation8 + $0x278] sm:$0xff] %v277
          %380 = vst [vmem:[#allocation8 + $0x280] sm:$0xff] %v281
          %381 = vst [vmem:[#allocation8 + $0x288] sm:$0xff] %v285
          %382 = vst [vmem:[#allocation8 + $0x290] sm:$0xff] %v289
          %383 = vst [vmem:[#allocation8 + $0x298] sm:$0xff] %v293
          %384 = vst [vmem:[#allocation8 + $0x2a0] sm:$0xff] %v273
          %385 = vst [vmem:[#allocation8 + $0x2a8] sm:$0xff] %v277
          %386 = vst [vmem:[#allocation8 + $0x2b0] sm:$0xff] %v281
          %387 = vst [vmem:[#allocation8 + $0x2b8] sm:$0xff] %v285
          %388 = vst [vmem:[#allocation8 + $0x2c0] sm:$0xff] %v289
          %389 = vst [vmem:[#allocation8 + $0x2c8] sm:$0xff] %v293
          %390 = vst [vmem:[#allocation8 + $0x2d0] sm:$0xff] %v273
          %391 = vst [vmem:[#allocation8 + $0x2d8] sm:$0xff] %v277
          %392 = vst [vmem:[#allocation8 + $0x2e0] sm:$0xff] %v281
          %393 = vst [vmem:[#allocation8 + $0x2e8] sm:$0xff] %v285
          %394 = vst [vmem:[#allocation8 + $0x2f0] sm:$0xff] %v289
          %395 = vst [vmem:[#allocation8 + $0x2f8] sm:$0xff] %v293
          %396 = vst [vmem:[#allocation8 + $0x300] sm:$0xff] %v273
          %397 = vst [vmem:[#allocation8 + $0x308] sm:$0xff] %v277
          %398 = vst [vmem:[#allocation8 + $0x310] sm:$0xff] %v281
          %399 = vst [vmem:[#allocation8 + $0x318] sm:$0xff] %v285
          %400 = vst [vmem:[#allocation8 + $0x320] sm:$0xff] %v289
          %401 = vst [vmem:[#allocation8 + $0x328] sm:$0xff] %v293
          %402 = vst [vmem:[#allocation8 + $0x330] sm:$0xff] %v273
          %403 = vst [vmem:[#allocation8 + $0x338] sm:$0xff] %v277
          %404 = vst [vmem:[#allocation8 + $0x340] sm:$0xff] %v281
          %405 = vst [vmem:[#allocation8 + $0x348] sm:$0xff] %v285
          %406 = vst [vmem:[#allocation8 + $0x350] sm:$0xff] %v289
          %407 = vst [vmem:[#allocation8 + $0x358] sm:$0xff] %v293
          %408 = vst [vmem:[#allocation8 + $0x360] sm:$0xff] %v273
          %409 = vst [vmem:[#allocation8 + $0x368] sm:$0xff] %v277
          %410 = vst [vmem:[#allocation8 + $0x370] sm:$0xff] %v281
          %411 = vst [vmem:[#allocation8 + $0x378] sm:$0xff] %v285
          %412 = vst [vmem:[#allocation8 + $0x380] sm:$0xff] %v289
          %413 = vst [vmem:[#allocation8 + $0x388] sm:$0xff] %v293
          %414 = vst [vmem:[#allocation8 + $0x390] sm:$0xff] %v273
          %415 = vst [vmem:[#allocation8 + $0x398] sm:$0xff] %v277
          %416 = vst [vmem:[#allocation8 + $0x3a0] sm:$0xff] %v281
          %417 = vst [vmem:[#allocation8 + $0x3a8] sm:$0xff] %v285
          %418 = vst [vmem:[#allocation8 + $0x3b0] sm:$0xff] %v289
          %419 = vst [vmem:[#allocation8 + $0x3b8] sm:$0xff] %v293
          %420 = vst [vmem:[#allocation8 + $0x3c0] sm:$0xff] %v273
          %421 = vst [vmem:[#allocation8 + $0x3c8] sm:$0xff] %v277
          %422 = vst [vmem:[#allocation8 + $0x3d0] sm:$0xff] %v281
          %423 = vst [vmem:[#allocation8 + $0x3d8] sm:$0xff] %v285
          %424 = vst [vmem:[#allocation8 + $0x3e0] sm:$0xff] %v289
          %425 = vst [vmem:[#allocation8 + $0x3e8] sm:$0xff] %v293
          %426 = vst [vmem:[#allocation8 + $0x3f0] sm:$0xff] %v273
          %427 = vst [vmem:[#allocation8 + $0x3f8] sm:$0xff] %v277
          %428 = vst [vmem:[#allocation8 + $0x400] sm:$0xff] %v281
          %429 = vst [vmem:[#allocation8 + $0x408] sm:$0xff] %v285
          %430 = vst [vmem:[#allocation8 + $0x410] sm:$0xff] %v289
          %431 = vst [vmem:[#allocation8 + $0x418] sm:$0xff] %v293
          %432 = vst [vmem:[#allocation8 + $0x420] sm:$0xff] %v273
          %433 = vst [vmem:[#allocation8 + $0x428] sm:$0xff] %v277
          %434 = vst [vmem:[#allocation8 + $0x430] sm:$0xff] %v281
          %435 = vst [vmem:[#allocation8 + $0x438] sm:$0xff] %v285
          %436 = vst [vmem:[#allocation8 + $0x440] sm:$0xff] %v289
          %437 = vst [vmem:[#allocation8 + $0x448] sm:$0xff] %v293
          %438 = vst [vmem:[#allocation8 + $0x450] sm:$0xff] %v273
          %439 = vst [vmem:[#allocation8 + $0x458] sm:$0xff] %v277
          %440 = vst [vmem:[#allocation8 + $0x460] sm:$0xff] %v281
          %441 = vst [vmem:[#allocation8 + $0x468] sm:$0xff] %v285
          %442 = vst [vmem:[#allocation8 + $0x470] sm:$0xff] %v289
          %443 = vst [vmem:[#allocation8 + $0x478] sm:$0xff] %v293
          %444 = vst [vmem:[#allocation8 + $0x480] sm:$0xff] %v273
          %445 = vst [vmem:[#allocation8 + $0x488] sm:$0xff] %v277
          %446 = vst [vmem:[#allocation8 + $0x490] sm:$0xff] %v281
          %447 = vst [vmem:[#allocation8 + $0x498] sm:$0xff] %v285
          %448 = vst [vmem:[#allocation8 + $0x4a0] sm:$0xff] %v289
          %449 = vst [vmem:[#allocation8 + $0x4a8] sm:$0xff] %v293
          %450 = vst [vmem:[#allocation8 + $0x4b0] sm:$0xff] %v273
          %451 = vst [vmem:[#allocation8 + $0x4b8] sm:$0xff] %v277
          %452 = vst [vmem:[#allocation8 + $0x4c0] sm:$0xff] %v281
          %453 = vst [vmem:[#allocation8 + $0x4c8] sm:$0xff] %v285
          %454 = vst [vmem:[#allocation8 + $0x4d0] sm:$0xff] %v289
          %455 = vst [vmem:[#allocation8 + $0x4d8] sm:$0xff] %v293
          %456 = vst [vmem:[#allocation8 + $0x4e0] sm:$0xff] %v273
          %457 = vst [vmem:[#allocation8 + $0x4e8] sm:$0xff] %v277
          %458 = vst [vmem:[#allocation8 + $0x4f0] sm:$0xff] %v281
          %459 = vst [vmem:[#allocation8 + $0x4f8] sm:$0xff] %v285
          %460 = vst [vmem:[#allocation8 + $0x500] sm:$0xff] %v289
          %461 = vst [vmem:[#allocation8 + $0x508] sm:$0xff] %v293
          %462 = vst [vmem:[#allocation8 + $0x510] sm:$0xff] %v273
          %463 = vst [vmem:[#allocation8 + $0x518] sm:$0xff] %v277
          %464 = vst [vmem:[#allocation8 + $0x520] sm:$0xff] %v281
          %465 = vst [vmem:[#allocation8 + $0x528] sm:$0xff] %v285
          %466 = vst [vmem:[#allocation8 + $0x530] sm:$0xff] %v289
          %467 = vst [vmem:[#allocation8 + $0x538] sm:$0xff] %v293
          %468 = vst [vmem:[#allocation8 + $0x540] sm:$0xff] %v273
          %469 = vst [vmem:[#allocation8 + $0x548] sm:$0xff] %v277
          %470 = vst [vmem:[#allocation8 + $0x550] sm:$0xff] %v281
          %471 = vst [vmem:[#allocation8 + $0x558] sm:$0xff] %v285
          %472 = vst [vmem:[#allocation8 + $0x560] sm:$0xff] %v289
          %473 = vst [vmem:[#allocation8 + $0x568] sm:$0xff] %v293
          %474 = vst [vmem:[#allocation8 + $0x570] sm:$0xff] %v273
          %475 = vst [vmem:[#allocation8 + $0x578] sm:$0xff] %v277
          %476 = vst [vmem:[#allocation8 + $0x580] sm:$0xff] %v281
          %477 = vst [vmem:[#allocation8 + $0x588] sm:$0xff] %v285
          %478 = vst [vmem:[#allocation8 + $0x590] sm:$0xff] %v289
          %479 = vst [vmem:[#allocation8 + $0x598] sm:$0xff] %v293
          %480 = vst [vmem:[#allocation8 + $0x5a0] sm:$0xff] %v273
          %481 = vst [vmem:[#allocation8 + $0x5a8] sm:$0xff] %v277
          %482 = vst [vmem:[#allocation8 + $0x5b0] sm:$0xff] %v281
          %483 = vst [vmem:[#allocation8 + $0x5b8] sm:$0xff] %v285
          %484 = vst [vmem:[#allocation8 + $0x5c0] sm:$0xff] %v289
          %485 = vst [vmem:[#allocation8 + $0x5c8] sm:$0xff] %v293
          %486 = vst [vmem:[#allocation8 + $0x5d0] sm:$0xff] %v273
          %487 = vst [vmem:[#allocation8 + $0x5d8] sm:$0xff] %v277
          %488 = vst [vmem:[#allocation8 + $0x5e0] sm:$0xff] %v281
          %489 = vst [vmem:[#allocation8 + $0x5e8] sm:$0xff] %v285
          %490 = vst [vmem:[#allocation8 + $0x5f0] sm:$0xff] %v289
          %491 = vst [vmem:[#allocation8 + $0x5f8] sm:$0xff] %v293
          %492 = vst [vmem:[#allocation8 + $0x600] sm:$0xff] %v273
          %493 = vst [vmem:[#allocation8 + $0x608] sm:$0xff] %v277
          %494 = vst [vmem:[#allocation8 + $0x610] sm:$0xff] %v281
          %495 = vst [vmem:[#allocation8 + $0x618] sm:$0xff] %v285
          %496 = vst [vmem:[#allocation8 + $0x620] sm:$0xff] %v289
          %497 = vst [vmem:[#allocation8 + $0x628] sm:$0xff] %v293
          %498 = vst [vmem:[#allocation8 + $0x630] sm:$0xff] %v273
          %499 = vst [vmem:[#allocation8 + $0x638] sm:$0xff] %v277
          %500 = vst [vmem:[#allocation8 + $0x640] sm:$0xff] %v281
          %501 = vst [vmem:[#allocation8 + $0x648] sm:$0xff] %v285
          %502 = vst [vmem:[#allocation8 + $0x650] sm:$0xff] %v289
          %503 = vst [vmem:[#allocation8 + $0x658] sm:$0xff] %v293
          %504 = vst [vmem:[#allocation8 + $0x660] sm:$0xff] %v273
          %505 = vst [vmem:[#allocation8 + $0x668] sm:$0xff] %v277
          %506 = vst [vmem:[#allocation8 + $0x670] sm:$0xff] %v281
          %507 = vst [vmem:[#allocation8 + $0x678] sm:$0xff] %v285
          %508 = vst [vmem:[#allocation8 + $0x680] sm:$0xff] %v289
          %509 = vst [vmem:[#allocation8 + $0x688] sm:$0xff] %v293
          %510 = vst [vmem:[#allocation8 + $0x690] sm:$0xff] %v273
          %511 = vst [vmem:[#allocation8 + $0x698] sm:$0xff] %v277
          %512 = vst [vmem:[#allocation8 + $0x6a0] sm:$0xff] %v281
          %513 = vst [vmem:[#allocation8 + $0x6a8] sm:$0xff] %v285
          %514 = vst [vmem:[#allocation8 + $0x6b0] sm:$0xff] %v289
          %515 = vst [vmem:[#allocation8 + $0x6b8] sm:$0xff] %v293
          %516 = vst [vmem:[#allocation8 + $0x6c0] sm:$0xff] %v273
          %517 = vst [vmem:[#allocation8 + $0x6c8] sm:$0xff] %v277
          %518 = vst [vmem:[#allocation8 + $0x6d0] sm:$0xff] %v281
          %519 = vst [vmem:[#allocation8 + $0x6d8] sm:$0xff] %v285
          %520 = vst [vmem:[#allocation8 + $0x6e0] sm:$0xff] %v289
          %521 = vst [vmem:[#allocation8 + $0x6e8] sm:$0xff] %v293
          %522 = vst [vmem:[#allocation8 + $0x6f0] sm:$0xff] %v273
          %523 = vst [vmem:[#allocation8 + $0x6f8] sm:$0xff] %v277
          %524 = vst [vmem:[#allocation8 + $0x700] sm:$0xff] %v281
          %525 = vst [vmem:[#allocation8 + $0x708] sm:$0xff] %v285
          %526 = vst [vmem:[#allocation8 + $0x710] sm:$0xff] %v289
          %527 = vst [vmem:[#allocation8 + $0x718] sm:$0xff] %v293
          %528 = vst [vmem:[#allocation8 + $0x720] sm:$0xff] %v273
          %529 = vst [vmem:[#allocation8 + $0x728] sm:$0xff] %v277
          %530 = vst [vmem:[#allocation8 + $0x730] sm:$0xff] %v281
          %531 = vst [vmem:[#allocation8 + $0x738] sm:$0xff] %v285
          %532 = vst [vmem:[#allocation8 + $0x740] sm:$0xff] %v289
          %533 = vst [vmem:[#allocation8 + $0x748] sm:$0xff] %v293
          %534 = vst [vmem:[#allocation8 + $0x750] sm:$0xff] %v273
          %535 = vst [vmem:[#allocation8 + $0x758] sm:$0xff] %v277
          %536 = vst [vmem:[#allocation8 + $0x760] sm:$0xff] %v281
          %537 = vst [vmem:[#allocation8 + $0x768] sm:$0xff] %v285
          %538 = vst [vmem:[#allocation8 + $0x770] sm:$0xff] %v289
          %539 = vst [vmem:[#allocation8 + $0x778] sm:$0xff] %v293
          %540 = vst [vmem:[#allocation8 + $0x780] sm:$0xff] %v273
          %541 = vst [vmem:[#allocation8 + $0x788] sm:$0xff] %v277
          %542 = vst [vmem:[#allocation8 + $0x790] sm:$0xff] %v281
          %543 = vst [vmem:[#allocation8 + $0x798] sm:$0xff] %v285
          %544 = vst [vmem:[#allocation8 + $0x7a0] sm:$0xff] %v289
          %545 = vst [vmem:[#allocation8 + $0x7a8] sm:$0xff] %v293
          %546 = vst [vmem:[#allocation8 + $0x7b0] sm:$0xff] %v273
          %547 = vst [vmem:[#allocation8 + $0x7b8] sm:$0xff] %v277
          %548 = vst [vmem:[#allocation8 + $0x7c0] sm:$0xff] %v281
          %549 = vst [vmem:[#allocation8 + $0x7c8] sm:$0xff] %v285
          %550 = vst [vmem:[#allocation8 + $0x7d0] sm:$0xff] %v289
          %551 = vst [vmem:[#allocation8 + $0x7d8] sm:$0xff] %v293
          %552 = vst [vmem:[#allocation8 + $0x7e0] sm:$0xff] %v273
          %553 = vst [vmem:[#allocation8 + $0x7e8] sm:$0xff] %v277
          %554 = vst [vmem:[#allocation8 + $0x7f0] sm:$0xff] %v281
          %555 = vst [vmem:[#allocation8 + $0x7f8] sm:$0xff] %v285
          %556 = vst [vmem:[#allocation8 + $0x800] sm:$0xff] %v289
          %557 = vst [vmem:[#allocation8 + $0x808] sm:$0xff] %v293
          %558 = vst [vmem:[#allocation8 + $0x810] sm:$0xff] %v273
          %559 = vst [vmem:[#allocation8 + $0x818] sm:$0xff] %v277
          %560 = vst [vmem:[#allocation8 + $0x820] sm:$0xff] %v281
          %561 = vst [vmem:[#allocation8 + $0x828] sm:$0xff] %v285
          %562 = vst [vmem:[#allocation8 + $0x830] sm:$0xff] %v289
          %563 = vst [vmem:[#allocation8 + $0x838] sm:$0xff] %v293
          %564 = vst [vmem:[#allocation8 + $0x840] sm:$0xff] %v273
          %565 = vst [vmem:[#allocation8 + $0x848] sm:$0xff] %v277
          %566 = vst [vmem:[#allocation8 + $0x850] sm:$0xff] %v281
          %567 = vst [vmem:[#allocation8 + $0x858] sm:$0xff] %v285
          %568 = vst [vmem:[#allocation8 + $0x860] sm:$0xff] %v289
          %569 = vst [vmem:[#allocation8 + $0x868] sm:$0xff] %v293
          %570 = vst [vmem:[#allocation8 + $0x870] sm:$0xff] %v273
          %571 = vst [vmem:[#allocation8 + $0x878] sm:$0xff] %v277
          %572 = vst [vmem:[#allocation8 + $0x880] sm:$0xff] %v281
          %573 = vst [vmem:[#allocation8 + $0x888] sm:$0xff] %v285
          %574 = vst [vmem:[#allocation8 + $0x890] sm:$0xff] %v289
          %575 = vst [vmem:[#allocation8 + $0x898] sm:$0xff] %v293
          %576 = vst [vmem:[#allocation8 + $0x8a0] sm:$0xff] %v273
          %577 = vst [vmem:[#allocation8 + $0x8a8] sm:$0xff] %v277
          %578 = vst [vmem:[#allocation8 + $0x8b0] sm:$0xff] %v281
          %579 = vst [vmem:[#allocation8 + $0x8b8] sm:$0xff] %v285
          %580 = vst [vmem:[#allocation8 + $0x8c0] sm:$0xff] %v289
          %581 = vst [vmem:[#allocation8 + $0x8c8] sm:$0xff] %v293
          %582 = vst [vmem:[#allocation8 + $0x8d0] sm:$0xff] %v273
          %583 = vst [vmem:[#allocation8 + $0x8d8] sm:$0xff] %v277
          %584 = vst [vmem:[#allocation8 + $0x8e0] sm:$0xff] %v281
          %585 = vst [vmem:[#allocation8 + $0x8e8] sm:$0xff] %v285
          %586 = vst [vmem:[#allocation8 + $0x8f0] sm:$0xff] %v289
          %587 = vst [vmem:[#allocation8 + $0x8f8] sm:$0xff] %v293
        $region48: #{_fused_fwd.1} parent=31 // pred_fallthru
          _
        %v588 = vld [vmem:[%s223] sm:$0xff]
        %v589 = vld [vmem:[%s223 + $0x8] sm:$0xff]
        %v590 = vld [vmem:[%s223 + $0x10] sm:$0xff]
        %v591 = vld [vmem:[%s223 + $0x18] sm:$0xff]
        %v592 = vld [vmem:[%s223 + $0x20] sm:$0xff]
        %v593 = vld [vmem:[%s223 + $0x28] sm:$0xff]
        %v594 = vld [vmem:[%s223 + $0x30] sm:$0xff]
        %v595 = vld [vmem:[%s223 + $0x38] sm:$0xff]
        %v596 = vld [vmem:[%s223 + $0x40] sm:$0xff]
        %v597 = vld [vmem:[%s223 + $0x48] sm:$0xff]
        %v598 = vld [vmem:[%s223 + $0x50] sm:$0xff]
        %v599 = vld [vmem:[%s223 + $0x58] sm:$0xff]
        %v600 = vld [vmem:[%s223 + $0x60] sm:$0xff]
        %v601 = vld [vmem:[%s223 + $0x68] sm:$0xff]
        %v602 = vld [vmem:[%s223 + $0x70] sm:$0xff]
        %v603 = vld [vmem:[%s223 + $0x78] sm:$0xff]
        %v604 = vld [vmem:[%s223 + $0x80] sm:$0xff]
        %v605 = vld [vmem:[%s223 + $0x88] sm:$0xff]
        %v606 = vld [vmem:[%s223 + $0x90] sm:$0xff]
        %v607 = vld [vmem:[%s223 + $0x98] sm:$0xff]
        %v608 = vld [vmem:[%s223 + $0xa0] sm:$0xff]
        %v609 = vld [vmem:[%s223 + $0xa8] sm:$0xff]
        %v610 = vld [vmem:[%s223 + $0xb0] sm:$0xff]
        %v611 = vld [vmem:[%s223 + $0xb8] sm:$0xff]
        %v612 = vld [vmem:[%s223 + $0xc0] sm:$0xff]
        %v613 = vld [vmem:[%s223 + $0xc8] sm:$0xff]
        %v614 = vld [vmem:[%s223 + $0xd0] sm:$0xff]
        %v615 = vld [vmem:[%s223 + $0xd8] sm:$0xff]
        %v616 = vld [vmem:[%s223 + $0xe0] sm:$0xff]
        %v617 = vld [vmem:[%s223 + $0xe8] sm:$0xff]
        %v618 = vld [vmem:[%s223 + $0xf0] sm:$0xff]
        %v619 = vld [vmem:[%s223 + $0xf8] sm:$0xff]
        %v620 = vld [vmem:[%s223 + $0x100] sm:$0xff]
        %v621 = vld [vmem:[%s223 + $0x108] sm:$0xff]
        %v622 = vld [vmem:[%s223 + $0x110] sm:$0xff]
        %v623 = vld [vmem:[%s223 + $0x118] sm:$0xff]
        %v624 = vld [vmem:[%s223 + $0x120] sm:$0xff]
        %v625 = vld [vmem:[%s223 + $0x128] sm:$0xff]
        %v626 = vld [vmem:[%s223 + $0x130] sm:$0xff]
        %v627 = vld [vmem:[%s223 + $0x138] sm:$0xff]
        %v628 = vld [vmem:[%s223 + $0x140] sm:$0xff]
        %v629 = vld [vmem:[%s223 + $0x148] sm:$0xff]
        %v630 = vld [vmem:[%s223 + $0x150] sm:$0xff]
        %v631 = vld [vmem:[%s223 + $0x158] sm:$0xff]
        %v632 = vld [vmem:[%s223 + $0x160] sm:$0xff]
        %v633 = vld [vmem:[%s223 + $0x168] sm:$0xff]
        %v634 = vld [vmem:[%s223 + $0x170] sm:$0xff]
        %v635 = vld [vmem:[%s223 + $0x178] sm:$0xff]
        %v636 = vld [vmem:[%s223 + $0x180] sm:$0xff]
        %v637 = vld [vmem:[%s223 + $0x188] sm:$0xff]
        %v638 = vld [vmem:[%s223 + $0x190] sm:$0xff]
        %v639 = vld [vmem:[%s223 + $0x198] sm:$0xff]
        %v640 = vld [vmem:[%s223 + $0x1a0] sm:$0xff]
        %v641 = vld [vmem:[%s223 + $0x1a8] sm:$0xff]
        %v642 = vld [vmem:[%s223 + $0x1b0] sm:$0xff]
        %v643 = vld [vmem:[%s223 + $0x1b8] sm:$0xff]
        %v644 = vld [vmem:[%s223 + $0x1c0] sm:$0xff]
        %v645 = vld [vmem:[%s223 + $0x1c8] sm:$0xff]
        %v646 = vld [vmem:[%s223 + $0x1d0] sm:$0xff]
        %v647 = vld [vmem:[%s223 + $0x1d8] sm:$0xff]
        %v648 = vld [vmem:[%s223 + $0x1e0] sm:$0xff]
        %v649 = vld [vmem:[%s223 + $0x1e8] sm:$0xff]
        %v650 = vld [vmem:[%s223 + $0x1f0] sm:$0xff]
        %v651 = vld [vmem:[%s223 + $0x1f8] sm:$0xff]
        %v652 = vld [vmem:[%s223 + $0x200] sm:$0xff]
        %v653 = vld [vmem:[%s223 + $0x208] sm:$0xff]
        %v654 = vld [vmem:[%s223 + $0x210] sm:$0xff]
        %v655 = vld [vmem:[%s223 + $0x218] sm:$0xff]
        %v656 = vld [vmem:[%s223 + $0x220] sm:$0xff]
        %v657 = vld [vmem:[%s223 + $0x228] sm:$0xff]
        %v658 = vld [vmem:[%s223 + $0x230] sm:$0xff]
        %v659 = vld [vmem:[%s223 + $0x238] sm:$0xff]
        %v660 = vld [vmem:[%s223 + $0x240] sm:$0xff]
        %v661 = vld [vmem:[%s223 + $0x248] sm:$0xff]
        %v662 = vld [vmem:[%s223 + $0x250] sm:$0xff]
        %v663 = vld [vmem:[%s223 + $0x258] sm:$0xff]
        %v664 = vld [vmem:[%s223 + $0x260] sm:$0xff]
        %v665 = vld [vmem:[%s223 + $0x268] sm:$0xff]
        %v666 = vld [vmem:[%s223 + $0x270] sm:$0xff]
        %v667 = vld [vmem:[%s223 + $0x278] sm:$0xff]
        %v668 = vld [vmem:[%s223 + $0x280] sm:$0xff]
        %v669 = vld [vmem:[%s223 + $0x288] sm:$0xff]
        %v670 = vld [vmem:[%s223 + $0x290] sm:$0xff]
        %v671 = vld [vmem:[%s223 + $0x298] sm:$0xff]
        %v672 = vld [vmem:[%s223 + $0x2a0] sm:$0xff]
        %v673 = vld [vmem:[%s223 + $0x2a8] sm:$0xff]
        %v674 = vld [vmem:[%s223 + $0x2b0] sm:$0xff]
        %v675 = vld [vmem:[%s223 + $0x2b8] sm:$0xff]
        %v676 = vld [vmem:[%s223 + $0x2c0] sm:$0xff]
        %v677 = vld [vmem:[%s223 + $0x2c8] sm:$0xff]
        %v678 = vld [vmem:[%s223 + $0x2d0] sm:$0xff]
        %v679 = vld [vmem:[%s223 + $0x2d8] sm:$0xff]
        %v680 = vld [vmem:[%s223 + $0x2e0] sm:$0xff]
        %v681 = vld [vmem:[%s223 + $0x2e8] sm:$0xff]
        %v682 = vld [vmem:[%s223 + $0x2f0] sm:$0xff]
        %v683 = vld [vmem:[%s223 + $0x2f8] sm:$0xff]
        %v684 = vld [vmem:[%s223 + $0x300] sm:$0xff]
        %v685 = vld [vmem:[%s223 + $0x308] sm:$0xff]
        %v686 = vld [vmem:[%s223 + $0x310] sm:$0xff]
        %v687 = vld [vmem:[%s223 + $0x318] sm:$0xff]
        %v688 = vld [vmem:[%s223 + $0x320] sm:$0xff]
        %v689 = vld [vmem:[%s223 + $0x328] sm:$0xff]
        %v690 = vld [vmem:[%s223 + $0x330] sm:$0xff]
        %v691 = vld [vmem:[%s223 + $0x338] sm:$0xff]
        %v692 = vld [vmem:[%s223 + $0x340] sm:$0xff]
        %v693 = vld [vmem:[%s223 + $0x348] sm:$0xff]
        %v694 = vld [vmem:[%s223 + $0x350] sm:$0xff]
        %v695 = vld [vmem:[%s223 + $0x358] sm:$0xff]
        %v696 = vld [vmem:[%s223 + $0x360] sm:$0xff]
        %v697 = vld [vmem:[%s223 + $0x368] sm:$0xff]
        %v698 = vld [vmem:[%s223 + $0x370] sm:$0xff]
        %v699 = vld [vmem:[%s223 + $0x378] sm:$0xff]
        %v700 = vld [vmem:[%s223 + $0x380] sm:$0xff]
        %v701 = vld [vmem:[%s223 + $0x388] sm:$0xff]
        %v702 = vld [vmem:[%s223 + $0x390] sm:$0xff]
        %v703 = vld [vmem:[%s223 + $0x398] sm:$0xff]
        %v704 = vld [vmem:[%s223 + $0x3a0] sm:$0xff]
        %v705 = vld [vmem:[%s223 + $0x3a8] sm:$0xff]
        %v706 = vld [vmem:[%s223 + $0x3b0] sm:$0xff]
        %v707 = vld [vmem:[%s223 + $0x3b8] sm:$0xff]
        %v708 = vld [vmem:[%s223 + $0x3c0] sm:$0xff]
        %v709 = vld [vmem:[%s223 + $0x3c8] sm:$0xff]
        %v710 = vld [vmem:[%s223 + $0x3d0] sm:$0xff]
        %v711 = vld [vmem:[%s223 + $0x3d8] sm:$0xff]
        %v712 = vld [vmem:[%s223 + $0x3e0] sm:$0xff]
        %v713 = vld [vmem:[%s223 + $0x3e8] sm:$0xff]
        %v714 = vld [vmem:[%s223 + $0x3f0] sm:$0xff]
        %v715 = vld [vmem:[%s223 + $0x3f8] sm:$0xff]
        %v716 = vld [vmem:[%s223 + $0x400] sm:$0xff]
        %v717 = vld [vmem:[%s223 + $0x408] sm:$0xff]
        %v718 = vld [vmem:[%s223 + $0x410] sm:$0xff]
        %v719 = vld [vmem:[%s223 + $0x418] sm:$0xff]
        %v720 = vld [vmem:[%s223 + $0x420] sm:$0xff]
        %v721 = vld [vmem:[%s223 + $0x428] sm:$0xff]
        %v722 = vld [vmem:[%s223 + $0x430] sm:$0xff]
        %v723 = vld [vmem:[%s223 + $0x438] sm:$0xff]
        %v724 = vld [vmem:[%s223 + $0x440] sm:$0xff]
        %v725 = vld [vmem:[%s223 + $0x448] sm:$0xff]
        %v726 = vld [vmem:[%s223 + $0x450] sm:$0xff]
        %v727 = vld [vmem:[%s223 + $0x458] sm:$0xff]
        %v728 = vld [vmem:[%s223 + $0x460] sm:$0xff]
        %v729 = vld [vmem:[%s223 + $0x468] sm:$0xff]
        %v730 = vld [vmem:[%s223 + $0x470] sm:$0xff]
        %v731 = vld [vmem:[%s223 + $0x478] sm:$0xff]
        %v732 = vld [vmem:[%s223 + $0x480] sm:$0xff]
        %v733 = vld [vmem:[%s223 + $0x488] sm:$0xff]
        %v734 = vld [vmem:[%s223 + $0x490] sm:$0xff]
        %v735 = vld [vmem:[%s223 + $0x498] sm:$0xff]
        %v736 = vld [vmem:[%s223 + $0x4a0] sm:$0xff]
        %v737 = vld [vmem:[%s223 + $0x4a8] sm:$0xff]
        %v738 = vld [vmem:[%s223 + $0x4b0] sm:$0xff]
        %v739 = vld [vmem:[%s223 + $0x4b8] sm:$0xff]
        %v740 = vld [vmem:[%s223 + $0x4c0] sm:$0xff]
        %v741 = vld [vmem:[%s223 + $0x4c8] sm:$0xff]
        %v742 = vld [vmem:[%s223 + $0x4d0] sm:$0xff]
        %v743 = vld [vmem:[%s223 + $0x4d8] sm:$0xff]
        %v744 = vld [vmem:[%s223 + $0x4e0] sm:$0xff]
        %v745 = vld [vmem:[%s223 + $0x4e8] sm:$0xff]
        %v746 = vld [vmem:[%s223 + $0x4f0] sm:$0xff]
        %v747 = vld [vmem:[%s223 + $0x4f8] sm:$0xff]
        %v748 = vld [vmem:[%s223 + $0x500] sm:$0xff]
        %v749 = vld [vmem:[%s223 + $0x508] sm:$0xff]
        %v750 = vld [vmem:[%s223 + $0x510] sm:$0xff]
        %v751 = vld [vmem:[%s223 + $0x518] sm:$0xff]
        %v752 = vld [vmem:[%s223 + $0x520] sm:$0xff]
        %v753 = vld [vmem:[%s223 + $0x528] sm:$0xff]
        %v754 = vld [vmem:[%s223 + $0x530] sm:$0xff]
        %v755 = vld [vmem:[%s223 + $0x538] sm:$0xff]
        %v756 = vld [vmem:[%s223 + $0x540] sm:$0xff]
        %v757 = vld [vmem:[%s223 + $0x548] sm:$0xff]
        %v758 = vld [vmem:[%s223 + $0x550] sm:$0xff]
        %v759 = vld [vmem:[%s223 + $0x558] sm:$0xff]
        %v760 = vld [vmem:[%s223 + $0x560] sm:$0xff]
        %v761 = vld [vmem:[%s223 + $0x568] sm:$0xff]
        %v762 = vld [vmem:[%s223 + $0x570] sm:$0xff]
        %v763 = vld [vmem:[%s223 + $0x578] sm:$0xff]
        %v764 = vld [vmem:[%s223 + $0x580] sm:$0xff]
        %v765 = vld [vmem:[%s223 + $0x588] sm:$0xff]
        %v766 = vld [vmem:[%s223 + $0x590] sm:$0xff]
        %v767 = vld [vmem:[%s223 + $0x598] sm:$0xff]
        %v768 = vld [vmem:[%s223 + $0x5a0] sm:$0xff]
        %v769 = vld [vmem:[%s223 + $0x5a8] sm:$0xff]
        %v770 = vld [vmem:[%s223 + $0x5b0] sm:$0xff]
        %v771 = vld [vmem:[%s223 + $0x5b8] sm:$0xff]
        %v772 = vld [vmem:[%s223 + $0x5c0] sm:$0xff]
        %v773 = vld [vmem:[%s223 + $0x5c8] sm:$0xff]
        %v774 = vld [vmem:[%s223 + $0x5d0] sm:$0xff]
        %v775 = vld [vmem:[%s223 + $0x5d8] sm:$0xff]
        %v776 = vld [vmem:[%s223 + $0x5e0] sm:$0xff]
        %v777 = vld [vmem:[%s223 + $0x5e8] sm:$0xff]
        %v778 = vld [vmem:[%s223 + $0x5f0] sm:$0xff]
        %v779 = vld [vmem:[%s223 + $0x5f8] sm:$0xff]
        %v780 = vld [vmem:[%s223 + $0x600] sm:$0xff]
        %v781 = vld [vmem:[%s223 + $0x608] sm:$0xff]
        %v782 = vld [vmem:[%s223 + $0x610] sm:$0xff]
        %v783 = vld [vmem:[%s223 + $0x618] sm:$0xff]
        %v784 = vld [vmem:[%s223 + $0x620] sm:$0xff]
        %v785 = vld [vmem:[%s223 + $0x628] sm:$0xff]
        %v786 = vld [vmem:[%s223 + $0x630] sm:$0xff]
        %v787 = vld [vmem:[%s223 + $0x638] sm:$0xff]
        %v788 = vld [vmem:[%s223 + $0x640] sm:$0xff]
        %v789 = vld [vmem:[%s223 + $0x648] sm:$0xff]
        %v790 = vld [vmem:[%s223 + $0x650] sm:$0xff]
        %v791 = vld [vmem:[%s223 + $0x658] sm:$0xff]
        %v792 = vld [vmem:[%s223 + $0x660] sm:$0xff]
        %v793 = vld [vmem:[%s223 + $0x668] sm:$0xff]
        %v794 = vld [vmem:[%s223 + $0x670] sm:$0xff]
        %v795 = vld [vmem:[%s223 + $0x678] sm:$0xff]
        %v796 = vld [vmem:[%s223 + $0x680] sm:$0xff]
        %v797 = vld [vmem:[%s223 + $0x688] sm:$0xff]
        %v798 = vld [vmem:[%s223 + $0x690] sm:$0xff]
        %v799 = vld [vmem:[%s223 + $0x698] sm:$0xff]
        %v800 = vld [vmem:[%s223 + $0x6a0] sm:$0xff]
        %v801 = vld [vmem:[%s223 + $0x6a8] sm:$0xff]
        %v802 = vld [vmem:[%s223 + $0x6b0] sm:$0xff]
        %v803 = vld [vmem:[%s223 + $0x6b8] sm:$0xff]
        %v804 = vld [vmem:[%s223 + $0x6c0] sm:$0xff]
        %v805 = vld [vmem:[%s223 + $0x6c8] sm:$0xff]
        %v806 = vld [vmem:[%s223 + $0x6d0] sm:$0xff]
        %v807 = vld [vmem:[%s223 + $0x6d8] sm:$0xff]
        %v808 = vld [vmem:[%s223 + $0x6e0] sm:$0xff]
        %v809 = vld [vmem:[%s223 + $0x6e8] sm:$0xff]
        %v810 = vld [vmem:[%s223 + $0x6f0] sm:$0xff]
        %v811 = vld [vmem:[%s223 + $0x6f8] sm:$0xff]
        %v812 = vld [vmem:[%s223 + $0x700] sm:$0xff]
        %v813 = vld [vmem:[%s223 + $0x708] sm:$0xff]
        %v814 = vld [vmem:[%s223 + $0x710] sm:$0xff]
        %v815 = vld [vmem:[%s223 + $0x718] sm:$0xff]
        %v816 = vld [vmem:[%s223 + $0x720] sm:$0xff]
        %v817 = vld [vmem:[%s223 + $0x728] sm:$0xff]
        %v818 = vld [vmem:[%s223 + $0x730] sm:$0xff]
        %v819 = vld [vmem:[%s223 + $0x738] sm:$0xff]
        %v820 = vld [vmem:[%s223 + $0x740] sm:$0xff]
        %v821 = vld [vmem:[%s223 + $0x748] sm:$0xff]
        %v822 = vld [vmem:[%s223 + $0x750] sm:$0xff]
        %v823 = vld [vmem:[%s223 + $0x758] sm:$0xff]
        %v824 = vld [vmem:[%s223 + $0x760] sm:$0xff]
        %v825 = vld [vmem:[%s223 + $0x768] sm:$0xff]
        %v826 = vld [vmem:[%s223 + $0x770] sm:$0xff]
        %v827 = vld [vmem:[%s223 + $0x778] sm:$0xff]
        %v828 = vld [vmem:[%s223 + $0x780] sm:$0xff]
        %v829 = vld [vmem:[%s223 + $0x788] sm:$0xff]
        %v830 = vld [vmem:[%s223 + $0x790] sm:$0xff]
        %v831 = vld [vmem:[%s223 + $0x798] sm:$0xff]
        %v832 = vld [vmem:[%s223 + $0x7a0] sm:$0xff]
        %v833 = vld [vmem:[%s223 + $0x7a8] sm:$0xff]
        %v834 = vld [vmem:[%s223 + $0x7b0] sm:$0xff]
        %v835 = vld [vmem:[%s223 + $0x7b8] sm:$0xff]
        %v836 = vld [vmem:[%s223 + $0x7c0] sm:$0xff]
        %v837 = vld [vmem:[%s223 + $0x7c8] sm:$0xff]
        %v838 = vld [vmem:[%s223 + $0x7d0] sm:$0xff]
        %v839 = vld [vmem:[%s223 + $0x7d8] sm:$0xff]
        %v840 = vld [vmem:[%s223 + $0x7e0] sm:$0xff]
        %v841 = vld [vmem:[%s223 + $0x7e8] sm:$0xff]
        %v842 = vld [vmem:[%s223 + $0x7f0] sm:$0xff]
        %v843 = vld [vmem:[%s223 + $0x7f8] sm:$0xff]
        %v844 = vld [vmem:[%s223 + $0x800] sm:$0xff]
        %v845 = vld [vmem:[%s223 + $0x808] sm:$0xff]
        %v846 = vld [vmem:[%s223 + $0x810] sm:$0xff]
        %v847 = vld [vmem:[%s223 + $0x818] sm:$0xff]
        %v848 = vld [vmem:[%s223 + $0x820] sm:$0xff]
        %v849 = vld [vmem:[%s223 + $0x828] sm:$0xff]
        %v850 = vld [vmem:[%s223 + $0x830] sm:$0xff]
        %v851 = vld [vmem:[%s223 + $0x838] sm:$0xff]
        %v852 = vld [vmem:[%s223 + $0x840] sm:$0xff]
        %v853 = vld [vmem:[%s223 + $0x848] sm:$0xff]
        %v854 = vld [vmem:[%s223 + $0x850] sm:$0xff]
        %v855 = vld [vmem:[%s223 + $0x858] sm:$0xff]
        %v856 = vld [vmem:[%s223 + $0x860] sm:$0xff]
        %v857 = vld [vmem:[%s223 + $0x868] sm:$0xff]
        %v858 = vld [vmem:[%s223 + $0x870] sm:$0xff]
        %v859 = vld [vmem:[%s223 + $0x878] sm:$0xff]
        %v860 = vld [vmem:[%s223 + $0x880] sm:$0xff]
        %v861 = vld [vmem:[%s223 + $0x888] sm:$0xff]
        %v862 = vld [vmem:[%s223 + $0x890] sm:$0xff]
        %v863 = vld [vmem:[%s223 + $0x898] sm:$0xff]
        %v864 = vld [vmem:[%s223 + $0x8a0] sm:$0xff]
        %v865 = vld [vmem:[%s223 + $0x8a8] sm:$0xff]
        %v866 = vld [vmem:[%s223 + $0x8b0] sm:$0xff]
        %v867 = vld [vmem:[%s223 + $0x8b8] sm:$0xff]
        %v868 = vld [vmem:[%s223 + $0x8c0] sm:$0xff]
        %v869 = vld [vmem:[%s223 + $0x8c8] sm:$0xff]
        %v870 = vld [vmem:[%s223 + $0x8d0] sm:$0xff]
        %v871 = vld [vmem:[%s223 + $0x8d8] sm:$0xff]
        %v872 = vld [vmem:[%s223 + $0x8e0] sm:$0xff]
        %v873 = vld [vmem:[%s223 + $0x8e8] sm:$0xff]
        %v874 = vld [vmem:[%s223 + $0x8f0] sm:$0xff]
        %v875 = vld [vmem:[%s223 + $0x8f8] sm:$0xff]
        %v876 = vmul.f32 %v588, 0.5
        %v877 = vmul.f32 %v589, 0.5
        %v878 = vmul.f32 %v590, 0.5
        %v879 = vmul.f32 %v591, 0.5
        %v880 = vmul.f32 %v592, 0.5
        %v881 = vmul.f32 %v593, 0.5
        %v882 = vmul.f32 %v594, 0.5
        %v883 = vmul.f32 %v595, 0.5
        %v884 = vmul.f32 %v596, 0.5
        %v885 = vmul.f32 %v597, 0.5
        %v886 = vmul.f32 %v598, 0.5
        %v887 = vmul.f32 %v599, 0.5
        %v888 = vmul.f32 %v600, 0.5
        %v889 = vmul.f32 %v601, 0.5
        %v890 = vmul.f32 %v602, 0.5
        %v891 = vmul.f32 %v603, 0.5
        %v892 = vmul.f32 %v604, 0.5
        %v893 = vmul.f32 %v605, 0.5
        %v894 = vmul.f32 %v606, 0.5
        %v895 = vmul.f32 %v607, 0.5
        %v896 = vmul.f32 %v608, 0.5
        %v897 = vmul.f32 %v609, 0.5
        %v898 = vmul.f32 %v610, 0.5
        %v899 = vmul.f32 %v611, 0.5
        %v900 = vmul.f32 %v612, 0.5
        %v901 = vmul.f32 %v613, 0.5
        %v902 = vmul.f32 %v614, 0.5
        %v903 = vmul.f32 %v615, 0.5
        %v904 = vmul.f32 %v616, 0.5
        %v905 = vmul.f32 %v617, 0.5
        %v906 = vmul.f32 %v618, 0.5
        %v907 = vmul.f32 %v619, 0.5
        %v908 = vmul.f32 %v620, 0.5
        %v909 = vmul.f32 %v621, 0.5
        %v910 = vmul.f32 %v622, 0.5
        %v911 = vmul.f32 %v623, 0.5
        %v912 = vmul.f32 %v624, 0.5
        %v913 = vmul.f32 %v625, 0.5
        %v914 = vmul.f32 %v626, 0.5
        %v915 = vmul.f32 %v627, 0.5
        %v916 = vmul.f32 %v628, 0.5
        %v917 = vmul.f32 %v629, 0.5
        %v918 = vmul.f32 %v630, 0.5
        %v919 = vmul.f32 %v631, 0.5
        %v920 = vmul.f32 %v632, 0.5
        %v921 = vmul.f32 %v633, 0.5
        %v922 = vmul.f32 %v634, 0.5
        %v923 = vmul.f32 %v635, 0.5
        %v924 = vmul.f32 %v636, 0.5
        %v925 = vmul.f32 %v637, 0.5
        %v926 = vmul.f32 %v638, 0.5
        %v927 = vmul.f32 %v639, 0.5
        %v928 = vmul.f32 %v640, 0.5
        %v929 = vmul.f32 %v641, 0.5
        %v930 = vmul.f32 %v642, 0.5
        %v931 = vmul.f32 %v643, 0.5
        %v932 = vmul.f32 %v644, 0.5
        %v933 = vmul.f32 %v645, 0.5
        %v934 = vmul.f32 %v646, 0.5
        %v935 = vmul.f32 %v647, 0.5
        %v936 = vmul.f32 %v648, 0.5
        %v937 = vmul.f32 %v649, 0.5
        %v938 = vmul.f32 %v650, 0.5
        %v939 = vmul.f32 %v651, 0.5
        %v940 = vmul.f32 %v652, 0.5
        %v941 = vmul.f32 %v653, 0.5
        %v942 = vmul.f32 %v654, 0.5
        %v943 = vmul.f32 %v655, 0.5
        %v944 = vmul.f32 %v656, 0.5
        %v945 = vmul.f32 %v657, 0.5
        %v946 = vmul.f32 %v658, 0.5
        %v947 = vmul.f32 %v659, 0.5
        %v948 = vmul.f32 %v660, 0.5
        %v949 = vmul.f32 %v661, 0.5
        %v950 = vmul.f32 %v662, 0.5
        %v951 = vmul.f32 %v663, 0.5
        %v952 = vmul.f32 %v664, 0.5
        %v953 = vmul.f32 %v665, 0.5
        %v954 = vmul.f32 %v666, 0.5
        %v955 = vmul.f32 %v667, 0.5
        %v956 = vmul.f32 %v668, 0.5
        %v957 = vmul.f32 %v669, 0.5
        %v958 = vmul.f32 %v670, 0.5
        %v959 = vmul.f32 %v671, 0.5
        %v960 = vmul.f32 %v672, 0.5
        %v961 = vmul.f32 %v673, 0.5
        %v962 = vmul.f32 %v674, 0.5
        %v963 = vmul.f32 %v675, 0.5
        %v964 = vmul.f32 %v676, 0.5
        %v965 = vmul.f32 %v677, 0.5
        %v966 = vmul.f32 %v678, 0.5
        %v967 = vmul.f32 %v679, 0.5
        %v968 = vmul.f32 %v680, 0.5
        %v969 = vmul.f32 %v681, 0.5
        %v970 = vmul.f32 %v682, 0.5
        %v971 = vmul.f32 %v683, 0.5
        %v972 = vmul.f32 %v684, 0.5
        %v973 = vmul.f32 %v685, 0.5
        %v974 = vmul.f32 %v686, 0.5
        %v975 = vmul.f32 %v687, 0.5
        %v976 = vmul.f32 %v688, 0.5
        %v977 = vmul.f32 %v689, 0.5
        %v978 = vmul.f32 %v690, 0.5
        %v979 = vmul.f32 %v691, 0.5
        %v980 = vmul.f32 %v692, 0.5
        %v981 = vmul.f32 %v693, 0.5
        %v982 = vmul.f32 %v694, 0.5
        %v983 = vmul.f32 %v695, 0.5
        %v984 = vmul.f32 %v696, 0.5
        %v985 = vmul.f32 %v697, 0.5
        %v986 = vmul.f32 %v698, 0.5
        %v987 = vmul.f32 %v699, 0.5
        %v988 = vmul.f32 %v700, 0.5
        %v989 = vmul.f32 %v701, 0.5
        %v990 = vmul.f32 %v702, 0.5
        %v991 = vmul.f32 %v703, 0.5
        %v992 = vmul.f32 %v704, 0.5
        %v993 = vmul.f32 %v705, 0.5
        %v994 = vmul.f32 %v706, 0.5
        %v995 = vmul.f32 %v707, 0.5
        %v996 = vmul.f32 %v708, 0.5
        %v997 = vmul.f32 %v709, 0.5
        %v998 = vmul.f32 %v710, 0.5
        %v999 = vmul.f32 %v711, 0.5
        %v1000 = vmul.f32 %v712, 0.5
        %v1001 = vmul.f32 %v713, 0.5
        %v1002 = vmul.f32 %v714, 0.5
        %v1003 = vmul.f32 %v715, 0.5
        %v1004 = vmul.f32 %v716, 0.5
        %v1005 = vmul.f32 %v717, 0.5
        %v1006 = vmul.f32 %v718, 0.5
        %v1007 = vmul.f32 %v719, 0.5
        %v1008 = vmul.f32 %v720, 0.5
        %v1009 = vmul.f32 %v721, 0.5
        %v1010 = vmul.f32 %v722, 0.5
        %v1011 = vmul.f32 %v723, 0.5
        %v1012 = vmul.f32 %v724, 0.5
        %v1013 = vmul.f32 %v725, 0.5
        %v1014 = vmul.f32 %v726, 0.5
        %v1015 = vmul.f32 %v727, 0.5
        %v1016 = vmul.f32 %v728, 0.5
        %v1017 = vmul.f32 %v729, 0.5
        %v1018 = vmul.f32 %v730, 0.5
        %v1019 = vmul.f32 %v731, 0.5
        %v1020 = vmul.f32 %v732, 0.5
        %v1021 = vmul.f32 %v733, 0.5
        %v1022 = vmul.f32 %v734, 0.5
        %v1023 = vmul.f32 %v735, 0.5
        %v1024 = vmul.f32 %v736, 0.5
        %v1025 = vmul.f32 %v737, 0.5
        %v1026 = vmul.f32 %v738, 0.5
        %v1027 = vmul.f32 %v739, 0.5
        %v1028 = vmul.f32 %v740, 0.5
        %v1029 = vmul.f32 %v741, 0.5
        %v1030 = vmul.f32 %v742, 0.5
        %v1031 = vmul.f32 %v743, 0.5
        %v1032 = vmul.f32 %v744, 0.5
        %v1033 = vmul.f32 %v745, 0.5
        %v1034 = vmul.f32 %v746, 0.5
        %v1035 = vmul.f32 %v747, 0.5
        %v1036 = vmul.f32 %v748, 0.5
        %v1037 = vmul.f32 %v749, 0.5
        %v1038 = vmul.f32 %v750, 0.5
        %v1039 = vmul.f32 %v751, 0.5
        %v1040 = vmul.f32 %v752, 0.5
        %v1041 = vmul.f32 %v753, 0.5
        %v1042 = vmul.f32 %v754, 0.5
        %v1043 = vmul.f32 %v755, 0.5
        %v1044 = vmul.f32 %v756, 0.5
        %v1045 = vmul.f32 %v757, 0.5
        %v1046 = vmul.f32 %v758, 0.5
        %v1047 = vmul.f32 %v759, 0.5
        %v1048 = vmul.f32 %v760, 0.5
        %v1049 = vmul.f32 %v761, 0.5
        %v1050 = vmul.f32 %v762, 0.5
        %v1051 = vmul.f32 %v763, 0.5
        %v1052 = vmul.f32 %v764, 0.5
        %v1053 = vmul.f32 %v765, 0.5
        %v1054 = vmul.f32 %v766, 0.5
        %v1055 = vmul.f32 %v767, 0.5
        %v1056 = vmul.f32 %v768, 0.5
        %v1057 = vmul.f32 %v769, 0.5
        %v1058 = vmul.f32 %v770, 0.5
        %v1059 = vmul.f32 %v771, 0.5
        %v1060 = vmul.f32 %v772, 0.5
        %v1061 = vmul.f32 %v773, 0.5
        %v1062 = vmul.f32 %v774, 0.5
        %v1063 = vmul.f32 %v775, 0.5
        %v1064 = vmul.f32 %v776, 0.5
        %v1065 = vmul.f32 %v777, 0.5
        %v1066 = vmul.f32 %v778, 0.5
        %v1067 = vmul.f32 %v779, 0.5
        %v1068 = vmul.f32 %v780, 0.5
        %v1069 = vmul.f32 %v781, 0.5
        %v1070 = vmul.f32 %v782, 0.5
        %v1071 = vmul.f32 %v783, 0.5
        %v1072 = vmul.f32 %v784, 0.5
        %v1073 = vmul.f32 %v785, 0.5
        %v1074 = vmul.f32 %v786, 0.5
        %v1075 = vmul.f32 %v787, 0.5
        %v1076 = vmul.f32 %v788, 0.5
        %v1077 = vmul.f32 %v789, 0.5
        %v1078 = vmul.f32 %v790, 0.5
        %v1079 = vmul.f32 %v791, 0.5
        %v1080 = vmul.f32 %v792, 0.5
        %v1081 = vmul.f32 %v793, 0.5
        %v1082 = vmul.f32 %v794, 0.5
        %v1083 = vmul.f32 %v795, 0.5
        %v1084 = vmul.f32 %v796, 0.5
        %v1085 = vmul.f32 %v797, 0.5
        %v1086 = vmul.f32 %v798, 0.5
        %v1087 = vmul.f32 %v799, 0.5
        %v1088 = vmul.f32 %v800, 0.5
        %v1089 = vmul.f32 %v801, 0.5
        %v1090 = vmul.f32 %v802, 0.5
        %v1091 = vmul.f32 %v803, 0.5
        %v1092 = vmul.f32 %v804, 0.5
        %v1093 = vmul.f32 %v805, 0.5
        %v1094 = vmul.f32 %v806, 0.5
        %v1095 = vmul.f32 %v807, 0.5
        %v1096 = vmul.f32 %v808, 0.5
        %v1097 = vmul.f32 %v809, 0.5
        %v1098 = vmul.f32 %v810, 0.5
        %v1099 = vmul.f32 %v811, 0.5
        %v1100 = vmul.f32 %v812, 0.5
        %v1101 = vmul.f32 %v813, 0.5
        %v1102 = vmul.f32 %v814, 0.5
        %v1103 = vmul.f32 %v815, 0.5
        %v1104 = vmul.f32 %v816, 0.5
        %v1105 = vmul.f32 %v817, 0.5
        %v1106 = vmul.f32 %v818, 0.5
        %v1107 = vmul.f32 %v819, 0.5
        %v1108 = vmul.f32 %v820, 0.5
        %v1109 = vmul.f32 %v821, 0.5
        %v1110 = vmul.f32 %v822, 0.5
        %v1111 = vmul.f32 %v823, 0.5
        %v1112 = vmul.f32 %v824, 0.5
        %v1113 = vmul.f32 %v825, 0.5
        %v1114 = vmul.f32 %v826, 0.5
        %v1115 = vmul.f32 %v827, 0.5
        %v1116 = vmul.f32 %v828, 0.5
        %v1117 = vmul.f32 %v829, 0.5
        %v1118 = vmul.f32 %v830, 0.5
        %v1119 = vmul.f32 %v831, 0.5
        %v1120 = vmul.f32 %v832, 0.5
        %v1121 = vmul.f32 %v833, 0.5
        %v1122 = vmul.f32 %v834, 0.5
        %v1123 = vmul.f32 %v835, 0.5
        %v1124 = vmul.f32 %v836, 0.5
        %v1125 = vmul.f32 %v837, 0.5
        %v1126 = vmul.f32 %v838, 0.5
        %v1127 = vmul.f32 %v839, 0.5
        %v1128 = vmul.f32 %v840, 0.5
        %v1129 = vmul.f32 %v841, 0.5
        %v1130 = vmul.f32 %v842, 0.5
        %v1131 = vmul.f32 %v843, 0.5
        %v1132 = vmul.f32 %v844, 0.5
        %v1133 = vmul.f32 %v845, 0.5
        %v1134 = vmul.f32 %v846, 0.5
        %v1135 = vmul.f32 %v847, 0.5
        %v1136 = vmul.f32 %v848, 0.5
        %v1137 = vmul.f32 %v849, 0.5
        %v1138 = vmul.f32 %v850, 0.5
        %v1139 = vmul.f32 %v851, 0.5
        %v1140 = vmul.f32 %v852, 0.5
        %v1141 = vmul.f32 %v853, 0.5
        %v1142 = vmul.f32 %v854, 0.5
        %v1143 = vmul.f32 %v855, 0.5
        %v1144 = vmul.f32 %v856, 0.5
        %v1145 = vmul.f32 %v857, 0.5
        %v1146 = vmul.f32 %v858, 0.5
        %v1147 = vmul.f32 %v859, 0.5
        %v1148 = vmul.f32 %v860, 0.5
        %v1149 = vmul.f32 %v861, 0.5
        %v1150 = vmul.f32 %v862, 0.5
        %v1151 = vmul.f32 %v863, 0.5
        %v1152 = vmul.f32 %v864, 0.5
        %v1153 = vmul.f32 %v865, 0.5
        %v1154 = vmul.f32 %v866, 0.5
        %v1155 = vmul.f32 %v867, 0.5
        %v1156 = vmul.f32 %v868, 0.5
        %v1157 = vmul.f32 %v869, 0.5
        %v1158 = vmul.f32 %v870, 0.5
        %v1159 = vmul.f32 %v871, 0.5
        %v1160 = vmul.f32 %v872, 0.5
        %v1161 = vmul.f32 %v873, 0.5
        %v1162 = vmul.f32 %v874, 0.5
        %v1163 = vmul.f32 %v875, 0.5
        %v1164 = vmul.f32 %v588, 0.70710677
        %v1165 = vmul.f32 %v589, 0.70710677
        %v1166 = vmul.f32 %v590, 0.70710677
        %v1167 = vmul.f32 %v591, 0.70710677
        %v1168 = vmul.f32 %v592, 0.70710677
        %v1169 = vmul.f32 %v593, 0.70710677
        %v1170 = vmul.f32 %v594, 0.70710677
        %v1171 = vmul.f32 %v595, 0.70710677
        %v1172 = vmul.f32 %v596, 0.70710677
        %v1173 = vmul.f32 %v597, 0.70710677
        %v1174 = vmul.f32 %v598, 0.70710677
        %v1175 = vmul.f32 %v599, 0.70710677
        %v1176 = vmul.f32 %v600, 0.70710677
        %v1177 = vmul.f32 %v601, 0.70710677
        %v1178 = vmul.f32 %v602, 0.70710677
        %v1179 = vmul.f32 %v603, 0.70710677
        %v1180 = vmul.f32 %v604, 0.70710677
        %v1181 = vmul.f32 %v605, 0.70710677
        %v1182 = vmul.f32 %v606, 0.70710677
        %v1183 = vmul.f32 %v607, 0.70710677
        %v1184 = vmul.f32 %v608, 0.70710677
        %v1185 = vmul.f32 %v609, 0.70710677
        %v1186 = vmul.f32 %v610, 0.70710677
        %v1187 = vmul.f32 %v611, 0.70710677
        %v1188 = vmul.f32 %v612, 0.70710677
        %v1189 = vmul.f32 %v613, 0.70710677
        %v1190 = vmul.f32 %v614, 0.70710677
        %v1191 = vmul.f32 %v615, 0.70710677
        %v1192 = vmul.f32 %v616, 0.70710677
        %v1193 = vmul.f32 %v617, 0.70710677
        %v1194 = vmul.f32 %v618, 0.70710677
        %v1195 = vmul.f32 %v619, 0.70710677
        %v1196 = vmul.f32 %v620, 0.70710677
        %v1197 = vmul.f32 %v621, 0.70710677
        %v1198 = vmul.f32 %v622, 0.70710677
        %v1199 = vmul.f32 %v623, 0.70710677
        %v1200 = vmul.f32 %v624, 0.70710677
        %v1201 = vmul.f32 %v625, 0.70710677
        %v1202 = vmul.f32 %v626, 0.70710677
        %v1203 = vmul.f32 %v627, 0.70710677
        %v1204 = vmul.f32 %v628, 0.70710677
        %v1205 = vmul.f32 %v629, 0.70710677
        %v1206 = vmul.f32 %v630, 0.70710677
        %v1207 = vmul.f32 %v631, 0.70710677
        %v1208 = vmul.f32 %v632, 0.70710677
        %v1209 = vmul.f32 %v633, 0.70710677
        %v1210 = vmul.f32 %v634, 0.70710677
        %v1211 = vmul.f32 %v635, 0.70710677
        %v1212 = vmul.f32 %v636, 0.70710677
        %v1213 = vmul.f32 %v637, 0.70710677
        %v1214 = vmul.f32 %v638, 0.70710677
        %v1215 = vmul.f32 %v639, 0.70710677
        %v1216 = vmul.f32 %v640, 0.70710677
        %v1217 = vmul.f32 %v641, 0.70710677
        %v1218 = vmul.f32 %v642, 0.70710677
        %v1219 = vmul.f32 %v643, 0.70710677
        %v1220 = vmul.f32 %v644, 0.70710677
        %v1221 = vmul.f32 %v645, 0.70710677
        %v1222 = vmul.f32 %v646, 0.70710677
        %v1223 = vmul.f32 %v647, 0.70710677
        %v1224 = vmul.f32 %v648, 0.70710677
        %v1225 = vmul.f32 %v649, 0.70710677
        %v1226 = vmul.f32 %v650, 0.70710677
        %v1227 = vmul.f32 %v651, 0.70710677
        %v1228 = vmul.f32 %v652, 0.70710677
        %v1229 = vmul.f32 %v653, 0.70710677
        %v1230 = vmul.f32 %v654, 0.70710677
        %v1231 = vmul.f32 %v655, 0.70710677
        %v1232 = vmul.f32 %v656, 0.70710677
        %v1233 = vmul.f32 %v657, 0.70710677
        %v1234 = vmul.f32 %v658, 0.70710677
        %v1235 = vmul.f32 %v659, 0.70710677
        %v1236 = vmul.f32 %v660, 0.70710677
        %v1237 = vmul.f32 %v661, 0.70710677
        %v1238 = vmul.f32 %v662, 0.70710677
        %v1239 = vmul.f32 %v663, 0.70710677
        %v1240 = vmul.f32 %v664, 0.70710677
        %v1241 = vmul.f32 %v665, 0.70710677
        %v1242 = vmul.f32 %v666, 0.70710677
        %v1243 = vmul.f32 %v667, 0.70710677
        %v1244 = vmul.f32 %v668, 0.70710677
        %v1245 = vmul.f32 %v669, 0.70710677
        %v1246 = vmul.f32 %v670, 0.70710677
        %v1247 = vmul.f32 %v671, 0.70710677
        %v1248 = vmul.f32 %v672, 0.70710677
        %v1249 = vmul.f32 %v673, 0.70710677
        %v1250 = vmul.f32 %v674, 0.70710677
        %v1251 = vmul.f32 %v675, 0.70710677
        %v1252 = vmul.f32 %v676, 0.70710677
        %v1253 = vmul.f32 %v677, 0.70710677
        %v1254 = vmul.f32 %v678, 0.70710677
        %v1255 = vmul.f32 %v679, 0.70710677
        %v1256 = vmul.f32 %v680, 0.70710677
        %v1257 = vmul.f32 %v681, 0.70710677
        %v1258 = vmul.f32 %v682, 0.70710677
        %v1259 = vmul.f32 %v683, 0.70710677
        %v1260 = vmul.f32 %v684, 0.70710677
        %v1261 = vmul.f32 %v685, 0.70710677
        %v1262 = vmul.f32 %v686, 0.70710677
        %v1263 = vmul.f32 %v687, 0.70710677
        %v1264 = vmul.f32 %v688, 0.70710677
        %v1265 = vmul.f32 %v689, 0.70710677
        %v1266 = vmul.f32 %v690, 0.70710677
        %v1267 = vmul.f32 %v691, 0.70710677
        %v1268 = vmul.f32 %v692, 0.70710677
        %v1269 = vmul.f32 %v693, 0.70710677
        %v1270 = vmul.f32 %v694, 0.70710677
        %v1271 = vmul.f32 %v695, 0.70710677
        %v1272 = vmul.f32 %v696, 0.70710677
        %v1273 = vmul.f32 %v697, 0.70710677
        %v1274 = vmul.f32 %v698, 0.70710677
        %v1275 = vmul.f32 %v699, 0.70710677
        %v1276 = vmul.f32 %v700, 0.70710677
        %v1277 = vmul.f32 %v701, 0.70710677
        %v1278 = vmul.f32 %v702, 0.70710677
        %v1279 = vmul.f32 %v703, 0.70710677
        %v1280 = vmul.f32 %v704, 0.70710677
        %v1281 = vmul.f32 %v705, 0.70710677
        %v1282 = vmul.f32 %v706, 0.70710677
        %v1283 = vmul.f32 %v707, 0.70710677
        %v1284 = vmul.f32 %v708, 0.70710677
        %v1285 = vmul.f32 %v709, 0.70710677
        %v1286 = vmul.f32 %v710, 0.70710677
        %v1287 = vmul.f32 %v711, 0.70710677
        %v1288 = vmul.f32 %v712, 0.70710677
        %v1289 = vmul.f32 %v713, 0.70710677
        %v1290 = vmul.f32 %v714, 0.70710677
        %v1291 = vmul.f32 %v715, 0.70710677
        %v1292 = vmul.f32 %v716, 0.70710677
        %v1293 = vmul.f32 %v717, 0.70710677
        %v1294 = vmul.f32 %v718, 0.70710677
        %v1295 = vmul.f32 %v719, 0.70710677
        %v1296 = vmul.f32 %v720, 0.70710677
        %v1297 = vmul.f32 %v721, 0.70710677
        %v1298 = vmul.f32 %v722, 0.70710677
        %v1299 = vmul.f32 %v723, 0.70710677
        %v1300 = vmul.f32 %v724, 0.70710677
        %v1301 = vmul.f32 %v725, 0.70710677
        %v1302 = vmul.f32 %v726, 0.70710677
        %v1303 = vmul.f32 %v727, 0.70710677
        %v1304 = vmul.f32 %v728, 0.70710677
        %v1305 = vmul.f32 %v729, 0.70710677
        %v1306 = vmul.f32 %v730, 0.70710677
        %v1307 = vmul.f32 %v731, 0.70710677
        %v1308 = vmul.f32 %v732, 0.70710677
        %v1309 = vmul.f32 %v733, 0.70710677
        %v1310 = vmul.f32 %v734, 0.70710677
        %v1311 = vmul.f32 %v735, 0.70710677
        %v1312 = vmul.f32 %v736, 0.70710677
        %v1313 = vmul.f32 %v737, 0.70710677
        %v1314 = vmul.f32 %v738, 0.70710677
        %v1315 = vmul.f32 %v739, 0.70710677
        %v1316 = vmul.f32 %v740, 0.70710677
        %v1317 = vmul.f32 %v741, 0.70710677
        %v1318 = vmul.f32 %v742, 0.70710677
        %v1319 = vmul.f32 %v743, 0.70710677
        %v1320 = vmul.f32 %v744, 0.70710677
        %v1321 = vmul.f32 %v745, 0.70710677
        %v1322 = vmul.f32 %v746, 0.70710677
        %v1323 = vmul.f32 %v747, 0.70710677
        %v1324 = vmul.f32 %v748, 0.70710677
        %v1325 = vmul.f32 %v749, 0.70710677
        %v1326 = vmul.f32 %v750, 0.70710677
        %v1327 = vmul.f32 %v751, 0.70710677
        %v1328 = vmul.f32 %v752, 0.70710677
        %v1329 = vmul.f32 %v753, 0.70710677
        %v1330 = vmul.f32 %v754, 0.70710677
        %v1331 = vmul.f32 %v755, 0.70710677
        %v1332 = vmul.f32 %v756, 0.70710677
        %v1333 = vmul.f32 %v757, 0.70710677
        %v1334 = vmul.f32 %v758, 0.70710677
        %v1335 = vmul.f32 %v759, 0.70710677
        %v1336 = vmul.f32 %v760, 0.70710677
        %v1337 = vmul.f32 %v761, 0.70710677
        %v1338 = vmul.f32 %v762, 0.70710677
        %v1339 = vmul.f32 %v763, 0.70710677
        %v1340 = vmul.f32 %v764, 0.70710677
        %v1341 = vmul.f32 %v765, 0.70710677
        %v1342 = vmul.f32 %v766, 0.70710677
        %v1343 = vmul.f32 %v767, 0.70710677
        %v1344 = vmul.f32 %v768, 0.70710677
        %v1345 = vmul.f32 %v769, 0.70710677
        %v1346 = vmul.f32 %v770, 0.70710677
        %v1347 = vmul.f32 %v771, 0.70710677
        %v1348 = vmul.f32 %v772, 0.70710677
        %v1349 = vmul.f32 %v773, 0.70710677
        %v1350 = vmul.f32 %v774, 0.70710677
        %v1351 = vmul.f32 %v775, 0.70710677
        %v1352 = vmul.f32 %v776, 0.70710677
        %v1353 = vmul.f32 %v777, 0.70710677
        %v1354 = vmul.f32 %v778, 0.70710677
        %v1355 = vmul.f32 %v779, 0.70710677
        %v1356 = vmul.f32 %v780, 0.70710677
        %v1357 = vmul.f32 %v781, 0.70710677
        %v1358 = vmul.f32 %v782, 0.70710677
        %v1359 = vmul.f32 %v783, 0.70710677
        %v1360 = vmul.f32 %v784, 0.70710677
        %v1361 = vmul.f32 %v785, 0.70710677
        %v1362 = vmul.f32 %v786, 0.70710677
        %v1363 = vmul.f32 %v787, 0.70710677
        %v1364 = vmul.f32 %v788, 0.70710677
        %v1365 = vmul.f32 %v789, 0.70710677
        %v1366 = vmul.f32 %v790, 0.70710677
        %v1367 = vmul.f32 %v791, 0.70710677
        %v1368 = vmul.f32 %v792, 0.70710677
        %v1369 = vmul.f32 %v793, 0.70710677
        %v1370 = vmul.f32 %v794, 0.70710677
        %v1371 = vmul.f32 %v795, 0.70710677
        %v1372 = vmul.f32 %v796, 0.70710677
        %v1373 = vmul.f32 %v797, 0.70710677
        %v1374 = vmul.f32 %v798, 0.70710677
        %v1375 = vmul.f32 %v799, 0.70710677
        %v1376 = vmul.f32 %v800, 0.70710677
        %v1377 = vmul.f32 %v801, 0.70710677
        %v1378 = vmul.f32 %v802, 0.70710677
        %v1379 = vmul.f32 %v803, 0.70710677
        %v1380 = vmul.f32 %v804, 0.70710677
        %v1381 = vmul.f32 %v805, 0.70710677
        %v1382 = vmul.f32 %v806, 0.70710677
        %v1383 = vmul.f32 %v807, 0.70710677
        %v1384 = vmul.f32 %v808, 0.70710677
        %v1385 = vmul.f32 %v809, 0.70710677
        %v1386 = vmul.f32 %v810, 0.70710677
        %v1387 = vmul.f32 %v811, 0.70710677
        %v1388 = vmul.f32 %v812, 0.70710677
        %v1389 = vmul.f32 %v813, 0.70710677
        %v1390 = vmul.f32 %v814, 0.70710677
        %v1391 = vmul.f32 %v815, 0.70710677
        %v1392 = vmul.f32 %v816, 0.70710677
        %v1393 = vmul.f32 %v817, 0.70710677
        %v1394 = vmul.f32 %v818, 0.70710677
        %v1395 = vmul.f32 %v819, 0.70710677
        %v1396 = vmul.f32 %v820, 0.70710677
        %v1397 = vmul.f32 %v821, 0.70710677
        %v1398 = vmul.f32 %v822, 0.70710677
        %v1399 = vmul.f32 %v823, 0.70710677
        %v1400 = vmul.f32 %v824, 0.70710677
        %v1401 = vmul.f32 %v825, 0.70710677
        %v1402 = vmul.f32 %v826, 0.70710677
        %v1403 = vmul.f32 %v827, 0.70710677
        %v1404 = vmul.f32 %v828, 0.70710677
        %v1405 = vmul.f32 %v829, 0.70710677
        %v1406 = vmul.f32 %v830, 0.70710677
        %v1407 = vmul.f32 %v831, 0.70710677
        %v1408 = vmul.f32 %v832, 0.70710677
        %v1409 = vmul.f32 %v833, 0.70710677
        %v1410 = vmul.f32 %v834, 0.70710677
        %v1411 = vmul.f32 %v835, 0.70710677
        %v1412 = vmul.f32 %v836, 0.70710677
        %v1413 = vmul.f32 %v837, 0.70710677
        %v1414 = vmul.f32 %v838, 0.70710677
        %v1415 = vmul.f32 %v839, 0.70710677
        %v1416 = vmul.f32 %v840, 0.70710677
        %v1417 = vmul.f32 %v841, 0.70710677
        %v1418 = vmul.f32 %v842, 0.70710677
        %v1419 = vmul.f32 %v843, 0.70710677
        %v1420 = vmul.f32 %v844, 0.70710677
        %v1421 = vmul.f32 %v845, 0.70710677
        %v1422 = vmul.f32 %v846, 0.70710677
        %v1423 = vmul.f32 %v847, 0.70710677
        %v1424 = vmul.f32 %v848, 0.70710677
        %v1425 = vmul.f32 %v849, 0.70710677
        %v1426 = vmul.f32 %v850, 0.70710677
        %v1427 = vmul.f32 %v851, 0.70710677
        %v1428 = vmul.f32 %v852, 0.70710677
        %v1429 = vmul.f32 %v853, 0.70710677
        %v1430 = vmul.f32 %v854, 0.70710677
        %v1431 = vmul.f32 %v855, 0.70710677
        %v1432 = vmul.f32 %v856, 0.70710677
        %v1433 = vmul.f32 %v857, 0.70710677
        %v1434 = vmul.f32 %v858, 0.70710677
        %v1435 = vmul.f32 %v859, 0.70710677
        %v1436 = vmul.f32 %v860, 0.70710677
        %v1437 = vmul.f32 %v861, 0.70710677
        %v1438 = vmul.f32 %v862, 0.70710677
        %v1439 = vmul.f32 %v863, 0.70710677
        %v1440 = vmul.f32 %v864, 0.70710677
        %v1441 = vmul.f32 %v865, 0.70710677
        %v1442 = vmul.f32 %v866, 0.70710677
        %v1443 = vmul.f32 %v867, 0.70710677
        %v1444 = vmul.f32 %v868, 0.70710677
        %v1445 = vmul.f32 %v869, 0.70710677
        %v1446 = vmul.f32 %v870, 0.70710677
        %v1447 = vmul.f32 %v871, 0.70710677
        %v1448 = vmul.f32 %v872, 0.70710677
        %v1449 = vmul.f32 %v873, 0.70710677
        %v1450 = vmul.f32 %v874, 0.70710677
        %v1451 = vmul.f32 %v875, 0.70710677
        %v1452 = verf.f32.pop %v1164
        %v1453 = verf.f32.pop %v1165
        %v1454 = verf.f32.pop %v1166
        %v1455 = verf.f32.pop %v1167
        %v1456 = verf.f32.pop %v1168
        %v1457 = verf.f32.pop %v1169
        %v1458 = verf.f32.pop %v1170
        %v1459 = verf.f32.pop %v1171
        %v1460 = verf.f32.pop %v1172
        %v1461 = verf.f32.pop %v1173
        %v1462 = verf.f32.pop %v1174
        %v1463 = verf.f32.pop %v1175
        %v1464 = verf.f32.pop %v1176
        %v1465 = verf.f32.pop %v1177
        %v1466 = verf.f32.pop %v1178
        %v1467 = verf.f32.pop %v1179
        %v1468 = verf.f32.pop %v1180
        %v1469 = verf.f32.pop %v1181
        %v1470 = verf.f32.pop %v1182
        %v1471 = verf.f32.pop %v1183
        %v1472 = verf.f32.pop %v1184
        %v1473 = verf.f32.pop %v1185
        %v1474 = verf.f32.pop %v1186
        %v1475 = verf.f32.pop %v1187
        %v1476 = verf.f32.pop %v1188
        %v1477 = verf.f32.pop %v1189
        %v1478 = verf.f32.pop %v1190
        %v1479 = verf.f32.pop %v1191
        %v1480 = verf.f32.pop %v1192
        %v1481 = verf.f32.pop %v1193
        %v1482 = verf.f32.pop %v1194
        %v1483 = verf.f32.pop %v1195
        %v1484 = verf.f32.pop %v1196
        %v1485 = verf.f32.pop %v1197
        %v1486 = verf.f32.pop %v1198
        %v1487 = verf.f32.pop %v1199
        %v1488 = verf.f32.pop %v1200
        %v1489 = verf.f32.pop %v1201
        %v1490 = verf.f32.pop %v1202
        %v1491 = verf.f32.pop %v1203
        %v1492 = verf.f32.pop %v1204
        %v1493 = verf.f32.pop %v1205
        %v1494 = verf.f32.pop %v1206
        %v1495 = verf.f32.pop %v1207
        %v1496 = verf.f32.pop %v1208
        %v1497 = verf.f32.pop %v1209
        %v1498 = verf.f32.pop %v1210
        %v1499 = verf.f32.pop %v1211
        %v1500 = verf.f32.pop %v1212
        %v1501 = verf.f32.pop %v1213
        %v1502 = verf.f32.pop %v1214
        %v1503 = verf.f32.pop %v1215
        %v1504 = verf.f32.pop %v1216
        %v1505 = verf.f32.pop %v1217
        %v1506 = verf.f32.pop %v1218
        %v1507 = verf.f32.pop %v1219
        %v1508 = verf.f32.pop %v1220
        %v1509 = verf.f32.pop %v1221
        %v1510 = verf.f32.pop %v1222
        %v1511 = verf.f32.pop %v1223
        %v1512 = verf.f32.pop %v1224
        %v1513 = verf.f32.pop %v1225
        %v1514 = verf.f32.pop %v1226
        %v1515 = verf.f32.pop %v1227
        %v1516 = verf.f32.pop %v1228
        %v1517 = verf.f32.pop %v1229
        %v1518 = verf.f32.pop %v1230
        %v1519 = verf.f32.pop %v1231
        %v1520 = verf.f32.pop %v1232
        %v1521 = verf.f32.pop %v1233
        %v1522 = verf.f32.pop %v1234
        %v1523 = verf.f32.pop %v1235
        %v1524 = verf.f32.pop %v1236
        %v1525 = verf.f32.pop %v1237
        %v1526 = verf.f32.pop %v1238
        %v1527 = verf.f32.pop %v1239
        %v1528 = verf.f32.pop %v1240
        %v1529 = verf.f32.pop %v1241
        %v1530 = verf.f32.pop %v1242
        %v1531 = verf.f32.pop %v1243
        %v1532 = verf.f32.pop %v1244
        %v1533 = verf.f32.pop %v1245
        %v1534 = verf.f32.pop %v1246
        %v1535 = verf.f32.pop %v1247
        %v1536 = verf.f32.pop %v1248
        %v1537 = verf.f32.pop %v1249
        %v1538 = verf.f32.pop %v1250
        %v1539 = verf.f32.pop %v1251
        %v1540 = verf.f32.pop %v1252
        %v1541 = verf.f32.pop %v1253
        %v1542 = verf.f32.pop %v1254
        %v1543 = verf.f32.pop %v1255
        %v1544 = verf.f32.pop %v1256
        %v1545 = verf.f32.pop %v1257
        %v1546 = verf.f32.pop %v1258
        %v1547 = verf.f32.pop %v1259
        %v1548 = verf.f32.pop %v1260
        %v1549 = verf.f32.pop %v1261
        %v1550 = verf.f32.pop %v1262
        %v1551 = verf.f32.pop %v1263
        %v1552 = verf.f32.pop %v1264
        %v1553 = verf.f32.pop %v1265
        %v1554 = verf.f32.pop %v1266
        %v1555 = verf.f32.pop %v1267
        %v1556 = verf.f32.pop %v1268
        %v1557 = verf.f32.pop %v1269
        %v1558 = verf.f32.pop %v1270
        %v1559 = verf.f32.pop %v1271
        %v1560 = verf.f32.pop %v1272
        %v1561 = verf.f32.pop %v1273
        %v1562 = verf.f32.pop %v1274
        %v1563 = verf.f32.pop %v1275
        %v1564 = verf.f32.pop %v1276
        %v1565 = verf.f32.pop %v1277
        %v1566 = verf.f32.pop %v1278
        %v1567 = verf.f32.pop %v1279
        %v1568 = verf.f32.pop %v1280
        %v1569 = verf.f32.pop %v1281
        %v1570 = verf.f32.pop %v1282
        %v1571 = verf.f32.pop %v1283
        %v1572 = verf.f32.pop %v1284
        %v1573 = verf.f32.pop %v1285
        %v1574 = verf.f32.pop %v1286
        %v1575 = verf.f32.pop %v1287
        %v1576 = verf.f32.pop %v1288
        %v1577 = verf.f32.pop %v1289
        %v1578 = verf.f32.pop %v1290
        %v1579 = verf.f32.pop %v1291
        %v1580 = verf.f32.pop %v1292
        %v1581 = verf.f32.pop %v1293
        %v1582 = verf.f32.pop %v1294
        %v1583 = verf.f32.pop %v1295
        %v1584 = verf.f32.pop %v1296
        %v1585 = verf.f32.pop %v1297
        %v1586 = verf.f32.pop %v1298
        %v1587 = verf.f32.pop %v1299
        %v1588 = verf.f32.pop %v1300
        %v1589 = verf.f32.pop %v1301
        %v1590 = verf.f32.pop %v1302
        %v1591 = verf.f32.pop %v1303
        %v1592 = verf.f32.pop %v1304
        %v1593 = verf.f32.pop %v1305
        %v1594 = verf.f32.pop %v1306
        %v1595 = verf.f32.pop %v1307
        %v1596 = verf.f32.pop %v1308
        %v1597 = verf.f32.pop %v1309
        %v1598 = verf.f32.pop %v1310
        %v1599 = verf.f32.pop %v1311
        %v1600 = verf.f32.pop %v1312
        %v1601 = verf.f32.pop %v1313
        %v1602 = verf.f32.pop %v1314
        %v1603 = verf.f32.pop %v1315
        %v1604 = verf.f32.pop %v1316
        %v1605 = verf.f32.pop %v1317
        %v1606 = verf.f32.pop %v1318
        %v1607 = verf.f32.pop %v1319
        %v1608 = verf.f32.pop %v1320
        %v1609 = verf.f32.pop %v1321
        %v1610 = verf.f32.pop %v1322
        %v1611 = verf.f32.pop %v1323
        %v1612 = verf.f32.pop %v1324
        %v1613 = verf.f32.pop %v1325
        %v1614 = verf.f32.pop %v1326
        %v1615 = verf.f32.pop %v1327
        %v1616 = verf.f32.pop %v1328
        %v1617 = verf.f32.pop %v1329
        %v1618 = verf.f32.pop %v1330
        %v1619 = verf.f32.pop %v1331
        %v1620 = verf.f32.pop %v1332
        %v1621 = verf.f32.pop %v1333
        %v1622 = verf.f32.pop %v1334
        %v1623 = verf.f32.pop %v1335
        %v1624 = verf.f32.pop %v1336
        %v1625 = verf.f32.pop %v1337
        %v1626 = verf.f32.pop %v1338
        %v1627 = verf.f32.pop %v1339
        %v1628 = verf.f32.pop %v1340
        %v1629 = verf.f32.pop %v1341
        %v1630 = verf.f32.pop %v1342
        %v1631 = verf.f32.pop %v1343
        %v1632 = verf.f32.pop %v1344
        %v1633 = verf.f32.pop %v1345
        %v1634 = verf.f32.pop %v1346
        %v1635 = verf.f32.pop %v1347
        %v1636 = verf.f32.pop %v1348
        %v1637 = verf.f32.pop %v1349
        %v1638 = verf.f32.pop %v1350
        %v1639 = verf.f32.pop %v1351
        %v1640 = verf.f32.pop %v1352
        %v1641 = verf.f32.pop %v1353
        %v1642 = verf.f32.pop %v1354
        %v1643 = verf.f32.pop %v1355
        %v1644 = verf.f32.pop %v1356
        %v1645 = verf.f32.pop %v1357
        %v1646 = verf.f32.pop %v1358
        %v1647 = verf.f32.pop %v1359
        %v1648 = verf.f32.pop %v1360
        %v1649 = verf.f32.pop %v1361
        %v1650 = verf.f32.pop %v1362
        %v1651 = verf.f32.pop %v1363
        %v1652 = verf.f32.pop %v1364
        %v1653 = verf.f32.pop %v1365
        %v1654 = verf.f32.pop %v1366
        %v1655 = verf.f32.pop %v1367
        %v1656 = verf.f32.pop %v1368
        %v1657 = verf.f32.pop %v1369
        %v1658 = verf.f32.pop %v1370
        %v1659 = verf.f32.pop %v1371
        %v1660 = verf.f32.pop %v1372
        %v1661 = verf.f32.pop %v1373
        %v1662 = verf.f32.pop %v1374
        %v1663 = verf.f32.pop %v1375
        %v1664 = verf.f32.pop %v1376
        %v1665 = verf.f32.pop %v1377
        %v1666 = verf.f32.pop %v1378
        %v1667 = verf.f32.pop %v1379
        %v1668 = verf.f32.pop %v1380
        %v1669 = verf.f32.pop %v1381
        %v1670 = verf.f32.pop %v1382
        %v1671 = verf.f32.pop %v1383
        %v1672 = verf.f32.pop %v1384
        %v1673 = verf.f32.pop %v1385
        %v1674 = verf.f32.pop %v1386
        %v1675 = verf.f32.pop %v1387
        %v1676 = verf.f32.pop %v1388
        %v1677 = verf.f32.pop %v1389
        %v1678 = verf.f32.pop %v1390
        %v1679 = verf.f32.pop %v1391
        %v1680 = verf.f32.pop %v1392
        %v1681 = verf.f32.pop %v1393
        %v1682 = verf.f32.pop %v1394
        %v1683 = verf.f32.pop %v1395
        %v1684 = verf.f32.pop %v1396
        %v1685 = verf.f32.pop %v1397
        %v1686 = verf.f32.pop %v1398
        %v1687 = verf.f32.pop %v1399
        %v1688 = verf.f32.pop %v1400
        %v1689 = verf.f32.pop %v1401
        %v1690 = verf.f32.pop %v1402
        %v1691 = verf.f32.pop %v1403
        %v1692 = verf.f32.pop %v1404
        %v1693 = verf.f32.pop %v1405
        %v1694 = verf.f32.pop %v1406
        %v1695 = verf.f32.pop %v1407
        %v1696 = verf.f32.pop %v1408
        %v1697 = verf.f32.pop %v1409
        %v1698 = verf.f32.pop %v1410
        %v1699 = verf.f32.pop %v1411
        %v1700 = verf.f32.pop %v1412
        %v1701 = verf.f32.pop %v1413
        %v1702 = verf.f32.pop %v1414
        %v1703 = verf.f32.pop %v1415
        %v1704 = verf.f32.pop %v1416
        %v1705 = verf.f32.pop %v1417
        %v1706 = verf.f32.pop %v1418
        %v1707 = verf.f32.pop %v1419
        %v1708 = verf.f32.pop %v1420
        %v1709 = verf.f32.pop %v1421
        %v1710 = verf.f32.pop %v1422
        %v1711 = verf.f32.pop %v1423
        %v1712 = verf.f32.pop %v1424
        %v1713 = verf.f32.pop %v1425
        %v1714 = verf.f32.pop %v1426
        %v1715 = verf.f32.pop %v1427
        %v1716 = verf.f32.pop %v1428
        %v1717 = verf.f32.pop %v1429
        %v1718 = verf.f32.pop %v1430
        %v1719 = verf.f32.pop %v1431
        %v1720 = verf.f32.pop %v1432
        %v1721 = verf.f32.pop %v1433
        %v1722 = verf.f32.pop %v1434
        %v1723 = verf.f32.pop %v1435
        %v1724 = verf.f32.pop %v1436
        %v1725 = verf.f32.pop %v1437
        %v1726 = verf.f32.pop %v1438
        %v1727 = verf.f32.pop %v1439
        %v1728 = verf.f32.pop %v1440
        %v1729 = verf.f32.pop %v1441
        %v1730 = verf.f32.pop %v1442
        %v1731 = verf.f32.pop %v1443
        %v1732 = verf.f32.pop %v1444
        %v1733 = verf.f32.pop %v1445
        %v1734 = verf.f32.pop %v1446
        %v1735 = verf.f32.pop %v1447
        %v1736 = verf.f32.pop %v1448
        %v1737 = verf.f32.pop %v1449
        %v1738 = verf.f32.pop %v1450
        %v1739 = verf.f32.pop %v1451
        %v1740 = vadd.f32 %v1452, 1.0
        %v1741 = vadd.f32 %v1453, 1.0
        %v1742 = vadd.f32 %v1454, 1.0
        %v1743 = vadd.f32 %v1455, 1.0
        %v1744 = vadd.f32 %v1456, 1.0
        %v1745 = vadd.f32 %v1457, 1.0
        %v1746 = vadd.f32 %v1458, 1.0
        %v1747 = vadd.f32 %v1459, 1.0
        %v1748 = vadd.f32 %v1460, 1.0
        %v1749 = vadd.f32 %v1461, 1.0
        %v1750 = vadd.f32 %v1462, 1.0
        %v1751 = vadd.f32 %v1463, 1.0
        %v1752 = vadd.f32 %v1464, 1.0
        %v1753 = vadd.f32 %v1465, 1.0
        %v1754 = vadd.f32 %v1466, 1.0
        %v1755 = vadd.f32 %v1467, 1.0
        %v1756 = vadd.f32 %v1468, 1.0
        %v1757 = vadd.f32 %v1469, 1.0
        %v1758 = vadd.f32 %v1470, 1.0
        %v1759 = vadd.f32 %v1471, 1.0
        %v1760 = vadd.f32 %v1472, 1.0
        %v1761 = vadd.f32 %v1473, 1.0
        %v1762 = vadd.f32 %v1474, 1.0
        %v1763 = vadd.f32 %v1475, 1.0
        %v1764 = vadd.f32 %v1476, 1.0
        %v1765 = vadd.f32 %v1477, 1.0
        %v1766 = vadd.f32 %v1478, 1.0
        %v1767 = vadd.f32 %v1479, 1.0
        %v1768 = vadd.f32 %v1480, 1.0
        %v1769 = vadd.f32 %v1481, 1.0
        %v1770 = vadd.f32 %v1482, 1.0
        %v1771 = vadd.f32 %v1483, 1.0
        %v1772 = vadd.f32 %v1484, 1.0
        %v1773 = vadd.f32 %v1485, 1.0
        %v1774 = vadd.f32 %v1486, 1.0
        %v1775 = vadd.f32 %v1487, 1.0
        %v1776 = vadd.f32 %v1488, 1.0
        %v1777 = vadd.f32 %v1489, 1.0
        %v1778 = vadd.f32 %v1490, 1.0
        %v1779 = vadd.f32 %v1491, 1.0
        %v1780 = vadd.f32 %v1492, 1.0
        %v1781 = vadd.f32 %v1493, 1.0
        %v1782 = vadd.f32 %v1494, 1.0
        %v1783 = vadd.f32 %v1495, 1.0
        %v1784 = vadd.f32 %v1496, 1.0
        %v1785 = vadd.f32 %v1497, 1.0
        %v1786 = vadd.f32 %v1498, 1.0
        %v1787 = vadd.f32 %v1499, 1.0
        %v1788 = vadd.f32 %v1500, 1.0
        %v1789 = vadd.f32 %v1501, 1.0
        %v1790 = vadd.f32 %v1502, 1.0
        %v1791 = vadd.f32 %v1503, 1.0
        %v1792 = vadd.f32 %v1504, 1.0
        %v1793 = vadd.f32 %v1505, 1.0
        %v1794 = vadd.f32 %v1506, 1.0
        %v1795 = vadd.f32 %v1507, 1.0
        %v1796 = vadd.f32 %v1508, 1.0
        %v1797 = vadd.f32 %v1509, 1.0
        %v1798 = vadd.f32 %v1510, 1.0
        %v1799 = vadd.f32 %v1511, 1.0
        %v1800 = vadd.f32 %v1512, 1.0
        %v1801 = vadd.f32 %v1513, 1.0
        %v1802 = vadd.f32 %v1514, 1.0
        %v1803 = vadd.f32 %v1515, 1.0
        %v1804 = vadd.f32 %v1516, 1.0
        %v1805 = vadd.f32 %v1517, 1.0
        %v1806 = vadd.f32 %v1518, 1.0
        %v1807 = vadd.f32 %v1519, 1.0
        %v1808 = vadd.f32 %v1520, 1.0
        %v1809 = vadd.f32 %v1521, 1.0
        %v1810 = vadd.f32 %v1522, 1.0
        %v1811 = vadd.f32 %v1523, 1.0
        %v1812 = vadd.f32 %v1524, 1.0
        %v1813 = vadd.f32 %v1525, 1.0
        %v1814 = vadd.f32 %v1526, 1.0
        %v1815 = vadd.f32 %v1527, 1.0
        %v1816 = vadd.f32 %v1528, 1.0
        %v1817 = vadd.f32 %v1529, 1.0
        %v1818 = vadd.f32 %v1530, 1.0
        %v1819 = vadd.f32 %v1531, 1.0
        %v1820 = vadd.f32 %v1532, 1.0
        %v1821 = vadd.f32 %v1533, 1.0
        %v1822 = vadd.f32 %v1534, 1.0
        %v1823 = vadd.f32 %v1535, 1.0
        %v1824 = vadd.f32 %v1536, 1.0
        %v1825 = vadd.f32 %v1537, 1.0
        %v1826 = vadd.f32 %v1538, 1.0
        %v1827 = vadd.f32 %v1539, 1.0
        %v1828 = vadd.f32 %v1540, 1.0
        %v1829 = vadd.f32 %v1541, 1.0
        %v1830 = vadd.f32 %v1542, 1.0
        %v1831 = vadd.f32 %v1543, 1.0
        %v1832 = vadd.f32 %v1544, 1.0
        %v1833 = vadd.f32 %v1545, 1.0
        %v1834 = vadd.f32 %v1546, 1.0
        %v1835 = vadd.f32 %v1547, 1.0
        %v1836 = vadd.f32 %v1548, 1.0
        %v1837 = vadd.f32 %v1549, 1.0
        %v1838 = vadd.f32 %v1550, 1.0
        %v1839 = vadd.f32 %v1551, 1.0
        %v1840 = vadd.f32 %v1552, 1.0
        %v1841 = vadd.f32 %v1553, 1.0
        %v1842 = vadd.f32 %v1554, 1.0
        %v1843 = vadd.f32 %v1555, 1.0
        %v1844 = vadd.f32 %v1556, 1.0
        %v1845 = vadd.f32 %v1557, 1.0
        %v1846 = vadd.f32 %v1558, 1.0
        %v1847 = vadd.f32 %v1559, 1.0
        %v1848 = vadd.f32 %v1560, 1.0
        %v1849 = vadd.f32 %v1561, 1.0
        %v1850 = vadd.f32 %v1562, 1.0
        %v1851 = vadd.f32 %v1563, 1.0
        %v1852 = vadd.f32 %v1564, 1.0
        %v1853 = vadd.f32 %v1565, 1.0
        %v1854 = vadd.f32 %v1566, 1.0
        %v1855 = vadd.f32 %v1567, 1.0
        %v1856 = vadd.f32 %v1568, 1.0
        %v1857 = vadd.f32 %v1569, 1.0
        %v1858 = vadd.f32 %v1570, 1.0
        %v1859 = vadd.f32 %v1571, 1.0
        %v1860 = vadd.f32 %v1572, 1.0
        %v1861 = vadd.f32 %v1573, 1.0
        %v1862 = vadd.f32 %v1574, 1.0
        %v1863 = vadd.f32 %v1575, 1.0
        %v1864 = vadd.f32 %v1576, 1.0
        %v1865 = vadd.f32 %v1577, 1.0
        %v1866 = vadd.f32 %v1578, 1.0
        %v1867 = vadd.f32 %v1579, 1.0
        %v1868 = vadd.f32 %v1580, 1.0
        %v1869 = vadd.f32 %v1581, 1.0
        %v1870 = vadd.f32 %v1582, 1.0
        %v1871 = vadd.f32 %v1583, 1.0
        %v1872 = vadd.f32 %v1584, 1.0
        %v1873 = vadd.f32 %v1585, 1.0
        %v1874 = vadd.f32 %v1586, 1.0
        %v1875 = vadd.f32 %v1587, 1.0
        %v1876 = vadd.f32 %v1588, 1.0
        %v1877 = vadd.f32 %v1589, 1.0
        %v1878 = vadd.f32 %v1590, 1.0
        %v1879 = vadd.f32 %v1591, 1.0
        %v1880 = vadd.f32 %v1592, 1.0
        %v1881 = vadd.f32 %v1593, 1.0
        %v1882 = vadd.f32 %v1594, 1.0
        %v1883 = vadd.f32 %v1595, 1.0
        %v1884 = vadd.f32 %v1596, 1.0
        %v1885 = vadd.f32 %v1597, 1.0
        %v1886 = vadd.f32 %v1598, 1.0
        %v1887 = vadd.f32 %v1599, 1.0
        %v1888 = vadd.f32 %v1600, 1.0
        %v1889 = vadd.f32 %v1601, 1.0
        %v1890 = vadd.f32 %v1602, 1.0
        %v1891 = vadd.f32 %v1603, 1.0
        %v1892 = vadd.f32 %v1604, 1.0
        %v1893 = vadd.f32 %v1605, 1.0
        %v1894 = vadd.f32 %v1606, 1.0
        %v1895 = vadd.f32 %v1607, 1.0
        %v1896 = vadd.f32 %v1608, 1.0
        %v1897 = vadd.f32 %v1609, 1.0
        %v1898 = vadd.f32 %v1610, 1.0
        %v1899 = vadd.f32 %v1611, 1.0
        %v1900 = vadd.f32 %v1612, 1.0
        %v1901 = vadd.f32 %v1613, 1.0
        %v1902 = vadd.f32 %v1614, 1.0
        %v1903 = vadd.f32 %v1615, 1.0
        %v1904 = vadd.f32 %v1616, 1.0
        %v1905 = vadd.f32 %v1617, 1.0
        %v1906 = vadd.f32 %v1618, 1.0
        %v1907 = vadd.f32 %v1619, 1.0
        %v1908 = vadd.f32 %v1620, 1.0
        %v1909 = vadd.f32 %v1621, 1.0
        %v1910 = vadd.f32 %v1622, 1.0
        %v1911 = vadd.f32 %v1623, 1.0
        %v1912 = vadd.f32 %v1624, 1.0
        %v1913 = vadd.f32 %v1625, 1.0
        %v1914 = vadd.f32 %v1626, 1.0
        %v1915 = vadd.f32 %v1627, 1.0
        %v1916 = vadd.f32 %v1628, 1.0
        %v1917 = vadd.f32 %v1629, 1.0
        %v1918 = vadd.f32 %v1630, 1.0
        %v1919 = vadd.f32 %v1631, 1.0
        %v1920 = vadd.f32 %v1632, 1.0
        %v1921 = vadd.f32 %v1633, 1.0
        %v1922 = vadd.f32 %v1634, 1.0
        %v1923 = vadd.f32 %v1635, 1.0
        %v1924 = vadd.f32 %v1636, 1.0
        %v1925 = vadd.f32 %v1637, 1.0
        %v1926 = vadd.f32 %v1638, 1.0
        %v1927 = vadd.f32 %v1639, 1.0
        %v1928 = vadd.f32 %v1640, 1.0
        %v1929 = vadd.f32 %v1641, 1.0
        %v1930 = vadd.f32 %v1642, 1.0
        %v1931 = vadd.f32 %v1643, 1.0
        %v1932 = vadd.f32 %v1644, 1.0
        %v1933 = vadd.f32 %v1645, 1.0
        %v1934 = vadd.f32 %v1646, 1.0
        %v1935 = vadd.f32 %v1647, 1.0
        %v1936 = vadd.f32 %v1648, 1.0
        %v1937 = vadd.f32 %v1649, 1.0
        %v1938 = vadd.f32 %v1650, 1.0
        %v1939 = vadd.f32 %v1651, 1.0
        %v1940 = vadd.f32 %v1652, 1.0
        %v1941 = vadd.f32 %v1653, 1.0
        %v1942 = vadd.f32 %v1654, 1.0
        %v1943 = vadd.f32 %v1655, 1.0
        %v1944 = vadd.f32 %v1656, 1.0
        %v1945 = vadd.f32 %v1657, 1.0
        %v1946 = vadd.f32 %v1658, 1.0
        %v1947 = vadd.f32 %v1659, 1.0
        %v1948 = vadd.f32 %v1660, 1.0
        %v1949 = vadd.f32 %v1661, 1.0
        %v1950 = vadd.f32 %v1662, 1.0
        %v1951 = vadd.f32 %v1663, 1.0
        %v1952 = vadd.f32 %v1664, 1.0
        %v1953 = vadd.f32 %v1665, 1.0
        %v1954 = vadd.f32 %v1666, 1.0
        %v1955 = vadd.f32 %v1667, 1.0
        %v1956 = vadd.f32 %v1668, 1.0
        %v1957 = vadd.f32 %v1669, 1.0
        %v1958 = vadd.f32 %v1670, 1.0
        %v1959 = vadd.f32 %v1671, 1.0
        %v1960 = vadd.f32 %v1672, 1.0
        %v1961 = vadd.f32 %v1673, 1.0
        %v1962 = vadd.f32 %v1674, 1.0
        %v1963 = vadd.f32 %v1675, 1.0
        %v1964 = vadd.f32 %v1676, 1.0
        %v1965 = vadd.f32 %v1677, 1.0
        %v1966 = vadd.f32 %v1678, 1.0
        %v1967 = vadd.f32 %v1679, 1.0
        %v1968 = vadd.f32 %v1680, 1.0
        %v1969 = vadd.f32 %v1681, 1.0
        %v1970 = vadd.f32 %v1682, 1.0
        %v1971 = vadd.f32 %v1683, 1.0
        %v1972 = vadd.f32 %v1684, 1.0
        %v1973 = vadd.f32 %v1685, 1.0
        %v1974 = vadd.f32 %v1686, 1.0
        %v1975 = vadd.f32 %v1687, 1.0
        %v1976 = vadd.f32 %v1688, 1.0
        %v1977 = vadd.f32 %v1689, 1.0
        %v1978 = vadd.f32 %v1690, 1.0
        %v1979 = vadd.f32 %v1691, 1.0
        %v1980 = vadd.f32 %v1692, 1.0
        %v1981 = vadd.f32 %v1693, 1.0
        %v1982 = vadd.f32 %v1694, 1.0
        %v1983 = vadd.f32 %v1695, 1.0
        %v1984 = vadd.f32 %v1696, 1.0
        %v1985 = vadd.f32 %v1697, 1.0
        %v1986 = vadd.f32 %v1698, 1.0
        %v1987 = vadd.f32 %v1699, 1.0
        %v1988 = vadd.f32 %v1700, 1.0
        %v1989 = vadd.f32 %v1701, 1.0
        %v1990 = vadd.f32 %v1702, 1.0
        %v1991 = vadd.f32 %v1703, 1.0
        %v1992 = vadd.f32 %v1704, 1.0
        %v1993 = vadd.f32 %v1705, 1.0
        %v1994 = vadd.f32 %v1706, 1.0
        %v1995 = vadd.f32 %v1707, 1.0
        %v1996 = vadd.f32 %v1708, 1.0
        %v1997 = vadd.f32 %v1709, 1.0
        %v1998 = vadd.f32 %v1710, 1.0
        %v1999 = vadd.f32 %v1711, 1.0
        %v2000 = vadd.f32 %v1712, 1.0
        %v2001 = vadd.f32 %v1713, 1.0
        %v2002 = vadd.f32 %v1714, 1.0
        %v2003 = vadd.f32 %v1715, 1.0
        %v2004 = vadd.f32 %v1716, 1.0
        %v2005 = vadd.f32 %v1717, 1.0
        %v2006 = vadd.f32 %v1718, 1.0
        %v2007 = vadd.f32 %v1719, 1.0
        %v2008 = vadd.f32 %v1720, 1.0
        %v2009 = vadd.f32 %v1721, 1.0
        %v2010 = vadd.f32 %v1722, 1.0
        %v2011 = vadd.f32 %v1723, 1.0
        %v2012 = vadd.f32 %v1724, 1.0
        %v2013 = vadd.f32 %v1725, 1.0
        %v2014 = vadd.f32 %v1726, 1.0
        %v2015 = vadd.f32 %v1727, 1.0
        %v2016 = vadd.f32 %v1728, 1.0
        %v2017 = vadd.f32 %v1729, 1.0
        %v2018 = vadd.f32 %v1730, 1.0
        %v2019 = vadd.f32 %v1731, 1.0
        %v2020 = vadd.f32 %v1732, 1.0
        %v2021 = vadd.f32 %v1733, 1.0
        %v2022 = vadd.f32 %v1734, 1.0
        %v2023 = vadd.f32 %v1735, 1.0
        %v2024 = vadd.f32 %v1736, 1.0
        %v2025 = vadd.f32 %v1737, 1.0
        %v2026 = vadd.f32 %v1738, 1.0
        %v2027 = vadd.f32 %v1739, 1.0
        %v2028 = vmul.f32 %v876, %v1740
        %v2029 = vmul.f32 %v877, %v1741
        %v2030 = vmul.f32 %v878, %v1742
        %v2031 = vmul.f32 %v879, %v1743
        %v2032 = vmul.f32 %v880, %v1744
        %v2033 = vmul.f32 %v881, %v1745
        %v2034 = vmul.f32 %v882, %v1746
        %v2035 = vmul.f32 %v883, %v1747
        %v2036 = vmul.f32 %v884, %v1748
        %v2037 = vmul.f32 %v885, %v1749
        %v2038 = vmul.f32 %v886, %v1750
        %v2039 = vmul.f32 %v887, %v1751
        %v2040 = vmul.f32 %v888, %v1752
        %v2041 = vmul.f32 %v889, %v1753
        %v2042 = vmul.f32 %v890, %v1754
        %v2043 = vmul.f32 %v891, %v1755
        %v2044 = vmul.f32 %v892, %v1756
        %v2045 = vmul.f32 %v893, %v1757
        %v2046 = vmul.f32 %v894, %v1758
        %v2047 = vmul.f32 %v895, %v1759
        %v2048 = vmul.f32 %v896, %v1760
        %v2049 = vmul.f32 %v897, %v1761
        %v2050 = vmul.f32 %v898, %v1762
        %v2051 = vmul.f32 %v899, %v1763
        %v2052 = vmul.f32 %v900, %v1764
        %v2053 = vmul.f32 %v901, %v1765
        %v2054 = vmul.f32 %v902, %v1766
        %v2055 = vmul.f32 %v903, %v1767
        %v2056 = vmul.f32 %v904, %v1768
        %v2057 = vmul.f32 %v905, %v1769
        %v2058 = vmul.f32 %v906, %v1770
        %v2059 = vmul.f32 %v907, %v1771
        %v2060 = vmul.f32 %v908, %v1772
        %v2061 = vmul.f32 %v909, %v1773
        %v2062 = vmul.f32 %v910, %v1774
        %v2063 = vmul.f32 %v911, %v1775
        %v2064 = vmul.f32 %v912, %v1776
        %v2065 = vmul.f32 %v913, %v1777
        %v2066 = vmul.f32 %v914, %v1778
        %v2067 = vmul.f32 %v915, %v1779
        %v2068 = vmul.f32 %v916, %v1780
        %v2069 = vmul.f32 %v917, %v1781
        %v2070 = vmul.f32 %v918, %v1782
        %v2071 = vmul.f32 %v919, %v1783
        %v2072 = vmul.f32 %v920, %v1784
        %v2073 = vmul.f32 %v921, %v1785
        %v2074 = vmul.f32 %v922, %v1786
        %v2075 = vmul.f32 %v923, %v1787
        %v2076 = vmul.f32 %v924, %v1788
        %v2077 = vmul.f32 %v925, %v1789
        %v2078 = vmul.f32 %v926, %v1790
        %v2079 = vmul.f32 %v927, %v1791
        %v2080 = vmul.f32 %v928, %v1792
        %v2081 = vmul.f32 %v929, %v1793
        %v2082 = vmul.f32 %v930, %v1794
        %v2083 = vmul.f32 %v931, %v1795
        %v2084 = vmul.f32 %v932, %v1796
        %v2085 = vmul.f32 %v933, %v1797
        %v2086 = vmul.f32 %v934, %v1798
        %v2087 = vmul.f32 %v935, %v1799
        %v2088 = vmul.f32 %v936, %v1800
        %v2089 = vmul.f32 %v937, %v1801
        %v2090 = vmul.f32 %v938, %v1802
        %v2091 = vmul.f32 %v939, %v1803
        %v2092 = vmul.f32 %v940, %v1804
        %v2093 = vmul.f32 %v941, %v1805
        %v2094 = vmul.f32 %v942, %v1806
        %v2095 = vmul.f32 %v943, %v1807
        %v2096 = vmul.f32 %v944, %v1808
        %v2097 = vmul.f32 %v945, %v1809
        %v2098 = vmul.f32 %v946, %v1810
        %v2099 = vmul.f32 %v947, %v1811
        %v2100 = vmul.f32 %v948, %v1812
        %v2101 = vmul.f32 %v949, %v1813
        %v2102 = vmul.f32 %v950, %v1814
        %v2103 = vmul.f32 %v951, %v1815
        %v2104 = vmul.f32 %v952, %v1816
        %v2105 = vmul.f32 %v953, %v1817
        %v2106 = vmul.f32 %v954, %v1818
        %v2107 = vmul.f32 %v955, %v1819
        %v2108 = vmul.f32 %v956, %v1820
        %v2109 = vmul.f32 %v957, %v1821
        %v2110 = vmul.f32 %v958, %v1822
        %v2111 = vmul.f32 %v959, %v1823
        %v2112 = vmul.f32 %v960, %v1824
        %v2113 = vmul.f32 %v961, %v1825
        %v2114 = vmul.f32 %v962, %v1826
        %v2115 = vmul.f32 %v963, %v1827
        %v2116 = vmul.f32 %v964, %v1828
        %v2117 = vmul.f32 %v965, %v1829
        %v2118 = vmul.f32 %v966, %v1830
        %v2119 = vmul.f32 %v967, %v1831
        %v2120 = vmul.f32 %v968, %v1832
        %v2121 = vmul.f32 %v969, %v1833
        %v2122 = vmul.f32 %v970, %v1834
        %v2123 = vmul.f32 %v971, %v1835
        %v2124 = vmul.f32 %v972, %v1836
        %v2125 = vmul.f32 %v973, %v1837
        %v2126 = vmul.f32 %v974, %v1838
        %v2127 = vmul.f32 %v975, %v1839
        %v2128 = vmul.f32 %v976, %v1840
        %v2129 = vmul.f32 %v977, %v1841
        %v2130 = vmul.f32 %v978, %v1842
        %v2131 = vmul.f32 %v979, %v1843
        %v2132 = vmul.f32 %v980, %v1844
        %v2133 = vmul.f32 %v981, %v1845
        %v2134 = vmul.f32 %v982, %v1846
        %v2135 = vmul.f32 %v983, %v1847
        %v2136 = vmul.f32 %v984, %v1848
        %v2137 = vmul.f32 %v985, %v1849
        %v2138 = vmul.f32 %v986, %v1850
        %v2139 = vmul.f32 %v987, %v1851
        %v2140 = vmul.f32 %v988, %v1852
        %v2141 = vmul.f32 %v989, %v1853
        %v2142 = vmul.f32 %v990, %v1854
        %v2143 = vmul.f32 %v991, %v1855
        %v2144 = vmul.f32 %v992, %v1856
        %v2145 = vmul.f32 %v993, %v1857
        %v2146 = vmul.f32 %v994, %v1858
        %v2147 = vmul.f32 %v995, %v1859
        %v2148 = vmul.f32 %v996, %v1860
        %v2149 = vmul.f32 %v997, %v1861
        %v2150 = vmul.f32 %v998, %v1862
        %v2151 = vmul.f32 %v999, %v1863
        %v2152 = vmul.f32 %v1000, %v1864
        %v2153 = vmul.f32 %v1001, %v1865
        %v2154 = vmul.f32 %v1002, %v1866
        %v2155 = vmul.f32 %v1003, %v1867
        %v2156 = vmul.f32 %v1004, %v1868
        %v2157 = vmul.f32 %v1005, %v1869
        %v2158 = vmul.f32 %v1006, %v1870
        %v2159 = vmul.f32 %v1007, %v1871
        %v2160 = vmul.f32 %v1008, %v1872
        %v2161 = vmul.f32 %v1009, %v1873
        %v2162 = vmul.f32 %v1010, %v1874
        %v2163 = vmul.f32 %v1011, %v1875
        %v2164 = vmul.f32 %v1012, %v1876
        %v2165 = vmul.f32 %v1013, %v1877
        %v2166 = vmul.f32 %v1014, %v1878
        %v2167 = vmul.f32 %v1015, %v1879
        %v2168 = vmul.f32 %v1016, %v1880
        %v2169 = vmul.f32 %v1017, %v1881
        %v2170 = vmul.f32 %v1018, %v1882
        %v2171 = vmul.f32 %v1019, %v1883
        %v2172 = vmul.f32 %v1020, %v1884
        %v2173 = vmul.f32 %v1021, %v1885
        %v2174 = vmul.f32 %v1022, %v1886
        %v2175 = vmul.f32 %v1023, %v1887
        %v2176 = vmul.f32 %v1024, %v1888
        %v2177 = vmul.f32 %v1025, %v1889
        %v2178 = vmul.f32 %v1026, %v1890
        %v2179 = vmul.f32 %v1027, %v1891
        %v2180 = vmul.f32 %v1028, %v1892
        %v2181 = vmul.f32 %v1029, %v1893
        %v2182 = vmul.f32 %v1030, %v1894
        %v2183 = vmul.f32 %v1031, %v1895
        %v2184 = vmul.f32 %v1032, %v1896
        %v2185 = vmul.f32 %v1033, %v1897
        %v2186 = vmul.f32 %v1034, %v1898
        %v2187 = vmul.f32 %v1035, %v1899
        %v2188 = vmul.f32 %v1036, %v1900
        %v2189 = vmul.f32 %v1037, %v1901
        %v2190 = vmul.f32 %v1038, %v1902
        %v2191 = vmul.f32 %v1039, %v1903
        %v2192 = vmul.f32 %v1040, %v1904
        %v2193 = vmul.f32 %v1041, %v1905
        %v2194 = vmul.f32 %v1042, %v1906
        %v2195 = vmul.f32 %v1043, %v1907
        %v2196 = vmul.f32 %v1044, %v1908
        %v2197 = vmul.f32 %v1045, %v1909
        %v2198 = vmul.f32 %v1046, %v1910
        %v2199 = vmul.f32 %v1047, %v1911
        %v2200 = vmul.f32 %v1048, %v1912
        %v2201 = vmul.f32 %v1049, %v1913
        %v2202 = vmul.f32 %v1050, %v1914
        %v2203 = vmul.f32 %v1051, %v1915
        %v2204 = vmul.f32 %v1052, %v1916
        %v2205 = vmul.f32 %v1053, %v1917
        %v2206 = vmul.f32 %v1054, %v1918
        %v2207 = vmul.f32 %v1055, %v1919
        %v2208 = vmul.f32 %v1056, %v1920
        %v2209 = vmul.f32 %v1057, %v1921
        %v2210 = vmul.f32 %v1058, %v1922
        %v2211 = vmul.f32 %v1059, %v1923
        %v2212 = vmul.f32 %v1060, %v1924
        %v2213 = vmul.f32 %v1061, %v1925
        %v2214 = vmul.f32 %v1062, %v1926
        %v2215 = vmul.f32 %v1063, %v1927
        %v2216 = vmul.f32 %v1064, %v1928
        %v2217 = vmul.f32 %v1065, %v1929
        %v2218 = vmul.f32 %v1066, %v1930
        %v2219 = vmul.f32 %v1067, %v1931
        %v2220 = vmul.f32 %v1068, %v1932
        %v2221 = vmul.f32 %v1069, %v1933
        %v2222 = vmul.f32 %v1070, %v1934
        %v2223 = vmul.f32 %v1071, %v1935
        %v2224 = vmul.f32 %v1072, %v1936
        %v2225 = vmul.f32 %v1073, %v1937
        %v2226 = vmul.f32 %v1074, %v1938
        %v2227 = vmul.f32 %v1075, %v1939
        %v2228 = vmul.f32 %v1076, %v1940
        %v2229 = vmul.f32 %v1077, %v1941
        %v2230 = vmul.f32 %v1078, %v1942
        %v2231 = vmul.f32 %v1079, %v1943
        %v2232 = vmul.f32 %v1080, %v1944
        %v2233 = vmul.f32 %v1081, %v1945
        %v2234 = vmul.f32 %v1082, %v1946
        %v2235 = vmul.f32 %v1083, %v1947
        %v2236 = vmul.f32 %v1084, %v1948
        %v2237 = vmul.f32 %v1085, %v1949
        %v2238 = vmul.f32 %v1086, %v1950
        %v2239 = vmul.f32 %v1087, %v1951
        %v2240 = vmul.f32 %v1088, %v1952
        %v2241 = vmul.f32 %v1089, %v1953
        %v2242 = vmul.f32 %v1090, %v1954
        %v2243 = vmul.f32 %v1091, %v1955
        %v2244 = vmul.f32 %v1092, %v1956
        %v2245 = vmul.f32 %v1093, %v1957
        %v2246 = vmul.f32 %v1094, %v1958
        %v2247 = vmul.f32 %v1095, %v1959
        %v2248 = vmul.f32 %v1096, %v1960
        %v2249 = vmul.f32 %v1097, %v1961
        %v2250 = vmul.f32 %v1098, %v1962
        %v2251 = vmul.f32 %v1099, %v1963
        %v2252 = vmul.f32 %v1100, %v1964
        %v2253 = vmul.f32 %v1101, %v1965
        %v2254 = vmul.f32 %v1102, %v1966
        %v2255 = vmul.f32 %v1103, %v1967
        %v2256 = vmul.f32 %v1104, %v1968
        %v2257 = vmul.f32 %v1105, %v1969
        %v2258 = vmul.f32 %v1106, %v1970
        %v2259 = vmul.f32 %v1107, %v1971
        %v2260 = vmul.f32 %v1108, %v1972
        %v2261 = vmul.f32 %v1109, %v1973
        %v2262 = vmul.f32 %v1110, %v1974
        %v2263 = vmul.f32 %v1111, %v1975
        %v2264 = vmul.f32 %v1112, %v1976
        %v2265 = vmul.f32 %v1113, %v1977
        %v2266 = vmul.f32 %v1114, %v1978
        %v2267 = vmul.f32 %v1115, %v1979
        %v2268 = vmul.f32 %v1116, %v1980
        %v2269 = vmul.f32 %v1117, %v1981
        %v2270 = vmul.f32 %v1118, %v1982
        %v2271 = vmul.f32 %v1119, %v1983
        %v2272 = vmul.f32 %v1120, %v1984
        %v2273 = vmul.f32 %v1121, %v1985
        %v2274 = vmul.f32 %v1122, %v1986
        %v2275 = vmul.f32 %v1123, %v1987
        %v2276 = vmul.f32 %v1124, %v1988
        %v2277 = vmul.f32 %v1125, %v1989
        %v2278 = vmul.f32 %v1126, %v1990
        %v2279 = vmul.f32 %v1127, %v1991
        %v2280 = vmul.f32 %v1128, %v1992
        %v2281 = vmul.f32 %v1129, %v1993
        %v2282 = vmul.f32 %v1130, %v1994
        %v2283 = vmul.f32 %v1131, %v1995
        %v2284 = vmul.f32 %v1132, %v1996
        %v2285 = vmul.f32 %v1133, %v1997
        %v2286 = vmul.f32 %v1134, %v1998
        %v2287 = vmul.f32 %v1135, %v1999
        %v2288 = vmul.f32 %v1136, %v2000
        %v2289 = vmul.f32 %v1137, %v2001
        %v2290 = vmul.f32 %v1138, %v2002
        %v2291 = vmul.f32 %v1139, %v2003
        %v2292 = vmul.f32 %v1140, %v2004
        %v2293 = vmul.f32 %v1141, %v2005
        %v2294 = vmul.f32 %v1142, %v2006
        %v2295 = vmul.f32 %v1143, %v2007
        %v2296 = vmul.f32 %v1144, %v2008
        %v2297 = vmul.f32 %v1145, %v2009
        %v2298 = vmul.f32 %v1146, %v2010
        %v2299 = vmul.f32 %v1147, %v2011
        %v2300 = vmul.f32 %v1148, %v2012
        %v2301 = vmul.f32 %v1149, %v2013
        %v2302 = vmul.f32 %v1150, %v2014
        %v2303 = vmul.f32 %v1151, %v2015
        %v2304 = vmul.f32 %v1152, %v2016
        %v2305 = vmul.f32 %v1153, %v2017
        %v2306 = vmul.f32 %v1154, %v2018
        %v2307 = vmul.f32 %v1155, %v2019
        %v2308 = vmul.f32 %v1156, %v2020
        %v2309 = vmul.f32 %v1157, %v2021
        %v2310 = vmul.f32 %v1158, %v2022
        %v2311 = vmul.f32 %v1159, %v2023
        %v2312 = vmul.f32 %v1160, %v2024
        %v2313 = vmul.f32 %v1161, %v2025
        %v2314 = vmul.f32 %v1162, %v2026
        %v2315 = vmul.f32 %v1163, %v2027
        %v2316 = vpack.c.bf16 %v2034, %v2028
        %v2317 = vpack.c.bf16 %v2035, %v2029
        %v2318 = vpack.c.bf16 %v2036, %v2030
        %v2319 = vpack.c.bf16 %v2037, %v2031
        %v2320 = vpack.c.bf16 %v2038, %v2032
        %v2321 = vpack.c.bf16 %v2039, %v2033
        %v2322 = vpack.c.bf16 %v2046, %v2040
        %v2323 = vpack.c.bf16 %v2047, %v2041
        %v2324 = vpack.c.bf16 %v2048, %v2042
        %v2325 = vpack.c.bf16 %v2049, %v2043
        %v2326 = vpack.c.bf16 %v2050, %v2044
        %v2327 = vpack.c.bf16 %v2051, %v2045
        %v2328 = vpack.c.bf16 %v2058, %v2052
        %v2329 = vpack.c.bf16 %v2059, %v2053
        %v2330 = vpack.c.bf16 %v2060, %v2054
        %v2331 = vpack.c.bf16 %v2061, %v2055
        %v2332 = vpack.c.bf16 %v2062, %v2056
        %v2333 = vpack.c.bf16 %v2063, %v2057
        %v2334 = vpack.c.bf16 %v2070, %v2064
        %v2335 = vpack.c.bf16 %v2071, %v2065
        %v2336 = vpack.c.bf16 %v2072, %v2066
        %v2337 = vpack.c.bf16 %v2073, %v2067
        %v2338 = vpack.c.bf16 %v2074, %v2068
        %v2339 = vpack.c.bf16 %v2075, %v2069
        %v2340 = vpack.c.bf16 %v2082, %v2076
        %v2341 = vpack.c.bf16 %v2083, %v2077
        %v2342 = vpack.c.bf16 %v2084, %v2078
        %v2343 = vpack.c.bf16 %v2085, %v2079
        %v2344 = vpack.c.bf16 %v2086, %v2080
        %v2345 = vpack.c.bf16 %v2087, %v2081
        %v2346 = vpack.c.bf16 %v2094, %v2088
        %v2347 = vpack.c.bf16 %v2095, %v2089
        %v2348 = vpack.c.bf16 %v2096, %v2090
        %v2349 = vpack.c.bf16 %v2097, %v2091
        %v2350 = vpack.c.bf16 %v2098, %v2092
        %v2351 = vpack.c.bf16 %v2099, %v2093
        %v2352 = vpack.c.bf16 %v2106, %v2100
        %v2353 = vpack.c.bf16 %v2107, %v2101
        %v2354 = vpack.c.bf16 %v2108, %v2102
        %v2355 = vpack.c.bf16 %v2109, %v2103
        %v2356 = vpack.c.bf16 %v2110, %v2104
        %v2357 = vpack.c.bf16 %v2111, %v2105
        %v2358 = vpack.c.bf16 %v2118, %v2112
        %v2359 = vpack.c.bf16 %v2119, %v2113
        %v2360 = vpack.c.bf16 %v2120, %v2114
        %v2361 = vpack.c.bf16 %v2121, %v2115
        %v2362 = vpack.c.bf16 %v2122, %v2116
        %v2363 = vpack.c.bf16 %v2123, %v2117
        %v2364 = vpack.c.bf16 %v2130, %v2124
        %v2365 = vpack.c.bf16 %v2131, %v2125
        %v2366 = vpack.c.bf16 %v2132, %v2126
        %v2367 = vpack.c.bf16 %v2133, %v2127
        %v2368 = vpack.c.bf16 %v2134, %v2128
        %v2369 = vpack.c.bf16 %v2135, %v2129
        %v2370 = vpack.c.bf16 %v2142, %v2136
        %v2371 = vpack.c.bf16 %v2143, %v2137
        %v2372 = vpack.c.bf16 %v2144, %v2138
        %v2373 = vpack.c.bf16 %v2145, %v2139
        %v2374 = vpack.c.bf16 %v2146, %v2140
        %v2375 = vpack.c.bf16 %v2147, %v2141
        %v2376 = vpack.c.bf16 %v2154, %v2148
        %v2377 = vpack.c.bf16 %v2155, %v2149
        %v2378 = vpack.c.bf16 %v2156, %v2150
        %v2379 = vpack.c.bf16 %v2157, %v2151
        %v2380 = vpack.c.bf16 %v2158, %v2152
        %v2381 = vpack.c.bf16 %v2159, %v2153
        %v2382 = vpack.c.bf16 %v2166, %v2160
        %v2383 = vpack.c.bf16 %v2167, %v2161
        %v2384 = vpack.c.bf16 %v2168, %v2162
        %v2385 = vpack.c.bf16 %v2169, %v2163
        %v2386 = vpack.c.bf16 %v2170, %v2164
        %v2387 = vpack.c.bf16 %v2171, %v2165
        %v2388 = vpack.c.bf16 %v2178, %v2172
        %v2389 = vpack.c.bf16 %v2179, %v2173
        %v2390 = vpack.c.bf16 %v2180, %v2174
        %v2391 = vpack.c.bf16 %v2181, %v2175
        %v2392 = vpack.c.bf16 %v2182, %v2176
        %v2393 = vpack.c.bf16 %v2183, %v2177
        %v2394 = vpack.c.bf16 %v2190, %v2184
        %v2395 = vpack.c.bf16 %v2191, %v2185
        %v2396 = vpack.c.bf16 %v2192, %v2186
        %v2397 = vpack.c.bf16 %v2193, %v2187
        %v2398 = vpack.c.bf16 %v2194, %v2188
        %v2399 = vpack.c.bf16 %v2195, %v2189
        %v2400 = vpack.c.bf16 %v2202, %v2196
        %v2401 = vpack.c.bf16 %v2203, %v2197
        %v2402 = vpack.c.bf16 %v2204, %v2198
        %v2403 = vpack.c.bf16 %v2205, %v2199
        %v2404 = vpack.c.bf16 %v2206, %v2200
        %v2405 = vpack.c.bf16 %v2207, %v2201
        %v2406 = vpack.c.bf16 %v2214, %v2208
        %v2407 = vpack.c.bf16 %v2215, %v2209
        %v2408 = vpack.c.bf16 %v2216, %v2210
        %v2409 = vpack.c.bf16 %v2217, %v2211
        %v2410 = vpack.c.bf16 %v2218, %v2212
        %v2411 = vpack.c.bf16 %v2219, %v2213
        %v2412 = vpack.c.bf16 %v2226, %v2220
        %v2413 = vpack.c.bf16 %v2227, %v2221
        %v2414 = vpack.c.bf16 %v2228, %v2222
        %v2415 = vpack.c.bf16 %v2229, %v2223
        %v2416 = vpack.c.bf16 %v2230, %v2224
        %v2417 = vpack.c.bf16 %v2231, %v2225
        %v2418 = vpack.c.bf16 %v2238, %v2232
        %v2419 = vpack.c.bf16 %v2239, %v2233
        %v2420 = vpack.c.bf16 %v2240, %v2234
        %v2421 = vpack.c.bf16 %v2241, %v2235
        %v2422 = vpack.c.bf16 %v2242, %v2236
        %v2423 = vpack.c.bf16 %v2243, %v2237
        %v2424 = vpack.c.bf16 %v2250, %v2244
        %v2425 = vpack.c.bf16 %v2251, %v2245
        %v2426 = vpack.c.bf16 %v2252, %v2246
        %v2427 = vpack.c.bf16 %v2253, %v2247
        %v2428 = vpack.c.bf16 %v2254, %v2248
        %v2429 = vpack.c.bf16 %v2255, %v2249
        %v2430 = vpack.c.bf16 %v2262, %v2256
        %v2431 = vpack.c.bf16 %v2263, %v2257
        %v2432 = vpack.c.bf16 %v2264, %v2258
        %v2433 = vpack.c.bf16 %v2265, %v2259
        %v2434 = vpack.c.bf16 %v2266, %v2260
        %v2435 = vpack.c.bf16 %v2267, %v2261
        %v2436 = vpack.c.bf16 %v2274, %v2268
        %v2437 = vpack.c.bf16 %v2275, %v2269
        %v2438 = vpack.c.bf16 %v2276, %v2270
        %v2439 = vpack.c.bf16 %v2277, %v2271
        %v2440 = vpack.c.bf16 %v2278, %v2272
        %v2441 = vpack.c.bf16 %v2279, %v2273
        %v2442 = vpack.c.bf16 %v2286, %v2280
        %v2443 = vpack.c.bf16 %v2287, %v2281
        %v2444 = vpack.c.bf16 %v2288, %v2282
        %v2445 = vpack.c.bf16 %v2289, %v2283
        %v2446 = vpack.c.bf16 %v2290, %v2284
        %v2447 = vpack.c.bf16 %v2291, %v2285
        %v2448 = vpack.c.bf16 %v2298, %v2292
        %v2449 = vpack.c.bf16 %v2299, %v2293
        %v2450 = vpack.c.bf16 %v2300, %v2294
        %v2451 = vpack.c.bf16 %v2301, %v2295
        %v2452 = vpack.c.bf16 %v2302, %v2296
        %v2453 = vpack.c.bf16 %v2303, %v2297
        %v2454 = vpack.c.bf16 %v2310, %v2304
        %v2455 = vpack.c.bf16 %v2311, %v2305
        %v2456 = vpack.c.bf16 %v2312, %v2306
        %v2457 = vpack.c.bf16 %v2313, %v2307
        %v2458 = vpack.c.bf16 %v2314, %v2308
        %v2459 = vpack.c.bf16 %v2315, %v2309
        %v2460 = vld [vmem:[#allocation8] sm:$0xff]
        %v2461 = vld [vmem:[#allocation8 + $0x8] sm:$0xff]
        %v2462 = vld [vmem:[#allocation8 + $0x10] sm:$0xff]
        %v2463 = vld [vmem:[#allocation8 + $0x18] sm:$0xff]
        %v2464 = vld [vmem:[#allocation8 + $0x20] sm:$0xff]
        %v2465 = vld [vmem:[#allocation8 + $0x28] sm:$0xff]
        %v2466 = vld [vmem:[#allocation8 + $0x30] sm:$0xff]
        %v2467 = vld [vmem:[#allocation8 + $0x38] sm:$0xff]
        %v2468 = vld [vmem:[#allocation8 + $0x40] sm:$0xff]
        %v2469 = vld [vmem:[#allocation8 + $0x48] sm:$0xff]
        %v2470 = vld [vmem:[#allocation8 + $0x50] sm:$0xff]
        %v2471 = vld [vmem:[#allocation8 + $0x58] sm:$0xff]
        %v2472 = vld [vmem:[#allocation8 + $0x60] sm:$0xff]
        %v2473 = vld [vmem:[#allocation8 + $0x68] sm:$0xff]
        %v2474 = vld [vmem:[#allocation8 + $0x70] sm:$0xff]
        %v2475 = vld [vmem:[#allocation8 + $0x78] sm:$0xff]
        %v2476 = vld [vmem:[#allocation8 + $0x80] sm:$0xff]
        %v2477 = vld [vmem:[#allocation8 + $0x88] sm:$0xff]
        %v2478 = vld [vmem:[#allocation8 + $0x90] sm:$0xff]
        %v2479 = vld [vmem:[#allocation8 + $0x98] sm:$0xff]
        %v2480 = vld [vmem:[#allocation8 + $0xa0] sm:$0xff]
        %v2481 = vld [vmem:[#allocation8 + $0xa8] sm:$0xff]
        %v2482 = vld [vmem:[#allocation8 + $0xb0] sm:$0xff]
        %v2483 = vld [vmem:[#allocation8 + $0xb8] sm:$0xff]
        %v2484 = vld [vmem:[#allocation8 + $0xc0] sm:$0xff]
        %v2485 = vld [vmem:[#allocation8 + $0xc8] sm:$0xff]
        %v2486 = vld [vmem:[#allocation8 + $0xd0] sm:$0xff]
        %v2487 = vld [vmem:[#allocation8 + $0xd8] sm:$0xff]
        %v2488 = vld [vmem:[#allocation8 + $0xe0] sm:$0xff]
        %v2489 = vld [vmem:[#allocation8 + $0xe8] sm:$0xff]
        %v2490 = vld [vmem:[#allocation8 + $0xf0] sm:$0xff]
        %v2491 = vld [vmem:[#allocation8 + $0xf8] sm:$0xff]
        %v2492 = vld [vmem:[#allocation8 + $0x100] sm:$0xff]
        %v2493 = vld [vmem:[#allocation8 + $0x108] sm:$0xff]
        %v2494 = vld [vmem:[#allocation8 + $0x110] sm:$0xff]
        %v2495 = vld [vmem:[#allocation8 + $0x118] sm:$0xff]
        %v2496 = vld [vmem:[#allocation8 + $0x120] sm:$0xff]
        %v2497 = vld [vmem:[#allocation8 + $0x128] sm:$0xff]
        %v2498 = vld [vmem:[#allocation8 + $0x130] sm:$0xff]
        %v2499 = vld [vmem:[#allocation8 + $0x138] sm:$0xff]
        %v2500 = vld [vmem:[#allocation8 + $0x140] sm:$0xff]
        %v2501 = vld [vmem:[#allocation8 + $0x148] sm:$0xff]
        %v2502 = vld [vmem:[#allocation8 + $0x150] sm:$0xff]
        %v2503 = vld [vmem:[#allocation8 + $0x158] sm:$0xff]
        %v2504 = vld [vmem:[#allocation8 + $0x160] sm:$0xff]
        %v2505 = vld [vmem:[#allocation8 + $0x168] sm:$0xff]
        %v2506 = vld [vmem:[#allocation8 + $0x170] sm:$0xff]
        %v2507 = vld [vmem:[#allocation8 + $0x178] sm:$0xff]
        %v2508 = vld [vmem:[#allocation8 + $0x180] sm:$0xff]
        %v2509 = vld [vmem:[#allocation8 + $0x188] sm:$0xff]
        %v2510 = vld [vmem:[#allocation8 + $0x190] sm:$0xff]
        %v2511 = vld [vmem:[#allocation8 + $0x198] sm:$0xff]
        %v2512 = vld [vmem:[#allocation8 + $0x1a0] sm:$0xff]
        %v2513 = vld [vmem:[#allocation8 + $0x1a8] sm:$0xff]
        %v2514 = vld [vmem:[#allocation8 + $0x1b0] sm:$0xff]
        %v2515 = vld [vmem:[#allocation8 + $0x1b8] sm:$0xff]
        %v2516 = vld [vmem:[#allocation8 + $0x1c0] sm:$0xff]
        %v2517 = vld [vmem:[#allocation8 + $0x1c8] sm:$0xff]
        %v2518 = vld [vmem:[#allocation8 + $0x1d0] sm:$0xff]
        %v2519 = vld [vmem:[#allocation8 + $0x1d8] sm:$0xff]
        %v2520 = vld [vmem:[#allocation8 + $0x1e0] sm:$0xff]
        %v2521 = vld [vmem:[#allocation8 + $0x1e8] sm:$0xff]
        %v2522 = vld [vmem:[#allocation8 + $0x1f0] sm:$0xff]
        %v2523 = vld [vmem:[#allocation8 + $0x1f8] sm:$0xff]
        %v2524 = vld [vmem:[#allocation8 + $0x200] sm:$0xff]
        %v2525 = vld [vmem:[#allocation8 + $0x208] sm:$0xff]
        %v2526 = vld [vmem:[#allocation8 + $0x210] sm:$0xff]
        %v2527 = vld [vmem:[#allocation8 + $0x218] sm:$0xff]
        %v2528 = vld [vmem:[#allocation8 + $0x220] sm:$0xff]
        %v2529 = vld [vmem:[#allocation8 + $0x228] sm:$0xff]
        %v2530 = vld [vmem:[#allocation8 + $0x230] sm:$0xff]
        %v2531 = vld [vmem:[#allocation8 + $0x238] sm:$0xff]
        %v2532 = vld [vmem:[#allocation8 + $0x240] sm:$0xff]
        %v2533 = vld [vmem:[#allocation8 + $0x248] sm:$0xff]
        %v2534 = vld [vmem:[#allocation8 + $0x250] sm:$0xff]
        %v2535 = vld [vmem:[#allocation8 + $0x258] sm:$0xff]
        %v2536 = vld [vmem:[#allocation8 + $0x260] sm:$0xff]
        %v2537 = vld [vmem:[#allocation8 + $0x268] sm:$0xff]
        %v2538 = vld [vmem:[#allocation8 + $0x270] sm:$0xff]
        %v2539 = vld [vmem:[#allocation8 + $0x278] sm:$0xff]
        %v2540 = vld [vmem:[#allocation8 + $0x280] sm:$0xff]
        %v2541 = vld [vmem:[#allocation8 + $0x288] sm:$0xff]
        %v2542 = vld [vmem:[#allocation8 + $0x290] sm:$0xff]
        %v2543 = vld [vmem:[#allocation8 + $0x298] sm:$0xff]
        %v2544 = vld [vmem:[#allocation8 + $0x2a0] sm:$0xff]
        %v2545 = vld [vmem:[#allocation8 + $0x2a8] sm:$0xff]
        %v2546 = vld [vmem:[#allocation8 + $0x2b0] sm:$0xff]
        %v2547 = vld [vmem:[#allocation8 + $0x2b8] sm:$0xff]
        %v2548 = vld [vmem:[#allocation8 + $0x2c0] sm:$0xff]
        %v2549 = vld [vmem:[#allocation8 + $0x2c8] sm:$0xff]
        %v2550 = vld [vmem:[#allocation8 + $0x2d0] sm:$0xff]
        %v2551 = vld [vmem:[#allocation8 + $0x2d8] sm:$0xff]
        %v2552 = vld [vmem:[#allocation8 + $0x2e0] sm:$0xff]
        %v2553 = vld [vmem:[#allocation8 + $0x2e8] sm:$0xff]
        %v2554 = vld [vmem:[#allocation8 + $0x2f0] sm:$0xff]
        %v2555 = vld [vmem:[#allocation8 + $0x2f8] sm:$0xff]
        %v2556 = vld [vmem:[#allocation8 + $0x300] sm:$0xff]
        %v2557 = vld [vmem:[#allocation8 + $0x308] sm:$0xff]
        %v2558 = vld [vmem:[#allocation8 + $0x310] sm:$0xff]
        %v2559 = vld [vmem:[#allocation8 + $0x318] sm:$0xff]
        %v2560 = vld [vmem:[#allocation8 + $0x320] sm:$0xff]
        %v2561 = vld [vmem:[#allocation8 + $0x328] sm:$0xff]
        %v2562 = vld [vmem:[#allocation8 + $0x330] sm:$0xff]
        %v2563 = vld [vmem:[#allocation8 + $0x338] sm:$0xff]
        %v2564 = vld [vmem:[#allocation8 + $0x340] sm:$0xff]
        %v2565 = vld [vmem:[#allocation8 + $0x348] sm:$0xff]
        %v2566 = vld [vmem:[#allocation8 + $0x350] sm:$0xff]
        %v2567 = vld [vmem:[#allocation8 + $0x358] sm:$0xff]
        %v2568 = vld [vmem:[#allocation8 + $0x360] sm:$0xff]
        %v2569 = vld [vmem:[#allocation8 + $0x368] sm:$0xff]
        %v2570 = vld [vmem:[#allocation8 + $0x370] sm:$0xff]
        %v2571 = vld [vmem:[#allocation8 + $0x378] sm:$0xff]
        %v2572 = vld [vmem:[#allocation8 + $0x380] sm:$0xff]
        %v2573 = vld [vmem:[#allocation8 + $0x388] sm:$0xff]
        %v2574 = vld [vmem:[#allocation8 + $0x390] sm:$0xff]
        %v2575 = vld [vmem:[#allocation8 + $0x398] sm:$0xff]
        %v2576 = vld [vmem:[#allocation8 + $0x3a0] sm:$0xff]
        %v2577 = vld [vmem:[#allocation8 + $0x3a8] sm:$0xff]
        %v2578 = vld [vmem:[#allocation8 + $0x3b0] sm:$0xff]
        %v2579 = vld [vmem:[#allocation8 + $0x3b8] sm:$0xff]
        %v2580 = vld [vmem:[#allocation8 + $0x3c0] sm:$0xff]
        %v2581 = vld [vmem:[#allocation8 + $0x3c8] sm:$0xff]
        %v2582 = vld [vmem:[#allocation8 + $0x3d0] sm:$0xff]
        %v2583 = vld [vmem:[#allocation8 + $0x3d8] sm:$0xff]
        %v2584 = vld [vmem:[#allocation8 + $0x3e0] sm:$0xff]
        %v2585 = vld [vmem:[#allocation8 + $0x3e8] sm:$0xff]
        %v2586 = vld [vmem:[#allocation8 + $0x3f0] sm:$0xff]
        %v2587 = vld [vmem:[#allocation8 + $0x3f8] sm:$0xff]
        %v2588 = vld [vmem:[#allocation8 + $0x400] sm:$0xff]
        %v2589 = vld [vmem:[#allocation8 + $0x408] sm:$0xff]
        %v2590 = vld [vmem:[#allocation8 + $0x410] sm:$0xff]
        %v2591 = vld [vmem:[#allocation8 + $0x418] sm:$0xff]
        %v2592 = vld [vmem:[#allocation8 + $0x420] sm:$0xff]
        %v2593 = vld [vmem:[#allocation8 + $0x428] sm:$0xff]
        %v2594 = vld [vmem:[#allocation8 + $0x430] sm:$0xff]
        %v2595 = vld [vmem:[#allocation8 + $0x438] sm:$0xff]
        %v2596 = vld [vmem:[#allocation8 + $0x440] sm:$0xff]
        %v2597 = vld [vmem:[#allocation8 + $0x448] sm:$0xff]
        %v2598 = vld [vmem:[#allocation8 + $0x450] sm:$0xff]
        %v2599 = vld [vmem:[#allocation8 + $0x458] sm:$0xff]
        %v2600 = vld [vmem:[#allocation8 + $0x460] sm:$0xff]
        %v2601 = vld [vmem:[#allocation8 + $0x468] sm:$0xff]
        %v2602 = vld [vmem:[#allocation8 + $0x470] sm:$0xff]
        %v2603 = vld [vmem:[#allocation8 + $0x478] sm:$0xff]
        %v2604 = vld [vmem:[#allocation8 + $0x480] sm:$0xff]
        %v2605 = vld [vmem:[#allocation8 + $0x488] sm:$0xff]
        %v2606 = vld [vmem:[#allocation8 + $0x490] sm:$0xff]
        %v2607 = vld [vmem:[#allocation8 + $0x498] sm:$0xff]
        %v2608 = vld [vmem:[#allocation8 + $0x4a0] sm:$0xff]
        %v2609 = vld [vmem:[#allocation8 + $0x4a8] sm:$0xff]
        %v2610 = vld [vmem:[#allocation8 + $0x4b0] sm:$0xff]
        %v2611 = vld [vmem:[#allocation8 + $0x4b8] sm:$0xff]
        %v2612 = vld [vmem:[#allocation8 + $0x4c0] sm:$0xff]
        %v2613 = vld [vmem:[#allocation8 + $0x4c8] sm:$0xff]
        %v2614 = vld [vmem:[#allocation8 + $0x4d0] sm:$0xff]
        %v2615 = vld [vmem:[#allocation8 + $0x4d8] sm:$0xff]
        %v2616 = vld [vmem:[#allocation8 + $0x4e0] sm:$0xff]
        %v2617 = vld [vmem:[#allocation8 + $0x4e8] sm:$0xff]
        %v2618 = vld [vmem:[#allocation8 + $0x4f0] sm:$0xff]
        %v2619 = vld [vmem:[#allocation8 + $0x4f8] sm:$0xff]
        %v2620 = vld [vmem:[#allocation8 + $0x500] sm:$0xff]
        %v2621 = vld [vmem:[#allocation8 + $0x508] sm:$0xff]
        %v2622 = vld [vmem:[#allocation8 + $0x510] sm:$0xff]
        %v2623 = vld [vmem:[#allocation8 + $0x518] sm:$0xff]
        %v2624 = vld [vmem:[#allocation8 + $0x520] sm:$0xff]
        %v2625 = vld [vmem:[#allocation8 + $0x528] sm:$0xff]
        %v2626 = vld [vmem:[#allocation8 + $0x530] sm:$0xff]
        %v2627 = vld [vmem:[#allocation8 + $0x538] sm:$0xff]
        %v2628 = vld [vmem:[#allocation8 + $0x540] sm:$0xff]
        %v2629 = vld [vmem:[#allocation8 + $0x548] sm:$0xff]
        %v2630 = vld [vmem:[#allocation8 + $0x550] sm:$0xff]
        %v2631 = vld [vmem:[#allocation8 + $0x558] sm:$0xff]
        %v2632 = vld [vmem:[#allocation8 + $0x560] sm:$0xff]
        %v2633 = vld [vmem:[#allocation8 + $0x568] sm:$0xff]
        %v2634 = vld [vmem:[#allocation8 + $0x570] sm:$0xff]
        %v2635 = vld [vmem:[#allocation8 + $0x578] sm:$0xff]
        %v2636 = vld [vmem:[#allocation8 + $0x580] sm:$0xff]
        %v2637 = vld [vmem:[#allocation8 + $0x588] sm:$0xff]
        %v2638 = vld [vmem:[#allocation8 + $0x590] sm:$0xff]
        %v2639 = vld [vmem:[#allocation8 + $0x598] sm:$0xff]
        %v2640 = vld [vmem:[#allocation8 + $0x5a0] sm:$0xff]
        %v2641 = vld [vmem:[#allocation8 + $0x5a8] sm:$0xff]
        %v2642 = vld [vmem:[#allocation8 + $0x5b0] sm:$0xff]
        %v2643 = vld [vmem:[#allocation8 + $0x5b8] sm:$0xff]
        %v2644 = vld [vmem:[#allocation8 + $0x5c0] sm:$0xff]
        %v2645 = vld [vmem:[#allocation8 + $0x5c8] sm:$0xff]
        %v2646 = vld [vmem:[#allocation8 + $0x5d0] sm:$0xff]
        %v2647 = vld [vmem:[#allocation8 + $0x5d8] sm:$0xff]
        %v2648 = vld [vmem:[#allocation8 + $0x5e0] sm:$0xff]
        %v2649 = vld [vmem:[#allocation8 + $0x5e8] sm:$0xff]
        %v2650 = vld [vmem:[#allocation8 + $0x5f0] sm:$0xff]
        %v2651 = vld [vmem:[#allocation8 + $0x5f8] sm:$0xff]
        %v2652 = vld [vmem:[#allocation8 + $0x600] sm:$0xff]
        %v2653 = vld [vmem:[#allocation8 + $0x608] sm:$0xff]
        %v2654 = vld [vmem:[#allocation8 + $0x610] sm:$0xff]
        %v2655 = vld [vmem:[#allocation8 + $0x618] sm:$0xff]
        %v2656 = vld [vmem:[#allocation8 + $0x620] sm:$0xff]
        %v2657 = vld [vmem:[#allocation8 + $0x628] sm:$0xff]
        %v2658 = vld [vmem:[#allocation8 + $0x630] sm:$0xff]
        %v2659 = vld [vmem:[#allocation8 + $0x638] sm:$0xff]
        %v2660 = vld [vmem:[#allocation8 + $0x640] sm:$0xff]
        %v2661 = vld [vmem:[#allocation8 + $0x648] sm:$0xff]
        %v2662 = vld [vmem:[#allocation8 + $0x650] sm:$0xff]
        %v2663 = vld [vmem:[#allocation8 + $0x658] sm:$0xff]
        %v2664 = vld [vmem:[#allocation8 + $0x660] sm:$0xff]
        %v2665 = vld [vmem:[#allocation8 + $0x668] sm:$0xff]
        %v2666 = vld [vmem:[#allocation8 + $0x670] sm:$0xff]
        %v2667 = vld [vmem:[#allocation8 + $0x678] sm:$0xff]
        %v2668 = vld [vmem:[#allocation8 + $0x680] sm:$0xff]
        %v2669 = vld [vmem:[#allocation8 + $0x688] sm:$0xff]
        %v2670 = vld [vmem:[#allocation8 + $0x690] sm:$0xff]
        %v2671 = vld [vmem:[#allocation8 + $0x698] sm:$0xff]
        %v2672 = vld [vmem:[#allocation8 + $0x6a0] sm:$0xff]
        %v2673 = vld [vmem:[#allocation8 + $0x6a8] sm:$0xff]
        %v2674 = vld [vmem:[#allocation8 + $0x6b0] sm:$0xff]
        %v2675 = vld [vmem:[#allocation8 + $0x6b8] sm:$0xff]
        %v2676 = vld [vmem:[#allocation8 + $0x6c0] sm:$0xff]
        %v2677 = vld [vmem:[#allocation8 + $0x6c8] sm:$0xff]
        %v2678 = vld [vmem:[#allocation8 + $0x6d0] sm:$0xff]
        %v2679 = vld [vmem:[#allocation8 + $0x6d8] sm:$0xff]
        %v2680 = vld [vmem:[#allocation8 + $0x6e0] sm:$0xff]
        %v2681 = vld [vmem:[#allocation8 + $0x6e8] sm:$0xff]
        %v2682 = vld [vmem:[#allocation8 + $0x6f0] sm:$0xff]
        %v2683 = vld [vmem:[#allocation8 + $0x6f8] sm:$0xff]
        %v2684 = vld [vmem:[#allocation8 + $0x700] sm:$0xff]
        %v2685 = vld [vmem:[#allocation8 + $0x708] sm:$0xff]
        %v2686 = vld [vmem:[#allocation8 + $0x710] sm:$0xff]
        %v2687 = vld [vmem:[#allocation8 + $0x718] sm:$0xff]
        %v2688 = vld [vmem:[#allocation8 + $0x720] sm:$0xff]
        %v2689 = vld [vmem:[#allocation8 + $0x728] sm:$0xff]
        %v2690 = vld [vmem:[#allocation8 + $0x730] sm:$0xff]
        %v2691 = vld [vmem:[#allocation8 + $0x738] sm:$0xff]
        %v2692 = vld [vmem:[#allocation8 + $0x740] sm:$0xff]
        %v2693 = vld [vmem:[#allocation8 + $0x748] sm:$0xff]
        %v2694 = vld [vmem:[#allocation8 + $0x750] sm:$0xff]
        %v2695 = vld [vmem:[#allocation8 + $0x758] sm:$0xff]
        %v2696 = vld [vmem:[#allocation8 + $0x760] sm:$0xff]
        %v2697 = vld [vmem:[#allocation8 + $0x768] sm:$0xff]
        %v2698 = vld [vmem:[#allocation8 + $0x770] sm:$0xff]
        %v2699 = vld [vmem:[#allocation8 + $0x778] sm:$0xff]
        %v2700 = vld [vmem:[#allocation8 + $0x780] sm:$0xff]
        %v2701 = vld [vmem:[#allocation8 + $0x788] sm:$0xff]
        %v2702 = vld [vmem:[#allocation8 + $0x790] sm:$0xff]
        %v2703 = vld [vmem:[#allocation8 + $0x798] sm:$0xff]
        %v2704 = vld [vmem:[#allocation8 + $0x7a0] sm:$0xff]
        %v2705 = vld [vmem:[#allocation8 + $0x7a8] sm:$0xff]
        %v2706 = vld [vmem:[#allocation8 + $0x7b0] sm:$0xff]
        %v2707 = vld [vmem:[#allocation8 + $0x7b8] sm:$0xff]
        %v2708 = vld [vmem:[#allocation8 + $0x7c0] sm:$0xff]
        %v2709 = vld [vmem:[#allocation8 + $0x7c8] sm:$0xff]
        %v2710 = vld [vmem:[#allocation8 + $0x7d0] sm:$0xff]
        %v2711 = vld [vmem:[#allocation8 + $0x7d8] sm:$0xff]
        %v2712 = vld [vmem:[#allocation8 + $0x7e0] sm:$0xff]
        %v2713 = vld [vmem:[#allocation8 + $0x7e8] sm:$0xff]
        %v2714 = vld [vmem:[#allocation8 + $0x7f0] sm:$0xff]
        %v2715 = vld [vmem:[#allocation8 + $0x7f8] sm:$0xff]
        %v2716 = vld [vmem:[#allocation8 + $0x800] sm:$0xff]
        %v2717 = vld [vmem:[#allocation8 + $0x808] sm:$0xff]
        %v2718 = vld [vmem:[#allocation8 + $0x810] sm:$0xff]
        %v2719 = vld [vmem:[#allocation8 + $0x818] sm:$0xff]
        %v2720 = vld [vmem:[#allocation8 + $0x820] sm:$0xff]
        %v2721 = vld [vmem:[#allocation8 + $0x828] sm:$0xff]
        %v2722 = vld [vmem:[#allocation8 + $0x830] sm:$0xff]
        %v2723 = vld [vmem:[#allocation8 + $0x838] sm:$0xff]
        %v2724 = vld [vmem:[#allocation8 + $0x840] sm:$0xff]
        %v2725 = vld [vmem:[#allocation8 + $0x848] sm:$0xff]
        %v2726 = vld [vmem:[#allocation8 + $0x850] sm:$0xff]
        %v2727 = vld [vmem:[#allocation8 + $0x858] sm:$0xff]
        %v2728 = vld [vmem:[#allocation8 + $0x860] sm:$0xff]
        %v2729 = vld [vmem:[#allocation8 + $0x868] sm:$0xff]
        %v2730 = vld [vmem:[#allocation8 + $0x870] sm:$0xff]
        %v2731 = vld [vmem:[#allocation8 + $0x878] sm:$0xff]
        %v2732 = vld [vmem:[#allocation8 + $0x880] sm:$0xff]
        %v2733 = vld [vmem:[#allocation8 + $0x888] sm:$0xff]
        %v2734 = vld [vmem:[#allocation8 + $0x890] sm:$0xff]
        %v2735 = vld [vmem:[#allocation8 + $0x898] sm:$0xff]
        %v2736 = vld [vmem:[#allocation8 + $0x8a0] sm:$0xff]
        %v2737 = vld [vmem:[#allocation8 + $0x8a8] sm:$0xff]
        %v2738 = vld [vmem:[#allocation8 + $0x8b0] sm:$0xff]
        %v2739 = vld [vmem:[#allocation8 + $0x8b8] sm:$0xff]
        %v2740 = vld [vmem:[#allocation8 + $0x8c0] sm:$0xff]
        %v2741 = vld [vmem:[#allocation8 + $0x8c8] sm:$0xff]
        %v2742 = vld [vmem:[#allocation8 + $0x8d0] sm:$0xff]
        %v2743 = vld [vmem:[#allocation8 + $0x8d8] sm:$0xff]
        %v2744 = vld [vmem:[#allocation8 + $0x8e0] sm:$0xff]
        %v2745 = vld [vmem:[#allocation8 + $0x8e8] sm:$0xff]
        %v2746 = vld [vmem:[#allocation8 + $0x8f0] sm:$0xff]
        %v2747 = vld [vmem:[#allocation8 + $0x8f8] sm:$0xff]
        %v2748 = vld [vmem:[%s232] sm:$0xff]
        %v2749 = vld [vmem:[%s232 + $0x8] sm:$0xff]
        %v2750 = vld [vmem:[%s232 + $0x10] sm:$0xff]
        %v2751 = vld [vmem:[%s232 + $0x18] sm:$0xff]
        %v2752 = vld [vmem:[%s232 + $0x20] sm:$0xff]
        %v2753 = vld [vmem:[%s232 + $0x28] sm:$0xff]
        %v2754 = vld [vmem:[%s232 + $0x30] sm:$0xff]
        %v2755 = vld [vmem:[%s232 + $0x38] sm:$0xff]
        %v2756 = vld [vmem:[%s232 + $0x40] sm:$0xff]
        %v2757 = vld [vmem:[%s232 + $0x48] sm:$0xff]
        %v2758 = vld [vmem:[%s232 + $0x50] sm:$0xff]
        %v2759 = vld [vmem:[%s232 + $0x58] sm:$0xff]
        %v2760 = vld [vmem:[%s232 + $0x60] sm:$0xff]
        %v2761 = vld [vmem:[%s232 + $0x68] sm:$0xff]
        %v2762 = vld [vmem:[%s232 + $0x70] sm:$0xff]
        %v2763 = vld [vmem:[%s232 + $0x78] sm:$0xff]
        %v2764 = vld [vmem:[%s232 + $0x80] sm:$0xff]
        %v2765 = vld [vmem:[%s232 + $0x88] sm:$0xff]
        %v2766 = vld [vmem:[%s232 + $0x90] sm:$0xff]
        %v2767 = vld [vmem:[%s232 + $0x98] sm:$0xff]
        %v2768 = vld [vmem:[%s232 + $0xa0] sm:$0xff]
        %v2769 = vld [vmem:[%s232 + $0xa8] sm:$0xff]
        %v2770 = vld [vmem:[%s232 + $0xb0] sm:$0xff]
        %v2771 = vld [vmem:[%s232 + $0xb8] sm:$0xff]
        %v2772 = vld [vmem:[%s232 + $0xc0] sm:$0xff]
        %v2773 = vld [vmem:[%s232 + $0xc8] sm:$0xff]
        %v2774 = vld [vmem:[%s232 + $0xd0] sm:$0xff]
        %v2775 = vld [vmem:[%s232 + $0xd8] sm:$0xff]
        %v2776 = vld [vmem:[%s232 + $0xe0] sm:$0xff]
        %v2777 = vld [vmem:[%s232 + $0xe8] sm:$0xff]
        %v2778 = vld [vmem:[%s232 + $0xf0] sm:$0xff]
        %v2779 = vld [vmem:[%s232 + $0xf8] sm:$0xff]
        %v2780 = vld [vmem:[%s232 + $0x100] sm:$0xff]
        %v2781 = vld [vmem:[%s232 + $0x108] sm:$0xff]
        %v2782 = vld [vmem:[%s232 + $0x110] sm:$0xff]
        %v2783 = vld [vmem:[%s232 + $0x118] sm:$0xff]
        %v2784 = vld [vmem:[%s232 + $0x120] sm:$0xff]
        %v2785 = vld [vmem:[%s232 + $0x128] sm:$0xff]
        %v2786 = vld [vmem:[%s232 + $0x130] sm:$0xff]
        %v2787 = vld [vmem:[%s232 + $0x138] sm:$0xff]
        %v2788 = vld [vmem:[%s232 + $0x140] sm:$0xff]
        %v2789 = vld [vmem:[%s232 + $0x148] sm:$0xff]
        %v2790 = vld [vmem:[%s232 + $0x150] sm:$0xff]
        %v2791 = vld [vmem:[%s232 + $0x158] sm:$0xff]
        %v2792 = vld [vmem:[%s232 + $0x160] sm:$0xff]
        %v2793 = vld [vmem:[%s232 + $0x168] sm:$0xff]
        %v2794 = vld [vmem:[%s232 + $0x170] sm:$0xff]
        %v2795 = vld [vmem:[%s232 + $0x178] sm:$0xff]
        %v2796 = vld [vmem:[%s232 + $0x180] sm:$0xff]
        %v2797 = vld [vmem:[%s232 + $0x188] sm:$0xff]
        %v2798 = vld [vmem:[%s232 + $0x190] sm:$0xff]
        %v2799 = vld [vmem:[%s232 + $0x198] sm:$0xff]
        %v2800 = vld [vmem:[%s232 + $0x1a0] sm:$0xff]
        %v2801 = vld [vmem:[%s232 + $0x1a8] sm:$0xff]
        %v2802 = vld [vmem:[%s232 + $0x1b0] sm:$0xff]
        %v2803 = vld [vmem:[%s232 + $0x1b8] sm:$0xff]
        %v2804 = vld [vmem:[%s232 + $0x1c0] sm:$0xff]
        %v2805 = vld [vmem:[%s232 + $0x1c8] sm:$0xff]
        %v2806 = vld [vmem:[%s232 + $0x1d0] sm:$0xff]
        %v2807 = vld [vmem:[%s232 + $0x1d8] sm:$0xff]
        %v2808 = vld [vmem:[%s232 + $0x1e0] sm:$0xff]
        %v2809 = vld [vmem:[%s232 + $0x1e8] sm:$0xff]
        %v2810 = vld [vmem:[%s232 + $0x1f0] sm:$0xff]
        %v2811 = vld [vmem:[%s232 + $0x1f8] sm:$0xff]
        %v2812 = vld [vmem:[%s232 + $0x200] sm:$0xff]
        %v2813 = vld [vmem:[%s232 + $0x208] sm:$0xff]
        %v2814 = vld [vmem:[%s232 + $0x210] sm:$0xff]
        %v2815 = vld [vmem:[%s232 + $0x218] sm:$0xff]
        %v2816 = vld [vmem:[%s232 + $0x220] sm:$0xff]
        %v2817 = vld [vmem:[%s232 + $0x228] sm:$0xff]
        %v2818 = vld [vmem:[%s232 + $0x230] sm:$0xff]
        %v2819 = vld [vmem:[%s232 + $0x238] sm:$0xff]
        %v2820 = vld [vmem:[%s232 + $0x240] sm:$0xff]
        %v2821 = vld [vmem:[%s232 + $0x248] sm:$0xff]
        %v2822 = vld [vmem:[%s232 + $0x250] sm:$0xff]
        %v2823 = vld [vmem:[%s232 + $0x258] sm:$0xff]
        %v2824 = vld [vmem:[%s232 + $0x260] sm:$0xff]
        %v2825 = vld [vmem:[%s232 + $0x268] sm:$0xff]
        %v2826 = vld [vmem:[%s232 + $0x270] sm:$0xff]
        %v2827 = vld [vmem:[%s232 + $0x278] sm:$0xff]
        %v2828 = vld [vmem:[%s232 + $0x280] sm:$0xff]
        %v2829 = vld [vmem:[%s232 + $0x288] sm:$0xff]
        %v2830 = vld [vmem:[%s232 + $0x290] sm:$0xff]
        %v2831 = vld [vmem:[%s232 + $0x298] sm:$0xff]
        %v2832 = vld [vmem:[%s232 + $0x2a0] sm:$0xff]
        %v2833 = vld [vmem:[%s232 + $0x2a8] sm:$0xff]
        %v2834 = vld [vmem:[%s232 + $0x2b0] sm:$0xff]
        %v2835 = vld [vmem:[%s232 + $0x2b8] sm:$0xff]
        %v2836 = vld [vmem:[%s232 + $0x2c0] sm:$0xff]
        %v2837 = vld [vmem:[%s232 + $0x2c8] sm:$0xff]
        %v2838 = vld [vmem:[%s232 + $0x2d0] sm:$0xff]
        %v2839 = vld [vmem:[%s232 + $0x2d8] sm:$0xff]
        %v2840 = vld [vmem:[%s232 + $0x2e0] sm:$0xff]
        %v2841 = vld [vmem:[%s232 + $0x2e8] sm:$0xff]
        %v2842 = vld [vmem:[%s232 + $0x2f0] sm:$0xff]
        %v2843 = vld [vmem:[%s232 + $0x2f8] sm:$0xff]
        %v2844 = vld [vmem:[%s232 + $0x300] sm:$0xff]
        %v2845 = vld [vmem:[%s232 + $0x308] sm:$0xff]
        %v2846 = vld [vmem:[%s232 + $0x310] sm:$0xff]
        %v2847 = vld [vmem:[%s232 + $0x318] sm:$0xff]
        %v2848 = vld [vmem:[%s232 + $0x320] sm:$0xff]
        %v2849 = vld [vmem:[%s232 + $0x328] sm:$0xff]
        %v2850 = vld [vmem:[%s232 + $0x330] sm:$0xff]
        %v2851 = vld [vmem:[%s232 + $0x338] sm:$0xff]
        %v2852 = vld [vmem:[%s232 + $0x340] sm:$0xff]
        %v2853 = vld [vmem:[%s232 + $0x348] sm:$0xff]
        %v2854 = vld [vmem:[%s232 + $0x350] sm:$0xff]
        %v2855 = vld [vmem:[%s232 + $0x358] sm:$0xff]
        %v2856 = vld [vmem:[%s232 + $0x360] sm:$0xff]
        %v2857 = vld [vmem:[%s232 + $0x368] sm:$0xff]
        %v2858 = vld [vmem:[%s232 + $0x370] sm:$0xff]
        %v2859 = vld [vmem:[%s232 + $0x378] sm:$0xff]
        %v2860 = vld [vmem:[%s232 + $0x380] sm:$0xff]
        %v2861 = vld [vmem:[%s232 + $0x388] sm:$0xff]
        %v2862 = vld [vmem:[%s232 + $0x390] sm:$0xff]
        %v2863 = vld [vmem:[%s232 + $0x398] sm:$0xff]
        %v2864 = vld [vmem:[%s232 + $0x3a0] sm:$0xff]
        %v2865 = vld [vmem:[%s232 + $0x3a8] sm:$0xff]
        %v2866 = vld [vmem:[%s232 + $0x3b0] sm:$0xff]
        %v2867 = vld [vmem:[%s232 + $0x3b8] sm:$0xff]
        %v2868 = vld [vmem:[%s232 + $0x3c0] sm:$0xff]
        %v2869 = vld [vmem:[%s232 + $0x3c8] sm:$0xff]
        %v2870 = vld [vmem:[%s232 + $0x3d0] sm:$0xff]
        %v2871 = vld [vmem:[%s232 + $0x3d8] sm:$0xff]
        %v2872 = vld [vmem:[%s232 + $0x3e0] sm:$0xff]
        %v2873 = vld [vmem:[%s232 + $0x3e8] sm:$0xff]
        %v2874 = vld [vmem:[%s232 + $0x3f0] sm:$0xff]
        %v2875 = vld [vmem:[%s232 + $0x3f8] sm:$0xff]
        %v2876 = vld [vmem:[%s232 + $0x400] sm:$0xff]
        %v2877 = vld [vmem:[%s232 + $0x408] sm:$0xff]
        %v2878 = vld [vmem:[%s232 + $0x410] sm:$0xff]
        %v2879 = vld [vmem:[%s232 + $0x418] sm:$0xff]
        %v2880 = vld [vmem:[%s232 + $0x420] sm:$0xff]
        %v2881 = vld [vmem:[%s232 + $0x428] sm:$0xff]
        %v2882 = vld [vmem:[%s232 + $0x430] sm:$0xff]
        %v2883 = vld [vmem:[%s232 + $0x438] sm:$0xff]
        %v2884 = vld [vmem:[%s232 + $0x440] sm:$0xff]
        %v2885 = vld [vmem:[%s232 + $0x448] sm:$0xff]
        %v2886 = vld [vmem:[%s232 + $0x450] sm:$0xff]
        %v2887 = vld [vmem:[%s232 + $0x458] sm:$0xff]
        %v2888 = vld [vmem:[%s232 + $0x460] sm:$0xff]
        %v2889 = vld [vmem:[%s232 + $0x468] sm:$0xff]
        %v2890 = vld [vmem:[%s232 + $0x470] sm:$0xff]
        %v2891 = vld [vmem:[%s232 + $0x478] sm:$0xff]
        %v2892 = vld [vmem:[%s232 + $0x480] sm:$0xff]
        %v2893 = vld [vmem:[%s232 + $0x488] sm:$0xff]
        %v2894 = vld [vmem:[%s232 + $0x490] sm:$0xff]
        %v2895 = vld [vmem:[%s232 + $0x498] sm:$0xff]
        %v2896 = vld [vmem:[%s232 + $0x4a0] sm:$0xff]
        %v2897 = vld [vmem:[%s232 + $0x4a8] sm:$0xff]
        %v2898 = vld [vmem:[%s232 + $0x4b0] sm:$0xff]
        %v2899 = vld [vmem:[%s232 + $0x4b8] sm:$0xff]
        %v2900 = vld [vmem:[%s232 + $0x4c0] sm:$0xff]
        %v2901 = vld [vmem:[%s232 + $0x4c8] sm:$0xff]
        %v2902 = vld [vmem:[%s232 + $0x4d0] sm:$0xff]
        %v2903 = vld [vmem:[%s232 + $0x4d8] sm:$0xff]
        %v2904 = vld [vmem:[%s232 + $0x4e0] sm:$0xff]
        %v2905 = vld [vmem:[%s232 + $0x4e8] sm:$0xff]
        %v2906 = vld [vmem:[%s232 + $0x4f0] sm:$0xff]
        %v2907 = vld [vmem:[%s232 + $0x4f8] sm:$0xff]
        %v2908 = vld [vmem:[%s232 + $0x500] sm:$0xff]
        %v2909 = vld [vmem:[%s232 + $0x508] sm:$0xff]
        %v2910 = vld [vmem:[%s232 + $0x510] sm:$0xff]
        %v2911 = vld [vmem:[%s232 + $0x518] sm:$0xff]
        %v2912 = vld [vmem:[%s232 + $0x520] sm:$0xff]
        %v2913 = vld [vmem:[%s232 + $0x528] sm:$0xff]
        %v2914 = vld [vmem:[%s232 + $0x530] sm:$0xff]
        %v2915 = vld [vmem:[%s232 + $0x538] sm:$0xff]
        %v2916 = vld [vmem:[%s232 + $0x540] sm:$0xff]
        %v2917 = vld [vmem:[%s232 + $0x548] sm:$0xff]
        %v2918 = vld [vmem:[%s232 + $0x550] sm:$0xff]
        %v2919 = vld [vmem:[%s232 + $0x558] sm:$0xff]
        %v2920 = vld [vmem:[%s232 + $0x560] sm:$0xff]
        %v2921 = vld [vmem:[%s232 + $0x568] sm:$0xff]
        %v2922 = vld [vmem:[%s232 + $0x570] sm:$0xff]
        %v2923 = vld [vmem:[%s232 + $0x578] sm:$0xff]
        %v2924 = vld [vmem:[%s232 + $0x580] sm:$0xff]
        %v2925 = vld [vmem:[%s232 + $0x588] sm:$0xff]
        %v2926 = vld [vmem:[%s232 + $0x590] sm:$0xff]
        %v2927 = vld [vmem:[%s232 + $0x598] sm:$0xff]
        %v2928 = vld [vmem:[%s232 + $0x5a0] sm:$0xff]
        %v2929 = vld [vmem:[%s232 + $0x5a8] sm:$0xff]
        %v2930 = vld [vmem:[%s232 + $0x5b0] sm:$0xff]
        %v2931 = vld [vmem:[%s232 + $0x5b8] sm:$0xff]
        %v2932 = vld [vmem:[%s232 + $0x5c0] sm:$0xff]
        %v2933 = vld [vmem:[%s232 + $0x5c8] sm:$0xff]
        %v2934 = vld [vmem:[%s232 + $0x5d0] sm:$0xff]
        %v2935 = vld [vmem:[%s232 + $0x5d8] sm:$0xff]
        %v2936 = vld [vmem:[%s232 + $0x5e0] sm:$0xff]
        %v2937 = vld [vmem:[%s232 + $0x5e8] sm:$0xff]
        %v2938 = vld [vmem:[%s232 + $0x5f0] sm:$0xff]
        %v2939 = vld [vmem:[%s232 + $0x5f8] sm:$0xff]
        %v2940 = vld [vmem:[%s232 + $0x600] sm:$0xff]
        %v2941 = vld [vmem:[%s232 + $0x608] sm:$0xff]
        %v2942 = vld [vmem:[%s232 + $0x610] sm:$0xff]
        %v2943 = vld [vmem:[%s232 + $0x618] sm:$0xff]
        %v2944 = vld [vmem:[%s232 + $0x620] sm:$0xff]
        %v2945 = vld [vmem:[%s232 + $0x628] sm:$0xff]
        %v2946 = vld [vmem:[%s232 + $0x630] sm:$0xff]
        %v2947 = vld [vmem:[%s232 + $0x638] sm:$0xff]
        %v2948 = vld [vmem:[%s232 + $0x640] sm:$0xff]
        %v2949 = vld [vmem:[%s232 + $0x648] sm:$0xff]
        %v2950 = vld [vmem:[%s232 + $0x650] sm:$0xff]
        %v2951 = vld [vmem:[%s232 + $0x658] sm:$0xff]
        %v2952 = vld [vmem:[%s232 + $0x660] sm:$0xff]
        %v2953 = vld [vmem:[%s232 + $0x668] sm:$0xff]
        %v2954 = vld [vmem:[%s232 + $0x670] sm:$0xff]
        %v2955 = vld [vmem:[%s232 + $0x678] sm:$0xff]
        %v2956 = vld [vmem:[%s232 + $0x680] sm:$0xff]
        %v2957 = vld [vmem:[%s232 + $0x688] sm:$0xff]
        %v2958 = vld [vmem:[%s232 + $0x690] sm:$0xff]
        %v2959 = vld [vmem:[%s232 + $0x698] sm:$0xff]
        %v2960 = vld [vmem:[%s232 + $0x6a0] sm:$0xff]
        %v2961 = vld [vmem:[%s232 + $0x6a8] sm:$0xff]
        %v2962 = vld [vmem:[%s232 + $0x6b0] sm:$0xff]
        %v2963 = vld [vmem:[%s232 + $0x6b8] sm:$0xff]
        %v2964 = vld [vmem:[%s232 + $0x6c0] sm:$0xff]
        %v2965 = vld [vmem:[%s232 + $0x6c8] sm:$0xff]
        %v2966 = vld [vmem:[%s232 + $0x6d0] sm:$0xff]
        %v2967 = vld [vmem:[%s232 + $0x6d8] sm:$0xff]
        %v2968 = vld [vmem:[%s232 + $0x6e0] sm:$0xff]
        %v2969 = vld [vmem:[%s232 + $0x6e8] sm:$0xff]
        %v2970 = vld [vmem:[%s232 + $0x6f0] sm:$0xff]
        %v2971 = vld [vmem:[%s232 + $0x6f8] sm:$0xff]
        %v2972 = vld [vmem:[%s232 + $0x700] sm:$0xff]
        %v2973 = vld [vmem:[%s232 + $0x708] sm:$0xff]
        %v2974 = vld [vmem:[%s232 + $0x710] sm:$0xff]
        %v2975 = vld [vmem:[%s232 + $0x718] sm:$0xff]
        %v2976 = vld [vmem:[%s232 + $0x720] sm:$0xff]
        %v2977 = vld [vmem:[%s232 + $0x728] sm:$0xff]
        %v2978 = vld [vmem:[%s232 + $0x730] sm:$0xff]
        %v2979 = vld [vmem:[%s232 + $0x738] sm:$0xff]
        %v2980 = vld [vmem:[%s232 + $0x740] sm:$0xff]
        %v2981 = vld [vmem:[%s232 + $0x748] sm:$0xff]
        %v2982 = vld [vmem:[%s232 + $0x750] sm:$0xff]
        %v2983 = vld [vmem:[%s232 + $0x758] sm:$0xff]
        %v2984 = vld [vmem:[%s232 + $0x760] sm:$0xff]
        %v2985 = vld [vmem:[%s232 + $0x768] sm:$0xff]
        %v2986 = vld [vmem:[%s232 + $0x770] sm:$0xff]
        %v2987 = vld [vmem:[%s232 + $0x778] sm:$0xff]
        %v2988 = vld [vmem:[%s232 + $0x780] sm:$0xff]
        %v2989 = vld [vmem:[%s232 + $0x788] sm:$0xff]
        %v2990 = vld [vmem:[%s232 + $0x790] sm:$0xff]
        %v2991 = vld [vmem:[%s232 + $0x798] sm:$0xff]
        %v2992 = vld [vmem:[%s232 + $0x7a0] sm:$0xff]
        %v2993 = vld [vmem:[%s232 + $0x7a8] sm:$0xff]
        %v2994 = vld [vmem:[%s232 + $0x7b0] sm:$0xff]
        %v2995 = vld [vmem:[%s232 + $0x7b8] sm:$0xff]
        %v2996 = vld [vmem:[%s232 + $0x7c0] sm:$0xff]
        %v2997 = vld [vmem:[%s232 + $0x7c8] sm:$0xff]
        %v2998 = vld [vmem:[%s232 + $0x7d0] sm:$0xff]
        %v2999 = vld [vmem:[%s232 + $0x7d8] sm:$0xff]
        %v3000 = vld [vmem:[%s232 + $0x7e0] sm:$0xff]
        %v3001 = vld [vmem:[%s232 + $0x7e8] sm:$0xff]
        %v3002 = vld [vmem:[%s232 + $0x7f0] sm:$0xff]
        %v3003 = vld [vmem:[%s232 + $0x7f8] sm:$0xff]
        %v3004 = vld [vmem:[%s232 + $0x800] sm:$0xff]
        %v3005 = vld [vmem:[%s232 + $0x808] sm:$0xff]
        %v3006 = vld [vmem:[%s232 + $0x810] sm:$0xff]
        %v3007 = vld [vmem:[%s232 + $0x818] sm:$0xff]
        %v3008 = vld [vmem:[%s232 + $0x820] sm:$0xff]
        %v3009 = vld [vmem:[%s232 + $0x828] sm:$0xff]
        %v3010 = vld [vmem:[%s232 + $0x830] sm:$0xff]
        %v3011 = vld [vmem:[%s232 + $0x838] sm:$0xff]
        %v3012 = vld [vmem:[%s232 + $0x840] sm:$0xff]
        %v3013 = vld [vmem:[%s232 + $0x848] sm:$0xff]
        %v3014 = vld [vmem:[%s232 + $0x850] sm:$0xff]
        %v3015 = vld [vmem:[%s232 + $0x858] sm:$0xff]
        %v3016 = vld [vmem:[%s232 + $0x860] sm:$0xff]
        %v3017 = vld [vmem:[%s232 + $0x868] sm:$0xff]
        %v3018 = vld [vmem:[%s232 + $0x870] sm:$0xff]
        %v3019 = vld [vmem:[%s232 + $0x878] sm:$0xff]
        %v3020 = vld [vmem:[%s232 + $0x880] sm:$0xff]
        %v3021 = vld [vmem:[%s232 + $0x888] sm:$0xff]
        %v3022 = vld [vmem:[%s232 + $0x890] sm:$0xff]
        %v3023 = vld [vmem:[%s232 + $0x898] sm:$0xff]
        %v3024 = vld [vmem:[%s232 + $0x8a0] sm:$0xff]
        %v3025 = vld [vmem:[%s232 + $0x8a8] sm:$0xff]
        %v3026 = vld [vmem:[%s232 + $0x8b0] sm:$0xff]
        %v3027 = vld [vmem:[%s232 + $0x8b8] sm:$0xff]
        %v3028 = vld [vmem:[%s232 + $0x8c0] sm:$0xff]
        %v3029 = vld [vmem:[%s232 + $0x8c8] sm:$0xff]
        %v3030 = vld [vmem:[%s232 + $0x8d0] sm:$0xff]
        %v3031 = vld [vmem:[%s232 + $0x8d8] sm:$0xff]
        %v3032 = vld [vmem:[%s232 + $0x8e0] sm:$0xff]
        %v3033 = vld [vmem:[%s232 + $0x8e8] sm:$0xff]
        %v3034 = vld [vmem:[%s232 + $0x8f0] sm:$0xff]
        %v3035 = vld [vmem:[%s232 + $0x8f8] sm:$0xff]
        %v3324 = vunpack.c.l.b16 %v2748
        %v3325 = vunpack.c.h.b16 %v2748
        %v3326 = vunpack.c.l.b16 %v2749
        %v3327 = vunpack.c.h.b16 %v2749
        %v3328 = vunpack.c.l.b16 %v2750
        %v3329 = vunpack.c.h.b16 %v2750
        %v3330 = vunpack.c.l.b16 %v2751
        %v3331 = vunpack.c.h.b16 %v2751
        %v3332 = vunpack.c.l.b16 %v2752
        %v3333 = vunpack.c.h.b16 %v2752
        %v3334 = vunpack.c.l.b16 %v2753
        %v3335 = vunpack.c.h.b16 %v2753
        %v3336 = vunpack.c.l.b16 %v2754
        %v3337 = vunpack.c.h.b16 %v2754
        %v3338 = vunpack.c.l.b16 %v2755
        %v3339 = vunpack.c.h.b16 %v2755
        %v3340 = vunpack.c.l.b16 %v2756
        %v3341 = vunpack.c.h.b16 %v2756
        %v3342 = vunpack.c.l.b16 %v2757
        %v3343 = vunpack.c.h.b16 %v2757
        %v3344 = vunpack.c.l.b16 %v2758
        %v3345 = vunpack.c.h.b16 %v2758
        %v3346 = vunpack.c.l.b16 %v2759
        %v3347 = vunpack.c.h.b16 %v2759
        %v3348 = vunpack.c.l.b16 %v2760
        %v3349 = vunpack.c.h.b16 %v2760
        %v3350 = vunpack.c.l.b16 %v2761
        %v3351 = vunpack.c.h.b16 %v2761
        %v3352 = vunpack.c.l.b16 %v2762
        %v3353 = vunpack.c.h.b16 %v2762
        %v3354 = vunpack.c.l.b16 %v2763
        %v3355 = vunpack.c.h.b16 %v2763
        %v3356 = vunpack.c.l.b16 %v2764
        %v3357 = vunpack.c.h.b16 %v2764
        %v3358 = vunpack.c.l.b16 %v2765
        %v3359 = vunpack.c.h.b16 %v2765
        %v3360 = vunpack.c.l.b16 %v2766
        %v3361 = vunpack.c.h.b16 %v2766
        %v3362 = vunpack.c.l.b16 %v2767
        %v3363 = vunpack.c.h.b16 %v2767
        %v3364 = vunpack.c.l.b16 %v2768
        %v3365 = vunpack.c.h.b16 %v2768
        %v3366 = vunpack.c.l.b16 %v2769
        %v3367 = vunpack.c.h.b16 %v2769
        %v3368 = vunpack.c.l.b16 %v2770
        %v3369 = vunpack.c.h.b16 %v2770
        %v3370 = vunpack.c.l.b16 %v2771
        %v3371 = vunpack.c.h.b16 %v2771
        %v3372 = vunpack.c.l.b16 %v2772
        %v3373 = vunpack.c.h.b16 %v2772
        %v3374 = vunpack.c.l.b16 %v2773
        %v3375 = vunpack.c.h.b16 %v2773
        %v3376 = vunpack.c.l.b16 %v2774
        %v3377 = vunpack.c.h.b16 %v2774
        %v3378 = vunpack.c.l.b16 %v2775
        %v3379 = vunpack.c.h.b16 %v2775
        %v3380 = vunpack.c.l.b16 %v2776
        %v3381 = vunpack.c.h.b16 %v2776
        %v3382 = vunpack.c.l.b16 %v2777
        %v3383 = vunpack.c.h.b16 %v2777
        %v3384 = vunpack.c.l.b16 %v2778
        %v3385 = vunpack.c.h.b16 %v2778
        %v3386 = vunpack.c.l.b16 %v2779
        %v3387 = vunpack.c.h.b16 %v2779
        %v3388 = vunpack.c.l.b16 %v2780
        %v3389 = vunpack.c.h.b16 %v2780
        %v3390 = vunpack.c.l.b16 %v2781
        %v3391 = vunpack.c.h.b16 %v2781
        %v3392 = vunpack.c.l.b16 %v2782
        %v3393 = vunpack.c.h.b16 %v2782
        %v3394 = vunpack.c.l.b16 %v2783
        %v3395 = vunpack.c.h.b16 %v2783
        %v3396 = vunpack.c.l.b16 %v2784
        %v3397 = vunpack.c.h.b16 %v2784
        %v3398 = vunpack.c.l.b16 %v2785
        %v3399 = vunpack.c.h.b16 %v2785
        %v3400 = vunpack.c.l.b16 %v2786
        %v3401 = vunpack.c.h.b16 %v2786
        %v3402 = vunpack.c.l.b16 %v2787
        %v3403 = vunpack.c.h.b16 %v2787
        %v3404 = vunpack.c.l.b16 %v2788
        %v3405 = vunpack.c.h.b16 %v2788
        %v3406 = vunpack.c.l.b16 %v2789
        %v3407 = vunpack.c.h.b16 %v2789
        %v3408 = vunpack.c.l.b16 %v2790
        %v3409 = vunpack.c.h.b16 %v2790
        %v3410 = vunpack.c.l.b16 %v2791
        %v3411 = vunpack.c.h.b16 %v2791
        %v3412 = vunpack.c.l.b16 %v2792
        %v3413 = vunpack.c.h.b16 %v2792
        %v3414 = vunpack.c.l.b16 %v2793
        %v3415 = vunpack.c.h.b16 %v2793
        %v3416 = vunpack.c.l.b16 %v2794
        %v3417 = vunpack.c.h.b16 %v2794
        %v3418 = vunpack.c.l.b16 %v2795
        %v3419 = vunpack.c.h.b16 %v2795
        %v3420 = vunpack.c.l.b16 %v2796
        %v3421 = vunpack.c.h.b16 %v2796
        %v3422 = vunpack.c.l.b16 %v2797
        %v3423 = vunpack.c.h.b16 %v2797
        %v3424 = vunpack.c.l.b16 %v2798
        %v3425 = vunpack.c.h.b16 %v2798
        %v3426 = vunpack.c.l.b16 %v2799
        %v3427 = vunpack.c.h.b16 %v2799
        %v3428 = vunpack.c.l.b16 %v2800
        %v3429 = vunpack.c.h.b16 %v2800
        %v3430 = vunpack.c.l.b16 %v2801
        %v3431 = vunpack.c.h.b16 %v2801
        %v3432 = vunpack.c.l.b16 %v2802
        %v3433 = vunpack.c.h.b16 %v2802
        %v3434 = vunpack.c.l.b16 %v2803
        %v3435 = vunpack.c.h.b16 %v2803
        %v3436 = vunpack.c.l.b16 %v2804
        %v3437 = vunpack.c.h.b16 %v2804
        %v3438 = vunpack.c.l.b16 %v2805
        %v3439 = vunpack.c.h.b16 %v2805
        %v3440 = vunpack.c.l.b16 %v2806
        %v3441 = vunpack.c.h.b16 %v2806
        %v3442 = vunpack.c.l.b16 %v2807
        %v3443 = vunpack.c.h.b16 %v2807
        %v3444 = vunpack.c.l.b16 %v2808
        %v3445 = vunpack.c.h.b16 %v2808
        %v3446 = vunpack.c.l.b16 %v2809
        %v3447 = vunpack.c.h.b16 %v2809
        %v3448 = vunpack.c.l.b16 %v2810
        %v3449 = vunpack.c.h.b16 %v2810
        %v3450 = vunpack.c.l.b16 %v2811
        %v3451 = vunpack.c.h.b16 %v2811
        %v3452 = vunpack.c.l.b16 %v2812
        %v3453 = vunpack.c.h.b16 %v2812
        %v3454 = vunpack.c.l.b16 %v2813
        %v3455 = vunpack.c.h.b16 %v2813
        %v3456 = vunpack.c.l.b16 %v2814
        %v3457 = vunpack.c.h.b16 %v2814
        %v3458 = vunpack.c.l.b16 %v2815
        %v3459 = vunpack.c.h.b16 %v2815
        %v3460 = vunpack.c.l.b16 %v2816
        %v3461 = vunpack.c.h.b16 %v2816
        %v3462 = vunpack.c.l.b16 %v2817
        %v3463 = vunpack.c.h.b16 %v2817
        %v3464 = vunpack.c.l.b16 %v2818
        %v3465 = vunpack.c.h.b16 %v2818
        %v3466 = vunpack.c.l.b16 %v2819
        %v3467 = vunpack.c.h.b16 %v2819
        %v3468 = vunpack.c.l.b16 %v2820
        %v3469 = vunpack.c.h.b16 %v2820
        %v3470 = vunpack.c.l.b16 %v2821
        %v3471 = vunpack.c.h.b16 %v2821
        %v3472 = vunpack.c.l.b16 %v2822
        %v3473 = vunpack.c.h.b16 %v2822
        %v3474 = vunpack.c.l.b16 %v2823
        %v3475 = vunpack.c.h.b16 %v2823
        %v3476 = vunpack.c.l.b16 %v2824
        %v3477 = vunpack.c.h.b16 %v2824
        %v3478 = vunpack.c.l.b16 %v2825
        %v3479 = vunpack.c.h.b16 %v2825
        %v3480 = vunpack.c.l.b16 %v2826
        %v3481 = vunpack.c.h.b16 %v2826
        %v3482 = vunpack.c.l.b16 %v2827
        %v3483 = vunpack.c.h.b16 %v2827
        %v3484 = vunpack.c.l.b16 %v2828
        %v3485 = vunpack.c.h.b16 %v2828
        %v3486 = vunpack.c.l.b16 %v2829
        %v3487 = vunpack.c.h.b16 %v2829
        %v3488 = vunpack.c.l.b16 %v2830
        %v3489 = vunpack.c.h.b16 %v2830
        %v3490 = vunpack.c.l.b16 %v2831
        %v3491 = vunpack.c.h.b16 %v2831
        %v3492 = vunpack.c.l.b16 %v2832
        %v3493 = vunpack.c.h.b16 %v2832
        %v3494 = vunpack.c.l.b16 %v2833
        %v3495 = vunpack.c.h.b16 %v2833
        %v3496 = vunpack.c.l.b16 %v2834
        %v3497 = vunpack.c.h.b16 %v2834
        %v3498 = vunpack.c.l.b16 %v2835
        %v3499 = vunpack.c.h.b16 %v2835
        %v3500 = vunpack.c.l.b16 %v2836
        %v3501 = vunpack.c.h.b16 %v2836
        %v3502 = vunpack.c.l.b16 %v2837
        %v3503 = vunpack.c.h.b16 %v2837
        %v3504 = vunpack.c.l.b16 %v2838
        %v3505 = vunpack.c.h.b16 %v2838
        %v3506 = vunpack.c.l.b16 %v2839
        %v3507 = vunpack.c.h.b16 %v2839
        %v3508 = vunpack.c.l.b16 %v2840
        %v3509 = vunpack.c.h.b16 %v2840
        %v3510 = vunpack.c.l.b16 %v2841
        %v3511 = vunpack.c.h.b16 %v2841
        %v3512 = vunpack.c.l.b16 %v2842
        %v3513 = vunpack.c.h.b16 %v2842
        %v3514 = vunpack.c.l.b16 %v2843
        %v3515 = vunpack.c.h.b16 %v2843
        %v3516 = vunpack.c.l.b16 %v2844
        %v3517 = vunpack.c.h.b16 %v2844
        %v3518 = vunpack.c.l.b16 %v2845
        %v3519 = vunpack.c.h.b16 %v2845
        %v3520 = vunpack.c.l.b16 %v2846
        %v3521 = vunpack.c.h.b16 %v2846
        %v3522 = vunpack.c.l.b16 %v2847
        %v3523 = vunpack.c.h.b16 %v2847
        %v3524 = vunpack.c.l.b16 %v2848
        %v3525 = vunpack.c.h.b16 %v2848
        %v3526 = vunpack.c.l.b16 %v2849
        %v3527 = vunpack.c.h.b16 %v2849
        %v3528 = vunpack.c.l.b16 %v2850
        %v3529 = vunpack.c.h.b16 %v2850
        %v3530 = vunpack.c.l.b16 %v2851
        %v3531 = vunpack.c.h.b16 %v2851
        %v3532 = vunpack.c.l.b16 %v2852
        %v3533 = vunpack.c.h.b16 %v2852
        %v3534 = vunpack.c.l.b16 %v2853
        %v3535 = vunpack.c.h.b16 %v2853
        %v3536 = vunpack.c.l.b16 %v2854
        %v3537 = vunpack.c.h.b16 %v2854
        %v3538 = vunpack.c.l.b16 %v2855
        %v3539 = vunpack.c.h.b16 %v2855
        %v3540 = vunpack.c.l.b16 %v2856
        %v3541 = vunpack.c.h.b16 %v2856
        %v3542 = vunpack.c.l.b16 %v2857
        %v3543 = vunpack.c.h.b16 %v2857
        %v3544 = vunpack.c.l.b16 %v2858
        %v3545 = vunpack.c.h.b16 %v2858
        %v3546 = vunpack.c.l.b16 %v2859
        %v3547 = vunpack.c.h.b16 %v2859
        %v3548 = vunpack.c.l.b16 %v2860
        %v3549 = vunpack.c.h.b16 %v2860
        %v3550 = vunpack.c.l.b16 %v2861
        %v3551 = vunpack.c.h.b16 %v2861
        %v3552 = vunpack.c.l.b16 %v2862
        %v3553 = vunpack.c.h.b16 %v2862
        %v3554 = vunpack.c.l.b16 %v2863
        %v3555 = vunpack.c.h.b16 %v2863
        %v3556 = vunpack.c.l.b16 %v2864
        %v3557 = vunpack.c.h.b16 %v2864
        %v3558 = vunpack.c.l.b16 %v2865
        %v3559 = vunpack.c.h.b16 %v2865
        %v3560 = vunpack.c.l.b16 %v2866
        %v3561 = vunpack.c.h.b16 %v2866
        %v3562 = vunpack.c.l.b16 %v2867
        %v3563 = vunpack.c.h.b16 %v2867
        %v3564 = vunpack.c.l.b16 %v2868
        %v3565 = vunpack.c.h.b16 %v2868
        %v3566 = vunpack.c.l.b16 %v2869
        %v3567 = vunpack.c.h.b16 %v2869
        %v3568 = vunpack.c.l.b16 %v2870
        %v3569 = vunpack.c.h.b16 %v2870
        %v3570 = vunpack.c.l.b16 %v2871
        %v3571 = vunpack.c.h.b16 %v2871
        %v3572 = vunpack.c.l.b16 %v2872
        %v3573 = vunpack.c.h.b16 %v2872
        %v3574 = vunpack.c.l.b16 %v2873
        %v3575 = vunpack.c.h.b16 %v2873
        %v3576 = vunpack.c.l.b16 %v2874
        %v3577 = vunpack.c.h.b16 %v2874
        %v3578 = vunpack.c.l.b16 %v2875
        %v3579 = vunpack.c.h.b16 %v2875
        %v3580 = vunpack.c.l.b16 %v2876
        %v3581 = vunpack.c.h.b16 %v2876
        %v3582 = vunpack.c.l.b16 %v2877
        %v3583 = vunpack.c.h.b16 %v2877
        %v3584 = vunpack.c.l.b16 %v2878
        %v3585 = vunpack.c.h.b16 %v2878
        %v3586 = vunpack.c.l.b16 %v2879
        %v3587 = vunpack.c.h.b16 %v2879
        %v3588 = vunpack.c.l.b16 %v2880
        %v3589 = vunpack.c.h.b16 %v2880
        %v3590 = vunpack.c.l.b16 %v2881
        %v3591 = vunpack.c.h.b16 %v2881
        %v3592 = vunpack.c.l.b16 %v2882
        %v3593 = vunpack.c.h.b16 %v2882
        %v3594 = vunpack.c.l.b16 %v2883
        %v3595 = vunpack.c.h.b16 %v2883
        %v3596 = vunpack.c.l.b16 %v2884
        %v3597 = vunpack.c.h.b16 %v2884
        %v3598 = vunpack.c.l.b16 %v2885
        %v3599 = vunpack.c.h.b16 %v2885
        %v3600 = vunpack.c.l.b16 %v2886
        %v3601 = vunpack.c.h.b16 %v2886
        %v3602 = vunpack.c.l.b16 %v2887
        %v3603 = vunpack.c.h.b16 %v2887
        %v3604 = vunpack.c.l.b16 %v2888
        %v3605 = vunpack.c.h.b16 %v2888
        %v3606 = vunpack.c.l.b16 %v2889
        %v3607 = vunpack.c.h.b16 %v2889
        %v3608 = vunpack.c.l.b16 %v2890
        %v3609 = vunpack.c.h.b16 %v2890
        %v3610 = vunpack.c.l.b16 %v2891
        %v3611 = vunpack.c.h.b16 %v2891
        %v3612 = vunpack.c.l.b16 %v2892
        %v3613 = vunpack.c.h.b16 %v2892
        %v3614 = vunpack.c.l.b16 %v2893
        %v3615 = vunpack.c.h.b16 %v2893
        %v3616 = vunpack.c.l.b16 %v2894
        %v3617 = vunpack.c.h.b16 %v2894
        %v3618 = vunpack.c.l.b16 %v2895
        %v3619 = vunpack.c.h.b16 %v2895
        %v3620 = vunpack.c.l.b16 %v2896
        %v3621 = vunpack.c.h.b16 %v2896
        %v3622 = vunpack.c.l.b16 %v2897
        %v3623 = vunpack.c.h.b16 %v2897
        %v3624 = vunpack.c.l.b16 %v2898
        %v3625 = vunpack.c.h.b16 %v2898
        %v3626 = vunpack.c.l.b16 %v2899
        %v3627 = vunpack.c.h.b16 %v2899
        %v3628 = vunpack.c.l.b16 %v2900
        %v3629 = vunpack.c.h.b16 %v2900
        %v3630 = vunpack.c.l.b16 %v2901
        %v3631 = vunpack.c.h.b16 %v2901
        %v3632 = vunpack.c.l.b16 %v2902
        %v3633 = vunpack.c.h.b16 %v2902
        %v3634 = vunpack.c.l.b16 %v2903
        %v3635 = vunpack.c.h.b16 %v2903
        %v3636 = vunpack.c.l.b16 %v2904
        %v3637 = vunpack.c.h.b16 %v2904
        %v3638 = vunpack.c.l.b16 %v2905
        %v3639 = vunpack.c.h.b16 %v2905
        %v3640 = vunpack.c.l.b16 %v2906
        %v3641 = vunpack.c.h.b16 %v2906
        %v3642 = vunpack.c.l.b16 %v2907
        %v3643 = vunpack.c.h.b16 %v2907
        %v3644 = vunpack.c.l.b16 %v2908
        %v3645 = vunpack.c.h.b16 %v2908
        %v3646 = vunpack.c.l.b16 %v2909
        %v3647 = vunpack.c.h.b16 %v2909
        %v3648 = vunpack.c.l.b16 %v2910
        %v3649 = vunpack.c.h.b16 %v2910
        %v3650 = vunpack.c.l.b16 %v2911
        %v3651 = vunpack.c.h.b16 %v2911
        %v3652 = vunpack.c.l.b16 %v2912
        %v3653 = vunpack.c.h.b16 %v2912
        %v3654 = vunpack.c.l.b16 %v2913
        %v3655 = vunpack.c.h.b16 %v2913
        %v3656 = vunpack.c.l.b16 %v2914
        %v3657 = vunpack.c.h.b16 %v2914
        %v3658 = vunpack.c.l.b16 %v2915
        %v3659 = vunpack.c.h.b16 %v2915
        %v3660 = vunpack.c.l.b16 %v2916
        %v3661 = vunpack.c.h.b16 %v2916
        %v3662 = vunpack.c.l.b16 %v2917
        %v3663 = vunpack.c.h.b16 %v2917
        %v3664 = vunpack.c.l.b16 %v2918
        %v3665 = vunpack.c.h.b16 %v2918
        %v3666 = vunpack.c.l.b16 %v2919
        %v3667 = vunpack.c.h.b16 %v2919
        %v3668 = vunpack.c.l.b16 %v2920
        %v3669 = vunpack.c.h.b16 %v2920
        %v3670 = vunpack.c.l.b16 %v2921
        %v3671 = vunpack.c.h.b16 %v2921
        %v3672 = vunpack.c.l.b16 %v2922
        %v3673 = vunpack.c.h.b16 %v2922
        %v3674 = vunpack.c.l.b16 %v2923
        %v3675 = vunpack.c.h.b16 %v2923
        %v3676 = vunpack.c.l.b16 %v2924
        %v3677 = vunpack.c.h.b16 %v2924
        %v3678 = vunpack.c.l.b16 %v2925
        %v3679 = vunpack.c.h.b16 %v2925
        %v3680 = vunpack.c.l.b16 %v2926
        %v3681 = vunpack.c.h.b16 %v2926
        %v3682 = vunpack.c.l.b16 %v2927
        %v3683 = vunpack.c.h.b16 %v2927
        %v3684 = vunpack.c.l.b16 %v2928
        %v3685 = vunpack.c.h.b16 %v2928
        %v3686 = vunpack.c.l.b16 %v2929
        %v3687 = vunpack.c.h.b16 %v2929
        %v3688 = vunpack.c.l.b16 %v2930
        %v3689 = vunpack.c.h.b16 %v2930
        %v3690 = vunpack.c.l.b16 %v2931
        %v3691 = vunpack.c.h.b16 %v2931
        %v3692 = vunpack.c.l.b16 %v2932
        %v3693 = vunpack.c.h.b16 %v2932
        %v3694 = vunpack.c.l.b16 %v2933
        %v3695 = vunpack.c.h.b16 %v2933
        %v3696 = vunpack.c.l.b16 %v2934
        %v3697 = vunpack.c.h.b16 %v2934
        %v3698 = vunpack.c.l.b16 %v2935
        %v3699 = vunpack.c.h.b16 %v2935
        %v3700 = vunpack.c.l.b16 %v2936
        %v3701 = vunpack.c.h.b16 %v2936
        %v3702 = vunpack.c.l.b16 %v2937
        %v3703 = vunpack.c.h.b16 %v2937
        %v3704 = vunpack.c.l.b16 %v2938
        %v3705 = vunpack.c.h.b16 %v2938
        %v3706 = vunpack.c.l.b16 %v2939
        %v3707 = vunpack.c.h.b16 %v2939
        %v3708 = vunpack.c.l.b16 %v2940
        %v3709 = vunpack.c.h.b16 %v2940
        %v3710 = vunpack.c.l.b16 %v2941
        %v3711 = vunpack.c.h.b16 %v2941
        %v3712 = vunpack.c.l.b16 %v2942
        %v3713 = vunpack.c.h.b16 %v2942
        %v3714 = vunpack.c.l.b16 %v2943
        %v3715 = vunpack.c.h.b16 %v2943
        %v3716 = vunpack.c.l.b16 %v2944
        %v3717 = vunpack.c.h.b16 %v2944
        %v3718 = vunpack.c.l.b16 %v2945
        %v3719 = vunpack.c.h.b16 %v2945
        %v3720 = vunpack.c.l.b16 %v2946
        %v3721 = vunpack.c.h.b16 %v2946
        %v3722 = vunpack.c.l.b16 %v2947
        %v3723 = vunpack.c.h.b16 %v2947
        %v3724 = vunpack.c.l.b16 %v2948
        %v3725 = vunpack.c.h.b16 %v2948
        %v3726 = vunpack.c.l.b16 %v2949
        %v3727 = vunpack.c.h.b16 %v2949
        %v3728 = vunpack.c.l.b16 %v2950
        %v3729 = vunpack.c.h.b16 %v2950
        %v3730 = vunpack.c.l.b16 %v2951
        %v3731 = vunpack.c.h.b16 %v2951
        %v3732 = vunpack.c.l.b16 %v2952
        %v3733 = vunpack.c.h.b16 %v2952
        %v3734 = vunpack.c.l.b16 %v2953
        %v3735 = vunpack.c.h.b16 %v2953
        %v3736 = vunpack.c.l.b16 %v2954
        %v3737 = vunpack.c.h.b16 %v2954
        %v3738 = vunpack.c.l.b16 %v2955
        %v3739 = vunpack.c.h.b16 %v2955
        %v3740 = vunpack.c.l.b16 %v2956
        %v3741 = vunpack.c.h.b16 %v2956
        %v3742 = vunpack.c.l.b16 %v2957
        %v3743 = vunpack.c.h.b16 %v2957
        %v3744 = vunpack.c.l.b16 %v2958
        %v3745 = vunpack.c.h.b16 %v2958
        %v3746 = vunpack.c.l.b16 %v2959
        %v3747 = vunpack.c.h.b16 %v2959
        %v3748 = vunpack.c.l.b16 %v2960
        %v3749 = vunpack.c.h.b16 %v2960
        %v3750 = vunpack.c.l.b16 %v2961
        %v3751 = vunpack.c.h.b16 %v2961
        %v3752 = vunpack.c.l.b16 %v2962
        %v3753 = vunpack.c.h.b16 %v2962
        %v3754 = vunpack.c.l.b16 %v2963
        %v3755 = vunpack.c.h.b16 %v2963
        %v3756 = vunpack.c.l.b16 %v2964
        %v3757 = vunpack.c.h.b16 %v2964
        %v3758 = vunpack.c.l.b16 %v2965
        %v3759 = vunpack.c.h.b16 %v2965
        %v3760 = vunpack.c.l.b16 %v2966
        %v3761 = vunpack.c.h.b16 %v2966
        %v3762 = vunpack.c.l.b16 %v2967
        %v3763 = vunpack.c.h.b16 %v2967
        %v3764 = vunpack.c.l.b16 %v2968
        %v3765 = vunpack.c.h.b16 %v2968
        %v3766 = vunpack.c.l.b16 %v2969
        %v3767 = vunpack.c.h.b16 %v2969
        %v3768 = vunpack.c.l.b16 %v2970
        %v3769 = vunpack.c.h.b16 %v2970
        %v3770 = vunpack.c.l.b16 %v2971
        %v3771 = vunpack.c.h.b16 %v2971
        %v3772 = vunpack.c.l.b16 %v2972
        %v3773 = vunpack.c.h.b16 %v2972
        %v3774 = vunpack.c.l.b16 %v2973
        %v3775 = vunpack.c.h.b16 %v2973
        %v3776 = vunpack.c.l.b16 %v2974
        %v3777 = vunpack.c.h.b16 %v2974
        %v3778 = vunpack.c.l.b16 %v2975
        %v3779 = vunpack.c.h.b16 %v2975
        %v3780 = vunpack.c.l.b16 %v2976
        %v3781 = vunpack.c.h.b16 %v2976
        %v3782 = vunpack.c.l.b16 %v2977
        %v3783 = vunpack.c.h.b16 %v2977
        %v3784 = vunpack.c.l.b16 %v2978
        %v3785 = vunpack.c.h.b16 %v2978
        %v3786 = vunpack.c.l.b16 %v2979
        %v3787 = vunpack.c.h.b16 %v2979
        %v3788 = vunpack.c.l.b16 %v2980
        %v3789 = vunpack.c.h.b16 %v2980
        %v3790 = vunpack.c.l.b16 %v2981
        %v3791 = vunpack.c.h.b16 %v2981
        %v3792 = vunpack.c.l.b16 %v2982
        %v3793 = vunpack.c.h.b16 %v2982
        %v3794 = vunpack.c.l.b16 %v2983
        %v3795 = vunpack.c.h.b16 %v2983
        %v3796 = vunpack.c.l.b16 %v2984
        %v3797 = vunpack.c.h.b16 %v2984
        %v3798 = vunpack.c.l.b16 %v2985
        %v3799 = vunpack.c.h.b16 %v2985
        %v3800 = vunpack.c.l.b16 %v2986
        %v3801 = vunpack.c.h.b16 %v2986
        %v3802 = vunpack.c.l.b16 %v2987
        %v3803 = vunpack.c.h.b16 %v2987
        %v3804 = vunpack.c.l.b16 %v2988
        %v3805 = vunpack.c.h.b16 %v2988
        %v3806 = vunpack.c.l.b16 %v2989
        %v3807 = vunpack.c.h.b16 %v2989
        %v3808 = vunpack.c.l.b16 %v2990
        %v3809 = vunpack.c.h.b16 %v2990
        %v3810 = vunpack.c.l.b16 %v2991
        %v3811 = vunpack.c.h.b16 %v2991
        %v3812 = vunpack.c.l.b16 %v2992
        %v3813 = vunpack.c.h.b16 %v2992
        %v3814 = vunpack.c.l.b16 %v2993
        %v3815 = vunpack.c.h.b16 %v2993
        %v3816 = vunpack.c.l.b16 %v2994
        %v3817 = vunpack.c.h.b16 %v2994
        %v3818 = vunpack.c.l.b16 %v2995
        %v3819 = vunpack.c.h.b16 %v2995
        %v3820 = vunpack.c.l.b16 %v2996
        %v3821 = vunpack.c.h.b16 %v2996
        %v3822 = vunpack.c.l.b16 %v2997
        %v3823 = vunpack.c.h.b16 %v2997
        %v3824 = vunpack.c.l.b16 %v2998
        %v3825 = vunpack.c.h.b16 %v2998
        %v3826 = vunpack.c.l.b16 %v2999
        %v3827 = vunpack.c.h.b16 %v2999
        %v3828 = vunpack.c.l.b16 %v3000
        %v3829 = vunpack.c.h.b16 %v3000
        %v3830 = vunpack.c.l.b16 %v3001
        %v3831 = vunpack.c.h.b16 %v3001
        %v3832 = vunpack.c.l.b16 %v3002
        %v3833 = vunpack.c.h.b16 %v3002
        %v3834 = vunpack.c.l.b16 %v3003
        %v3835 = vunpack.c.h.b16 %v3003
        %v3836 = vunpack.c.l.b16 %v3004
        %v3837 = vunpack.c.h.b16 %v3004
        %v3838 = vunpack.c.l.b16 %v3005
        %v3839 = vunpack.c.h.b16 %v3005
        %v3840 = vunpack.c.l.b16 %v3006
        %v3841 = vunpack.c.h.b16 %v3006
        %v3842 = vunpack.c.l.b16 %v3007
        %v3843 = vunpack.c.h.b16 %v3007
        %v3844 = vunpack.c.l.b16 %v3008
        %v3845 = vunpack.c.h.b16 %v3008
        %v3846 = vunpack.c.l.b16 %v3009
        %v3847 = vunpack.c.h.b16 %v3009
        %v3848 = vunpack.c.l.b16 %v3010
        %v3849 = vunpack.c.h.b16 %v3010
        %v3850 = vunpack.c.l.b16 %v3011
        %v3851 = vunpack.c.h.b16 %v3011
        %v3852 = vunpack.c.l.b16 %v3012
        %v3853 = vunpack.c.h.b16 %v3012
        %v3854 = vunpack.c.l.b16 %v3013
        %v3855 = vunpack.c.h.b16 %v3013
        %v3856 = vunpack.c.l.b16 %v3014
        %v3857 = vunpack.c.h.b16 %v3014
        %v3858 = vunpack.c.l.b16 %v3015
        %v3859 = vunpack.c.h.b16 %v3015
        %v3860 = vunpack.c.l.b16 %v3016
        %v3861 = vunpack.c.h.b16 %v3016
        %v3862 = vunpack.c.l.b16 %v3017
        %v3863 = vunpack.c.h.b16 %v3017
        %v3864 = vunpack.c.l.b16 %v3018
        %v3865 = vunpack.c.h.b16 %v3018
        %v3866 = vunpack.c.l.b16 %v3019
        %v3867 = vunpack.c.h.b16 %v3019
        %v3868 = vunpack.c.l.b16 %v3020
        %v3869 = vunpack.c.h.b16 %v3020
        %v3870 = vunpack.c.l.b16 %v3021
        %v3871 = vunpack.c.h.b16 %v3021
        %v3872 = vunpack.c.l.b16 %v3022
        %v3873 = vunpack.c.h.b16 %v3022
        %v3874 = vunpack.c.l.b16 %v3023
        %v3875 = vunpack.c.h.b16 %v3023
        %v3876 = vunpack.c.l.b16 %v3024
        %v3877 = vunpack.c.h.b16 %v3024
        %v3878 = vunpack.c.l.b16 %v3025
        %v3879 = vunpack.c.h.b16 %v3025
        %v3880 = vunpack.c.l.b16 %v3026
        %v3881 = vunpack.c.h.b16 %v3026
        %v3882 = vunpack.c.l.b16 %v3027
        %v3883 = vunpack.c.h.b16 %v3027
        %v3884 = vunpack.c.l.b16 %v3028
        %v3885 = vunpack.c.h.b16 %v3028
        %v3886 = vunpack.c.l.b16 %v3029
        %v3887 = vunpack.c.h.b16 %v3029
        %v3888 = vunpack.c.l.b16 %v3030
        %v3889 = vunpack.c.h.b16 %v3030
        %v3890 = vunpack.c.l.b16 %v3031
        %v3891 = vunpack.c.h.b16 %v3031
        %v3892 = vunpack.c.l.b16 %v3032
        %v3893 = vunpack.c.h.b16 %v3032
        %v3894 = vunpack.c.l.b16 %v3033
        %v3895 = vunpack.c.h.b16 %v3033
        %v3896 = vunpack.c.l.b16 %v3034
        %v3897 = vunpack.c.h.b16 %v3034
        %v3898 = vunpack.c.l.b16 %v3035
        %v3899 = vunpack.c.h.b16 %v3035
        %v3900 = vpack.c.b16 %v3330, %v3324
        %v3901 = vpack.c.b16 %v3331, %v3325
        %v3902 = vpack.c.b16 %v3332, %v3326
        %v3903 = vpack.c.b16 %v3333, %v3327
        %v3904 = vpack.c.b16 %v3334, %v3328
        %v3905 = vpack.c.b16 %v3335, %v3329
        %v3906 = vpack.c.b16 %v3342, %v3336
        %v3907 = vpack.c.b16 %v3343, %v3337
        %v3908 = vpack.c.b16 %v3344, %v3338
        %v3909 = vpack.c.b16 %v3345, %v3339
        %v3910 = vpack.c.b16 %v3346, %v3340
        %v3911 = vpack.c.b16 %v3347, %v3341
        %v3912 = vpack.c.b16 %v3354, %v3348
        %v3913 = vpack.c.b16 %v3355, %v3349
        %v3914 = vpack.c.b16 %v3356, %v3350
        %v3915 = vpack.c.b16 %v3357, %v3351
        %v3916 = vpack.c.b16 %v3358, %v3352
        %v3917 = vpack.c.b16 %v3359, %v3353
        %v3918 = vpack.c.b16 %v3366, %v3360
        %v3919 = vpack.c.b16 %v3367, %v3361
        %v3920 = vpack.c.b16 %v3368, %v3362
        %v3921 = vpack.c.b16 %v3369, %v3363
        %v3922 = vpack.c.b16 %v3370, %v3364
        %v3923 = vpack.c.b16 %v3371, %v3365
        %v3924 = vpack.c.b16 %v3378, %v3372
        %v3925 = vpack.c.b16 %v3379, %v3373
        %v3926 = vpack.c.b16 %v3380, %v3374
        %v3927 = vpack.c.b16 %v3381, %v3375
        %v3928 = vpack.c.b16 %v3382, %v3376
        %v3929 = vpack.c.b16 %v3383, %v3377
        %v3930 = vpack.c.b16 %v3390, %v3384
        %v3931 = vpack.c.b16 %v3391, %v3385
        %v3932 = vpack.c.b16 %v3392, %v3386
        %v3933 = vpack.c.b16 %v3393, %v3387
        %v3934 = vpack.c.b16 %v3394, %v3388
        %v3935 = vpack.c.b16 %v3395, %v3389
        %v3936 = vpack.c.b16 %v3402, %v3396
        %v3937 = vpack.c.b16 %v3403, %v3397
        %v3938 = vpack.c.b16 %v3404, %v3398
        %v3939 = vpack.c.b16 %v3405, %v3399
        %v3940 = vpack.c.b16 %v3406, %v3400
        %v3941 = vpack.c.b16 %v3407, %v3401
        %v3942 = vpack.c.b16 %v3414, %v3408
        %v3943 = vpack.c.b16 %v3415, %v3409
        %v3944 = vpack.c.b16 %v3416, %v3410
        %v3945 = vpack.c.b16 %v3417, %v3411
        %v3946 = vpack.c.b16 %v3418, %v3412
        %v3947 = vpack.c.b16 %v3419, %v3413
        %v3948 = vpack.c.b16 %v3426, %v3420
        %v3949 = vpack.c.b16 %v3427, %v3421
        %v3950 = vpack.c.b16 %v3428, %v3422
        %v3951 = vpack.c.b16 %v3429, %v3423
        %v3952 = vpack.c.b16 %v3430, %v3424
        %v3953 = vpack.c.b16 %v3431, %v3425
        %v3954 = vpack.c.b16 %v3438, %v3432
        %v3955 = vpack.c.b16 %v3439, %v3433
        %v3956 = vpack.c.b16 %v3440, %v3434
        %v3957 = vpack.c.b16 %v3441, %v3435
        %v3958 = vpack.c.b16 %v3442, %v3436
        %v3959 = vpack.c.b16 %v3443, %v3437
        %v3960 = vpack.c.b16 %v3450, %v3444
        %v3961 = vpack.c.b16 %v3451, %v3445
        %v3962 = vpack.c.b16 %v3452, %v3446
        %v3963 = vpack.c.b16 %v3453, %v3447
        %v3964 = vpack.c.b16 %v3454, %v3448
        %v3965 = vpack.c.b16 %v3455, %v3449
        %v3966 = vpack.c.b16 %v3462, %v3456
        %v3967 = vpack.c.b16 %v3463, %v3457
        %v3968 = vpack.c.b16 %v3464, %v3458
        %v3969 = vpack.c.b16 %v3465, %v3459
        %v3970 = vpack.c.b16 %v3466, %v3460
        %v3971 = vpack.c.b16 %v3467, %v3461
        %v3972 = vpack.c.b16 %v3474, %v3468
        %v3973 = vpack.c.b16 %v3475, %v3469
        %v3974 = vpack.c.b16 %v3476, %v3470
        %v3975 = vpack.c.b16 %v3477, %v3471
        %v3976 = vpack.c.b16 %v3478, %v3472
        %v3977 = vpack.c.b16 %v3479, %v3473
        %v3978 = vpack.c.b16 %v3486, %v3480
        %v3979 = vpack.c.b16 %v3487, %v3481
        %v3980 = vpack.c.b16 %v3488, %v3482
        %v3981 = vpack.c.b16 %v3489, %v3483
        %v3982 = vpack.c.b16 %v3490, %v3484
        %v3983 = vpack.c.b16 %v3491, %v3485
        %v3984 = vpack.c.b16 %v3498, %v3492
        %v3985 = vpack.c.b16 %v3499, %v3493
        %v3986 = vpack.c.b16 %v3500, %v3494
        %v3987 = vpack.c.b16 %v3501, %v3495
        %v3988 = vpack.c.b16 %v3502, %v3496
        %v3989 = vpack.c.b16 %v3503, %v3497
        %v3990 = vpack.c.b16 %v3510, %v3504
        %v3991 = vpack.c.b16 %v3511, %v3505
        %v3992 = vpack.c.b16 %v3512, %v3506
        %v3993 = vpack.c.b16 %v3513, %v3507
        %v3994 = vpack.c.b16 %v3514, %v3508
        %v3995 = vpack.c.b16 %v3515, %v3509
        %v3996 = vpack.c.b16 %v3522, %v3516
        %v3997 = vpack.c.b16 %v3523, %v3517
        %v3998 = vpack.c.b16 %v3524, %v3518
        %v3999 = vpack.c.b16 %v3525, %v3519
        %v4000 = vpack.c.b16 %v3526, %v3520
        %v4001 = vpack.c.b16 %v3527, %v3521
        %v4002 = vpack.c.b16 %v3534, %v3528
        %v4003 = vpack.c.b16 %v3535, %v3529
        %v4004 = vpack.c.b16 %v3536, %v3530
        %v4005 = vpack.c.b16 %v3537, %v3531
        %v4006 = vpack.c.b16 %v3538, %v3532
        %v4007 = vpack.c.b16 %v3539, %v3533
        %v4008 = vpack.c.b16 %v3546, %v3540
        %v4009 = vpack.c.b16 %v3547, %v3541
        %v4010 = vpack.c.b16 %v3548, %v3542
        %v4011 = vpack.c.b16 %v3549, %v3543
        %v4012 = vpack.c.b16 %v3550, %v3544
        %v4013 = vpack.c.b16 %v3551, %v3545
        %v4014 = vpack.c.b16 %v3558, %v3552
        %v4015 = vpack.c.b16 %v3559, %v3553
        %v4016 = vpack.c.b16 %v3560, %v3554
        %v4017 = vpack.c.b16 %v3561, %v3555
        %v4018 = vpack.c.b16 %v3562, %v3556
        %v4019 = vpack.c.b16 %v3563, %v3557
        %v4020 = vpack.c.b16 %v3570, %v3564
        %v4021 = vpack.c.b16 %v3571, %v3565
        %v4022 = vpack.c.b16 %v3572, %v3566
        %v4023 = vpack.c.b16 %v3573, %v3567
        %v4024 = vpack.c.b16 %v3574, %v3568
        %v4025 = vpack.c.b16 %v3575, %v3569
        %v4026 = vpack.c.b16 %v3582, %v3576
        %v4027 = vpack.c.b16 %v3583, %v3577
        %v4028 = vpack.c.b16 %v3584, %v3578
        %v4029 = vpack.c.b16 %v3585, %v3579
        %v4030 = vpack.c.b16 %v3586, %v3580
        %v4031 = vpack.c.b16 %v3587, %v3581
        %v4032 = vpack.c.b16 %v3594, %v3588
        %v4033 = vpack.c.b16 %v3595, %v3589
        %v4034 = vpack.c.b16 %v3596, %v3590
        %v4035 = vpack.c.b16 %v3597, %v3591
        %v4036 = vpack.c.b16 %v3598, %v3592
        %v4037 = vpack.c.b16 %v3599, %v3593
        %v4038 = vpack.c.b16 %v3606, %v3600
        %v4039 = vpack.c.b16 %v3607, %v3601
        %v4040 = vpack.c.b16 %v3608, %v3602
        %v4041 = vpack.c.b16 %v3609, %v3603
        %v4042 = vpack.c.b16 %v3610, %v3604
        %v4043 = vpack.c.b16 %v3611, %v3605
        %v4044 = vpack.c.b16 %v3618, %v3612
        %v4045 = vpack.c.b16 %v3619, %v3613
        %v4046 = vpack.c.b16 %v3620, %v3614
        %v4047 = vpack.c.b16 %v3621, %v3615
        %v4048 = vpack.c.b16 %v3622, %v3616
        %v4049 = vpack.c.b16 %v3623, %v3617
        %v4050 = vpack.c.b16 %v3630, %v3624
        %v4051 = vpack.c.b16 %v3631, %v3625
        %v4052 = vpack.c.b16 %v3632, %v3626
        %v4053 = vpack.c.b16 %v3633, %v3627
        %v4054 = vpack.c.b16 %v3634, %v3628
        %v4055 = vpack.c.b16 %v3635, %v3629
        %v4056 = vpack.c.b16 %v3642, %v3636
        %v4057 = vpack.c.b16 %v3643, %v3637
        %v4058 = vpack.c.b16 %v3644, %v3638
        %v4059 = vpack.c.b16 %v3645, %v3639
        %v4060 = vpack.c.b16 %v3646, %v3640
        %v4061 = vpack.c.b16 %v3647, %v3641
        %v4062 = vpack.c.b16 %v3654, %v3648
        %v4063 = vpack.c.b16 %v3655, %v3649
        %v4064 = vpack.c.b16 %v3656, %v3650
        %v4065 = vpack.c.b16 %v3657, %v3651
        %v4066 = vpack.c.b16 %v3658, %v3652
        %v4067 = vpack.c.b16 %v3659, %v3653
        %v4068 = vpack.c.b16 %v3666, %v3660
        %v4069 = vpack.c.b16 %v3667, %v3661
        %v4070 = vpack.c.b16 %v3668, %v3662
        %v4071 = vpack.c.b16 %v3669, %v3663
        %v4072 = vpack.c.b16 %v3670, %v3664
        %v4073 = vpack.c.b16 %v3671, %v3665
        %v4074 = vpack.c.b16 %v3678, %v3672
        %v4075 = vpack.c.b16 %v3679, %v3673
        %v4076 = vpack.c.b16 %v3680, %v3674
        %v4077 = vpack.c.b16 %v3681, %v3675
        %v4078 = vpack.c.b16 %v3682, %v3676
        %v4079 = vpack.c.b16 %v3683, %v3677
        %v4080 = vpack.c.b16 %v3690, %v3684
        %v4081 = vpack.c.b16 %v3691, %v3685
        %v4082 = vpack.c.b16 %v3692, %v3686
        %v4083 = vpack.c.b16 %v3693, %v3687
        %v4084 = vpack.c.b16 %v3694, %v3688
        %v4085 = vpack.c.b16 %v3695, %v3689
        %v4086 = vpack.c.b16 %v3702, %v3696
        %v4087 = vpack.c.b16 %v3703, %v3697
        %v4088 = vpack.c.b16 %v3704, %v3698
        %v4089 = vpack.c.b16 %v3705, %v3699
        %v4090 = vpack.c.b16 %v3706, %v3700
        %v4091 = vpack.c.b16 %v3707, %v3701
        %v4092 = vpack.c.b16 %v3714, %v3708
        %v4093 = vpack.c.b16 %v3715, %v3709
        %v4094 = vpack.c.b16 %v3716, %v3710
        %v4095 = vpack.c.b16 %v3717, %v3711
        %v4096 = vpack.c.b16 %v3718, %v3712
        %v4097 = vpack.c.b16 %v3719, %v3713
        %v4098 = vpack.c.b16 %v3726, %v3720
        %v4099 = vpack.c.b16 %v3727, %v3721
        %v4100 = vpack.c.b16 %v3728, %v3722
        %v4101 = vpack.c.b16 %v3729, %v3723
        %v4102 = vpack.c.b16 %v3730, %v3724
        %v4103 = vpack.c.b16 %v3731, %v3725
        %v4104 = vpack.c.b16 %v3738, %v3732
        %v4105 = vpack.c.b16 %v3739, %v3733
        %v4106 = vpack.c.b16 %v3740, %v3734
        %v4107 = vpack.c.b16 %v3741, %v3735
        %v4108 = vpack.c.b16 %v3742, %v3736
        %v4109 = vpack.c.b16 %v3743, %v3737
        %v4110 = vpack.c.b16 %v3750, %v3744
        %v4111 = vpack.c.b16 %v3751, %v3745
        %v4112 = vpack.c.b16 %v3752, %v3746
        %v4113 = vpack.c.b16 %v3753, %v3747
        %v4114 = vpack.c.b16 %v3754, %v3748
        %v4115 = vpack.c.b16 %v3755, %v3749
        %v4116 = vpack.c.b16 %v3762, %v3756
        %v4117 = vpack.c.b16 %v3763, %v3757
        %v4118 = vpack.c.b16 %v3764, %v3758
        %v4119 = vpack.c.b16 %v3765, %v3759
        %v4120 = vpack.c.b16 %v3766, %v3760
        %v4121 = vpack.c.b16 %v3767, %v3761
        %v4122 = vpack.c.b16 %v3774, %v3768
        %v4123 = vpack.c.b16 %v3775, %v3769
        %v4124 = vpack.c.b16 %v3776, %v3770
        %v4125 = vpack.c.b16 %v3777, %v3771
        %v4126 = vpack.c.b16 %v3778, %v3772
        %v4127 = vpack.c.b16 %v3779, %v3773
        %v4128 = vpack.c.b16 %v3786, %v3780
        %v4129 = vpack.c.b16 %v3787, %v3781
        %v4130 = vpack.c.b16 %v3788, %v3782
        %v4131 = vpack.c.b16 %v3789, %v3783
        %v4132 = vpack.c.b16 %v3790, %v3784
        %v4133 = vpack.c.b16 %v3791, %v3785
        %v4134 = vpack.c.b16 %v3798, %v3792
        %v4135 = vpack.c.b16 %v3799, %v3793
        %v4136 = vpack.c.b16 %v3800, %v3794
        %v4137 = vpack.c.b16 %v3801, %v3795
        %v4138 = vpack.c.b16 %v3802, %v3796
        %v4139 = vpack.c.b16 %v3803, %v3797
        %v4140 = vpack.c.b16 %v3810, %v3804
        %v4141 = vpack.c.b16 %v3811, %v3805
        %v4142 = vpack.c.b16 %v3812, %v3806
        %v4143 = vpack.c.b16 %v3813, %v3807
        %v4144 = vpack.c.b16 %v3814, %v3808
        %v4145 = vpack.c.b16 %v3815, %v3809
        %v4146 = vpack.c.b16 %v3822, %v3816
        %v4147 = vpack.c.b16 %v3823, %v3817
        %v4148 = vpack.c.b16 %v3824, %v3818
        %v4149 = vpack.c.b16 %v3825, %v3819
        %v4150 = vpack.c.b16 %v3826, %v3820
        %v4151 = vpack.c.b16 %v3827, %v3821
        %v4152 = vpack.c.b16 %v3834, %v3828
        %v4153 = vpack.c.b16 %v3835, %v3829
        %v4154 = vpack.c.b16 %v3836, %v3830
        %v4155 = vpack.c.b16 %v3837, %v3831
        %v4156 = vpack.c.b16 %v3838, %v3832
        %v4157 = vpack.c.b16 %v3839, %v3833
        %v4158 = vpack.c.b16 %v3846, %v3840
        %v4159 = vpack.c.b16 %v3847, %v3841
        %v4160 = vpack.c.b16 %v3848, %v3842
        %v4161 = vpack.c.b16 %v3849, %v3843
        %v4162 = vpack.c.b16 %v3850, %v3844
        %v4163 = vpack.c.b16 %v3851, %v3845
        %v4164 = vpack.c.b16 %v3858, %v3852
        %v4165 = vpack.c.b16 %v3859, %v3853
        %v4166 = vpack.c.b16 %v3860, %v3854
        %v4167 = vpack.c.b16 %v3861, %v3855
        %v4168 = vpack.c.b16 %v3862, %v3856
        %v4169 = vpack.c.b16 %v3863, %v3857
        %v4170 = vpack.c.b16 %v3870, %v3864
        %v4171 = vpack.c.b16 %v3871, %v3865
        %v4172 = vpack.c.b16 %v3872, %v3866
        %v4173 = vpack.c.b16 %v3873, %v3867
        %v4174 = vpack.c.b16 %v3874, %v3868
        %v4175 = vpack.c.b16 %v3875, %v3869
        %v4176 = vpack.c.b16 %v3882, %v3876
        %v4177 = vpack.c.b16 %v3883, %v3877
        %v4178 = vpack.c.b16 %v3884, %v3878
        %v4179 = vpack.c.b16 %v3885, %v3879
        %v4180 = vpack.c.b16 %v3886, %v3880
        %v4181 = vpack.c.b16 %v3887, %v3881
        %v4182 = vpack.c.b16 %v3894, %v3888
        %v4183 = vpack.c.b16 %v3895, %v3889
        %v4184 = vpack.c.b16 %v3896, %v3890
        %v4185 = vpack.c.b16 %v3897, %v3891
        %v4186 = vpack.c.b16 %v3898, %v3892
        %v4187 = vpack.c.b16 %v3899, %v3893
        %4476 = vmatprep.subr.bf16.mxu0 %v3943
        %4477 = vmatpush1.bf16.msra.mxu0 %v3942
        %4478 = vmatprep.subr.bf16.mxu0 %v3937
        %4479 = vmatpush1.bf16.msra.mxu0 %v3936
        %4480 = vmatprep.subr.bf16.mxu0 %v3931
        %4481 = vmatpush1.bf16.msra.mxu0 %v3930
        %4482 = vmatprep.subr.bf16.mxu0 %v3925
        %4483 = vmatpush1.bf16.msra.mxu0 %v3924
        %4484 = vmatprep.subr.bf16.mxu0 %v3919
        %4485 = vmatpush1.bf16.msra.mxu0 %v3918
        %4486 = vmatprep.subr.bf16.mxu0 %v3913
        %4487 = vmatpush1.bf16.msra.mxu0 %v3912
        %4488 = vmatprep.subr.bf16.mxu0 %v3907
        %4489 = vmatpush1.bf16.msra.mxu0 %v3906
        %4490 = vmatprep.subr.bf16.mxu0 %v3901
        %4491 = vmatpush1.bf16.msra.mxu0 %v3900
        %4492 = vmatprep.subr.bf16.mxu0 %v3991
        %4493 = vmatpush2.bf16.msra.mxu0 %v3990
        %4494 = vmatprep.subr.bf16.mxu0 %v3985
        %4495 = vmatpush2.bf16.msra.mxu0 %v3984
        %4496 = vmatprep.subr.bf16.mxu0 %v3979
        %4497 = vmatpush2.bf16.msra.mxu0 %v3978
        %4498 = vmatprep.subr.bf16.mxu0 %v3973
        %4499 = vmatpush2.bf16.msra.mxu0 %v3972
        %4500 = vmatprep.subr.bf16.mxu0 %v3967
        %4501 = vmatpush2.bf16.msra.mxu0 %v3966
        %4502 = vmatprep.subr.bf16.mxu0 %v3961
        %4503 = vmatpush2.bf16.msra.mxu0 %v3960
        %4504 = vmatprep.subr.bf16.mxu0 %v3955
        %4505 = vmatpush2.bf16.msra.mxu0 %v3954
        %4506 = vmatprep.subr.bf16.mxu0 %v3949
        %4507 = vmatpush2.bf16.msra.mxu0 %v3948
        %4508 = vmatprep.mubr.bf16.mxu0 %v2317
        %4509 = vmatmul.mubr.bf16.gmra.mxu0 %v2316
        %v4510 = vpop.f32.mrf.mxu0
        %v4511 = vadd.f32 0.0, %v4510
        %v4512 = vpop.f32.mrf.mxu0
        %v4513 = vadd.f32 0.0, %v4512
        %v4514 = vpop.f32.mrf.mxu0
        %v4515 = vadd.f32 0.0, %v4514
        %v4516 = vpop.f32.mrf.mxu0
        %v4517 = vadd.f32 0.0, %v4516
        %4518 = vmatprep.mubr.bf16.mxu0 %v2323
        %4519 = vmatmul.mubr.bf16.gmra.mxu0 %v2322
        %v4520 = vpop.f32.mrf.mxu0
        %v4521 = vadd.f32 0.0, %v4520
        %v4522 = vpop.f32.mrf.mxu0
        %v4523 = vadd.f32 0.0, %v4522
        %v4524 = vpop.f32.mrf.mxu0
        %v4525 = vadd.f32 0.0, %v4524
        %v4526 = vpop.f32.mrf.mxu0
        %v4527 = vadd.f32 0.0, %v4526
        %4528 = vmatprep.mubr.bf16.mxu0 %v2329
        %4529 = vmatmul.mubr.bf16.gmra.mxu0 %v2328
        %v4530 = vpop.f32.mrf.mxu0
        %v4531 = vadd.f32 0.0, %v4530
        %v4532 = vpop.f32.mrf.mxu0
        %v4533 = vadd.f32 0.0, %v4532
        %v4534 = vpop.f32.mrf.mxu0
        %v4535 = vadd.f32 0.0, %v4534
        %v4536 = vpop.f32.mrf.mxu0
        %v4537 = vadd.f32 0.0, %v4536
        %4538 = vmatprep.mubr.bf16.mxu0 %v2335
        %4539 = vmatmul.mubr.bf16.gmra.mxu0 %v2334
        %v4540 = vpop.f32.mrf.mxu0
        %v4541 = vadd.f32 0.0, %v4540
        %v4542 = vpop.f32.mrf.mxu0
        %v4543 = vadd.f32 0.0, %v4542
        %v4544 = vpop.f32.mrf.mxu0
        %v4545 = vadd.f32 0.0, %v4544
        %v4546 = vpop.f32.mrf.mxu0
        %v4547 = vadd.f32 0.0, %v4546
        %4548 = vmatprep.mubr.bf16.mxu0 %v2341
        %4549 = vmatmul.mubr.bf16.gmra.mxu0 %v2340
        %v4550 = vpop.f32.mrf.mxu0
        %v4551 = vadd.f32 0.0, %v4550
        %v4552 = vpop.f32.mrf.mxu0
        %v4553 = vadd.f32 0.0, %v4552
        %v4554 = vpop.f32.mrf.mxu0
        %v4555 = vadd.f32 0.0, %v4554
        %v4556 = vpop.f32.mrf.mxu0
        %v4557 = vadd.f32 0.0, %v4556
        %4558 = vmatprep.mubr.bf16.mxu0 %v2347
        %4559 = vmatmul.mubr.bf16.gmra.mxu0 %v2346
        %v4560 = vpop.f32.mrf.mxu0
        %v4561 = vadd.f32 0.0, %v4560
        %v4562 = vpop.f32.mrf.mxu0
        %v4563 = vadd.f32 0.0, %v4562
        %v4564 = vpop.f32.mrf.mxu0
        %v4565 = vadd.f32 0.0, %v4564
        %v4566 = vpop.f32.mrf.mxu0
        %v4567 = vadd.f32 0.0, %v4566
        %4568 = vmatprep.mubr.bf16.mxu0 %v2353
        %4569 = vmatmul.mubr.bf16.gmra.mxu0 %v2352
        %v4570 = vpop.f32.mrf.mxu0
        %v4571 = vadd.f32 0.0, %v4570
        %v4572 = vpop.f32.mrf.mxu0
        %v4573 = vadd.f32 0.0, %v4572
        %v4574 = vpop.f32.mrf.mxu0
        %v4575 = vadd.f32 0.0, %v4574
        %v4576 = vpop.f32.mrf.mxu0
        %v4577 = vadd.f32 0.0, %v4576
        %4578 = vmatprep.mubr.bf16.mxu0 %v2359
        %4579 = vmatmul.mubr.bf16.gmra.mxu0 %v2358
        %v4580 = vpop.f32.mrf.mxu0
        %v4581 = vadd.f32 0.0, %v4580
        %v4582 = vpop.f32.mrf.mxu0
        %v4583 = vadd.f32 0.0, %v4582
        %v4584 = vpop.f32.mrf.mxu0
        %v4585 = vadd.f32 0.0, %v4584
        %v4586 = vpop.f32.mrf.mxu0
        %v4587 = vadd.f32 0.0, %v4586
        %4588 = vmatprep.mubr.bf16.mxu0 %v2365
        %4589 = vmatmul.mubr.bf16.gmra.mxu0 %v2364
        %v4590 = vpop.f32.mrf.mxu0
        %v4591 = vadd.f32 0.0, %v4590
        %v4592 = vpop.f32.mrf.mxu0
        %v4593 = vadd.f32 0.0, %v4592
        %v4594 = vpop.f32.mrf.mxu0
        %v4595 = vadd.f32 0.0, %v4594
        %v4596 = vpop.f32.mrf.mxu0
        %v4597 = vadd.f32 0.0, %v4596
        %4598 = vmatprep.mubr.bf16.mxu0 %v2371
        %4599 = vmatmul.mubr.bf16.gmra.mxu0 %v2370
        %v4600 = vpop.f32.mrf.mxu0
        %v4601 = vadd.f32 0.0, %v4600
        %v4602 = vpop.f32.mrf.mxu0
        %v4603 = vadd.f32 0.0, %v4602
        %v4604 = vpop.f32.mrf.mxu0
        %v4605 = vadd.f32 0.0, %v4604
        %v4606 = vpop.f32.mrf.mxu0
        %v4607 = vadd.f32 0.0, %v4606
        %4608 = vmatprep.mubr.bf16.mxu0 %v2377
        %4609 = vmatmul.mubr.bf16.gmra.mxu0 %v2376
        %v4610 = vpop.f32.mrf.mxu0
        %v4611 = vadd.f32 0.0, %v4610
        %v4612 = vpop.f32.mrf.mxu0
        %v4613 = vadd.f32 0.0, %v4612
        %v4614 = vpop.f32.mrf.mxu0
        %v4615 = vadd.f32 0.0, %v4614
        %v4616 = vpop.f32.mrf.mxu0
        %v4617 = vadd.f32 0.0, %v4616
        %4618 = vmatprep.mubr.bf16.mxu0 %v2383
        %4619 = vmatmul.mubr.bf16.gmra.mxu0 %v2382
        %v4620 = vpop.f32.mrf.mxu0
        %v4621 = vadd.f32 0.0, %v4620
        %v4622 = vpop.f32.mrf.mxu0
        %v4623 = vadd.f32 0.0, %v4622
        %v4624 = vpop.f32.mrf.mxu0
        %v4625 = vadd.f32 0.0, %v4624
        %v4626 = vpop.f32.mrf.mxu0
        %v4627 = vadd.f32 0.0, %v4626
        %4628 = vmatprep.mubr.bf16.mxu0 %v2389
        %4629 = vmatmul.mubr.bf16.gmra.mxu0 %v2388
        %v4630 = vpop.f32.mrf.mxu0
        %v4631 = vadd.f32 0.0, %v4630
        %v4632 = vpop.f32.mrf.mxu0
        %v4633 = vadd.f32 0.0, %v4632
        %v4634 = vpop.f32.mrf.mxu0
        %v4635 = vadd.f32 0.0, %v4634
        %v4636 = vpop.f32.mrf.mxu0
        %v4637 = vadd.f32 0.0, %v4636
        %4638 = vmatprep.mubr.bf16.mxu0 %v2395
        %4639 = vmatmul.mubr.bf16.gmra.mxu0 %v2394
        %v4640 = vpop.f32.mrf.mxu0
        %v4641 = vadd.f32 0.0, %v4640
        %v4642 = vpop.f32.mrf.mxu0
        %v4643 = vadd.f32 0.0, %v4642
        %v4644 = vpop.f32.mrf.mxu0
        %v4645 = vadd.f32 0.0, %v4644
        %v4646 = vpop.f32.mrf.mxu0
        %v4647 = vadd.f32 0.0, %v4646
        %4648 = vmatprep.mubr.bf16.mxu0 %v2401
        %4649 = vmatmul.mubr.bf16.gmra.mxu0 %v2400
        %v4650 = vpop.f32.mrf.mxu0
        %v4651 = vadd.f32 0.0, %v4650
        %v4652 = vpop.f32.mrf.mxu0
        %v4653 = vadd.f32 0.0, %v4652
        %v4654 = vpop.f32.mrf.mxu0
        %v4655 = vadd.f32 0.0, %v4654
        %v4656 = vpop.f32.mrf.mxu0
        %v4657 = vadd.f32 0.0, %v4656
        %4658 = vmatprep.mubr.bf16.mxu0 %v2407
        %4659 = vmatmul.mubr.bf16.gmra.mxu0 %v2406
        %v4660 = vpop.f32.mrf.mxu0
        %v4661 = vadd.f32 0.0, %v4660
        %v4662 = vpop.f32.mrf.mxu0
        %v4663 = vadd.f32 0.0, %v4662
        %v4664 = vpop.f32.mrf.mxu0
        %v4665 = vadd.f32 0.0, %v4664
        %v4666 = vpop.f32.mrf.mxu0
        %v4667 = vadd.f32 0.0, %v4666
        %4668 = vmatprep.mubr.bf16.mxu0 %v2413
        %4669 = vmatmul.mubr.bf16.gmra.mxu0 %v2412
        %v4670 = vpop.f32.mrf.mxu0
        %v4671 = vadd.f32 0.0, %v4670
        %v4672 = vpop.f32.mrf.mxu0
        %v4673 = vadd.f32 0.0, %v4672
        %v4674 = vpop.f32.mrf.mxu0
        %v4675 = vadd.f32 0.0, %v4674
        %v4676 = vpop.f32.mrf.mxu0
        %v4677 = vadd.f32 0.0, %v4676
        %4678 = vmatprep.mubr.bf16.mxu0 %v2419
        %4679 = vmatmul.mubr.bf16.gmra.mxu0 %v2418
        %v4680 = vpop.f32.mrf.mxu0
        %v4681 = vadd.f32 0.0, %v4680
        %v4682 = vpop.f32.mrf.mxu0
        %v4683 = vadd.f32 0.0, %v4682
        %v4684 = vpop.f32.mrf.mxu0
        %v4685 = vadd.f32 0.0, %v4684
        %v4686 = vpop.f32.mrf.mxu0
        %v4687 = vadd.f32 0.0, %v4686
        %4688 = vmatprep.mubr.bf16.mxu0 %v2425
        %4689 = vmatmul.mubr.bf16.gmra.mxu0 %v2424
        %v4690 = vpop.f32.mrf.mxu0
        %v4691 = vadd.f32 0.0, %v4690
        %v4692 = vpop.f32.mrf.mxu0
        %v4693 = vadd.f32 0.0, %v4692
        %v4694 = vpop.f32.mrf.mxu0
        %v4695 = vadd.f32 0.0, %v4694
        %v4696 = vpop.f32.mrf.mxu0
        %v4697 = vadd.f32 0.0, %v4696
        %4698 = vmatprep.mubr.bf16.mxu0 %v2431
        %4699 = vmatmul.mubr.bf16.gmra.mxu0 %v2430
        %v4700 = vpop.f32.mrf.mxu0
        %v4701 = vadd.f32 0.0, %v4700
        %v4702 = vpop.f32.mrf.mxu0
        %v4703 = vadd.f32 0.0, %v4702
        %v4704 = vpop.f32.mrf.mxu0
        %v4705 = vadd.f32 0.0, %v4704
        %v4706 = vpop.f32.mrf.mxu0
        %v4707 = vadd.f32 0.0, %v4706
        %4708 = vmatprep.mubr.bf16.mxu0 %v2437
        %4709 = vmatmul.mubr.bf16.gmra.mxu0 %v2436
        %v4710 = vpop.f32.mrf.mxu0
        %v4711 = vadd.f32 0.0, %v4710
        %v4712 = vpop.f32.mrf.mxu0
        %v4713 = vadd.f32 0.0, %v4712
        %v4714 = vpop.f32.mrf.mxu0
        %v4715 = vadd.f32 0.0, %v4714
        %v4716 = vpop.f32.mrf.mxu0
        %v4717 = vadd.f32 0.0, %v4716
        %4718 = vmatprep.mubr.bf16.mxu0 %v2443
        %4719 = vmatmul.mubr.bf16.gmra.mxu0 %v2442
        %v4720 = vpop.f32.mrf.mxu0
        %v4721 = vadd.f32 0.0, %v4720
        %v4722 = vpop.f32.mrf.mxu0
        %v4723 = vadd.f32 0.0, %v4722
        %v4724 = vpop.f32.mrf.mxu0
        %v4725 = vadd.f32 0.0, %v4724
        %v4726 = vpop.f32.mrf.mxu0
        %v4727 = vadd.f32 0.0, %v4726
        %4728 = vmatprep.mubr.bf16.mxu0 %v2449
        %4729 = vmatmul.mubr.bf16.gmra.mxu0 %v2448
        %v4730 = vpop.f32.mrf.mxu0
        %v4731 = vadd.f32 0.0, %v4730
        %v4732 = vpop.f32.mrf.mxu0
        %v4733 = vadd.f32 0.0, %v4732
        %v4734 = vpop.f32.mrf.mxu0
        %v4735 = vadd.f32 0.0, %v4734
        %v4736 = vpop.f32.mrf.mxu0
        %v4737 = vadd.f32 0.0, %v4736
        %4738 = vmatprep.mubr.bf16.mxu0 %v2455
        %4739 = vmatmul.mubr.bf16.gmra.mxu0 %v2454
        %v4740 = vpop.f32.mrf.mxu0
        %v4741 = vadd.f32 0.0, %v4740
        %v4742 = vpop.f32.mrf.mxu0
        %v4743 = vadd.f32 0.0, %v4742
        %v4744 = vpop.f32.mrf.mxu0
        %v4745 = vadd.f32 0.0, %v4744
        %v4746 = vpop.f32.mrf.mxu0
        %v4747 = vadd.f32 0.0, %v4746
        %4748 = vdwg.mxu0
        %4749 = vmatprep.subr.bf16.mxu0 %v4039
        %4750 = vmatpush1.bf16.msra.mxu0 %v4038
        %4751 = vmatprep.subr.bf16.mxu0 %v4033
        %4752 = vmatpush1.bf16.msra.mxu0 %v4032
        %4753 = vmatprep.subr.bf16.mxu0 %v4027
        %4754 = vmatpush1.bf16.msra.mxu0 %v4026
        %4755 = vmatprep.subr.bf16.mxu0 %v4021
        %4756 = vmatpush1.bf16.msra.mxu0 %v4020
        %4757 = vmatprep.subr.bf16.mxu0 %v4015
        %4758 = vmatpush1.bf16.msra.mxu0 %v4014
        %4759 = vmatprep.subr.bf16.mxu0 %v4009
        %4760 = vmatpush1.bf16.msra.mxu0 %v4008
        %4761 = vmatprep.subr.bf16.mxu0 %v4003
        %4762 = vmatpush1.bf16.msra.mxu0 %v4002
        %4763 = vmatprep.subr.bf16.mxu0 %v3997
        %4764 = vmatpush1.bf16.msra.mxu0 %v3996
        %4765 = vmatprep.subr.bf16.mxu0 %v4087
        %4766 = vmatpush2.bf16.msra.mxu0 %v4086
        %4767 = vmatprep.subr.bf16.mxu0 %v4081
        %4768 = vmatpush2.bf16.msra.mxu0 %v4080
        %4769 = vmatprep.subr.bf16.mxu0 %v4075
        %4770 = vmatpush2.bf16.msra.mxu0 %v4074
        %4771 = vmatprep.subr.bf16.mxu0 %v4069
        %4772 = vmatpush2.bf16.msra.mxu0 %v4068
        %4773 = vmatprep.subr.bf16.mxu0 %v4063
        %4774 = vmatpush2.bf16.msra.mxu0 %v4062
        %4775 = vmatprep.subr.bf16.mxu0 %v4057
        %4776 = vmatpush2.bf16.msra.mxu0 %v4056
        %4777 = vmatprep.subr.bf16.mxu0 %v4051
        %4778 = vmatpush2.bf16.msra.mxu0 %v4050
        %4779 = vmatprep.subr.bf16.mxu0 %v4045
        %4780 = vmatpush2.bf16.msra.mxu0 %v4044
        %4781 = vmatprep.mubr.bf16.mxu0 %v2319
        %4782 = vmatmul.mubr.bf16.gmra.mxu0 %v2318
        %v4783 = vpop.f32.mrf.mxu0
        %v4784 = vadd.f32 %v4511, %v4783
        %v4785 = vpop.f32.mrf.mxu0
        %v4786 = vadd.f32 %v4513, %v4785
        %v4787 = vpop.f32.mrf.mxu0
        %v4788 = vadd.f32 %v4515, %v4787
        %v4789 = vpop.f32.mrf.mxu0
        %v4790 = vadd.f32 %v4517, %v4789
        %4791 = vmatprep.mubr.bf16.mxu0 %v2325
        %4792 = vmatmul.mubr.bf16.gmra.mxu0 %v2324
        %v4793 = vpop.f32.mrf.mxu0
        %v4794 = vadd.f32 %v4521, %v4793
        %v4795 = vpop.f32.mrf.mxu0
        %v4796 = vadd.f32 %v4523, %v4795
        %v4797 = vpop.f32.mrf.mxu0
        %v4798 = vadd.f32 %v4525, %v4797
        %v4799 = vpop.f32.mrf.mxu0
        %v4800 = vadd.f32 %v4527, %v4799
        %4801 = vmatprep.mubr.bf16.mxu0 %v2331
        %4802 = vmatmul.mubr.bf16.gmra.mxu0 %v2330
        %v4803 = vpop.f32.mrf.mxu0
        %v4804 = vadd.f32 %v4531, %v4803
        %v4805 = vpop.f32.mrf.mxu0
        %v4806 = vadd.f32 %v4533, %v4805
        %v4807 = vpop.f32.mrf.mxu0
        %v4808 = vadd.f32 %v4535, %v4807
        %v4809 = vpop.f32.mrf.mxu0
        %v4810 = vadd.f32 %v4537, %v4809
        %4811 = vmatprep.mubr.bf16.mxu0 %v2337
        %4812 = vmatmul.mubr.bf16.gmra.mxu0 %v2336
        %v4813 = vpop.f32.mrf.mxu0
        %v4814 = vadd.f32 %v4541, %v4813
        %v4815 = vpop.f32.mrf.mxu0
        %v4816 = vadd.f32 %v4543, %v4815
        %v4817 = vpop.f32.mrf.mxu0
        %v4818 = vadd.f32 %v4545, %v4817
        %v4819 = vpop.f32.mrf.mxu0
        %v4820 = vadd.f32 %v4547, %v4819
        %4821 = vmatprep.mubr.bf16.mxu0 %v2343
        %4822 = vmatmul.mubr.bf16.gmra.mxu0 %v2342
        %v4823 = vpop.f32.mrf.mxu0
        %v4824 = vadd.f32 %v4551, %v4823
        %v4825 = vpop.f32.mrf.mxu0
        %v4826 = vadd.f32 %v4553, %v4825
        %v4827 = vpop.f32.mrf.mxu0
        %v4828 = vadd.f32 %v4555, %v4827
        %v4829 = vpop.f32.mrf.mxu0
        %v4830 = vadd.f32 %v4557, %v4829
        %4831 = vmatprep.mubr.bf16.mxu0 %v2349
        %4832 = vmatmul.mubr.bf16.gmra.mxu0 %v2348
        %v4833 = vpop.f32.mrf.mxu0
        %v4834 = vadd.f32 %v4561, %v4833
        %v4835 = vpop.f32.mrf.mxu0
        %v4836 = vadd.f32 %v4563, %v4835
        %v4837 = vpop.f32.mrf.mxu0
        %v4838 = vadd.f32 %v4565, %v4837
        %v4839 = vpop.f32.mrf.mxu0
        %v4840 = vadd.f32 %v4567, %v4839
        %4841 = vmatprep.mubr.bf16.mxu0 %v2355
        %4842 = vmatmul.mubr.bf16.gmra.mxu0 %v2354
        %v4843 = vpop.f32.mrf.mxu0
        %v4844 = vadd.f32 %v4571, %v4843
        %v4845 = vpop.f32.mrf.mxu0
        %v4846 = vadd.f32 %v4573, %v4845
        %v4847 = vpop.f32.mrf.mxu0
        %v4848 = vadd.f32 %v4575, %v4847
        %v4849 = vpop.f32.mrf.mxu0
        %v4850 = vadd.f32 %v4577, %v4849
        %4851 = vmatprep.mubr.bf16.mxu0 %v2361
        %4852 = vmatmul.mubr.bf16.gmra.mxu0 %v2360
        %v4853 = vpop.f32.mrf.mxu0
        %v4854 = vadd.f32 %v4581, %v4853
        %v4855 = vpop.f32.mrf.mxu0
        %v4856 = vadd.f32 %v4583, %v4855
        %v4857 = vpop.f32.mrf.mxu0
        %v4858 = vadd.f32 %v4585, %v4857
        %v4859 = vpop.f32.mrf.mxu0
        %v4860 = vadd.f32 %v4587, %v4859
        %4861 = vmatprep.mubr.bf16.mxu0 %v2367
        %4862 = vmatmul.mubr.bf16.gmra.mxu0 %v2366
        %v4863 = vpop.f32.mrf.mxu0
        %v4864 = vadd.f32 %v4591, %v4863
        %v4865 = vpop.f32.mrf.mxu0
        %v4866 = vadd.f32 %v4593, %v4865
        %v4867 = vpop.f32.mrf.mxu0
        %v4868 = vadd.f32 %v4595, %v4867
        %v4869 = vpop.f32.mrf.mxu0
        %v4870 = vadd.f32 %v4597, %v4869
        %4871 = vmatprep.mubr.bf16.mxu0 %v2373
        %4872 = vmatmul.mubr.bf16.gmra.mxu0 %v2372
        %v4873 = vpop.f32.mrf.mxu0
        %v4874 = vadd.f32 %v4601, %v4873
        %v4875 = vpop.f32.mrf.mxu0
        %v4876 = vadd.f32 %v4603, %v4875
        %v4877 = vpop.f32.mrf.mxu0
        %v4878 = vadd.f32 %v4605, %v4877
        %v4879 = vpop.f32.mrf.mxu0
        %v4880 = vadd.f32 %v4607, %v4879
        %4881 = vmatprep.mubr.bf16.mxu0 %v2379
        %4882 = vmatmul.mubr.bf16.gmra.mxu0 %v2378
        %v4883 = vpop.f32.mrf.mxu0
        %v4884 = vadd.f32 %v4611, %v4883
        %v4885 = vpop.f32.mrf.mxu0
        %v4886 = vadd.f32 %v4613, %v4885
        %v4887 = vpop.f32.mrf.mxu0
        %v4888 = vadd.f32 %v4615, %v4887
        %v4889 = vpop.f32.mrf.mxu0
        %v4890 = vadd.f32 %v4617, %v4889
        %4891 = vmatprep.mubr.bf16.mxu0 %v2385
        %4892 = vmatmul.mubr.bf16.gmra.mxu0 %v2384
        %v4893 = vpop.f32.mrf.mxu0
        %v4894 = vadd.f32 %v4621, %v4893
        %v4895 = vpop.f32.mrf.mxu0
        %v4896 = vadd.f32 %v4623, %v4895
        %v4897 = vpop.f32.mrf.mxu0
        %v4898 = vadd.f32 %v4625, %v4897
        %v4899 = vpop.f32.mrf.mxu0
        %v4900 = vadd.f32 %v4627, %v4899
        %4901 = vmatprep.mubr.bf16.mxu0 %v2391
        %4902 = vmatmul.mubr.bf16.gmra.mxu0 %v2390
        %v4903 = vpop.f32.mrf.mxu0
        %v4904 = vadd.f32 %v4631, %v4903
        %v4905 = vpop.f32.mrf.mxu0
        %v4906 = vadd.f32 %v4633, %v4905
        %v4907 = vpop.f32.mrf.mxu0
        %v4908 = vadd.f32 %v4635, %v4907
        %v4909 = vpop.f32.mrf.mxu0
        %v4910 = vadd.f32 %v4637, %v4909
        %4911 = vmatprep.mubr.bf16.mxu0 %v2397
        %4912 = vmatmul.mubr.bf16.gmra.mxu0 %v2396
        %v4913 = vpop.f32.mrf.mxu0
        %v4914 = vadd.f32 %v4641, %v4913
        %v4915 = vpop.f32.mrf.mxu0
        %v4916 = vadd.f32 %v4643, %v4915
        %v4917 = vpop.f32.mrf.mxu0
        %v4918 = vadd.f32 %v4645, %v4917
        %v4919 = vpop.f32.mrf.mxu0
        %v4920 = vadd.f32 %v4647, %v4919
        %4921 = vmatprep.mubr.bf16.mxu0 %v2403
        %4922 = vmatmul.mubr.bf16.gmra.mxu0 %v2402
        %v4923 = vpop.f32.mrf.mxu0
        %v4924 = vadd.f32 %v4651, %v4923
        %v4925 = vpop.f32.mrf.mxu0
        %v4926 = vadd.f32 %v4653, %v4925
        %v4927 = vpop.f32.mrf.mxu0
        %v4928 = vadd.f32 %v4655, %v4927
        %v4929 = vpop.f32.mrf.mxu0
        %v4930 = vadd.f32 %v4657, %v4929
        %4931 = vmatprep.mubr.bf16.mxu0 %v2409
        %4932 = vmatmul.mubr.bf16.gmra.mxu0 %v2408
        %v4933 = vpop.f32.mrf.mxu0
        %v4934 = vadd.f32 %v4661, %v4933
        %v4935 = vpop.f32.mrf.mxu0
        %v4936 = vadd.f32 %v4663, %v4935
        %v4937 = vpop.f32.mrf.mxu0
        %v4938 = vadd.f32 %v4665, %v4937
        %v4939 = vpop.f32.mrf.mxu0
        %v4940 = vadd.f32 %v4667, %v4939
        %4941 = vmatprep.mubr.bf16.mxu0 %v2415
        %4942 = vmatmul.mubr.bf16.gmra.mxu0 %v2414
        %v4943 = vpop.f32.mrf.mxu0
        %v4944 = vadd.f32 %v4671, %v4943
        %v4945 = vpop.f32.mrf.mxu0
        %v4946 = vadd.f32 %v4673, %v4945
        %v4947 = vpop.f32.mrf.mxu0
        %v4948 = vadd.f32 %v4675, %v4947
        %v4949 = vpop.f32.mrf.mxu0
        %v4950 = vadd.f32 %v4677, %v4949
        %4951 = vmatprep.mubr.bf16.mxu0 %v2421
        %4952 = vmatmul.mubr.bf16.gmra.mxu0 %v2420
        %v4953 = vpop.f32.mrf.mxu0
        %v4954 = vadd.f32 %v4681, %v4953
        %v4955 = vpop.f32.mrf.mxu0
        %v4956 = vadd.f32 %v4683, %v4955
        %v4957 = vpop.f32.mrf.mxu0
        %v4958 = vadd.f32 %v4685, %v4957
        %v4959 = vpop.f32.mrf.mxu0
        %v4960 = vadd.f32 %v4687, %v4959
        %4961 = vmatprep.mubr.bf16.mxu0 %v2427
        %4962 = vmatmul.mubr.bf16.gmra.mxu0 %v2426
        %v4963 = vpop.f32.mrf.mxu0
        %v4964 = vadd.f32 %v4691, %v4963
        %v4965 = vpop.f32.mrf.mxu0
        %v4966 = vadd.f32 %v4693, %v4965
        %v4967 = vpop.f32.mrf.mxu0
        %v4968 = vadd.f32 %v4695, %v4967
        %v4969 = vpop.f32.mrf.mxu0
        %v4970 = vadd.f32 %v4697, %v4969
        %4971 = vmatprep.mubr.bf16.mxu0 %v2433
        %4972 = vmatmul.mubr.bf16.gmra.mxu0 %v2432
        %v4973 = vpop.f32.mrf.mxu0
        %v4974 = vadd.f32 %v4701, %v4973
        %v4975 = vpop.f32.mrf.mxu0
        %v4976 = vadd.f32 %v4703, %v4975
        %v4977 = vpop.f32.mrf.mxu0
        %v4978 = vadd.f32 %v4705, %v4977
        %v4979 = vpop.f32.mrf.mxu0
        %v4980 = vadd.f32 %v4707, %v4979
        %4981 = vmatprep.mubr.bf16.mxu0 %v2439
        %4982 = vmatmul.mubr.bf16.gmra.mxu0 %v2438
        %v4983 = vpop.f32.mrf.mxu0
        %v4984 = vadd.f32 %v4711, %v4983
        %v4985 = vpop.f32.mrf.mxu0
        %v4986 = vadd.f32 %v4713, %v4985
        %v4987 = vpop.f32.mrf.mxu0
        %v4988 = vadd.f32 %v4715, %v4987
        %v4989 = vpop.f32.mrf.mxu0
        %v4990 = vadd.f32 %v4717, %v4989
        %4991 = vmatprep.mubr.bf16.mxu0 %v2445
        %4992 = vmatmul.mubr.bf16.gmra.mxu0 %v2444
        %v4993 = vpop.f32.mrf.mxu0
        %v4994 = vadd.f32 %v4721, %v4993
        %v4995 = vpop.f32.mrf.mxu0
        %v4996 = vadd.f32 %v4723, %v4995
        %v4997 = vpop.f32.mrf.mxu0
        %v4998 = vadd.f32 %v4725, %v4997
        %v4999 = vpop.f32.mrf.mxu0
        %v5000 = vadd.f32 %v4727, %v4999
        %5001 = vmatprep.mubr.bf16.mxu0 %v2451
        %5002 = vmatmul.mubr.bf16.gmra.mxu0 %v2450
        %v5003 = vpop.f32.mrf.mxu0
        %v5004 = vadd.f32 %v4731, %v5003
        %v5005 = vpop.f32.mrf.mxu0
        %v5006 = vadd.f32 %v4733, %v5005
        %v5007 = vpop.f32.mrf.mxu0
        %v5008 = vadd.f32 %v4735, %v5007
        %v5009 = vpop.f32.mrf.mxu0
        %v5010 = vadd.f32 %v4737, %v5009
        %5011 = vmatprep.mubr.bf16.mxu0 %v2457
        %5012 = vmatmul.mubr.bf16.gmra.mxu0 %v2456
        %v5013 = vpop.f32.mrf.mxu0
        %v5014 = vadd.f32 %v4741, %v5013
        %v5015 = vpop.f32.mrf.mxu0
        %v5016 = vadd.f32 %v4743, %v5015
        %v5017 = vpop.f32.mrf.mxu0
        %v5018 = vadd.f32 %v4745, %v5017
        %v5019 = vpop.f32.mrf.mxu0
        %v5020 = vadd.f32 %v4747, %v5019
        %5021 = vdwg.mxu0
        %5022 = vmatprep.subr.bf16.mxu0 %v4135
        %5023 = vmatpush1.bf16.msra.mxu0 %v4134
        %5024 = vmatprep.subr.bf16.mxu0 %v4129
        %5025 = vmatpush1.bf16.msra.mxu0 %v4128
        %5026 = vmatprep.subr.bf16.mxu0 %v4123
        %5027 = vmatpush1.bf16.msra.mxu0 %v4122
        %5028 = vmatprep.subr.bf16.mxu0 %v4117
        %5029 = vmatpush1.bf16.msra.mxu0 %v4116
        %5030 = vmatprep.subr.bf16.mxu0 %v4111
        %5031 = vmatpush1.bf16.msra.mxu0 %v4110
        %5032 = vmatprep.subr.bf16.mxu0 %v4105
        %5033 = vmatpush1.bf16.msra.mxu0 %v4104
        %5034 = vmatprep.subr.bf16.mxu0 %v4099
        %5035 = vmatpush1.bf16.msra.mxu0 %v4098
        %5036 = vmatprep.subr.bf16.mxu0 %v4093
        %5037 = vmatpush1.bf16.msra.mxu0 %v4092
        %5038 = vmatprep.subr.bf16.mxu0 %v4183
        %5039 = vmatpush2.bf16.msra.mxu0 %v4182
        %5040 = vmatprep.subr.bf16.mxu0 %v4177
        %5041 = vmatpush2.bf16.msra.mxu0 %v4176
        %5042 = vmatprep.subr.bf16.mxu0 %v4171
        %5043 = vmatpush2.bf16.msra.mxu0 %v4170
        %5044 = vmatprep.subr.bf16.mxu0 %v4165
        %5045 = vmatpush2.bf16.msra.mxu0 %v4164
        %5046 = vmatprep.subr.bf16.mxu0 %v4159
        %5047 = vmatpush2.bf16.msra.mxu0 %v4158
        %5048 = vmatprep.subr.bf16.mxu0 %v4153
        %5049 = vmatpush2.bf16.msra.mxu0 %v4152
        %5050 = vmatprep.subr.bf16.mxu0 %v4147
        %5051 = vmatpush2.bf16.msra.mxu0 %v4146
        %5052 = vmatprep.subr.bf16.mxu0 %v4141
        %5053 = vmatpush2.bf16.msra.mxu0 %v4140
        %5054 = vmatprep.mubr.bf16.mxu0 %v2321
        %5055 = vmatmul.mubr.bf16.gmra.mxu0 %v2320
        %v5056 = vpop.f32.mrf.mxu0
        %v5057 = vadd.f32 %v4784, %v5056
        %v5058 = vpop.f32.mrf.mxu0
        %v5059 = vadd.f32 %v4786, %v5058
        %v5060 = vpop.f32.mrf.mxu0
        %v5061 = vadd.f32 %v4788, %v5060
        %v5062 = vpop.f32.mrf.mxu0
        %v5063 = vadd.f32 %v4790, %v5062
        %5064 = vmatprep.mubr.bf16.mxu0 %v2327
        %5065 = vmatmul.mubr.bf16.gmra.mxu0 %v2326
        %v5066 = vpop.f32.mrf.mxu0
        %v5067 = vadd.f32 %v4794, %v5066
        %v5068 = vpop.f32.mrf.mxu0
        %v5069 = vadd.f32 %v4796, %v5068
        %v5070 = vpop.f32.mrf.mxu0
        %v5071 = vadd.f32 %v4798, %v5070
        %v5072 = vpop.f32.mrf.mxu0
        %v5073 = vadd.f32 %v4800, %v5072
        %5074 = vmatprep.mubr.bf16.mxu0 %v2333
        %5075 = vmatmul.mubr.bf16.gmra.mxu0 %v2332
        %v5076 = vpop.f32.mrf.mxu0
        %v5077 = vadd.f32 %v4804, %v5076
        %v5078 = vpop.f32.mrf.mxu0
        %v5079 = vadd.f32 %v4806, %v5078
        %v5080 = vpop.f32.mrf.mxu0
        %v5081 = vadd.f32 %v4808, %v5080
        %v5082 = vpop.f32.mrf.mxu0
        %v5083 = vadd.f32 %v4810, %v5082
        %5084 = vmatprep.mubr.bf16.mxu0 %v2339
        %5085 = vmatmul.mubr.bf16.gmra.mxu0 %v2338
        %v5086 = vpop.f32.mrf.mxu0
        %v5087 = vadd.f32 %v4814, %v5086
        %v5088 = vpop.f32.mrf.mxu0
        %v5089 = vadd.f32 %v4816, %v5088
        %v5090 = vpop.f32.mrf.mxu0
        %v5091 = vadd.f32 %v4818, %v5090
        %v5092 = vpop.f32.mrf.mxu0
        %v5093 = vadd.f32 %v4820, %v5092
        %5094 = vmatprep.mubr.bf16.mxu0 %v2345
        %5095 = vmatmul.mubr.bf16.gmra.mxu0 %v2344
        %v5096 = vpop.f32.mrf.mxu0
        %v5097 = vadd.f32 %v4824, %v5096
        %v5098 = vpop.f32.mrf.mxu0
        %v5099 = vadd.f32 %v4826, %v5098
        %v5100 = vpop.f32.mrf.mxu0
        %v5101 = vadd.f32 %v4828, %v5100
        %v5102 = vpop.f32.mrf.mxu0
        %v5103 = vadd.f32 %v4830, %v5102
        %5104 = vmatprep.mubr.bf16.mxu0 %v2351
        %5105 = vmatmul.mubr.bf16.gmra.mxu0 %v2350
        %v5106 = vpop.f32.mrf.mxu0
        %v5107 = vadd.f32 %v4834, %v5106
        %v5108 = vpop.f32.mrf.mxu0
        %v5109 = vadd.f32 %v4836, %v5108
        %v5110 = vpop.f32.mrf.mxu0
        %v5111 = vadd.f32 %v4838, %v5110
        %v5112 = vpop.f32.mrf.mxu0
        %v5113 = vadd.f32 %v4840, %v5112
        %5114 = vmatprep.mubr.bf16.mxu0 %v2357
        %5115 = vmatmul.mubr.bf16.gmra.mxu0 %v2356
        %v5116 = vpop.f32.mrf.mxu0
        %v5117 = vadd.f32 %v4844, %v5116
        %v5118 = vpop.f32.mrf.mxu0
        %v5119 = vadd.f32 %v4846, %v5118
        %v5120 = vpop.f32.mrf.mxu0
        %v5121 = vadd.f32 %v4848, %v5120
        %v5122 = vpop.f32.mrf.mxu0
        %v5123 = vadd.f32 %v4850, %v5122
        %5124 = vmatprep.mubr.bf16.mxu0 %v2363
        %5125 = vmatmul.mubr.bf16.gmra.mxu0 %v2362
        %v5126 = vpop.f32.mrf.mxu0
        %v5127 = vadd.f32 %v4854, %v5126
        %v5128 = vpop.f32.mrf.mxu0
        %v5129 = vadd.f32 %v4856, %v5128
        %v5130 = vpop.f32.mrf.mxu0
        %v5131 = vadd.f32 %v4858, %v5130
        %v5132 = vpop.f32.mrf.mxu0
        %v5133 = vadd.f32 %v4860, %v5132
        %5134 = vmatprep.mubr.bf16.mxu0 %v2369
        %5135 = vmatmul.mubr.bf16.gmra.mxu0 %v2368
        %v5136 = vpop.f32.mrf.mxu0
        %v5137 = vadd.f32 %v4864, %v5136
        %v5138 = vpop.f32.mrf.mxu0
        %v5139 = vadd.f32 %v4866, %v5138
        %v5140 = vpop.f32.mrf.mxu0
        %v5141 = vadd.f32 %v4868, %v5140
        %v5142 = vpop.f32.mrf.mxu0
        %v5143 = vadd.f32 %v4870, %v5142
        %5144 = vmatprep.mubr.bf16.mxu0 %v2375
        %5145 = vmatmul.mubr.bf16.gmra.mxu0 %v2374
        %v5146 = vpop.f32.mrf.mxu0
        %v5147 = vadd.f32 %v4874, %v5146
        %v5148 = vpop.f32.mrf.mxu0
        %v5149 = vadd.f32 %v4876, %v5148
        %v5150 = vpop.f32.mrf.mxu0
        %v5151 = vadd.f32 %v4878, %v5150
        %v5152 = vpop.f32.mrf.mxu0
        %v5153 = vadd.f32 %v4880, %v5152
        %5154 = vmatprep.mubr.bf16.mxu0 %v2381
        %5155 = vmatmul.mubr.bf16.gmra.mxu0 %v2380
        %v5156 = vpop.f32.mrf.mxu0
        %v5157 = vadd.f32 %v4884, %v5156
        %v5158 = vpop.f32.mrf.mxu0
        %v5159 = vadd.f32 %v4886, %v5158
        %v5160 = vpop.f32.mrf.mxu0
        %v5161 = vadd.f32 %v4888, %v5160
        %v5162 = vpop.f32.mrf.mxu0
        %v5163 = vadd.f32 %v4890, %v5162
        %5164 = vmatprep.mubr.bf16.mxu0 %v2387
        %5165 = vmatmul.mubr.bf16.gmra.mxu0 %v2386
        %v5166 = vpop.f32.mrf.mxu0
        %v5167 = vadd.f32 %v4894, %v5166
        %v5168 = vpop.f32.mrf.mxu0
        %v5169 = vadd.f32 %v4896, %v5168
        %v5170 = vpop.f32.mrf.mxu0
        %v5171 = vadd.f32 %v4898, %v5170
        %v5172 = vpop.f32.mrf.mxu0
        %v5173 = vadd.f32 %v4900, %v5172
        %5174 = vmatprep.mubr.bf16.mxu0 %v2393
        %5175 = vmatmul.mubr.bf16.gmra.mxu0 %v2392
        %v5176 = vpop.f32.mrf.mxu0
        %v5177 = vadd.f32 %v4904, %v5176
        %v5178 = vpop.f32.mrf.mxu0
        %v5179 = vadd.f32 %v4906, %v5178
        %v5180 = vpop.f32.mrf.mxu0
        %v5181 = vadd.f32 %v4908, %v5180
        %v5182 = vpop.f32.mrf.mxu0
        %v5183 = vadd.f32 %v4910, %v5182
        %5184 = vmatprep.mubr.bf16.mxu0 %v2399
        %5185 = vmatmul.mubr.bf16.gmra.mxu0 %v2398
        %v5186 = vpop.f32.mrf.mxu0
        %v5187 = vadd.f32 %v4914, %v5186
        %v5188 = vpop.f32.mrf.mxu0
        %v5189 = vadd.f32 %v4916, %v5188
        %v5190 = vpop.f32.mrf.mxu0
        %v5191 = vadd.f32 %v4918, %v5190
        %v5192 = vpop.f32.mrf.mxu0
        %v5193 = vadd.f32 %v4920, %v5192
        %5194 = vmatprep.mubr.bf16.mxu0 %v2405
        %5195 = vmatmul.mubr.bf16.gmra.mxu0 %v2404
        %v5196 = vpop.f32.mrf.mxu0
        %v5197 = vadd.f32 %v4924, %v5196
        %v5198 = vpop.f32.mrf.mxu0
        %v5199 = vadd.f32 %v4926, %v5198
        %v5200 = vpop.f32.mrf.mxu0
        %v5201 = vadd.f32 %v4928, %v5200
        %v5202 = vpop.f32.mrf.mxu0
        %v5203 = vadd.f32 %v4930, %v5202
        %5204 = vmatprep.mubr.bf16.mxu0 %v2411
        %5205 = vmatmul.mubr.bf16.gmra.mxu0 %v2410
        %v5206 = vpop.f32.mrf.mxu0
        %v5207 = vadd.f32 %v4934, %v5206
        %v5208 = vpop.f32.mrf.mxu0
        %v5209 = vadd.f32 %v4936, %v5208
        %v5210 = vpop.f32.mrf.mxu0
        %v5211 = vadd.f32 %v4938, %v5210
        %v5212 = vpop.f32.mrf.mxu0
        %v5213 = vadd.f32 %v4940, %v5212
        %5214 = vmatprep.mubr.bf16.mxu0 %v2417
        %5215 = vmatmul.mubr.bf16.gmra.mxu0 %v2416
        %v5216 = vpop.f32.mrf.mxu0
        %v5217 = vadd.f32 %v4944, %v5216
        %v5218 = vpop.f32.mrf.mxu0
        %v5219 = vadd.f32 %v4946, %v5218
        %v5220 = vpop.f32.mrf.mxu0
        %v5221 = vadd.f32 %v4948, %v5220
        %v5222 = vpop.f32.mrf.mxu0
        %v5223 = vadd.f32 %v4950, %v5222
        %5224 = vmatprep.mubr.bf16.mxu0 %v2423
        %5225 = vmatmul.mubr.bf16.gmra.mxu0 %v2422
        %v5226 = vpop.f32.mrf.mxu0
        %v5227 = vadd.f32 %v4954, %v5226
        %v5228 = vpop.f32.mrf.mxu0
        %v5229 = vadd.f32 %v4956, %v5228
        %v5230 = vpop.f32.mrf.mxu0
        %v5231 = vadd.f32 %v4958, %v5230
        %v5232 = vpop.f32.mrf.mxu0
        %v5233 = vadd.f32 %v4960, %v5232
        %5234 = vmatprep.mubr.bf16.mxu0 %v2429
        %5235 = vmatmul.mubr.bf16.gmra.mxu0 %v2428
        %v5236 = vpop.f32.mrf.mxu0
        %v5237 = vadd.f32 %v4964, %v5236
        %v5238 = vpop.f32.mrf.mxu0
        %v5239 = vadd.f32 %v4966, %v5238
        %v5240 = vpop.f32.mrf.mxu0
        %v5241 = vadd.f32 %v4968, %v5240
        %v5242 = vpop.f32.mrf.mxu0
        %v5243 = vadd.f32 %v4970, %v5242
        %5244 = vmatprep.mubr.bf16.mxu0 %v2435
        %5245 = vmatmul.mubr.bf16.gmra.mxu0 %v2434
        %v5246 = vpop.f32.mrf.mxu0
        %v5247 = vadd.f32 %v4974, %v5246
        %v5248 = vpop.f32.mrf.mxu0
        %v5249 = vadd.f32 %v4976, %v5248
        %v5250 = vpop.f32.mrf.mxu0
        %v5251 = vadd.f32 %v4978, %v5250
        %v5252 = vpop.f32.mrf.mxu0
        %v5253 = vadd.f32 %v4980, %v5252
        %5254 = vmatprep.mubr.bf16.mxu0 %v2441
        %5255 = vmatmul.mubr.bf16.gmra.mxu0 %v2440
        %v5256 = vpop.f32.mrf.mxu0
        %v5257 = vadd.f32 %v4984, %v5256
        %v5258 = vpop.f32.mrf.mxu0
        %v5259 = vadd.f32 %v4986, %v5258
        %v5260 = vpop.f32.mrf.mxu0
        %v5261 = vadd.f32 %v4988, %v5260
        %v5262 = vpop.f32.mrf.mxu0
        %v5263 = vadd.f32 %v4990, %v5262
        %5264 = vmatprep.mubr.bf16.mxu0 %v2447
        %5265 = vmatmul.mubr.bf16.gmra.mxu0 %v2446
        %v5266 = vpop.f32.mrf.mxu0
        %v5267 = vadd.f32 %v4994, %v5266
        %v5268 = vpop.f32.mrf.mxu0
        %v5269 = vadd.f32 %v4996, %v5268
        %v5270 = vpop.f32.mrf.mxu0
        %v5271 = vadd.f32 %v4998, %v5270
        %v5272 = vpop.f32.mrf.mxu0
        %v5273 = vadd.f32 %v5000, %v5272
        %5274 = vmatprep.mubr.bf16.mxu0 %v2453
        %5275 = vmatmul.mubr.bf16.gmra.mxu0 %v2452
        %v5276 = vpop.f32.mrf.mxu0
        %v5277 = vadd.f32 %v5004, %v5276
        %v5278 = vpop.f32.mrf.mxu0
        %v5279 = vadd.f32 %v5006, %v5278
        %v5280 = vpop.f32.mrf.mxu0
        %v5281 = vadd.f32 %v5008, %v5280
        %v5282 = vpop.f32.mrf.mxu0
        %v5283 = vadd.f32 %v5010, %v5282
        %5284 = vmatprep.mubr.bf16.mxu0 %v2459
        %5285 = vmatmul.mubr.bf16.gmra.mxu0 %v2458
        %v5286 = vpop.f32.mrf.mxu0
        %v5287 = vadd.f32 %v5014, %v5286
        %v5288 = vpop.f32.mrf.mxu0
        %v5289 = vadd.f32 %v5016, %v5288
        %v5290 = vpop.f32.mrf.mxu0
        %v5291 = vadd.f32 %v5018, %v5290
        %v5292 = vpop.f32.mrf.mxu0
        %v5293 = vadd.f32 %v5020, %v5292
        %5294 = vdwg.mxu0
        %5295 = vmatprep.subr.bf16.mxu0 %v3945
        %5296 = vmatpush1.bf16.msra.mxu0 %v3944
        %5297 = vmatprep.subr.bf16.mxu0 %v3939
        %5298 = vmatpush1.bf16.msra.mxu0 %v3938
        %5299 = vmatprep.subr.bf16.mxu0 %v3933
        %5300 = vmatpush1.bf16.msra.mxu0 %v3932
        %5301 = vmatprep.subr.bf16.mxu0 %v3927
        %5302 = vmatpush1.bf16.msra.mxu0 %v3926
        %5303 = vmatprep.subr.bf16.mxu0 %v3921
        %5304 = vmatpush1.bf16.msra.mxu0 %v3920
        %5305 = vmatprep.subr.bf16.mxu0 %v3915
        %5306 = vmatpush1.bf16.msra.mxu0 %v3914
        %5307 = vmatprep.subr.bf16.mxu0 %v3909
        %5308 = vmatpush1.bf16.msra.mxu0 %v3908
        %5309 = vmatprep.subr.bf16.mxu0 %v3903
        %5310 = vmatpush1.bf16.msra.mxu0 %v3902
        %5311 = vmatprep.subr.bf16.mxu0 %v3993
        %5312 = vmatpush2.bf16.msra.mxu0 %v3992
        %5313 = vmatprep.subr.bf16.mxu0 %v3987
        %5314 = vmatpush2.bf16.msra.mxu0 %v3986
        %5315 = vmatprep.subr.bf16.mxu0 %v3981
        %5316 = vmatpush2.bf16.msra.mxu0 %v3980
        %5317 = vmatprep.subr.bf16.mxu0 %v3975
        %5318 = vmatpush2.bf16.msra.mxu0 %v3974
        %5319 = vmatprep.subr.bf16.mxu0 %v3969
        %5320 = vmatpush2.bf16.msra.mxu0 %v3968
        %5321 = vmatprep.subr.bf16.mxu0 %v3963
        %5322 = vmatpush2.bf16.msra.mxu0 %v3962
        %5323 = vmatprep.subr.bf16.mxu0 %v3957
        %5324 = vmatpush2.bf16.msra.mxu0 %v3956
        %5325 = vmatprep.subr.bf16.mxu0 %v3951
        %5326 = vmatpush2.bf16.msra.mxu0 %v3950
        %5327 = vmatprep.mubr.bf16.mxu0 %v2317
        %5328 = vmatmul.mubr.bf16.gmra.mxu0 %v2316
        %v5329 = vpop.f32.mrf.mxu0
        %v5330 = vadd.f32 0.0, %v5329
        %v5331 = vpop.f32.mrf.mxu0
        %v5332 = vadd.f32 0.0, %v5331
        %v5333 = vpop.f32.mrf.mxu0
        %v5334 = vadd.f32 0.0, %v5333
        %v5335 = vpop.f32.mrf.mxu0
        %v5336 = vadd.f32 0.0, %v5335
        %5337 = vmatprep.mubr.bf16.mxu0 %v2323
        %5338 = vmatmul.mubr.bf16.gmra.mxu0 %v2322
        %v5339 = vpop.f32.mrf.mxu0
        %v5340 = vadd.f32 0.0, %v5339
        %v5341 = vpop.f32.mrf.mxu0
        %v5342 = vadd.f32 0.0, %v5341
        %v5343 = vpop.f32.mrf.mxu0
        %v5344 = vadd.f32 0.0, %v5343
        %v5345 = vpop.f32.mrf.mxu0
        %v5346 = vadd.f32 0.0, %v5345
        %5347 = vmatprep.mubr.bf16.mxu0 %v2329
        %5348 = vmatmul.mubr.bf16.gmra.mxu0 %v2328
        %v5349 = vpop.f32.mrf.mxu0
        %v5350 = vadd.f32 0.0, %v5349
        %v5351 = vpop.f32.mrf.mxu0
        %v5352 = vadd.f32 0.0, %v5351
        %v5353 = vpop.f32.mrf.mxu0
        %v5354 = vadd.f32 0.0, %v5353
        %v5355 = vpop.f32.mrf.mxu0
        %v5356 = vadd.f32 0.0, %v5355
        %5357 = vmatprep.mubr.bf16.mxu0 %v2335
        %5358 = vmatmul.mubr.bf16.gmra.mxu0 %v2334
        %v5359 = vpop.f32.mrf.mxu0
        %v5360 = vadd.f32 0.0, %v5359
        %v5361 = vpop.f32.mrf.mxu0
        %v5362 = vadd.f32 0.0, %v5361
        %v5363 = vpop.f32.mrf.mxu0
        %v5364 = vadd.f32 0.0, %v5363
        %v5365 = vpop.f32.mrf.mxu0
        %v5366 = vadd.f32 0.0, %v5365
        %5367 = vmatprep.mubr.bf16.mxu0 %v2341
        %5368 = vmatmul.mubr.bf16.gmra.mxu0 %v2340
        %v5369 = vpop.f32.mrf.mxu0
        %v5370 = vadd.f32 0.0, %v5369
        %v5371 = vpop.f32.mrf.mxu0
        %v5372 = vadd.f32 0.0, %v5371
        %v5373 = vpop.f32.mrf.mxu0
        %v5374 = vadd.f32 0.0, %v5373
        %v5375 = vpop.f32.mrf.mxu0
        %v5376 = vadd.f32 0.0, %v5375
        %5377 = vmatprep.mubr.bf16.mxu0 %v2347
        %5378 = vmatmul.mubr.bf16.gmra.mxu0 %v2346
        %v5379 = vpop.f32.mrf.mxu0
        %v5380 = vadd.f32 0.0, %v5379
        %v5381 = vpop.f32.mrf.mxu0
        %v5382 = vadd.f32 0.0, %v5381
        %v5383 = vpop.f32.mrf.mxu0
        %v5384 = vadd.f32 0.0, %v5383
        %v5385 = vpop.f32.mrf.mxu0
        %v5386 = vadd.f32 0.0, %v5385
        %5387 = vmatprep.mubr.bf16.mxu0 %v2353
        %5388 = vmatmul.mubr.bf16.gmra.mxu0 %v2352
        %v5389 = vpop.f32.mrf.mxu0
        %v5390 = vadd.f32 0.0, %v5389
        %v5391 = vpop.f32.mrf.mxu0
        %v5392 = vadd.f32 0.0, %v5391
        %v5393 = vpop.f32.mrf.mxu0
        %v5394 = vadd.f32 0.0, %v5393
        %v5395 = vpop.f32.mrf.mxu0
        %v5396 = vadd.f32 0.0, %v5395
        %5397 = vmatprep.mubr.bf16.mxu0 %v2359
        %5398 = vmatmul.mubr.bf16.gmra.mxu0 %v2358
        %v5399 = vpop.f32.mrf.mxu0
        %v5400 = vadd.f32 0.0, %v5399
        %v5401 = vpop.f32.mrf.mxu0
        %v5402 = vadd.f32 0.0, %v5401
        %v5403 = vpop.f32.mrf.mxu0
        %v5404 = vadd.f32 0.0, %v5403
        %v5405 = vpop.f32.mrf.mxu0
        %v5406 = vadd.f32 0.0, %v5405
        %5407 = vmatprep.mubr.bf16.mxu0 %v2365
        %5408 = vmatmul.mubr.bf16.gmra.mxu0 %v2364
        %v5409 = vpop.f32.mrf.mxu0
        %v5410 = vadd.f32 0.0, %v5409
        %v5411 = vpop.f32.mrf.mxu0
        %v5412 = vadd.f32 0.0, %v5411
        %v5413 = vpop.f32.mrf.mxu0
        %v5414 = vadd.f32 0.0, %v5413
        %v5415 = vpop.f32.mrf.mxu0
        %v5416 = vadd.f32 0.0, %v5415
        %5417 = vmatprep.mubr.bf16.mxu0 %v2371
        %5418 = vmatmul.mubr.bf16.gmra.mxu0 %v2370
        %v5419 = vpop.f32.mrf.mxu0
        %v5420 = vadd.f32 0.0, %v5419
        %v5421 = vpop.f32.mrf.mxu0
        %v5422 = vadd.f32 0.0, %v5421
        %v5423 = vpop.f32.mrf.mxu0
        %v5424 = vadd.f32 0.0, %v5423
        %v5425 = vpop.f32.mrf.mxu0
        %v5426 = vadd.f32 0.0, %v5425
        %5427 = vmatprep.mubr.bf16.mxu0 %v2377
        %5428 = vmatmul.mubr.bf16.gmra.mxu0 %v2376
        %v5429 = vpop.f32.mrf.mxu0
        %v5430 = vadd.f32 0.0, %v5429
        %v5431 = vpop.f32.mrf.mxu0
        %v5432 = vadd.f32 0.0, %v5431
        %v5433 = vpop.f32.mrf.mxu0
        %v5434 = vadd.f32 0.0, %v5433
        %v5435 = vpop.f32.mrf.mxu0
        %v5436 = vadd.f32 0.0, %v5435
        %5437 = vmatprep.mubr.bf16.mxu0 %v2383
        %5438 = vmatmul.mubr.bf16.gmra.mxu0 %v2382
        %v5439 = vpop.f32.mrf.mxu0
        %v5440 = vadd.f32 0.0, %v5439
        %v5441 = vpop.f32.mrf.mxu0
        %v5442 = vadd.f32 0.0, %v5441
        %v5443 = vpop.f32.mrf.mxu0
        %v5444 = vadd.f32 0.0, %v5443
        %v5445 = vpop.f32.mrf.mxu0
        %v5446 = vadd.f32 0.0, %v5445
        %5447 = vmatprep.mubr.bf16.mxu0 %v2389
        %5448 = vmatmul.mubr.bf16.gmra.mxu0 %v2388
        %v5449 = vpop.f32.mrf.mxu0
        %v5450 = vadd.f32 0.0, %v5449
        %v5451 = vpop.f32.mrf.mxu0
        %v5452 = vadd.f32 0.0, %v5451
        %v5453 = vpop.f32.mrf.mxu0
        %v5454 = vadd.f32 0.0, %v5453
        %v5455 = vpop.f32.mrf.mxu0
        %v5456 = vadd.f32 0.0, %v5455
        %5457 = vmatprep.mubr.bf16.mxu0 %v2395
        %5458 = vmatmul.mubr.bf16.gmra.mxu0 %v2394
        %v5459 = vpop.f32.mrf.mxu0
        %v5460 = vadd.f32 0.0, %v5459
        %v5461 = vpop.f32.mrf.mxu0
        %v5462 = vadd.f32 0.0, %v5461
        %v5463 = vpop.f32.mrf.mxu0
        %v5464 = vadd.f32 0.0, %v5463
        %v5465 = vpop.f32.mrf.mxu0
        %v5466 = vadd.f32 0.0, %v5465
        %5467 = vmatprep.mubr.bf16.mxu0 %v2401
        %5468 = vmatmul.mubr.bf16.gmra.mxu0 %v2400
        %v5469 = vpop.f32.mrf.mxu0
        %v5470 = vadd.f32 0.0, %v5469
        %v5471 = vpop.f32.mrf.mxu0
        %v5472 = vadd.f32 0.0, %v5471
        %v5473 = vpop.f32.mrf.mxu0
        %v5474 = vadd.f32 0.0, %v5473
        %v5475 = vpop.f32.mrf.mxu0
        %v5476 = vadd.f32 0.0, %v5475
        %5477 = vmatprep.mubr.bf16.mxu0 %v2407
        %5478 = vmatmul.mubr.bf16.gmra.mxu0 %v2406
        %v5479 = vpop.f32.mrf.mxu0
        %v5480 = vadd.f32 0.0, %v5479
        %v5481 = vpop.f32.mrf.mxu0
        %v5482 = vadd.f32 0.0, %v5481
        %v5483 = vpop.f32.mrf.mxu0
        %v5484 = vadd.f32 0.0, %v5483
        %v5485 = vpop.f32.mrf.mxu0
        %v5486 = vadd.f32 0.0, %v5485
        %5487 = vmatprep.mubr.bf16.mxu0 %v2413
        %5488 = vmatmul.mubr.bf16.gmra.mxu0 %v2412
        %v5489 = vpop.f32.mrf.mxu0
        %v5490 = vadd.f32 0.0, %v5489
        %v5491 = vpop.f32.mrf.mxu0
        %v5492 = vadd.f32 0.0, %v5491
        %v5493 = vpop.f32.mrf.mxu0
        %v5494 = vadd.f32 0.0, %v5493
        %v5495 = vpop.f32.mrf.mxu0
        %v5496 = vadd.f32 0.0, %v5495
        %5497 = vmatprep.mubr.bf16.mxu0 %v2419
        %5498 = vmatmul.mubr.bf16.gmra.mxu0 %v2418
        %v5499 = vpop.f32.mrf.mxu0
        %v5500 = vadd.f32 0.0, %v5499
        %v5501 = vpop.f32.mrf.mxu0
        %v5502 = vadd.f32 0.0, %v5501
        %v5503 = vpop.f32.mrf.mxu0
        %v5504 = vadd.f32 0.0, %v5503
        %v5505 = vpop.f32.mrf.mxu0
        %v5506 = vadd.f32 0.0, %v5505
        %5507 = vmatprep.mubr.bf16.mxu0 %v2425
        %5508 = vmatmul.mubr.bf16.gmra.mxu0 %v2424
        %v5509 = vpop.f32.mrf.mxu0
        %v5510 = vadd.f32 0.0, %v5509
        %v5511 = vpop.f32.mrf.mxu0
        %v5512 = vadd.f32 0.0, %v5511
        %v5513 = vpop.f32.mrf.mxu0
        %v5514 = vadd.f32 0.0, %v5513
        %v5515 = vpop.f32.mrf.mxu0
        %v5516 = vadd.f32 0.0, %v5515
        %5517 = vmatprep.mubr.bf16.mxu0 %v2431
        %5518 = vmatmul.mubr.bf16.gmra.mxu0 %v2430
        %v5519 = vpop.f32.mrf.mxu0
        %v5520 = vadd.f32 0.0, %v5519
        %v5521 = vpop.f32.mrf.mxu0
        %v5522 = vadd.f32 0.0, %v5521
        %v5523 = vpop.f32.mrf.mxu0
        %v5524 = vadd.f32 0.0, %v5523
        %v5525 = vpop.f32.mrf.mxu0
        %v5526 = vadd.f32 0.0, %v5525
        %5527 = vmatprep.mubr.bf16.mxu0 %v2437
        %5528 = vmatmul.mubr.bf16.gmra.mxu0 %v2436
        %v5529 = vpop.f32.mrf.mxu0
        %v5530 = vadd.f32 0.0, %v5529
        %v5531 = vpop.f32.mrf.mxu0
        %v5532 = vadd.f32 0.0, %v5531
        %v5533 = vpop.f32.mrf.mxu0
        %v5534 = vadd.f32 0.0, %v5533
        %v5535 = vpop.f32.mrf.mxu0
        %v5536 = vadd.f32 0.0, %v5535
        %5537 = vmatprep.mubr.bf16.mxu0 %v2443
        %5538 = vmatmul.mubr.bf16.gmra.mxu0 %v2442
        %v5539 = vpop.f32.mrf.mxu0
        %v5540 = vadd.f32 0.0, %v5539
        %v5541 = vpop.f32.mrf.mxu0
        %v5542 = vadd.f32 0.0, %v5541
        %v5543 = vpop.f32.mrf.mxu0
        %v5544 = vadd.f32 0.0, %v5543
        %v5545 = vpop.f32.mrf.mxu0
        %v5546 = vadd.f32 0.0, %v5545
        %5547 = vmatprep.mubr.bf16.mxu0 %v2449
        %5548 = vmatmul.mubr.bf16.gmra.mxu0 %v2448
        %v5549 = vpop.f32.mrf.mxu0
        %v5550 = vadd.f32 0.0, %v5549
        %v5551 = vpop.f32.mrf.mxu0
        %v5552 = vadd.f32 0.0, %v5551
        %v5553 = vpop.f32.mrf.mxu0
        %v5554 = vadd.f32 0.0, %v5553
        %v5555 = vpop.f32.mrf.mxu0
        %v5556 = vadd.f32 0.0, %v5555
        %5557 = vmatprep.mubr.bf16.mxu0 %v2455
        %5558 = vmatmul.mubr.bf16.gmra.mxu0 %v2454
        %v5559 = vpop.f32.mrf.mxu0
        %v5560 = vadd.f32 0.0, %v5559
        %v5561 = vpop.f32.mrf.mxu0
        %v5562 = vadd.f32 0.0, %v5561
        %v5563 = vpop.f32.mrf.mxu0
        %v5564 = vadd.f32 0.0, %v5563
        %v5565 = vpop.f32.mrf.mxu0
        %v5566 = vadd.f32 0.0, %v5565
        %5567 = vdwg.mxu0
        %5568 = vmatprep.subr.bf16.mxu0 %v4041
        %5569 = vmatpush1.bf16.msra.mxu0 %v4040
        %5570 = vmatprep.subr.bf16.mxu0 %v4035
        %5571 = vmatpush1.bf16.msra.mxu0 %v4034
        %5572 = vmatprep.subr.bf16.mxu0 %v4029
        %5573 = vmatpush1.bf16.msra.mxu0 %v4028
        %5574 = vmatprep.subr.bf16.mxu0 %v4023
        %5575 = vmatpush1.bf16.msra.mxu0 %v4022
        %5576 = vmatprep.subr.bf16.mxu0 %v4017
        %5577 = vmatpush1.bf16.msra.mxu0 %v4016
        %5578 = vmatprep.subr.bf16.mxu0 %v4011
        %5579 = vmatpush1.bf16.msra.mxu0 %v4010
        %5580 = vmatprep.subr.bf16.mxu0 %v4005
        %5581 = vmatpush1.bf16.msra.mxu0 %v4004
        %5582 = vmatprep.subr.bf16.mxu0 %v3999
        %5583 = vmatpush1.bf16.msra.mxu0 %v3998
        %5584 = vmatprep.subr.bf16.mxu0 %v4089
        %5585 = vmatpush2.bf16.msra.mxu0 %v4088
        %5586 = vmatprep.subr.bf16.mxu0 %v4083
        %5587 = vmatpush2.bf16.msra.mxu0 %v4082
        %5588 = vmatprep.subr.bf16.mxu0 %v4077
        %5589 = vmatpush2.bf16.msra.mxu0 %v4076
        %5590 = vmatprep.subr.bf16.mxu0 %v4071
        %5591 = vmatpush2.bf16.msra.mxu0 %v4070
        %5592 = vmatprep.subr.bf16.mxu0 %v4065
        %5593 = vmatpush2.bf16.msra.mxu0 %v4064
        %5594 = vmatprep.subr.bf16.mxu0 %v4059
        %5595 = vmatpush2.bf16.msra.mxu0 %v4058
        %5596 = vmatprep.subr.bf16.mxu0 %v4053
        %5597 = vmatpush2.bf16.msra.mxu0 %v4052
        %5598 = vmatprep.subr.bf16.mxu0 %v4047
        %5599 = vmatpush2.bf16.msra.mxu0 %v4046
        %5600 = vmatprep.mubr.bf16.mxu0 %v2319
        %5601 = vmatmul.mubr.bf16.gmra.mxu0 %v2318
        %v5602 = vpop.f32.mrf.mxu0
        %v5603 = vadd.f32 %v5330, %v5602
        %v5604 = vpop.f32.mrf.mxu0
        %v5605 = vadd.f32 %v5332, %v5604
        %v5606 = vpop.f32.mrf.mxu0
        %v5607 = vadd.f32 %v5334, %v5606
        %v5608 = vpop.f32.mrf.mxu0
        %v5609 = vadd.f32 %v5336, %v5608
        %5610 = vmatprep.mubr.bf16.mxu0 %v2325
        %5611 = vmatmul.mubr.bf16.gmra.mxu0 %v2324
        %v5612 = vpop.f32.mrf.mxu0
        %v5613 = vadd.f32 %v5340, %v5612
        %v5614 = vpop.f32.mrf.mxu0
        %v5615 = vadd.f32 %v5342, %v5614
        %v5616 = vpop.f32.mrf.mxu0
        %v5617 = vadd.f32 %v5344, %v5616
        %v5618 = vpop.f32.mrf.mxu0
        %v5619 = vadd.f32 %v5346, %v5618
        %5620 = vmatprep.mubr.bf16.mxu0 %v2331
        %5621 = vmatmul.mubr.bf16.gmra.mxu0 %v2330
        %v5622 = vpop.f32.mrf.mxu0
        %v5623 = vadd.f32 %v5350, %v5622
        %v5624 = vpop.f32.mrf.mxu0
        %v5625 = vadd.f32 %v5352, %v5624
        %v5626 = vpop.f32.mrf.mxu0
        %v5627 = vadd.f32 %v5354, %v5626
        %v5628 = vpop.f32.mrf.mxu0
        %v5629 = vadd.f32 %v5356, %v5628
        %5630 = vmatprep.mubr.bf16.mxu0 %v2337
        %5631 = vmatmul.mubr.bf16.gmra.mxu0 %v2336
        %v5632 = vpop.f32.mrf.mxu0
        %v5633 = vadd.f32 %v5360, %v5632
        %v5634 = vpop.f32.mrf.mxu0
        %v5635 = vadd.f32 %v5362, %v5634
        %v5636 = vpop.f32.mrf.mxu0
        %v5637 = vadd.f32 %v5364, %v5636
        %v5638 = vpop.f32.mrf.mxu0
        %v5639 = vadd.f32 %v5366, %v5638
        %5640 = vmatprep.mubr.bf16.mxu0 %v2343
        %5641 = vmatmul.mubr.bf16.gmra.mxu0 %v2342
        %v5642 = vpop.f32.mrf.mxu0
        %v5643 = vadd.f32 %v5370, %v5642
        %v5644 = vpop.f32.mrf.mxu0
        %v5645 = vadd.f32 %v5372, %v5644
        %v5646 = vpop.f32.mrf.mxu0
        %v5647 = vadd.f32 %v5374, %v5646
        %v5648 = vpop.f32.mrf.mxu0
        %v5649 = vadd.f32 %v5376, %v5648
        %5650 = vmatprep.mubr.bf16.mxu0 %v2349
        %5651 = vmatmul.mubr.bf16.gmra.mxu0 %v2348
        %v5652 = vpop.f32.mrf.mxu0
        %v5653 = vadd.f32 %v5380, %v5652
        %v5654 = vpop.f32.mrf.mxu0
        %v5655 = vadd.f32 %v5382, %v5654
        %v5656 = vpop.f32.mrf.mxu0
        %v5657 = vadd.f32 %v5384, %v5656
        %v5658 = vpop.f32.mrf.mxu0
        %v5659 = vadd.f32 %v5386, %v5658
        %5660 = vmatprep.mubr.bf16.mxu0 %v2355
        %5661 = vmatmul.mubr.bf16.gmra.mxu0 %v2354
        %v5662 = vpop.f32.mrf.mxu0
        %v5663 = vadd.f32 %v5390, %v5662
        %v5664 = vpop.f32.mrf.mxu0
        %v5665 = vadd.f32 %v5392, %v5664
        %v5666 = vpop.f32.mrf.mxu0
        %v5667 = vadd.f32 %v5394, %v5666
        %v5668 = vpop.f32.mrf.mxu0
        %v5669 = vadd.f32 %v5396, %v5668
        %5670 = vmatprep.mubr.bf16.mxu0 %v2361
        %5671 = vmatmul.mubr.bf16.gmra.mxu0 %v2360
        %v5672 = vpop.f32.mrf.mxu0
        %v5673 = vadd.f32 %v5400, %v5672
        %v5674 = vpop.f32.mrf.mxu0
        %v5675 = vadd.f32 %v5402, %v5674
        %v5676 = vpop.f32.mrf.mxu0
        %v5677 = vadd.f32 %v5404, %v5676
        %v5678 = vpop.f32.mrf.mxu0
        %v5679 = vadd.f32 %v5406, %v5678
        %5680 = vmatprep.mubr.bf16.mxu0 %v2367
        %5681 = vmatmul.mubr.bf16.gmra.mxu0 %v2366
        %v5682 = vpop.f32.mrf.mxu0
        %v5683 = vadd.f32 %v5410, %v5682
        %v5684 = vpop.f32.mrf.mxu0
        %v5685 = vadd.f32 %v5412, %v5684
        %v5686 = vpop.f32.mrf.mxu0
        %v5687 = vadd.f32 %v5414, %v5686
        %v5688 = vpop.f32.mrf.mxu0
        %v5689 = vadd.f32 %v5416, %v5688
        %5690 = vmatprep.mubr.bf16.mxu0 %v2373
        %5691 = vmatmul.mubr.bf16.gmra.mxu0 %v2372
        %v5692 = vpop.f32.mrf.mxu0
        %v5693 = vadd.f32 %v5420, %v5692
        %v5694 = vpop.f32.mrf.mxu0
        %v5695 = vadd.f32 %v5422, %v5694
        %v5696 = vpop.f32.mrf.mxu0
        %v5697 = vadd.f32 %v5424, %v5696
        %v5698 = vpop.f32.mrf.mxu0
        %v5699 = vadd.f32 %v5426, %v5698
        %5700 = vmatprep.mubr.bf16.mxu0 %v2379
        %5701 = vmatmul.mubr.bf16.gmra.mxu0 %v2378
        %v5702 = vpop.f32.mrf.mxu0
        %v5703 = vadd.f32 %v5430, %v5702
        %v5704 = vpop.f32.mrf.mxu0
        %v5705 = vadd.f32 %v5432, %v5704
        %v5706 = vpop.f32.mrf.mxu0
        %v5707 = vadd.f32 %v5434, %v5706
        %v5708 = vpop.f32.mrf.mxu0
        %v5709 = vadd.f32 %v5436, %v5708
        %5710 = vmatprep.mubr.bf16.mxu0 %v2385
        %5711 = vmatmul.mubr.bf16.gmra.mxu0 %v2384
        %v5712 = vpop.f32.mrf.mxu0
        %v5713 = vadd.f32 %v5440, %v5712
        %v5714 = vpop.f32.mrf.mxu0
        %v5715 = vadd.f32 %v5442, %v5714
        %v5716 = vpop.f32.mrf.mxu0
        %v5717 = vadd.f32 %v5444, %v5716
        %v5718 = vpop.f32.mrf.mxu0
        %v5719 = vadd.f32 %v5446, %v5718
        %5720 = vmatprep.mubr.bf16.mxu0 %v2391
        %5721 = vmatmul.mubr.bf16.gmra.mxu0 %v2390
        %v5722 = vpop.f32.mrf.mxu0
        %v5723 = vadd.f32 %v5450, %v5722
        %v5724 = vpop.f32.mrf.mxu0
        %v5725 = vadd.f32 %v5452, %v5724
        %v5726 = vpop.f32.mrf.mxu0
        %v5727 = vadd.f32 %v5454, %v5726
        %v5728 = vpop.f32.mrf.mxu0
        %v5729 = vadd.f32 %v5456, %v5728
        %5730 = vmatprep.mubr.bf16.mxu0 %v2397
        %5731 = vmatmul.mubr.bf16.gmra.mxu0 %v2396
        %v5732 = vpop.f32.mrf.mxu0
        %v5733 = vadd.f32 %v5460, %v5732
        %v5734 = vpop.f32.mrf.mxu0
        %v5735 = vadd.f32 %v5462, %v5734
        %v5736 = vpop.f32.mrf.mxu0
        %v5737 = vadd.f32 %v5464, %v5736
        %v5738 = vpop.f32.mrf.mxu0
        %v5739 = vadd.f32 %v5466, %v5738
        %5740 = vmatprep.mubr.bf16.mxu0 %v2403
        %5741 = vmatmul.mubr.bf16.gmra.mxu0 %v2402
        %v5742 = vpop.f32.mrf.mxu0
        %v5743 = vadd.f32 %v5470, %v5742
        %v5744 = vpop.f32.mrf.mxu0
        %v5745 = vadd.f32 %v5472, %v5744
        %v5746 = vpop.f32.mrf.mxu0
        %v5747 = vadd.f32 %v5474, %v5746
        %v5748 = vpop.f32.mrf.mxu0
        %v5749 = vadd.f32 %v5476, %v5748
        %5750 = vmatprep.mubr.bf16.mxu0 %v2409
        %5751 = vmatmul.mubr.bf16.gmra.mxu0 %v2408
        %v5752 = vpop.f32.mrf.mxu0
        %v5753 = vadd.f32 %v5480, %v5752
        %v5754 = vpop.f32.mrf.mxu0
        %v5755 = vadd.f32 %v5482, %v5754
        %v5756 = vpop.f32.mrf.mxu0
        %v5757 = vadd.f32 %v5484, %v5756
        %v5758 = vpop.f32.mrf.mxu0
        %v5759 = vadd.f32 %v5486, %v5758
        %5760 = vmatprep.mubr.bf16.mxu0 %v2415
        %5761 = vmatmul.mubr.bf16.gmra.mxu0 %v2414
        %v5762 = vpop.f32.mrf.mxu0
        %v5763 = vadd.f32 %v5490, %v5762
        %v5764 = vpop.f32.mrf.mxu0
        %v5765 = vadd.f32 %v5492, %v5764
        %v5766 = vpop.f32.mrf.mxu0
        %v5767 = vadd.f32 %v5494, %v5766
        %v5768 = vpop.f32.mrf.mxu0
        %v5769 = vadd.f32 %v5496, %v5768
        %5770 = vmatprep.mubr.bf16.mxu0 %v2421
        %5771 = vmatmul.mubr.bf16.gmra.mxu0 %v2420
        %v5772 = vpop.f32.mrf.mxu0
        %v5773 = vadd.f32 %v5500, %v5772
        %v5774 = vpop.f32.mrf.mxu0
        %v5775 = vadd.f32 %v5502, %v5774
        %v5776 = vpop.f32.mrf.mxu0
        %v5777 = vadd.f32 %v5504, %v5776
        %v5778 = vpop.f32.mrf.mxu0
        %v5779 = vadd.f32 %v5506, %v5778
        %5780 = vmatprep.mubr.bf16.mxu0 %v2427
        %5781 = vmatmul.mubr.bf16.gmra.mxu0 %v2426
        %v5782 = vpop.f32.mrf.mxu0
        %v5783 = vadd.f32 %v5510, %v5782
        %v5784 = vpop.f32.mrf.mxu0
        %v5785 = vadd.f32 %v5512, %v5784
        %v5786 = vpop.f32.mrf.mxu0
        %v5787 = vadd.f32 %v5514, %v5786
        %v5788 = vpop.f32.mrf.mxu0
        %v5789 = vadd.f32 %v5516, %v5788
        %5790 = vmatprep.mubr.bf16.mxu0 %v2433
        %5791 = vmatmul.mubr.bf16.gmra.mxu0 %v2432
        %v5792 = vpop.f32.mrf.mxu0
        %v5793 = vadd.f32 %v5520, %v5792
        %v5794 = vpop.f32.mrf.mxu0
        %v5795 = vadd.f32 %v5522, %v5794
        %v5796 = vpop.f32.mrf.mxu0
        %v5797 = vadd.f32 %v5524, %v5796
        %v5798 = vpop.f32.mrf.mxu0
        %v5799 = vadd.f32 %v5526, %v5798
        %5800 = vmatprep.mubr.bf16.mxu0 %v2439
        %5801 = vmatmul.mubr.bf16.gmra.mxu0 %v2438
        %v5802 = vpop.f32.mrf.mxu0
        %v5803 = vadd.f32 %v5530, %v5802
        %v5804 = vpop.f32.mrf.mxu0
        %v5805 = vadd.f32 %v5532, %v5804
        %v5806 = vpop.f32.mrf.mxu0
        %v5807 = vadd.f32 %v5534, %v5806
        %v5808 = vpop.f32.mrf.mxu0
        %v5809 = vadd.f32 %v5536, %v5808
        %5810 = vmatprep.mubr.bf16.mxu0 %v2445
        %5811 = vmatmul.mubr.bf16.gmra.mxu0 %v2444
        %v5812 = vpop.f32.mrf.mxu0
        %v5813 = vadd.f32 %v5540, %v5812
        %v5814 = vpop.f32.mrf.mxu0
        %v5815 = vadd.f32 %v5542, %v5814
        %v5816 = vpop.f32.mrf.mxu0
        %v5817 = vadd.f32 %v5544, %v5816
        %v5818 = vpop.f32.mrf.mxu0
        %v5819 = vadd.f32 %v5546, %v5818
        %5820 = vmatprep.mubr.bf16.mxu0 %v2451
        %5821 = vmatmul.mubr.bf16.gmra.mxu0 %v2450
        %v5822 = vpop.f32.mrf.mxu0
        %v5823 = vadd.f32 %v5550, %v5822
        %v5824 = vpop.f32.mrf.mxu0
        %v5825 = vadd.f32 %v5552, %v5824
        %v5826 = vpop.f32.mrf.mxu0
        %v5827 = vadd.f32 %v5554, %v5826
        %v5828 = vpop.f32.mrf.mxu0
        %v5829 = vadd.f32 %v5556, %v5828
        %5830 = vmatprep.mubr.bf16.mxu0 %v2457
        %5831 = vmatmul.mubr.bf16.gmra.mxu0 %v2456
        %v5832 = vpop.f32.mrf.mxu0
        %v5833 = vadd.f32 %v5560, %v5832
        %v5834 = vpop.f32.mrf.mxu0
        %v5835 = vadd.f32 %v5562, %v5834
        %v5836 = vpop.f32.mrf.mxu0
        %v5837 = vadd.f32 %v5564, %v5836
        %v5838 = vpop.f32.mrf.mxu0
        %v5839 = vadd.f32 %v5566, %v5838
        %5840 = vdwg.mxu0
        %5841 = vmatprep.subr.bf16.mxu0 %v4137
        %5842 = vmatpush1.bf16.msra.mxu0 %v4136
        %5843 = vmatprep.subr.bf16.mxu0 %v4131
        %5844 = vmatpush1.bf16.msra.mxu0 %v4130
        %5845 = vmatprep.subr.bf16.mxu0 %v4125
        %5846 = vmatpush1.bf16.msra.mxu0 %v4124
        %5847 = vmatprep.subr.bf16.mxu0 %v4119
        %5848 = vmatpush1.bf16.msra.mxu0 %v4118
        %5849 = vmatprep.subr.bf16.mxu0 %v4113
        %5850 = vmatpush1.bf16.msra.mxu0 %v4112
        %5851 = vmatprep.subr.bf16.mxu0 %v4107
        %5852 = vmatpush1.bf16.msra.mxu0 %v4106
        %5853 = vmatprep.subr.bf16.mxu0 %v4101
        %5854 = vmatpush1.bf16.msra.mxu0 %v4100
        %5855 = vmatprep.subr.bf16.mxu0 %v4095
        %5856 = vmatpush1.bf16.msra.mxu0 %v4094
        %5857 = vmatprep.subr.bf16.mxu0 %v4185
        %5858 = vmatpush2.bf16.msra.mxu0 %v4184
        %5859 = vmatprep.subr.bf16.mxu0 %v4179
        %5860 = vmatpush2.bf16.msra.mxu0 %v4178
        %5861 = vmatprep.subr.bf16.mxu0 %v4173
        %5862 = vmatpush2.bf16.msra.mxu0 %v4172
        %5863 = vmatprep.subr.bf16.mxu0 %v4167
        %5864 = vmatpush2.bf16.msra.mxu0 %v4166
        %5865 = vmatprep.subr.bf16.mxu0 %v4161
        %5866 = vmatpush2.bf16.msra.mxu0 %v4160
        %5867 = vmatprep.subr.bf16.mxu0 %v4155
        %5868 = vmatpush2.bf16.msra.mxu0 %v4154
        %5869 = vmatprep.subr.bf16.mxu0 %v4149
        %5870 = vmatpush2.bf16.msra.mxu0 %v4148
        %5871 = vmatprep.subr.bf16.mxu0 %v4143
        %5872 = vmatpush2.bf16.msra.mxu0 %v4142
        %5873 = vmatprep.mubr.bf16.mxu0 %v2321
        %5874 = vmatmul.mubr.bf16.gmra.mxu0 %v2320
        %v5875 = vpop.f32.mrf.mxu0
        %v5876 = vadd.f32 %v5603, %v5875
        %v5877 = vpop.f32.mrf.mxu0
        %v5878 = vadd.f32 %v5605, %v5877
        %v5879 = vpop.f32.mrf.mxu0
        %v5880 = vadd.f32 %v5607, %v5879
        %v5881 = vpop.f32.mrf.mxu0
        %v5882 = vadd.f32 %v5609, %v5881
        %5883 = vmatprep.mubr.bf16.mxu0 %v2327
        %5884 = vmatmul.mubr.bf16.gmra.mxu0 %v2326
        %v5885 = vpop.f32.mrf.mxu0
        %v5886 = vadd.f32 %v5613, %v5885
        %v5887 = vpop.f32.mrf.mxu0
        %v5888 = vadd.f32 %v5615, %v5887
        %v5889 = vpop.f32.mrf.mxu0
        %v5890 = vadd.f32 %v5617, %v5889
        %v5891 = vpop.f32.mrf.mxu0
        %v5892 = vadd.f32 %v5619, %v5891
        %5893 = vmatprep.mubr.bf16.mxu0 %v2333
        %5894 = vmatmul.mubr.bf16.gmra.mxu0 %v2332
        %v5895 = vpop.f32.mrf.mxu0
        %v5896 = vadd.f32 %v5623, %v5895
        %v5897 = vpop.f32.mrf.mxu0
        %v5898 = vadd.f32 %v5625, %v5897
        %v5899 = vpop.f32.mrf.mxu0
        %v5900 = vadd.f32 %v5627, %v5899
        %v5901 = vpop.f32.mrf.mxu0
        %v5902 = vadd.f32 %v5629, %v5901
        %5903 = vmatprep.mubr.bf16.mxu0 %v2339
        %5904 = vmatmul.mubr.bf16.gmra.mxu0 %v2338
        %v5905 = vpop.f32.mrf.mxu0
        %v5906 = vadd.f32 %v5633, %v5905
        %v5907 = vpop.f32.mrf.mxu0
        %v5908 = vadd.f32 %v5635, %v5907
        %v5909 = vpop.f32.mrf.mxu0
        %v5910 = vadd.f32 %v5637, %v5909
        %v5911 = vpop.f32.mrf.mxu0
        %v5912 = vadd.f32 %v5639, %v5911
        %5913 = vmatprep.mubr.bf16.mxu0 %v2345
        %5914 = vmatmul.mubr.bf16.gmra.mxu0 %v2344
        %v5915 = vpop.f32.mrf.mxu0
        %v5916 = vadd.f32 %v5643, %v5915
        %v5917 = vpop.f32.mrf.mxu0
        %v5918 = vadd.f32 %v5645, %v5917
        %v5919 = vpop.f32.mrf.mxu0
        %v5920 = vadd.f32 %v5647, %v5919
        %v5921 = vpop.f32.mrf.mxu0
        %v5922 = vadd.f32 %v5649, %v5921
        %5923 = vmatprep.mubr.bf16.mxu0 %v2351
        %5924 = vmatmul.mubr.bf16.gmra.mxu0 %v2350
        %v5925 = vpop.f32.mrf.mxu0
        %v5926 = vadd.f32 %v5653, %v5925
        %v5927 = vpop.f32.mrf.mxu0
        %v5928 = vadd.f32 %v5655, %v5927
        %v5929 = vpop.f32.mrf.mxu0
        %v5930 = vadd.f32 %v5657, %v5929
        %v5931 = vpop.f32.mrf.mxu0
        %v5932 = vadd.f32 %v5659, %v5931
        %5933 = vmatprep.mubr.bf16.mxu0 %v2357
        %5934 = vmatmul.mubr.bf16.gmra.mxu0 %v2356
        %v5935 = vpop.f32.mrf.mxu0
        %v5936 = vadd.f32 %v5663, %v5935
        %v5937 = vpop.f32.mrf.mxu0
        %v5938 = vadd.f32 %v5665, %v5937
        %v5939 = vpop.f32.mrf.mxu0
        %v5940 = vadd.f32 %v5667, %v5939
        %v5941 = vpop.f32.mrf.mxu0
        %v5942 = vadd.f32 %v5669, %v5941
        %5943 = vmatprep.mubr.bf16.mxu0 %v2363
        %5944 = vmatmul.mubr.bf16.gmra.mxu0 %v2362
        %v5945 = vpop.f32.mrf.mxu0
        %v5946 = vadd.f32 %v5673, %v5945
        %v5947 = vpop.f32.mrf.mxu0
        %v5948 = vadd.f32 %v5675, %v5947
        %v5949 = vpop.f32.mrf.mxu0
        %v5950 = vadd.f32 %v5677, %v5949
        %v5951 = vpop.f32.mrf.mxu0
        %v5952 = vadd.f32 %v5679, %v5951
        %5953 = vmatprep.mubr.bf16.mxu0 %v2369
        %5954 = vmatmul.mubr.bf16.gmra.mxu0 %v2368
        %v5955 = vpop.f32.mrf.mxu0
        %v5956 = vadd.f32 %v5683, %v5955
        %v5957 = vpop.f32.mrf.mxu0
        %v5958 = vadd.f32 %v5685, %v5957
        %v5959 = vpop.f32.mrf.mxu0
        %v5960 = vadd.f32 %v5687, %v5959
        %v5961 = vpop.f32.mrf.mxu0
        %v5962 = vadd.f32 %v5689, %v5961
        %5963 = vmatprep.mubr.bf16.mxu0 %v2375
        %5964 = vmatmul.mubr.bf16.gmra.mxu0 %v2374
        %v5965 = vpop.f32.mrf.mxu0
        %v5966 = vadd.f32 %v5693, %v5965
        %v5967 = vpop.f32.mrf.mxu0
        %v5968 = vadd.f32 %v5695, %v5967
        %v5969 = vpop.f32.mrf.mxu0
        %v5970 = vadd.f32 %v5697, %v5969
        %v5971 = vpop.f32.mrf.mxu0
        %v5972 = vadd.f32 %v5699, %v5971
        %5973 = vmatprep.mubr.bf16.mxu0 %v2381
        %5974 = vmatmul.mubr.bf16.gmra.mxu0 %v2380
        %v5975 = vpop.f32.mrf.mxu0
        %v5976 = vadd.f32 %v5703, %v5975
        %v5977 = vpop.f32.mrf.mxu0
        %v5978 = vadd.f32 %v5705, %v5977
        %v5979 = vpop.f32.mrf.mxu0
        %v5980 = vadd.f32 %v5707, %v5979
        %v5981 = vpop.f32.mrf.mxu0
        %v5982 = vadd.f32 %v5709, %v5981
        %5983 = vmatprep.mubr.bf16.mxu0 %v2387
        %5984 = vmatmul.mubr.bf16.gmra.mxu0 %v2386
        %v5985 = vpop.f32.mrf.mxu0
        %v5986 = vadd.f32 %v5713, %v5985
        %v5987 = vpop.f32.mrf.mxu0
        %v5988 = vadd.f32 %v5715, %v5987
        %v5989 = vpop.f32.mrf.mxu0
        %v5990 = vadd.f32 %v5717, %v5989
        %v5991 = vpop.f32.mrf.mxu0
        %v5992 = vadd.f32 %v5719, %v5991
        %5993 = vmatprep.mubr.bf16.mxu0 %v2393
        %5994 = vmatmul.mubr.bf16.gmra.mxu0 %v2392
        %v5995 = vpop.f32.mrf.mxu0
        %v5996 = vadd.f32 %v5723, %v5995
        %v5997 = vpop.f32.mrf.mxu0
        %v5998 = vadd.f32 %v5725, %v5997
        %v5999 = vpop.f32.mrf.mxu0
        %v6000 = vadd.f32 %v5727, %v5999
        %v6001 = vpop.f32.mrf.mxu0
        %v6002 = vadd.f32 %v5729, %v6001
        %6003 = vmatprep.mubr.bf16.mxu0 %v2399
        %6004 = vmatmul.mubr.bf16.gmra.mxu0 %v2398
        %v6005 = vpop.f32.mrf.mxu0
        %v6006 = vadd.f32 %v5733, %v6005
        %v6007 = vpop.f32.mrf.mxu0
        %v6008 = vadd.f32 %v5735, %v6007
        %v6009 = vpop.f32.mrf.mxu0
        %v6010 = vadd.f32 %v5737, %v6009
        %v6011 = vpop.f32.mrf.mxu0
        %v6012 = vadd.f32 %v5739, %v6011
        %6013 = vmatprep.mubr.bf16.mxu0 %v2405
        %6014 = vmatmul.mubr.bf16.gmra.mxu0 %v2404
        %v6015 = vpop.f32.mrf.mxu0
        %v6016 = vadd.f32 %v5743, %v6015
        %v6017 = vpop.f32.mrf.mxu0
        %v6018 = vadd.f32 %v5745, %v6017
        %v6019 = vpop.f32.mrf.mxu0
        %v6020 = vadd.f32 %v5747, %v6019
        %v6021 = vpop.f32.mrf.mxu0
        %v6022 = vadd.f32 %v5749, %v6021
        %6023 = vmatprep.mubr.bf16.mxu0 %v2411
        %6024 = vmatmul.mubr.bf16.gmra.mxu0 %v2410
        %v6025 = vpop.f32.mrf.mxu0
        %v6026 = vadd.f32 %v5753, %v6025
        %v6027 = vpop.f32.mrf.mxu0
        %v6028 = vadd.f32 %v5755, %v6027
        %v6029 = vpop.f32.mrf.mxu0
        %v6030 = vadd.f32 %v5757, %v6029
        %v6031 = vpop.f32.mrf.mxu0
        %v6032 = vadd.f32 %v5759, %v6031
        %6033 = vmatprep.mubr.bf16.mxu0 %v2417
        %6034 = vmatmul.mubr.bf16.gmra.mxu0 %v2416
        %v6035 = vpop.f32.mrf.mxu0
        %v6036 = vadd.f32 %v5763, %v6035
        %v6037 = vpop.f32.mrf.mxu0
        %v6038 = vadd.f32 %v5765, %v6037
        %v6039 = vpop.f32.mrf.mxu0
        %v6040 = vadd.f32 %v5767, %v6039
        %v6041 = vpop.f32.mrf.mxu0
        %v6042 = vadd.f32 %v5769, %v6041
        %6043 = vmatprep.mubr.bf16.mxu0 %v2423
        %6044 = vmatmul.mubr.bf16.gmra.mxu0 %v2422
        %v6045 = vpop.f32.mrf.mxu0
        %v6046 = vadd.f32 %v5773, %v6045
        %v6047 = vpop.f32.mrf.mxu0
        %v6048 = vadd.f32 %v5775, %v6047
        %v6049 = vpop.f32.mrf.mxu0
        %v6050 = vadd.f32 %v5777, %v6049
        %v6051 = vpop.f32.mrf.mxu0
        %v6052 = vadd.f32 %v5779, %v6051
        %6053 = vmatprep.mubr.bf16.mxu0 %v2429
        %6054 = vmatmul.mubr.bf16.gmra.mxu0 %v2428
        %v6055 = vpop.f32.mrf.mxu0
        %v6056 = vadd.f32 %v5783, %v6055
        %v6057 = vpop.f32.mrf.mxu0
        %v6058 = vadd.f32 %v5785, %v6057
        %v6059 = vpop.f32.mrf.mxu0
        %v6060 = vadd.f32 %v5787, %v6059
        %v6061 = vpop.f32.mrf.mxu0
        %v6062 = vadd.f32 %v5789, %v6061
        %6063 = vmatprep.mubr.bf16.mxu0 %v2435
        %6064 = vmatmul.mubr.bf16.gmra.mxu0 %v2434
        %v6065 = vpop.f32.mrf.mxu0
        %v6066 = vadd.f32 %v5793, %v6065
        %v6067 = vpop.f32.mrf.mxu0
        %v6068 = vadd.f32 %v5795, %v6067
        %v6069 = vpop.f32.mrf.mxu0
        %v6070 = vadd.f32 %v5797, %v6069
        %v6071 = vpop.f32.mrf.mxu0
        %v6072 = vadd.f32 %v5799, %v6071
        %6073 = vmatprep.mubr.bf16.mxu0 %v2441
        %6074 = vmatmul.mubr.bf16.gmra.mxu0 %v2440
        %v6075 = vpop.f32.mrf.mxu0
        %v6076 = vadd.f32 %v5803, %v6075
        %v6077 = vpop.f32.mrf.mxu0
        %v6078 = vadd.f32 %v5805, %v6077
        %v6079 = vpop.f32.mrf.mxu0
        %v6080 = vadd.f32 %v5807, %v6079
        %v6081 = vpop.f32.mrf.mxu0
        %v6082 = vadd.f32 %v5809, %v6081
        %6083 = vmatprep.mubr.bf16.mxu0 %v2447
        %6084 = vmatmul.mubr.bf16.gmra.mxu0 %v2446
        %v6085 = vpop.f32.mrf.mxu0
        %v6086 = vadd.f32 %v5813, %v6085
        %v6087 = vpop.f32.mrf.mxu0
        %v6088 = vadd.f32 %v5815, %v6087
        %v6089 = vpop.f32.mrf.mxu0
        %v6090 = vadd.f32 %v5817, %v6089
        %v6091 = vpop.f32.mrf.mxu0
        %v6092 = vadd.f32 %v5819, %v6091
        %6093 = vmatprep.mubr.bf16.mxu0 %v2453
        %6094 = vmatmul.mubr.bf16.gmra.mxu0 %v2452
        %v6095 = vpop.f32.mrf.mxu0
        %v6096 = vadd.f32 %v5823, %v6095
        %v6097 = vpop.f32.mrf.mxu0
        %v6098 = vadd.f32 %v5825, %v6097
        %v6099 = vpop.f32.mrf.mxu0
        %v6100 = vadd.f32 %v5827, %v6099
        %v6101 = vpop.f32.mrf.mxu0
        %v6102 = vadd.f32 %v5829, %v6101
        %6103 = vmatprep.mubr.bf16.mxu0 %v2459
        %6104 = vmatmul.mubr.bf16.gmra.mxu0 %v2458
        %v6105 = vpop.f32.mrf.mxu0
        %v6106 = vadd.f32 %v5833, %v6105
        %v6107 = vpop.f32.mrf.mxu0
        %v6108 = vadd.f32 %v5835, %v6107
        %v6109 = vpop.f32.mrf.mxu0
        %v6110 = vadd.f32 %v5837, %v6109
        %v6111 = vpop.f32.mrf.mxu0
        %v6112 = vadd.f32 %v5839, %v6111
        %6113 = vdwg.mxu0
        %6114 = vmatprep.subr.bf16.mxu0 %v3947
        %6115 = vmatpush1.bf16.msra.mxu0 %v3946
        %6116 = vmatprep.subr.bf16.mxu0 %v3941
        %6117 = vmatpush1.bf16.msra.mxu0 %v3940
        %6118 = vmatprep.subr.bf16.mxu0 %v3935
        %6119 = vmatpush1.bf16.msra.mxu0 %v3934
        %6120 = vmatprep.subr.bf16.mxu0 %v3929
        %6121 = vmatpush1.bf16.msra.mxu0 %v3928
        %6122 = vmatprep.subr.bf16.mxu0 %v3923
        %6123 = vmatpush1.bf16.msra.mxu0 %v3922
        %6124 = vmatprep.subr.bf16.mxu0 %v3917
        %6125 = vmatpush1.bf16.msra.mxu0 %v3916
        %6126 = vmatprep.subr.bf16.mxu0 %v3911
        %6127 = vmatpush1.bf16.msra.mxu0 %v3910
        %6128 = vmatprep.subr.bf16.mxu0 %v3905
        %6129 = vmatpush1.bf16.msra.mxu0 %v3904
        %6130 = vmatprep.subr.bf16.mxu0 %v3995
        %6131 = vmatpush2.bf16.msra.mxu0 %v3994
        %6132 = vmatprep.subr.bf16.mxu0 %v3989
        %6133 = vmatpush2.bf16.msra.mxu0 %v3988
        %6134 = vmatprep.subr.bf16.mxu0 %v3983
        %6135 = vmatpush2.bf16.msra.mxu0 %v3982
        %6136 = vmatprep.subr.bf16.mxu0 %v3977
        %6137 = vmatpush2.bf16.msra.mxu0 %v3976
        %6138 = vmatprep.subr.bf16.mxu0 %v3971
        %6139 = vmatpush2.bf16.msra.mxu0 %v3970
        %6140 = vmatprep.subr.bf16.mxu0 %v3965
        %6141 = vmatpush2.bf16.msra.mxu0 %v3964
        %6142 = vmatprep.subr.bf16.mxu0 %v3959
        %6143 = vmatpush2.bf16.msra.mxu0 %v3958
        %6144 = vmatprep.subr.bf16.mxu0 %v3953
        %6145 = vmatpush2.bf16.msra.mxu0 %v3952
        %6146 = vmatprep.mubr.bf16.mxu0 %v2317
        %6147 = vmatmul.mubr.bf16.gmra.mxu0 %v2316
        %v6148 = vpop.f32.mrf.mxu0
        %v6149 = vadd.f32 0.0, %v6148
        %v6150 = vpop.f32.mrf.mxu0
        %v6151 = vadd.f32 0.0, %v6150
        %v6152 = vpop.f32.mrf.mxu0
        %v6153 = vadd.f32 0.0, %v6152
        %v6154 = vpop.f32.mrf.mxu0
        %v6155 = vadd.f32 0.0, %v6154
        %6156 = vmatprep.mubr.bf16.mxu0 %v2323
        %6157 = vmatmul.mubr.bf16.gmra.mxu0 %v2322
        %v6158 = vpop.f32.mrf.mxu0
        %v6159 = vadd.f32 0.0, %v6158
        %v6160 = vpop.f32.mrf.mxu0
        %v6161 = vadd.f32 0.0, %v6160
        %v6162 = vpop.f32.mrf.mxu0
        %v6163 = vadd.f32 0.0, %v6162
        %v6164 = vpop.f32.mrf.mxu0
        %v6165 = vadd.f32 0.0, %v6164
        %6166 = vmatprep.mubr.bf16.mxu0 %v2329
        %6167 = vmatmul.mubr.bf16.gmra.mxu0 %v2328
        %v6168 = vpop.f32.mrf.mxu0
        %v6169 = vadd.f32 0.0, %v6168
        %v6170 = vpop.f32.mrf.mxu0
        %v6171 = vadd.f32 0.0, %v6170
        %v6172 = vpop.f32.mrf.mxu0
        %v6173 = vadd.f32 0.0, %v6172
        %v6174 = vpop.f32.mrf.mxu0
        %v6175 = vadd.f32 0.0, %v6174
        %6176 = vmatprep.mubr.bf16.mxu0 %v2335
        %6177 = vmatmul.mubr.bf16.gmra.mxu0 %v2334
        %v6178 = vpop.f32.mrf.mxu0
        %v6179 = vadd.f32 0.0, %v6178
        %v6180 = vpop.f32.mrf.mxu0
        %v6181 = vadd.f32 0.0, %v6180
        %v6182 = vpop.f32.mrf.mxu0
        %v6183 = vadd.f32 0.0, %v6182
        %v6184 = vpop.f32.mrf.mxu0
        %v6185 = vadd.f32 0.0, %v6184
        %6186 = vmatprep.mubr.bf16.mxu0 %v2341
        %6187 = vmatmul.mubr.bf16.gmra.mxu0 %v2340
        %v6188 = vpop.f32.mrf.mxu0
        %v6189 = vadd.f32 0.0, %v6188
        %v6190 = vpop.f32.mrf.mxu0
        %v6191 = vadd.f32 0.0, %v6190
        %v6192 = vpop.f32.mrf.mxu0
        %v6193 = vadd.f32 0.0, %v6192
        %v6194 = vpop.f32.mrf.mxu0
        %v6195 = vadd.f32 0.0, %v6194
        %6196 = vmatprep.mubr.bf16.mxu0 %v2347
        %6197 = vmatmul.mubr.bf16.gmra.mxu0 %v2346
        %v6198 = vpop.f32.mrf.mxu0
        %v6199 = vadd.f32 0.0, %v6198
        %v6200 = vpop.f32.mrf.mxu0
        %v6201 = vadd.f32 0.0, %v6200
        %v6202 = vpop.f32.mrf.mxu0
        %v6203 = vadd.f32 0.0, %v6202
        %v6204 = vpop.f32.mrf.mxu0
        %v6205 = vadd.f32 0.0, %v6204
        %6206 = vmatprep.mubr.bf16.mxu0 %v2353
        %6207 = vmatmul.mubr.bf16.gmra.mxu0 %v2352
        %v6208 = vpop.f32.mrf.mxu0
        %v6209 = vadd.f32 0.0, %v6208
        %v6210 = vpop.f32.mrf.mxu0
        %v6211 = vadd.f32 0.0, %v6210
        %v6212 = vpop.f32.mrf.mxu0
        %v6213 = vadd.f32 0.0, %v6212
        %v6214 = vpop.f32.mrf.mxu0
        %v6215 = vadd.f32 0.0, %v6214
        %6216 = vmatprep.mubr.bf16.mxu0 %v2359
        %6217 = vmatmul.mubr.bf16.gmra.mxu0 %v2358
        %v6218 = vpop.f32.mrf.mxu0
        %v6219 = vadd.f32 0.0, %v6218
        %v6220 = vpop.f32.mrf.mxu0
        %v6221 = vadd.f32 0.0, %v6220
        %v6222 = vpop.f32.mrf.mxu0
        %v6223 = vadd.f32 0.0, %v6222
        %v6224 = vpop.f32.mrf.mxu0
        %v6225 = vadd.f32 0.0, %v6224
        %6226 = vmatprep.mubr.bf16.mxu0 %v2365
        %6227 = vmatmul.mubr.bf16.gmra.mxu0 %v2364
        %v6228 = vpop.f32.mrf.mxu0
        %v6229 = vadd.f32 0.0, %v6228
        %v6230 = vpop.f32.mrf.mxu0
        %v6231 = vadd.f32 0.0, %v6230
        %v6232 = vpop.f32.mrf.mxu0
        %v6233 = vadd.f32 0.0, %v6232
        %v6234 = vpop.f32.mrf.mxu0
        %v6235 = vadd.f32 0.0, %v6234
        %6236 = vmatprep.mubr.bf16.mxu0 %v2371
        %6237 = vmatmul.mubr.bf16.gmra.mxu0 %v2370
        %v6238 = vpop.f32.mrf.mxu0
        %v6239 = vadd.f32 0.0, %v6238
        %v6240 = vpop.f32.mrf.mxu0
        %v6241 = vadd.f32 0.0, %v6240
        %v6242 = vpop.f32.mrf.mxu0
        %v6243 = vadd.f32 0.0, %v6242
        %v6244 = vpop.f32.mrf.mxu0
        %v6245 = vadd.f32 0.0, %v6244
        %6246 = vmatprep.mubr.bf16.mxu0 %v2377
        %6247 = vmatmul.mubr.bf16.gmra.mxu0 %v2376
        %v6248 = vpop.f32.mrf.mxu0
        %v6249 = vadd.f32 0.0, %v6248
        %v6250 = vpop.f32.mrf.mxu0
        %v6251 = vadd.f32 0.0, %v6250
        %v6252 = vpop.f32.mrf.mxu0
        %v6253 = vadd.f32 0.0, %v6252
        %v6254 = vpop.f32.mrf.mxu0
        %v6255 = vadd.f32 0.0, %v6254
        %6256 = vmatprep.mubr.bf16.mxu0 %v2383
        %6257 = vmatmul.mubr.bf16.gmra.mxu0 %v2382
        %v6258 = vpop.f32.mrf.mxu0
        %v6259 = vadd.f32 0.0, %v6258
        %v6260 = vpop.f32.mrf.mxu0
        %v6261 = vadd.f32 0.0, %v6260
        %v6262 = vpop.f32.mrf.mxu0
        %v6263 = vadd.f32 0.0, %v6262
        %v6264 = vpop.f32.mrf.mxu0
        %v6265 = vadd.f32 0.0, %v6264
        %6266 = vmatprep.mubr.bf16.mxu0 %v2389
        %6267 = vmatmul.mubr.bf16.gmra.mxu0 %v2388
        %v6268 = vpop.f32.mrf.mxu0
        %v6269 = vadd.f32 0.0, %v6268
        %v6270 = vpop.f32.mrf.mxu0
        %v6271 = vadd.f32 0.0, %v6270
        %v6272 = vpop.f32.mrf.mxu0
        %v6273 = vadd.f32 0.0, %v6272
        %v6274 = vpop.f32.mrf.mxu0
        %v6275 = vadd.f32 0.0, %v6274
        %6276 = vmatprep.mubr.bf16.mxu0 %v2395
        %6277 = vmatmul.mubr.bf16.gmra.mxu0 %v2394
        %v6278 = vpop.f32.mrf.mxu0
        %v6279 = vadd.f32 0.0, %v6278
        %v6280 = vpop.f32.mrf.mxu0
        %v6281 = vadd.f32 0.0, %v6280
        %v6282 = vpop.f32.mrf.mxu0
        %v6283 = vadd.f32 0.0, %v6282
        %v6284 = vpop.f32.mrf.mxu0
        %v6285 = vadd.f32 0.0, %v6284
        %6286 = vmatprep.mubr.bf16.mxu0 %v2401
        %6287 = vmatmul.mubr.bf16.gmra.mxu0 %v2400
        %v6288 = vpop.f32.mrf.mxu0
        %v6289 = vadd.f32 0.0, %v6288
        %v6290 = vpop.f32.mrf.mxu0
        %v6291 = vadd.f32 0.0, %v6290
        %v6292 = vpop.f32.mrf.mxu0
        %v6293 = vadd.f32 0.0, %v6292
        %v6294 = vpop.f32.mrf.mxu0
        %v6295 = vadd.f32 0.0, %v6294
        %6296 = vmatprep.mubr.bf16.mxu0 %v2407
        %6297 = vmatmul.mubr.bf16.gmra.mxu0 %v2406
        %v6298 = vpop.f32.mrf.mxu0
        %v6299 = vadd.f32 0.0, %v6298
        %v6300 = vpop.f32.mrf.mxu0
        %v6301 = vadd.f32 0.0, %v6300
        %v6302 = vpop.f32.mrf.mxu0
        %v6303 = vadd.f32 0.0, %v6302
        %v6304 = vpop.f32.mrf.mxu0
        %v6305 = vadd.f32 0.0, %v6304
        %6306 = vmatprep.mubr.bf16.mxu0 %v2413
        %6307 = vmatmul.mubr.bf16.gmra.mxu0 %v2412
        %v6308 = vpop.f32.mrf.mxu0
        %v6309 = vadd.f32 0.0, %v6308
        %v6310 = vpop.f32.mrf.mxu0
        %v6311 = vadd.f32 0.0, %v6310
        %v6312 = vpop.f32.mrf.mxu0
        %v6313 = vadd.f32 0.0, %v6312
        %v6314 = vpop.f32.mrf.mxu0
        %v6315 = vadd.f32 0.0, %v6314
        %6316 = vmatprep.mubr.bf16.mxu0 %v2419
        %6317 = vmatmul.mubr.bf16.gmra.mxu0 %v2418
        %v6318 = vpop.f32.mrf.mxu0
        %v6319 = vadd.f32 0.0, %v6318
        %v6320 = vpop.f32.mrf.mxu0
        %v6321 = vadd.f32 0.0, %v6320
        %v6322 = vpop.f32.mrf.mxu0
        %v6323 = vadd.f32 0.0, %v6322
        %v6324 = vpop.f32.mrf.mxu0
        %v6325 = vadd.f32 0.0, %v6324
        %6326 = vmatprep.mubr.bf16.mxu0 %v2425
        %6327 = vmatmul.mubr.bf16.gmra.mxu0 %v2424
        %v6328 = vpop.f32.mrf.mxu0
        %v6329 = vadd.f32 0.0, %v6328
        %v6330 = vpop.f32.mrf.mxu0
        %v6331 = vadd.f32 0.0, %v6330
        %v6332 = vpop.f32.mrf.mxu0
        %v6333 = vadd.f32 0.0, %v6332
        %v6334 = vpop.f32.mrf.mxu0
        %v6335 = vadd.f32 0.0, %v6334
        %6336 = vmatprep.mubr.bf16.mxu0 %v2431
        %6337 = vmatmul.mubr.bf16.gmra.mxu0 %v2430
        %v6338 = vpop.f32.mrf.mxu0
        %v6339 = vadd.f32 0.0, %v6338
        %v6340 = vpop.f32.mrf.mxu0
        %v6341 = vadd.f32 0.0, %v6340
        %v6342 = vpop.f32.mrf.mxu0
        %v6343 = vadd.f32 0.0, %v6342
        %v6344 = vpop.f32.mrf.mxu0
        %v6345 = vadd.f32 0.0, %v6344
        %6346 = vmatprep.mubr.bf16.mxu0 %v2437
        %6347 = vmatmul.mubr.bf16.gmra.mxu0 %v2436
        %v6348 = vpop.f32.mrf.mxu0
        %v6349 = vadd.f32 0.0, %v6348
        %v6350 = vpop.f32.mrf.mxu0
        %v6351 = vadd.f32 0.0, %v6350
        %v6352 = vpop.f32.mrf.mxu0
        %v6353 = vadd.f32 0.0, %v6352
        %v6354 = vpop.f32.mrf.mxu0
        %v6355 = vadd.f32 0.0, %v6354
        %6356 = vmatprep.mubr.bf16.mxu0 %v2443
        %6357 = vmatmul.mubr.bf16.gmra.mxu0 %v2442
        %v6358 = vpop.f32.mrf.mxu0
        %v6359 = vadd.f32 0.0, %v6358
        %v6360 = vpop.f32.mrf.mxu0
        %v6361 = vadd.f32 0.0, %v6360
        %v6362 = vpop.f32.mrf.mxu0
        %v6363 = vadd.f32 0.0, %v6362
        %v6364 = vpop.f32.mrf.mxu0
        %v6365 = vadd.f32 0.0, %v6364
        %6366 = vmatprep.mubr.bf16.mxu0 %v2449
        %6367 = vmatmul.mubr.bf16.gmra.mxu0 %v2448
        %v6368 = vpop.f32.mrf.mxu0
        %v6369 = vadd.f32 0.0, %v6368
        %v6370 = vpop.f32.mrf.mxu0
        %v6371 = vadd.f32 0.0, %v6370
        %v6372 = vpop.f32.mrf.mxu0
        %v6373 = vadd.f32 0.0, %v6372
        %v6374 = vpop.f32.mrf.mxu0
        %v6375 = vadd.f32 0.0, %v6374
        %6376 = vmatprep.mubr.bf16.mxu0 %v2455
        %6377 = vmatmul.mubr.bf16.gmra.mxu0 %v2454
        %v6378 = vpop.f32.mrf.mxu0
        %v6379 = vadd.f32 0.0, %v6378
        %v6380 = vpop.f32.mrf.mxu0
        %v6381 = vadd.f32 0.0, %v6380
        %v6382 = vpop.f32.mrf.mxu0
        %v6383 = vadd.f32 0.0, %v6382
        %v6384 = vpop.f32.mrf.mxu0
        %v6385 = vadd.f32 0.0, %v6384
        %6386 = vdwg.mxu0
        %6387 = vmatprep.subr.bf16.mxu0 %v4043
        %6388 = vmatpush1.bf16.msra.mxu0 %v4042
        %6389 = vmatprep.subr.bf16.mxu0 %v4037
        %6390 = vmatpush1.bf16.msra.mxu0 %v4036
        %6391 = vmatprep.subr.bf16.mxu0 %v4031
        %6392 = vmatpush1.bf16.msra.mxu0 %v4030
        %6393 = vmatprep.subr.bf16.mxu0 %v4025
        %6394 = vmatpush1.bf16.msra.mxu0 %v4024
        %6395 = vmatprep.subr.bf16.mxu0 %v4019
        %6396 = vmatpush1.bf16.msra.mxu0 %v4018
        %6397 = vmatprep.subr.bf16.mxu0 %v4013
        %6398 = vmatpush1.bf16.msra.mxu0 %v4012
        %6399 = vmatprep.subr.bf16.mxu0 %v4007
        %6400 = vmatpush1.bf16.msra.mxu0 %v4006
        %6401 = vmatprep.subr.bf16.mxu0 %v4001
        %6402 = vmatpush1.bf16.msra.mxu0 %v4000
        %6403 = vmatprep.subr.bf16.mxu0 %v4091
        %6404 = vmatpush2.bf16.msra.mxu0 %v4090
        %6405 = vmatprep.subr.bf16.mxu0 %v4085
        %6406 = vmatpush2.bf16.msra.mxu0 %v4084
        %6407 = vmatprep.subr.bf16.mxu0 %v4079
        %6408 = vmatpush2.bf16.msra.mxu0 %v4078
        %6409 = vmatprep.subr.bf16.mxu0 %v4073
        %6410 = vmatpush2.bf16.msra.mxu0 %v4072
        %6411 = vmatprep.subr.bf16.mxu0 %v4067
        %6412 = vmatpush2.bf16.msra.mxu0 %v4066
        %6413 = vmatprep.subr.bf16.mxu0 %v4061
        %6414 = vmatpush2.bf16.msra.mxu0 %v4060
        %6415 = vmatprep.subr.bf16.mxu0 %v4055
        %6416 = vmatpush2.bf16.msra.mxu0 %v4054
        %6417 = vmatprep.subr.bf16.mxu0 %v4049
        %6418 = vmatpush2.bf16.msra.mxu0 %v4048
        %6419 = vmatprep.mubr.bf16.mxu0 %v2319
        %6420 = vmatmul.mubr.bf16.gmra.mxu0 %v2318
        %v6421 = vpop.f32.mrf.mxu0
        %v6422 = vadd.f32 %v6149, %v6421
        %v6423 = vpop.f32.mrf.mxu0
        %v6424 = vadd.f32 %v6151, %v6423
        %v6425 = vpop.f32.mrf.mxu0
        %v6426 = vadd.f32 %v6153, %v6425
        %v6427 = vpop.f32.mrf.mxu0
        %v6428 = vadd.f32 %v6155, %v6427
        %6429 = vmatprep.mubr.bf16.mxu0 %v2325
        %6430 = vmatmul.mubr.bf16.gmra.mxu0 %v2324
        %v6431 = vpop.f32.mrf.mxu0
        %v6432 = vadd.f32 %v6159, %v6431
        %v6433 = vpop.f32.mrf.mxu0
        %v6434 = vadd.f32 %v6161, %v6433
        %v6435 = vpop.f32.mrf.mxu0
        %v6436 = vadd.f32 %v6163, %v6435
        %v6437 = vpop.f32.mrf.mxu0
        %v6438 = vadd.f32 %v6165, %v6437
        %6439 = vmatprep.mubr.bf16.mxu0 %v2331
        %6440 = vmatmul.mubr.bf16.gmra.mxu0 %v2330
        %v6441 = vpop.f32.mrf.mxu0
        %v6442 = vadd.f32 %v6169, %v6441
        %v6443 = vpop.f32.mrf.mxu0
        %v6444 = vadd.f32 %v6171, %v6443
        %v6445 = vpop.f32.mrf.mxu0
        %v6446 = vadd.f32 %v6173, %v6445
        %v6447 = vpop.f32.mrf.mxu0
        %v6448 = vadd.f32 %v6175, %v6447
        %6449 = vmatprep.mubr.bf16.mxu0 %v2337
        %6450 = vmatmul.mubr.bf16.gmra.mxu0 %v2336
        %v6451 = vpop.f32.mrf.mxu0
        %v6452 = vadd.f32 %v6179, %v6451
        %v6453 = vpop.f32.mrf.mxu0
        %v6454 = vadd.f32 %v6181, %v6453
        %v6455 = vpop.f32.mrf.mxu0
        %v6456 = vadd.f32 %v6183, %v6455
        %v6457 = vpop.f32.mrf.mxu0
        %v6458 = vadd.f32 %v6185, %v6457
        %6459 = vmatprep.mubr.bf16.mxu0 %v2343
        %6460 = vmatmul.mubr.bf16.gmra.mxu0 %v2342
        %v6461 = vpop.f32.mrf.mxu0
        %v6462 = vadd.f32 %v6189, %v6461
        %v6463 = vpop.f32.mrf.mxu0
        %v6464 = vadd.f32 %v6191, %v6463
        %v6465 = vpop.f32.mrf.mxu0
        %v6466 = vadd.f32 %v6193, %v6465
        %v6467 = vpop.f32.mrf.mxu0
        %v6468 = vadd.f32 %v6195, %v6467
        %6469 = vmatprep.mubr.bf16.mxu0 %v2349
        %6470 = vmatmul.mubr.bf16.gmra.mxu0 %v2348
        %v6471 = vpop.f32.mrf.mxu0
        %v6472 = vadd.f32 %v6199, %v6471
        %v6473 = vpop.f32.mrf.mxu0
        %v6474 = vadd.f32 %v6201, %v6473
        %v6475 = vpop.f32.mrf.mxu0
        %v6476 = vadd.f32 %v6203, %v6475
        %v6477 = vpop.f32.mrf.mxu0
        %v6478 = vadd.f32 %v6205, %v6477
        %6479 = vmatprep.mubr.bf16.mxu0 %v2355
        %6480 = vmatmul.mubr.bf16.gmra.mxu0 %v2354
        %v6481 = vpop.f32.mrf.mxu0
        %v6482 = vadd.f32 %v6209, %v6481
        %v6483 = vpop.f32.mrf.mxu0
        %v6484 = vadd.f32 %v6211, %v6483
        %v6485 = vpop.f32.mrf.mxu0
        %v6486 = vadd.f32 %v6213, %v6485
        %v6487 = vpop.f32.mrf.mxu0
        %v6488 = vadd.f32 %v6215, %v6487
        %6489 = vmatprep.mubr.bf16.mxu0 %v2361
        %6490 = vmatmul.mubr.bf16.gmra.mxu0 %v2360
        %v6491 = vpop.f32.mrf.mxu0
        %v6492 = vadd.f32 %v6219, %v6491
        %v6493 = vpop.f32.mrf.mxu0
        %v6494 = vadd.f32 %v6221, %v6493
        %v6495 = vpop.f32.mrf.mxu0
        %v6496 = vadd.f32 %v6223, %v6495
        %v6497 = vpop.f32.mrf.mxu0
        %v6498 = vadd.f32 %v6225, %v6497
        %6499 = vmatprep.mubr.bf16.mxu0 %v2367
        %6500 = vmatmul.mubr.bf16.gmra.mxu0 %v2366
        %v6501 = vpop.f32.mrf.mxu0
        %v6502 = vadd.f32 %v6229, %v6501
        %v6503 = vpop.f32.mrf.mxu0
        %v6504 = vadd.f32 %v6231, %v6503
        %v6505 = vpop.f32.mrf.mxu0
        %v6506 = vadd.f32 %v6233, %v6505
        %v6507 = vpop.f32.mrf.mxu0
        %v6508 = vadd.f32 %v6235, %v6507
        %6509 = vmatprep.mubr.bf16.mxu0 %v2373
        %6510 = vmatmul.mubr.bf16.gmra.mxu0 %v2372
        %v6511 = vpop.f32.mrf.mxu0
        %v6512 = vadd.f32 %v6239, %v6511
        %v6513 = vpop.f32.mrf.mxu0
        %v6514 = vadd.f32 %v6241, %v6513
        %v6515 = vpop.f32.mrf.mxu0
        %v6516 = vadd.f32 %v6243, %v6515
        %v6517 = vpop.f32.mrf.mxu0
        %v6518 = vadd.f32 %v6245, %v6517
        %6519 = vmatprep.mubr.bf16.mxu0 %v2379
        %6520 = vmatmul.mubr.bf16.gmra.mxu0 %v2378
        %v6521 = vpop.f32.mrf.mxu0
        %v6522 = vadd.f32 %v6249, %v6521
        %v6523 = vpop.f32.mrf.mxu0
        %v6524 = vadd.f32 %v6251, %v6523
        %v6525 = vpop.f32.mrf.mxu0
        %v6526 = vadd.f32 %v6253, %v6525
        %v6527 = vpop.f32.mrf.mxu0
        %v6528 = vadd.f32 %v6255, %v6527
        %6529 = vmatprep.mubr.bf16.mxu0 %v2385
        %6530 = vmatmul.mubr.bf16.gmra.mxu0 %v2384
        %v6531 = vpop.f32.mrf.mxu0
        %v6532 = vadd.f32 %v6259, %v6531
        %v6533 = vpop.f32.mrf.mxu0
        %v6534 = vadd.f32 %v6261, %v6533
        %v6535 = vpop.f32.mrf.mxu0
        %v6536 = vadd.f32 %v6263, %v6535
        %v6537 = vpop.f32.mrf.mxu0
        %v6538 = vadd.f32 %v6265, %v6537
        %6539 = vmatprep.mubr.bf16.mxu0 %v2391
        %6540 = vmatmul.mubr.bf16.gmra.mxu0 %v2390
        %v6541 = vpop.f32.mrf.mxu0
        %v6542 = vadd.f32 %v6269, %v6541
        %v6543 = vpop.f32.mrf.mxu0
        %v6544 = vadd.f32 %v6271, %v6543
        %v6545 = vpop.f32.mrf.mxu0
        %v6546 = vadd.f32 %v6273, %v6545
        %v6547 = vpop.f32.mrf.mxu0
        %v6548 = vadd.f32 %v6275, %v6547
        %6549 = vmatprep.mubr.bf16.mxu0 %v2397
        %6550 = vmatmul.mubr.bf16.gmra.mxu0 %v2396
        %v6551 = vpop.f32.mrf.mxu0
        %v6552 = vadd.f32 %v6279, %v6551
        %v6553 = vpop.f32.mrf.mxu0
        %v6554 = vadd.f32 %v6281, %v6553
        %v6555 = vpop.f32.mrf.mxu0
        %v6556 = vadd.f32 %v6283, %v6555
        %v6557 = vpop.f32.mrf.mxu0
        %v6558 = vadd.f32 %v6285, %v6557
        %6559 = vmatprep.mubr.bf16.mxu0 %v2403
        %6560 = vmatmul.mubr.bf16.gmra.mxu0 %v2402
        %v6561 = vpop.f32.mrf.mxu0
        %v6562 = vadd.f32 %v6289, %v6561
        %v6563 = vpop.f32.mrf.mxu0
        %v6564 = vadd.f32 %v6291, %v6563
        %v6565 = vpop.f32.mrf.mxu0
        %v6566 = vadd.f32 %v6293, %v6565
        %v6567 = vpop.f32.mrf.mxu0
        %v6568 = vadd.f32 %v6295, %v6567
        %6569 = vmatprep.mubr.bf16.mxu0 %v2409
        %6570 = vmatmul.mubr.bf16.gmra.mxu0 %v2408
        %v6571 = vpop.f32.mrf.mxu0
        %v6572 = vadd.f32 %v6299, %v6571
        %v6573 = vpop.f32.mrf.mxu0
        %v6574 = vadd.f32 %v6301, %v6573
        %v6575 = vpop.f32.mrf.mxu0
        %v6576 = vadd.f32 %v6303, %v6575
        %v6577 = vpop.f32.mrf.mxu0
        %v6578 = vadd.f32 %v6305, %v6577
        %6579 = vmatprep.mubr.bf16.mxu0 %v2415
        %6580 = vmatmul.mubr.bf16.gmra.mxu0 %v2414
        %v6581 = vpop.f32.mrf.mxu0
        %v6582 = vadd.f32 %v6309, %v6581
        %v6583 = vpop.f32.mrf.mxu0
        %v6584 = vadd.f32 %v6311, %v6583
        %v6585 = vpop.f32.mrf.mxu0
        %v6586 = vadd.f32 %v6313, %v6585
        %v6587 = vpop.f32.mrf.mxu0
        %v6588 = vadd.f32 %v6315, %v6587
        %6589 = vmatprep.mubr.bf16.mxu0 %v2421
        %6590 = vmatmul.mubr.bf16.gmra.mxu0 %v2420
        %v6591 = vpop.f32.mrf.mxu0
        %v6592 = vadd.f32 %v6319, %v6591
        %v6593 = vpop.f32.mrf.mxu0
        %v6594 = vadd.f32 %v6321, %v6593
        %v6595 = vpop.f32.mrf.mxu0
        %v6596 = vadd.f32 %v6323, %v6595
        %v6597 = vpop.f32.mrf.mxu0
        %v6598 = vadd.f32 %v6325, %v6597
        %6599 = vmatprep.mubr.bf16.mxu0 %v2427
        %6600 = vmatmul.mubr.bf16.gmra.mxu0 %v2426
        %v6601 = vpop.f32.mrf.mxu0
        %v6602 = vadd.f32 %v6329, %v6601
        %v6603 = vpop.f32.mrf.mxu0
        %v6604 = vadd.f32 %v6331, %v6603
        %v6605 = vpop.f32.mrf.mxu0
        %v6606 = vadd.f32 %v6333, %v6605
        %v6607 = vpop.f32.mrf.mxu0
        %v6608 = vadd.f32 %v6335, %v6607
        %6609 = vmatprep.mubr.bf16.mxu0 %v2433
        %6610 = vmatmul.mubr.bf16.gmra.mxu0 %v2432
        %v6611 = vpop.f32.mrf.mxu0
        %v6612 = vadd.f32 %v6339, %v6611
        %v6613 = vpop.f32.mrf.mxu0
        %v6614 = vadd.f32 %v6341, %v6613
        %v6615 = vpop.f32.mrf.mxu0
        %v6616 = vadd.f32 %v6343, %v6615
        %v6617 = vpop.f32.mrf.mxu0
        %v6618 = vadd.f32 %v6345, %v6617
        %6619 = vmatprep.mubr.bf16.mxu0 %v2439
        %6620 = vmatmul.mubr.bf16.gmra.mxu0 %v2438
        %v6621 = vpop.f32.mrf.mxu0
        %v6622 = vadd.f32 %v6349, %v6621
        %v6623 = vpop.f32.mrf.mxu0
        %v6624 = vadd.f32 %v6351, %v6623
        %v6625 = vpop.f32.mrf.mxu0
        %v6626 = vadd.f32 %v6353, %v6625
        %v6627 = vpop.f32.mrf.mxu0
        %v6628 = vadd.f32 %v6355, %v6627
        %6629 = vmatprep.mubr.bf16.mxu0 %v2445
        %6630 = vmatmul.mubr.bf16.gmra.mxu0 %v2444
        %v6631 = vpop.f32.mrf.mxu0
        %v6632 = vadd.f32 %v6359, %v6631
        %v6633 = vpop.f32.mrf.mxu0
        %v6634 = vadd.f32 %v6361, %v6633
        %v6635 = vpop.f32.mrf.mxu0
        %v6636 = vadd.f32 %v6363, %v6635
        %v6637 = vpop.f32.mrf.mxu0
        %v6638 = vadd.f32 %v6365, %v6637
        %6639 = vmatprep.mubr.bf16.mxu0 %v2451
        %6640 = vmatmul.mubr.bf16.gmra.mxu0 %v2450
        %v6641 = vpop.f32.mrf.mxu0
        %v6642 = vadd.f32 %v6369, %v6641
        %v6643 = vpop.f32.mrf.mxu0
        %v6644 = vadd.f32 %v6371, %v6643
        %v6645 = vpop.f32.mrf.mxu0
        %v6646 = vadd.f32 %v6373, %v6645
        %v6647 = vpop.f32.mrf.mxu0
        %v6648 = vadd.f32 %v6375, %v6647
        %6649 = vmatprep.mubr.bf16.mxu0 %v2457
        %6650 = vmatmul.mubr.bf16.gmra.mxu0 %v2456
        %v6651 = vpop.f32.mrf.mxu0
        %v6652 = vadd.f32 %v6379, %v6651
        %v6653 = vpop.f32.mrf.mxu0
        %v6654 = vadd.f32 %v6381, %v6653
        %v6655 = vpop.f32.mrf.mxu0
        %v6656 = vadd.f32 %v6383, %v6655
        %v6657 = vpop.f32.mrf.mxu0
        %v6658 = vadd.f32 %v6385, %v6657
        %6659 = vdwg.mxu0
        %6660 = vmatprep.subr.bf16.mxu0 %v4139
        %6661 = vmatpush1.bf16.msra.mxu0 %v4138
        %6662 = vmatprep.subr.bf16.mxu0 %v4133
        %6663 = vmatpush1.bf16.msra.mxu0 %v4132
        %6664 = vmatprep.subr.bf16.mxu0 %v4127
        %6665 = vmatpush1.bf16.msra.mxu0 %v4126
        %6666 = vmatprep.subr.bf16.mxu0 %v4121
        %6667 = vmatpush1.bf16.msra.mxu0 %v4120
        %6668 = vmatprep.subr.bf16.mxu0 %v4115
        %6669 = vmatpush1.bf16.msra.mxu0 %v4114
        %6670 = vmatprep.subr.bf16.mxu0 %v4109
        %6671 = vmatpush1.bf16.msra.mxu0 %v4108
        %6672 = vmatprep.subr.bf16.mxu0 %v4103
        %6673 = vmatpush1.bf16.msra.mxu0 %v4102
        %6674 = vmatprep.subr.bf16.mxu0 %v4097
        %6675 = vmatpush1.bf16.msra.mxu0 %v4096
        %6676 = vmatprep.subr.bf16.mxu0 %v4187
        %6677 = vmatpush2.bf16.msra.mxu0 %v4186
        %6678 = vmatprep.subr.bf16.mxu0 %v4181
        %6679 = vmatpush2.bf16.msra.mxu0 %v4180
        %6680 = vmatprep.subr.bf16.mxu0 %v4175
        %6681 = vmatpush2.bf16.msra.mxu0 %v4174
        %6682 = vmatprep.subr.bf16.mxu0 %v4169
        %6683 = vmatpush2.bf16.msra.mxu0 %v4168
        %6684 = vmatprep.subr.bf16.mxu0 %v4163
        %6685 = vmatpush2.bf16.msra.mxu0 %v4162
        %6686 = vmatprep.subr.bf16.mxu0 %v4157
        %6687 = vmatpush2.bf16.msra.mxu0 %v4156
        %6688 = vmatprep.subr.bf16.mxu0 %v4151
        %6689 = vmatpush2.bf16.msra.mxu0 %v4150
        %6690 = vmatprep.subr.bf16.mxu0 %v4145
        %6691 = vmatpush2.bf16.msra.mxu0 %v4144
        %6692 = vmatprep.mubr.bf16.mxu0 %v2321
        %6693 = vmatmul.mubr.bf16.gmra.mxu0 %v2320
        %v6694 = vpop.f32.mrf.mxu0
        %v6695 = vadd.f32 %v6422, %v6694
        %v6696 = vpop.f32.mrf.mxu0
        %v6697 = vadd.f32 %v6424, %v6696
        %v6698 = vpop.f32.mrf.mxu0
        %v6699 = vadd.f32 %v6426, %v6698
        %v6700 = vpop.f32.mrf.mxu0
        %v6701 = vadd.f32 %v6428, %v6700
        %6702 = vmatprep.mubr.bf16.mxu0 %v2327
        %6703 = vmatmul.mubr.bf16.gmra.mxu0 %v2326
        %v6704 = vpop.f32.mrf.mxu0
        %v6705 = vadd.f32 %v6432, %v6704
        %v6706 = vpop.f32.mrf.mxu0
        %v6707 = vadd.f32 %v6434, %v6706
        %v6708 = vpop.f32.mrf.mxu0
        %v6709 = vadd.f32 %v6436, %v6708
        %v6710 = vpop.f32.mrf.mxu0
        %v6711 = vadd.f32 %v6438, %v6710
        %6712 = vmatprep.mubr.bf16.mxu0 %v2333
        %6713 = vmatmul.mubr.bf16.gmra.mxu0 %v2332
        %v6714 = vpop.f32.mrf.mxu0
        %v6715 = vadd.f32 %v6442, %v6714
        %v6716 = vpop.f32.mrf.mxu0
        %v6717 = vadd.f32 %v6444, %v6716
        %v6718 = vpop.f32.mrf.mxu0
        %v6719 = vadd.f32 %v6446, %v6718
        %v6720 = vpop.f32.mrf.mxu0
        %v6721 = vadd.f32 %v6448, %v6720
        %6722 = vmatprep.mubr.bf16.mxu0 %v2339
        %6723 = vmatmul.mubr.bf16.gmra.mxu0 %v2338
        %v6724 = vpop.f32.mrf.mxu0
        %v6725 = vadd.f32 %v6452, %v6724
        %v6726 = vpop.f32.mrf.mxu0
        %v6727 = vadd.f32 %v6454, %v6726
        %v6728 = vpop.f32.mrf.mxu0
        %v6729 = vadd.f32 %v6456, %v6728
        %v6730 = vpop.f32.mrf.mxu0
        %v6731 = vadd.f32 %v6458, %v6730
        %6732 = vmatprep.mubr.bf16.mxu0 %v2345
        %6733 = vmatmul.mubr.bf16.gmra.mxu0 %v2344
        %v6734 = vpop.f32.mrf.mxu0
        %v6735 = vadd.f32 %v6462, %v6734
        %v6736 = vpop.f32.mrf.mxu0
        %v6737 = vadd.f32 %v6464, %v6736
        %v6738 = vpop.f32.mrf.mxu0
        %v6739 = vadd.f32 %v6466, %v6738
        %v6740 = vpop.f32.mrf.mxu0
        %v6741 = vadd.f32 %v6468, %v6740
        %6742 = vmatprep.mubr.bf16.mxu0 %v2351
        %6743 = vmatmul.mubr.bf16.gmra.mxu0 %v2350
        %v6744 = vpop.f32.mrf.mxu0
        %v6745 = vadd.f32 %v6472, %v6744
        %v6746 = vpop.f32.mrf.mxu0
        %v6747 = vadd.f32 %v6474, %v6746
        %v6748 = vpop.f32.mrf.mxu0
        %v6749 = vadd.f32 %v6476, %v6748
        %v6750 = vpop.f32.mrf.mxu0
        %v6751 = vadd.f32 %v6478, %v6750
        %6752 = vmatprep.mubr.bf16.mxu0 %v2357
        %6753 = vmatmul.mubr.bf16.gmra.mxu0 %v2356
        %v6754 = vpop.f32.mrf.mxu0
        %v6755 = vadd.f32 %v6482, %v6754
        %v6756 = vpop.f32.mrf.mxu0
        %v6757 = vadd.f32 %v6484, %v6756
        %v6758 = vpop.f32.mrf.mxu0
        %v6759 = vadd.f32 %v6486, %v6758
        %v6760 = vpop.f32.mrf.mxu0
        %v6761 = vadd.f32 %v6488, %v6760
        %6762 = vmatprep.mubr.bf16.mxu0 %v2363
        %6763 = vmatmul.mubr.bf16.gmra.mxu0 %v2362
        %v6764 = vpop.f32.mrf.mxu0
        %v6765 = vadd.f32 %v6492, %v6764
        %v6766 = vpop.f32.mrf.mxu0
        %v6767 = vadd.f32 %v6494, %v6766
        %v6768 = vpop.f32.mrf.mxu0
        %v6769 = vadd.f32 %v6496, %v6768
        %v6770 = vpop.f32.mrf.mxu0
        %v6771 = vadd.f32 %v6498, %v6770
        %6772 = vmatprep.mubr.bf16.mxu0 %v2369
        %6773 = vmatmul.mubr.bf16.gmra.mxu0 %v2368
        %v6774 = vpop.f32.mrf.mxu0
        %v6775 = vadd.f32 %v6502, %v6774
        %v6776 = vpop.f32.mrf.mxu0
        %v6777 = vadd.f32 %v6504, %v6776
        %v6778 = vpop.f32.mrf.mxu0
        %v6779 = vadd.f32 %v6506, %v6778
        %v6780 = vpop.f32.mrf.mxu0
        %v6781 = vadd.f32 %v6508, %v6780
        %6782 = vmatprep.mubr.bf16.mxu0 %v2375
        %6783 = vmatmul.mubr.bf16.gmra.mxu0 %v2374
        %v6784 = vpop.f32.mrf.mxu0
        %v6785 = vadd.f32 %v6512, %v6784
        %v6786 = vpop.f32.mrf.mxu0
        %v6787 = vadd.f32 %v6514, %v6786
        %v6788 = vpop.f32.mrf.mxu0
        %v6789 = vadd.f32 %v6516, %v6788
        %v6790 = vpop.f32.mrf.mxu0
        %v6791 = vadd.f32 %v6518, %v6790
        %6792 = vmatprep.mubr.bf16.mxu0 %v2381
        %6793 = vmatmul.mubr.bf16.gmra.mxu0 %v2380
        %v6794 = vpop.f32.mrf.mxu0
        %v6795 = vadd.f32 %v6522, %v6794
        %v6796 = vpop.f32.mrf.mxu0
        %v6797 = vadd.f32 %v6524, %v6796
        %v6798 = vpop.f32.mrf.mxu0
        %v6799 = vadd.f32 %v6526, %v6798
        %v6800 = vpop.f32.mrf.mxu0
        %v6801 = vadd.f32 %v6528, %v6800
        %6802 = vmatprep.mubr.bf16.mxu0 %v2387
        %6803 = vmatmul.mubr.bf16.gmra.mxu0 %v2386
        %v6804 = vpop.f32.mrf.mxu0
        %v6805 = vadd.f32 %v6532, %v6804
        %v6806 = vpop.f32.mrf.mxu0
        %v6807 = vadd.f32 %v6534, %v6806
        %v6808 = vpop.f32.mrf.mxu0
        %v6809 = vadd.f32 %v6536, %v6808
        %v6810 = vpop.f32.mrf.mxu0
        %v6811 = vadd.f32 %v6538, %v6810
        %6812 = vmatprep.mubr.bf16.mxu0 %v2393
        %6813 = vmatmul.mubr.bf16.gmra.mxu0 %v2392
        %v6814 = vpop.f32.mrf.mxu0
        %v6815 = vadd.f32 %v6542, %v6814
        %v6816 = vpop.f32.mrf.mxu0
        %v6817 = vadd.f32 %v6544, %v6816
        %v6818 = vpop.f32.mrf.mxu0
        %v6819 = vadd.f32 %v6546, %v6818
        %v6820 = vpop.f32.mrf.mxu0
        %v6821 = vadd.f32 %v6548, %v6820
        %6822 = vmatprep.mubr.bf16.mxu0 %v2399
        %6823 = vmatmul.mubr.bf16.gmra.mxu0 %v2398
        %v6824 = vpop.f32.mrf.mxu0
        %v6825 = vadd.f32 %v6552, %v6824
        %v6826 = vpop.f32.mrf.mxu0
        %v6827 = vadd.f32 %v6554, %v6826
        %v6828 = vpop.f32.mrf.mxu0
        %v6829 = vadd.f32 %v6556, %v6828
        %v6830 = vpop.f32.mrf.mxu0
        %v6831 = vadd.f32 %v6558, %v6830
        %6832 = vmatprep.mubr.bf16.mxu0 %v2405
        %6833 = vmatmul.mubr.bf16.gmra.mxu0 %v2404
        %v6834 = vpop.f32.mrf.mxu0
        %v6835 = vadd.f32 %v6562, %v6834
        %v6836 = vpop.f32.mrf.mxu0
        %v6837 = vadd.f32 %v6564, %v6836
        %v6838 = vpop.f32.mrf.mxu0
        %v6839 = vadd.f32 %v6566, %v6838
        %v6840 = vpop.f32.mrf.mxu0
        %v6841 = vadd.f32 %v6568, %v6840
        %6842 = vmatprep.mubr.bf16.mxu0 %v2411
        %6843 = vmatmul.mubr.bf16.gmra.mxu0 %v2410
        %v6844 = vpop.f32.mrf.mxu0
        %v6845 = vadd.f32 %v6572, %v6844
        %v6846 = vpop.f32.mrf.mxu0
        %v6847 = vadd.f32 %v6574, %v6846
        %v6848 = vpop.f32.mrf.mxu0
        %v6849 = vadd.f32 %v6576, %v6848
        %v6850 = vpop.f32.mrf.mxu0
        %v6851 = vadd.f32 %v6578, %v6850
        %6852 = vmatprep.mubr.bf16.mxu0 %v2417
        %6853 = vmatmul.mubr.bf16.gmra.mxu0 %v2416
        %v6854 = vpop.f32.mrf.mxu0
        %v6855 = vadd.f32 %v6582, %v6854
        %v6856 = vpop.f32.mrf.mxu0
        %v6857 = vadd.f32 %v6584, %v6856
        %v6858 = vpop.f32.mrf.mxu0
        %v6859 = vadd.f32 %v6586, %v6858
        %v6860 = vpop.f32.mrf.mxu0
        %v6861 = vadd.f32 %v6588, %v6860
        %6862 = vmatprep.mubr.bf16.mxu0 %v2423
        %6863 = vmatmul.mubr.bf16.gmra.mxu0 %v2422
        %v6864 = vpop.f32.mrf.mxu0
        %v6865 = vadd.f32 %v6592, %v6864
        %v6866 = vpop.f32.mrf.mxu0
        %v6867 = vadd.f32 %v6594, %v6866
        %v6868 = vpop.f32.mrf.mxu0
        %v6869 = vadd.f32 %v6596, %v6868
        %v6870 = vpop.f32.mrf.mxu0
        %v6871 = vadd.f32 %v6598, %v6870
        %6872 = vmatprep.mubr.bf16.mxu0 %v2429
        %6873 = vmatmul.mubr.bf16.gmra.mxu0 %v2428
        %v6874 = vpop.f32.mrf.mxu0
        %v6875 = vadd.f32 %v6602, %v6874
        %v6876 = vpop.f32.mrf.mxu0
        %v6877 = vadd.f32 %v6604, %v6876
        %v6878 = vpop.f32.mrf.mxu0
        %v6879 = vadd.f32 %v6606, %v6878
        %v6880 = vpop.f32.mrf.mxu0
        %v6881 = vadd.f32 %v6608, %v6880
        %6882 = vmatprep.mubr.bf16.mxu0 %v2435
        %6883 = vmatmul.mubr.bf16.gmra.mxu0 %v2434
        %v6884 = vpop.f32.mrf.mxu0
        %v6885 = vadd.f32 %v6612, %v6884
        %v6886 = vpop.f32.mrf.mxu0
        %v6887 = vadd.f32 %v6614, %v6886
        %v6888 = vpop.f32.mrf.mxu0
        %v6889 = vadd.f32 %v6616, %v6888
        %v6890 = vpop.f32.mrf.mxu0
        %v6891 = vadd.f32 %v6618, %v6890
        %6892 = vmatprep.mubr.bf16.mxu0 %v2441
        %6893 = vmatmul.mubr.bf16.gmra.mxu0 %v2440
        %v6894 = vpop.f32.mrf.mxu0
        %v6895 = vadd.f32 %v6622, %v6894
        %v6896 = vpop.f32.mrf.mxu0
        %v6897 = vadd.f32 %v6624, %v6896
        %v6898 = vpop.f32.mrf.mxu0
        %v6899 = vadd.f32 %v6626, %v6898
        %v6900 = vpop.f32.mrf.mxu0
        %v6901 = vadd.f32 %v6628, %v6900
        %6902 = vmatprep.mubr.bf16.mxu0 %v2447
        %6903 = vmatmul.mubr.bf16.gmra.mxu0 %v2446
        %v6904 = vpop.f32.mrf.mxu0
        %v6905 = vadd.f32 %v6632, %v6904
        %v6906 = vpop.f32.mrf.mxu0
        %v6907 = vadd.f32 %v6634, %v6906
        %v6908 = vpop.f32.mrf.mxu0
        %v6909 = vadd.f32 %v6636, %v6908
        %v6910 = vpop.f32.mrf.mxu0
        %v6911 = vadd.f32 %v6638, %v6910
        %6912 = vmatprep.mubr.bf16.mxu0 %v2453
        %6913 = vmatmul.mubr.bf16.gmra.mxu0 %v2452
        %v6914 = vpop.f32.mrf.mxu0
        %v6915 = vadd.f32 %v6642, %v6914
        %v6916 = vpop.f32.mrf.mxu0
        %v6917 = vadd.f32 %v6644, %v6916
        %v6918 = vpop.f32.mrf.mxu0
        %v6919 = vadd.f32 %v6646, %v6918
        %v6920 = vpop.f32.mrf.mxu0
        %v6921 = vadd.f32 %v6648, %v6920
        %6922 = vmatprep.mubr.bf16.mxu0 %v2459
        %6923 = vmatmul.mubr.bf16.gmra.mxu0 %v2458
        %v6924 = vpop.f32.mrf.mxu0
        %v6925 = vadd.f32 %v6652, %v6924
        %v6926 = vpop.f32.mrf.mxu0
        %v6927 = vadd.f32 %v6654, %v6926
        %v6928 = vpop.f32.mrf.mxu0
        %v6929 = vadd.f32 %v6656, %v6928
        %v6930 = vpop.f32.mrf.mxu0
        %v6931 = vadd.f32 %v6658, %v6930
        %6932 = vdwg.mxu0
        %v6933 = vadd.f32 %v2460, %v5057
        %v6934 = vadd.f32 %v2461, %v5059
        %v6935 = vadd.f32 %v2462, %v5876
        %v6936 = vadd.f32 %v2463, %v5878
        %v6937 = vadd.f32 %v2464, %v6695
        %v6938 = vadd.f32 %v2465, %v6697
        %v6939 = vadd.f32 %v2466, %v5061
        %v6940 = vadd.f32 %v2467, %v5063
        %v6941 = vadd.f32 %v2468, %v5880
        %v6942 = vadd.f32 %v2469, %v5882
        %v6943 = vadd.f32 %v2470, %v6699
        %v6944 = vadd.f32 %v2471, %v6701
        %v6945 = vadd.f32 %v2472, %v5067
        %v6946 = vadd.f32 %v2473, %v5069
        %v6947 = vadd.f32 %v2474, %v5886
        %v6948 = vadd.f32 %v2475, %v5888
        %v6949 = vadd.f32 %v2476, %v6705
        %v6950 = vadd.f32 %v2477, %v6707
        %v6951 = vadd.f32 %v2478, %v5071
        %v6952 = vadd.f32 %v2479, %v5073
        %v6953 = vadd.f32 %v2480, %v5890
        %v6954 = vadd.f32 %v2481, %v5892
        %v6955 = vadd.f32 %v2482, %v6709
        %v6956 = vadd.f32 %v2483, %v6711
        %v6957 = vadd.f32 %v2484, %v5077
        %v6958 = vadd.f32 %v2485, %v5079
        %v6959 = vadd.f32 %v2486, %v5896
        %v6960 = vadd.f32 %v2487, %v5898
        %v6961 = vadd.f32 %v2488, %v6715
        %v6962 = vadd.f32 %v2489, %v6717
        %v6963 = vadd.f32 %v2490, %v5081
        %v6964 = vadd.f32 %v2491, %v5083
        %v6965 = vadd.f32 %v2492, %v5900
        %v6966 = vadd.f32 %v2493, %v5902
        %v6967 = vadd.f32 %v2494, %v6719
        %v6968 = vadd.f32 %v2495, %v6721
        %v6969 = vadd.f32 %v2496, %v5087
        %v6970 = vadd.f32 %v2497, %v5089
        %v6971 = vadd.f32 %v2498, %v5906
        %v6972 = vadd.f32 %v2499, %v5908
        %v6973 = vadd.f32 %v2500, %v6725
        %v6974 = vadd.f32 %v2501, %v6727
        %v6975 = vadd.f32 %v2502, %v5091
        %v6976 = vadd.f32 %v2503, %v5093
        %v6977 = vadd.f32 %v2504, %v5910
        %v6978 = vadd.f32 %v2505, %v5912
        %v6979 = vadd.f32 %v2506, %v6729
        %v6980 = vadd.f32 %v2507, %v6731
        %v6981 = vadd.f32 %v2508, %v5097
        %v6982 = vadd.f32 %v2509, %v5099
        %v6983 = vadd.f32 %v2510, %v5916
        %v6984 = vadd.f32 %v2511, %v5918
        %v6985 = vadd.f32 %v2512, %v6735
        %v6986 = vadd.f32 %v2513, %v6737
        %v6987 = vadd.f32 %v2514, %v5101
        %v6988 = vadd.f32 %v2515, %v5103
        %v6989 = vadd.f32 %v2516, %v5920
        %v6990 = vadd.f32 %v2517, %v5922
        %v6991 = vadd.f32 %v2518, %v6739
        %v6992 = vadd.f32 %v2519, %v6741
        %v6993 = vadd.f32 %v2520, %v5107
        %v6994 = vadd.f32 %v2521, %v5109
        %v6995 = vadd.f32 %v2522, %v5926
        %v6996 = vadd.f32 %v2523, %v5928
        %v6997 = vadd.f32 %v2524, %v6745
        %v6998 = vadd.f32 %v2525, %v6747
        %v6999 = vadd.f32 %v2526, %v5111
        %v7000 = vadd.f32 %v2527, %v5113
        %v7001 = vadd.f32 %v2528, %v5930
        %v7002 = vadd.f32 %v2529, %v5932
        %v7003 = vadd.f32 %v2530, %v6749
        %v7004 = vadd.f32 %v2531, %v6751
        %v7005 = vadd.f32 %v2532, %v5117
        %v7006 = vadd.f32 %v2533, %v5119
        %v7007 = vadd.f32 %v2534, %v5936
        %v7008 = vadd.f32 %v2535, %v5938
        %v7009 = vadd.f32 %v2536, %v6755
        %v7010 = vadd.f32 %v2537, %v6757
        %v7011 = vadd.f32 %v2538, %v5121
        %v7012 = vadd.f32 %v2539, %v5123
        %v7013 = vadd.f32 %v2540, %v5940
        %v7014 = vadd.f32 %v2541, %v5942
        %v7015 = vadd.f32 %v2542, %v6759
        %v7016 = vadd.f32 %v2543, %v6761
        %v7017 = vadd.f32 %v2544, %v5127
        %v7018 = vadd.f32 %v2545, %v5129
        %v7019 = vadd.f32 %v2546, %v5946
        %v7020 = vadd.f32 %v2547, %v5948
        %v7021 = vadd.f32 %v2548, %v6765
        %v7022 = vadd.f32 %v2549, %v6767
        %v7023 = vadd.f32 %v2550, %v5131
        %v7024 = vadd.f32 %v2551, %v5133
        %v7025 = vadd.f32 %v2552, %v5950
        %v7026 = vadd.f32 %v2553, %v5952
        %v7027 = vadd.f32 %v2554, %v6769
        %v7028 = vadd.f32 %v2555, %v6771
        %v7029 = vadd.f32 %v2556, %v5137
        %v7030 = vadd.f32 %v2557, %v5139
        %v7031 = vadd.f32 %v2558, %v5956
        %v7032 = vadd.f32 %v2559, %v5958
        %v7033 = vadd.f32 %v2560, %v6775
        %v7034 = vadd.f32 %v2561, %v6777
        %v7035 = vadd.f32 %v2562, %v5141
        %v7036 = vadd.f32 %v2563, %v5143
        %v7037 = vadd.f32 %v2564, %v5960
        %v7038 = vadd.f32 %v2565, %v5962
        %v7039 = vadd.f32 %v2566, %v6779
        %v7040 = vadd.f32 %v2567, %v6781
        %v7041 = vadd.f32 %v2568, %v5147
        %v7042 = vadd.f32 %v2569, %v5149
        %v7043 = vadd.f32 %v2570, %v5966
        %v7044 = vadd.f32 %v2571, %v5968
        %v7045 = vadd.f32 %v2572, %v6785
        %v7046 = vadd.f32 %v2573, %v6787
        %v7047 = vadd.f32 %v2574, %v5151
        %v7048 = vadd.f32 %v2575, %v5153
        %v7049 = vadd.f32 %v2576, %v5970
        %v7050 = vadd.f32 %v2577, %v5972
        %v7051 = vadd.f32 %v2578, %v6789
        %v7052 = vadd.f32 %v2579, %v6791
        %v7053 = vadd.f32 %v2580, %v5157
        %v7054 = vadd.f32 %v2581, %v5159
        %v7055 = vadd.f32 %v2582, %v5976
        %v7056 = vadd.f32 %v2583, %v5978
        %v7057 = vadd.f32 %v2584, %v6795
        %v7058 = vadd.f32 %v2585, %v6797
        %v7059 = vadd.f32 %v2586, %v5161
        %v7060 = vadd.f32 %v2587, %v5163
        %v7061 = vadd.f32 %v2588, %v5980
        %v7062 = vadd.f32 %v2589, %v5982
        %v7063 = vadd.f32 %v2590, %v6799
        %v7064 = vadd.f32 %v2591, %v6801
        %v7065 = vadd.f32 %v2592, %v5167
        %v7066 = vadd.f32 %v2593, %v5169
        %v7067 = vadd.f32 %v2594, %v5986
        %v7068 = vadd.f32 %v2595, %v5988
        %v7069 = vadd.f32 %v2596, %v6805
        %v7070 = vadd.f32 %v2597, %v6807
        %v7071 = vadd.f32 %v2598, %v5171
        %v7072 = vadd.f32 %v2599, %v5173
        %v7073 = vadd.f32 %v2600, %v5990
        %v7074 = vadd.f32 %v2601, %v5992
        %v7075 = vadd.f32 %v2602, %v6809
        %v7076 = vadd.f32 %v2603, %v6811
        %v7077 = vadd.f32 %v2604, %v5177
        %v7078 = vadd.f32 %v2605, %v5179
        %v7079 = vadd.f32 %v2606, %v5996
        %v7080 = vadd.f32 %v2607, %v5998
        %v7081 = vadd.f32 %v2608, %v6815
        %v7082 = vadd.f32 %v2609, %v6817
        %v7083 = vadd.f32 %v2610, %v5181
        %v7084 = vadd.f32 %v2611, %v5183
        %v7085 = vadd.f32 %v2612, %v6000
        %v7086 = vadd.f32 %v2613, %v6002
        %v7087 = vadd.f32 %v2614, %v6819
        %v7088 = vadd.f32 %v2615, %v6821
        %v7089 = vadd.f32 %v2616, %v5187
        %v7090 = vadd.f32 %v2617, %v5189
        %v7091 = vadd.f32 %v2618, %v6006
        %v7092 = vadd.f32 %v2619, %v6008
        %v7093 = vadd.f32 %v2620, %v6825
        %v7094 = vadd.f32 %v2621, %v6827
        %v7095 = vadd.f32 %v2622, %v5191
        %v7096 = vadd.f32 %v2623, %v5193
        %v7097 = vadd.f32 %v2624, %v6010
        %v7098 = vadd.f32 %v2625, %v6012
        %v7099 = vadd.f32 %v2626, %v6829
        %v7100 = vadd.f32 %v2627, %v6831
        %v7101 = vadd.f32 %v2628, %v5197
        %v7102 = vadd.f32 %v2629, %v5199
        %v7103 = vadd.f32 %v2630, %v6016
        %v7104 = vadd.f32 %v2631, %v6018
        %v7105 = vadd.f32 %v2632, %v6835
        %v7106 = vadd.f32 %v2633, %v6837
        %v7107 = vadd.f32 %v2634, %v5201
        %v7108 = vadd.f32 %v2635, %v5203
        %v7109 = vadd.f32 %v2636, %v6020
        %v7110 = vadd.f32 %v2637, %v6022
        %v7111 = vadd.f32 %v2638, %v6839
        %v7112 = vadd.f32 %v2639, %v6841
        %v7113 = vadd.f32 %v2640, %v5207
        %v7114 = vadd.f32 %v2641, %v5209
        %v7115 = vadd.f32 %v2642, %v6026
        %v7116 = vadd.f32 %v2643, %v6028
        %v7117 = vadd.f32 %v2644, %v6845
        %v7118 = vadd.f32 %v2645, %v6847
        %v7119 = vadd.f32 %v2646, %v5211
        %v7120 = vadd.f32 %v2647, %v5213
        %v7121 = vadd.f32 %v2648, %v6030
        %v7122 = vadd.f32 %v2649, %v6032
        %v7123 = vadd.f32 %v2650, %v6849
        %v7124 = vadd.f32 %v2651, %v6851
        %v7125 = vadd.f32 %v2652, %v5217
        %v7126 = vadd.f32 %v2653, %v5219
        %v7127 = vadd.f32 %v2654, %v6036
        %v7128 = vadd.f32 %v2655, %v6038
        %v7129 = vadd.f32 %v2656, %v6855
        %v7130 = vadd.f32 %v2657, %v6857
        %v7131 = vadd.f32 %v2658, %v5221
        %v7132 = vadd.f32 %v2659, %v5223
        %v7133 = vadd.f32 %v2660, %v6040
        %v7134 = vadd.f32 %v2661, %v6042
        %v7135 = vadd.f32 %v2662, %v6859
        %v7136 = vadd.f32 %v2663, %v6861
        %v7137 = vadd.f32 %v2664, %v5227
        %v7138 = vadd.f32 %v2665, %v5229
        %v7139 = vadd.f32 %v2666, %v6046
        %v7140 = vadd.f32 %v2667, %v6048
        %v7141 = vadd.f32 %v2668, %v6865
        %v7142 = vadd.f32 %v2669, %v6867
        %v7143 = vadd.f32 %v2670, %v5231
        %v7144 = vadd.f32 %v2671, %v5233
        %v7145 = vadd.f32 %v2672, %v6050
        %v7146 = vadd.f32 %v2673, %v6052
        %v7147 = vadd.f32 %v2674, %v6869
        %v7148 = vadd.f32 %v2675, %v6871
        %v7149 = vadd.f32 %v2676, %v5237
        %v7150 = vadd.f32 %v2677, %v5239
        %v7151 = vadd.f32 %v2678, %v6056
        %v7152 = vadd.f32 %v2679, %v6058
        %v7153 = vadd.f32 %v2680, %v6875
        %v7154 = vadd.f32 %v2681, %v6877
        %v7155 = vadd.f32 %v2682, %v5241
        %v7156 = vadd.f32 %v2683, %v5243
        %v7157 = vadd.f32 %v2684, %v6060
        %v7158 = vadd.f32 %v2685, %v6062
        %v7159 = vadd.f32 %v2686, %v6879
        %v7160 = vadd.f32 %v2687, %v6881
        %v7161 = vadd.f32 %v2688, %v5247
        %v7162 = vadd.f32 %v2689, %v5249
        %v7163 = vadd.f32 %v2690, %v6066
        %v7164 = vadd.f32 %v2691, %v6068
        %v7165 = vadd.f32 %v2692, %v6885
        %v7166 = vadd.f32 %v2693, %v6887
        %v7167 = vadd.f32 %v2694, %v5251
        %v7168 = vadd.f32 %v2695, %v5253
        %v7169 = vadd.f32 %v2696, %v6070
        %v7170 = vadd.f32 %v2697, %v6072
        %v7171 = vadd.f32 %v2698, %v6889
        %v7172 = vadd.f32 %v2699, %v6891
        %v7173 = vadd.f32 %v2700, %v5257
        %v7174 = vadd.f32 %v2701, %v5259
        %v7175 = vadd.f32 %v2702, %v6076
        %v7176 = vadd.f32 %v2703, %v6078
        %v7177 = vadd.f32 %v2704, %v6895
        %v7178 = vadd.f32 %v2705, %v6897
        %v7179 = vadd.f32 %v2706, %v5261
        %v7180 = vadd.f32 %v2707, %v5263
        %v7181 = vadd.f32 %v2708, %v6080
        %v7182 = vadd.f32 %v2709, %v6082
        %v7183 = vadd.f32 %v2710, %v6899
        %v7184 = vadd.f32 %v2711, %v6901
        %v7185 = vadd.f32 %v2712, %v5267
        %v7186 = vadd.f32 %v2713, %v5269
        %v7187 = vadd.f32 %v2714, %v6086
        %v7188 = vadd.f32 %v2715, %v6088
        %v7189 = vadd.f32 %v2716, %v6905
        %v7190 = vadd.f32 %v2717, %v6907
        %v7191 = vadd.f32 %v2718, %v5271
        %v7192 = vadd.f32 %v2719, %v5273
        %v7193 = vadd.f32 %v2720, %v6090
        %v7194 = vadd.f32 %v2721, %v6092
        %v7195 = vadd.f32 %v2722, %v6909
        %v7196 = vadd.f32 %v2723, %v6911
        %v7197 = vadd.f32 %v2724, %v5277
        %v7198 = vadd.f32 %v2725, %v5279
        %v7199 = vadd.f32 %v2726, %v6096
        %v7200 = vadd.f32 %v2727, %v6098
        %v7201 = vadd.f32 %v2728, %v6915
        %v7202 = vadd.f32 %v2729, %v6917
        %v7203 = vadd.f32 %v2730, %v5281
        %v7204 = vadd.f32 %v2731, %v5283
        %v7205 = vadd.f32 %v2732, %v6100
        %v7206 = vadd.f32 %v2733, %v6102
        %v7207 = vadd.f32 %v2734, %v6919
        %v7208 = vadd.f32 %v2735, %v6921
        %v7209 = vadd.f32 %v2736, %v5287
        %v7210 = vadd.f32 %v2737, %v5289
        %v7211 = vadd.f32 %v2738, %v6106
        %v7212 = vadd.f32 %v2739, %v6108
        %v7213 = vadd.f32 %v2740, %v6925
        %v7214 = vadd.f32 %v2741, %v6927
        %v7215 = vadd.f32 %v2742, %v5291
        %v7216 = vadd.f32 %v2743, %v5293
        %v7217 = vadd.f32 %v2744, %v6110
        %v7218 = vadd.f32 %v2745, %v6112
        %v7219 = vadd.f32 %v2746, %v6929
        %v7220 = vadd.f32 %v2747, %v6931
        %7221 = vst [vmem:[#allocation8] sm:$0xff] %v6933
        %7222 = vst [vmem:[#allocation8 + $0x8] sm:$0xff] %v6934
        %7223 = vst [vmem:[#allocation8 + $0x10] sm:$0xff] %v6935
        %7224 = vst [vmem:[#allocation8 + $0x18] sm:$0xff] %v6936
        %7225 = vst [vmem:[#allocation8 + $0x20] sm:$0xff] %v6937
        %7226 = vst [vmem:[#allocation8 + $0x28] sm:$0xff] %v6938
        %7227 = vst [vmem:[#allocation8 + $0x30] sm:$0xff] %v6939
        %7228 = vst [vmem:[#allocation8 + $0x38] sm:$0xff] %v6940
        %7229 = vst [vmem:[#allocation8 + $0x40] sm:$0xff] %v6941
        %7230 = vst [vmem:[#allocation8 + $0x48] sm:$0xff] %v6942
        %7231 = vst [vmem:[#allocation8 + $0x50] sm:$0xff] %v6943
        %7232 = vst [vmem:[#allocation8 + $0x58] sm:$0xff] %v6944
        %7233 = vst [vmem:[#allocation8 + $0x60] sm:$0xff] %v6945
        %7234 = vst [vmem:[#allocation8 + $0x68] sm:$0xff] %v6946
        %7235 = vst [vmem:[#allocation8 + $0x70] sm:$0xff] %v6947
        %7236 = vst [vmem:[#allocation8 + $0x78] sm:$0xff] %v6948
        %7237 = vst [vmem:[#allocation8 + $0x80] sm:$0xff] %v6949
        %7238 = vst [vmem:[#allocation8 + $0x88] sm:$0xff] %v6950
        %7239 = vst [vmem:[#allocation8 + $0x90] sm:$0xff] %v6951
        %7240 = vst [vmem:[#allocation8 + $0x98] sm:$0xff] %v6952
        %7241 = vst [vmem:[#allocation8 + $0xa0] sm:$0xff] %v6953
        %7242 = vst [vmem:[#allocation8 + $0xa8] sm:$0xff] %v6954
        %7243 = vst [vmem:[#allocation8 + $0xb0] sm:$0xff] %v6955
        %7244 = vst [vmem:[#allocation8 + $0xb8] sm:$0xff] %v6956
        %7245 = vst [vmem:[#allocation8 + $0xc0] sm:$0xff] %v6957
        %7246 = vst [vmem:[#allocation8 + $0xc8] sm:$0xff] %v6958
        %7247 = vst [vmem:[#allocation8 + $0xd0] sm:$0xff] %v6959
        %7248 = vst [vmem:[#allocation8 + $0xd8] sm:$0xff] %v6960
        %7249 = vst [vmem:[#allocation8 + $0xe0] sm:$0xff] %v6961
        %7250 = vst [vmem:[#allocation8 + $0xe8] sm:$0xff] %v6962
        %7251 = vst [vmem:[#allocation8 + $0xf0] sm:$0xff] %v6963
        %7252 = vst [vmem:[#allocation8 + $0xf8] sm:$0xff] %v6964
        %7253 = vst [vmem:[#allocation8 + $0x100] sm:$0xff] %v6965
        %7254 = vst [vmem:[#allocation8 + $0x108] sm:$0xff] %v6966
        %7255 = vst [vmem:[#allocation8 + $0x110] sm:$0xff] %v6967
        %7256 = vst [vmem:[#allocation8 + $0x118] sm:$0xff] %v6968
        %7257 = vst [vmem:[#allocation8 + $0x120] sm:$0xff] %v6969
        %7258 = vst [vmem:[#allocation8 + $0x128] sm:$0xff] %v6970
        %7259 = vst [vmem:[#allocation8 + $0x130] sm:$0xff] %v6971
        %7260 = vst [vmem:[#allocation8 + $0x138] sm:$0xff] %v6972
        %7261 = vst [vmem:[#allocation8 + $0x140] sm:$0xff] %v6973
        %7262 = vst [vmem:[#allocation8 + $0x148] sm:$0xff] %v6974
        %7263 = vst [vmem:[#allocation8 + $0x150] sm:$0xff] %v6975
        %7264 = vst [vmem:[#allocation8 + $0x158] sm:$0xff] %v6976
        %7265 = vst [vmem:[#allocation8 + $0x160] sm:$0xff] %v6977
        %7266 = vst [vmem:[#allocation8 + $0x168] sm:$0xff] %v6978
        %7267 = vst [vmem:[#allocation8 + $0x170] sm:$0xff] %v6979
        %7268 = vst [vmem:[#allocation8 + $0x178] sm:$0xff] %v6980
        %7269 = vst [vmem:[#allocation8 + $0x180] sm:$0xff] %v6981
        %7270 = vst [vmem:[#allocation8 + $0x188] sm:$0xff] %v6982
        %7271 = vst [vmem:[#allocation8 + $0x190] sm:$0xff] %v6983
        %7272 = vst [vmem:[#allocation8 + $0x198] sm:$0xff] %v6984
        %7273 = vst [vmem:[#allocation8 + $0x1a0] sm:$0xff] %v6985
        %7274 = vst [vmem:[#allocation8 + $0x1a8] sm:$0xff] %v6986
        %7275 = vst [vmem:[#allocation8 + $0x1b0] sm:$0xff] %v6987
        %7276 = vst [vmem:[#allocation8 + $0x1b8] sm:$0xff] %v6988
        %7277 = vst [vmem:[#allocation8 + $0x1c0] sm:$0xff] %v6989
        %7278 = vst [vmem:[#allocation8 + $0x1c8] sm:$0xff] %v6990
        %7279 = vst [vmem:[#allocation8 + $0x1d0] sm:$0xff] %v6991
        %7280 = vst [vmem:[#allocation8 + $0x1d8] sm:$0xff] %v6992
        %7281 = vst [vmem:[#allocation8 + $0x1e0] sm:$0xff] %v6993
        %7282 = vst [vmem:[#allocation8 + $0x1e8] sm:$0xff] %v6994
        %7283 = vst [vmem:[#allocation8 + $0x1f0] sm:$0xff] %v6995
        %7284 = vst [vmem:[#allocation8 + $0x1f8] sm:$0xff] %v6996
        %7285 = vst [vmem:[#allocation8 + $0x200] sm:$0xff] %v6997
        %7286 = vst [vmem:[#allocation8 + $0x208] sm:$0xff] %v6998
        %7287 = vst [vmem:[#allocation8 + $0x210] sm:$0xff] %v6999
        %7288 = vst [vmem:[#allocation8 + $0x218] sm:$0xff] %v7000
        %7289 = vst [vmem:[#allocation8 + $0x220] sm:$0xff] %v7001
        %7290 = vst [vmem:[#allocation8 + $0x228] sm:$0xff] %v7002
        %7291 = vst [vmem:[#allocation8 + $0x230] sm:$0xff] %v7003
        %7292 = vst [vmem:[#allocation8 + $0x238] sm:$0xff] %v7004
        %7293 = vst [vmem:[#allocation8 + $0x240] sm:$0xff] %v7005
        %7294 = vst [vmem:[#allocation8 + $0x248] sm:$0xff] %v7006
        %7295 = vst [vmem:[#allocation8 + $0x250] sm:$0xff] %v7007
        %7296 = vst [vmem:[#allocation8 + $0x258] sm:$0xff] %v7008
        %7297 = vst [vmem:[#allocation8 + $0x260] sm:$0xff] %v7009
        %7298 = vst [vmem:[#allocation8 + $0x268] sm:$0xff] %v7010
        %7299 = vst [vmem:[#allocation8 + $0x270] sm:$0xff] %v7011
        %7300 = vst [vmem:[#allocation8 + $0x278] sm:$0xff] %v7012
        %7301 = vst [vmem:[#allocation8 + $0x280] sm:$0xff] %v7013
        %7302 = vst [vmem:[#allocation8 + $0x288] sm:$0xff] %v7014
        %7303 = vst [vmem:[#allocation8 + $0x290] sm:$0xff] %v7015
        %7304 = vst [vmem:[#allocation8 + $0x298] sm:$0xff] %v7016
        %7305 = vst [vmem:[#allocation8 + $0x2a0] sm:$0xff] %v7017
        %7306 = vst [vmem:[#allocation8 + $0x2a8] sm:$0xff] %v7018
        %7307 = vst [vmem:[#allocation8 + $0x2b0] sm:$0xff] %v7019
        %7308 = vst [vmem:[#allocation8 + $0x2b8] sm:$0xff] %v7020
        %7309 = vst [vmem:[#allocation8 + $0x2c0] sm:$0xff] %v7021
        %7310 = vst [vmem:[#allocation8 + $0x2c8] sm:$0xff] %v7022
        %7311 = vst [vmem:[#allocation8 + $0x2d0] sm:$0xff] %v7023
        %7312 = vst [vmem:[#allocation8 + $0x2d8] sm:$0xff] %v7024
        %7313 = vst [vmem:[#allocation8 + $0x2e0] sm:$0xff] %v7025
        %7314 = vst [vmem:[#allocation8 + $0x2e8] sm:$0xff] %v7026
        %7315 = vst [vmem:[#allocation8 + $0x2f0] sm:$0xff] %v7027
        %7316 = vst [vmem:[#allocation8 + $0x2f8] sm:$0xff] %v7028
        %7317 = vst [vmem:[#allocation8 + $0x300] sm:$0xff] %v7029
        %7318 = vst [vmem:[#allocation8 + $0x308] sm:$0xff] %v7030
        %7319 = vst [vmem:[#allocation8 + $0x310] sm:$0xff] %v7031
        %7320 = vst [vmem:[#allocation8 + $0x318] sm:$0xff] %v7032
        %7321 = vst [vmem:[#allocation8 + $0x320] sm:$0xff] %v7033
        %7322 = vst [vmem:[#allocation8 + $0x328] sm:$0xff] %v7034
        %7323 = vst [vmem:[#allocation8 + $0x330] sm:$0xff] %v7035
        %7324 = vst [vmem:[#allocation8 + $0x338] sm:$0xff] %v7036
        %7325 = vst [vmem:[#allocation8 + $0x340] sm:$0xff] %v7037
        %7326 = vst [vmem:[#allocation8 + $0x348] sm:$0xff] %v7038
        %7327 = vst [vmem:[#allocation8 + $0x350] sm:$0xff] %v7039
        %7328 = vst [vmem:[#allocation8 + $0x358] sm:$0xff] %v7040
        %7329 = vst [vmem:[#allocation8 + $0x360] sm:$0xff] %v7041
        %7330 = vst [vmem:[#allocation8 + $0x368] sm:$0xff] %v7042
        %7331 = vst [vmem:[#allocation8 + $0x370] sm:$0xff] %v7043
        %7332 = vst [vmem:[#allocation8 + $0x378] sm:$0xff] %v7044
        %7333 = vst [vmem:[#allocation8 + $0x380] sm:$0xff] %v7045
        %7334 = vst [vmem:[#allocation8 + $0x388] sm:$0xff] %v7046
        %7335 = vst [vmem:[#allocation8 + $0x390] sm:$0xff] %v7047
        %7336 = vst [vmem:[#allocation8 + $0x398] sm:$0xff] %v7048
        %7337 = vst [vmem:[#allocation8 + $0x3a0] sm:$0xff] %v7049
        %7338 = vst [vmem:[#allocation8 + $0x3a8] sm:$0xff] %v7050
        %7339 = vst [vmem:[#allocation8 + $0x3b0] sm:$0xff] %v7051
        %7340 = vst [vmem:[#allocation8 + $0x3b8] sm:$0xff] %v7052
        %7341 = vst [vmem:[#allocation8 + $0x3c0] sm:$0xff] %v7053
        %7342 = vst [vmem:[#allocation8 + $0x3c8] sm:$0xff] %v7054
        %7343 = vst [vmem:[#allocation8 + $0x3d0] sm:$0xff] %v7055
        %7344 = vst [vmem:[#allocation8 + $0x3d8] sm:$0xff] %v7056
        %7345 = vst [vmem:[#allocation8 + $0x3e0] sm:$0xff] %v7057
        %7346 = vst [vmem:[#allocation8 + $0x3e8] sm:$0xff] %v7058
        %7347 = vst [vmem:[#allocation8 + $0x3f0] sm:$0xff] %v7059
        %7348 = vst [vmem:[#allocation8 + $0x3f8] sm:$0xff] %v7060
        %7349 = vst [vmem:[#allocation8 + $0x400] sm:$0xff] %v7061
        %7350 = vst [vmem:[#allocation8 + $0x408] sm:$0xff] %v7062
        %7351 = vst [vmem:[#allocation8 + $0x410] sm:$0xff] %v7063
        %7352 = vst [vmem:[#allocation8 + $0x418] sm:$0xff] %v7064
        %7353 = vst [vmem:[#allocation8 + $0x420] sm:$0xff] %v7065
        %7354 = vst [vmem:[#allocation8 + $0x428] sm:$0xff] %v7066
        %7355 = vst [vmem:[#allocation8 + $0x430] sm:$0xff] %v7067
        %7356 = vst [vmem:[#allocation8 + $0x438] sm:$0xff] %v7068
        %7357 = vst [vmem:[#allocation8 + $0x440] sm:$0xff] %v7069
        %7358 = vst [vmem:[#allocation8 + $0x448] sm:$0xff] %v7070
        %7359 = vst [vmem:[#allocation8 + $0x450] sm:$0xff] %v7071
        %7360 = vst [vmem:[#allocation8 + $0x458] sm:$0xff] %v7072
        %7361 = vst [vmem:[#allocation8 + $0x460] sm:$0xff] %v7073
        %7362 = vst [vmem:[#allocation8 + $0x468] sm:$0xff] %v7074
        %7363 = vst [vmem:[#allocation8 + $0x470] sm:$0xff] %v7075
        %7364 = vst [vmem:[#allocation8 + $0x478] sm:$0xff] %v7076
        %7365 = vst [vmem:[#allocation8 + $0x480] sm:$0xff] %v7077
        %7366 = vst [vmem:[#allocation8 + $0x488] sm:$0xff] %v7078
        %7367 = vst [vmem:[#allocation8 + $0x490] sm:$0xff] %v7079
        %7368 = vst [vmem:[#allocation8 + $0x498] sm:$0xff] %v7080
        %7369 = vst [vmem:[#allocation8 + $0x4a0] sm:$0xff] %v7081
        %7370 = vst [vmem:[#allocation8 + $0x4a8] sm:$0xff] %v7082
        %7371 = vst [vmem:[#allocation8 + $0x4b0] sm:$0xff] %v7083
        %7372 = vst [vmem:[#allocation8 + $0x4b8] sm:$0xff] %v7084
        %7373 = vst [vmem:[#allocation8 + $0x4c0] sm:$0xff] %v7085
        %7374 = vst [vmem:[#allocation8 + $0x4c8] sm:$0xff] %v7086
        %7375 = vst [vmem:[#allocation8 + $0x4d0] sm:$0xff] %v7087
        %7376 = vst [vmem:[#allocation8 + $0x4d8] sm:$0xff] %v7088
        %7377 = vst [vmem:[#allocation8 + $0x4e0] sm:$0xff] %v7089
        %7378 = vst [vmem:[#allocation8 + $0x4e8] sm:$0xff] %v7090
        %7379 = vst [vmem:[#allocation8 + $0x4f0] sm:$0xff] %v7091
        %7380 = vst [vmem:[#allocation8 + $0x4f8] sm:$0xff] %v7092
        %7381 = vst [vmem:[#allocation8 + $0x500] sm:$0xff] %v7093
        %7382 = vst [vmem:[#allocation8 + $0x508] sm:$0xff] %v7094
        %7383 = vst [vmem:[#allocation8 + $0x510] sm:$0xff] %v7095
        %7384 = vst [vmem:[#allocation8 + $0x518] sm:$0xff] %v7096
        %7385 = vst [vmem:[#allocation8 + $0x520] sm:$0xff] %v7097
        %7386 = vst [vmem:[#allocation8 + $0x528] sm:$0xff] %v7098
        %7387 = vst [vmem:[#allocation8 + $0x530] sm:$0xff] %v7099
        %7388 = vst [vmem:[#allocation8 + $0x538] sm:$0xff] %v7100
        %7389 = vst [vmem:[#allocation8 + $0x540] sm:$0xff] %v7101
        %7390 = vst [vmem:[#allocation8 + $0x548] sm:$0xff] %v7102
        %7391 = vst [vmem:[#allocation8 + $0x550] sm:$0xff] %v7103
        %7392 = vst [vmem:[#allocation8 + $0x558] sm:$0xff] %v7104
        %7393 = vst [vmem:[#allocation8 + $0x560] sm:$0xff] %v7105
        %7394 = vst [vmem:[#allocation8 + $0x568] sm:$0xff] %v7106
        %7395 = vst [vmem:[#allocation8 + $0x570] sm:$0xff] %v7107
        %7396 = vst [vmem:[#allocation8 + $0x578] sm:$0xff] %v7108
        %7397 = vst [vmem:[#allocation8 + $0x580] sm:$0xff] %v7109
        %7398 = vst [vmem:[#allocation8 + $0x588] sm:$0xff] %v7110
        %7399 = vst [vmem:[#allocation8 + $0x590] sm:$0xff] %v7111
        %7400 = vst [vmem:[#allocation8 + $0x598] sm:$0xff] %v7112
        %7401 = vst [vmem:[#allocation8 + $0x5a0] sm:$0xff] %v7113
        %7402 = vst [vmem:[#allocation8 + $0x5a8] sm:$0xff] %v7114
        %7403 = vst [vmem:[#allocation8 + $0x5b0] sm:$0xff] %v7115
        %7404 = vst [vmem:[#allocation8 + $0x5b8] sm:$0xff] %v7116
        %7405 = vst [vmem:[#allocation8 + $0x5c0] sm:$0xff] %v7117
        %7406 = vst [vmem:[#allocation8 + $0x5c8] sm:$0xff] %v7118
        %7407 = vst [vmem:[#allocation8 + $0x5d0] sm:$0xff] %v7119
        %7408 = vst [vmem:[#allocation8 + $0x5d8] sm:$0xff] %v7120
        %7409 = vst [vmem:[#allocation8 + $0x5e0] sm:$0xff] %v7121
        %7410 = vst [vmem:[#allocation8 + $0x5e8] sm:$0xff] %v7122
        %7411 = vst [vmem:[#allocation8 + $0x5f0] sm:$0xff] %v7123
        %7412 = vst [vmem:[#allocation8 + $0x5f8] sm:$0xff] %v7124
        %7413 = vst [vmem:[#allocation8 + $0x600] sm:$0xff] %v7125
        %7414 = vst [vmem:[#allocation8 + $0x608] sm:$0xff] %v7126
        %7415 = vst [vmem:[#allocation8 + $0x610] sm:$0xff] %v7127
        %7416 = vst [vmem:[#allocation8 + $0x618] sm:$0xff] %v7128
        %7417 = vst [vmem:[#allocation8 + $0x620] sm:$0xff] %v7129
        %7418 = vst [vmem:[#allocation8 + $0x628] sm:$0xff] %v7130
        %7419 = vst [vmem:[#allocation8 + $0x630] sm:$0xff] %v7131
        %7420 = vst [vmem:[#allocation8 + $0x638] sm:$0xff] %v7132
        %7421 = vst [vmem:[#allocation8 + $0x640] sm:$0xff] %v7133
        %7422 = vst [vmem:[#allocation8 + $0x648] sm:$0xff] %v7134
        %7423 = vst [vmem:[#allocation8 + $0x650] sm:$0xff] %v7135
        %7424 = vst [vmem:[#allocation8 + $0x658] sm:$0xff] %v7136
        %7425 = vst [vmem:[#allocation8 + $0x660] sm:$0xff] %v7137
        %7426 = vst [vmem:[#allocation8 + $0x668] sm:$0xff] %v7138
        %7427 = vst [vmem:[#allocation8 + $0x670] sm:$0xff] %v7139
        %7428 = vst [vmem:[#allocation8 + $0x678] sm:$0xff] %v7140
        %7429 = vst [vmem:[#allocation8 + $0x680] sm:$0xff] %v7141
        %7430 = vst [vmem:[#allocation8 + $0x688] sm:$0xff] %v7142
        %7431 = vst [vmem:[#allocation8 + $0x690] sm:$0xff] %v7143
        %7432 = vst [vmem:[#allocation8 + $0x698] sm:$0xff] %v7144
        %7433 = vst [vmem:[#allocation8 + $0x6a0] sm:$0xff] %v7145
        %7434 = vst [vmem:[#allocation8 + $0x6a8] sm:$0xff] %v7146
        %7435 = vst [vmem:[#allocation8 + $0x6b0] sm:$0xff] %v7147
        %7436 = vst [vmem:[#allocation8 + $0x6b8] sm:$0xff] %v7148
        %7437 = vst [vmem:[#allocation8 + $0x6c0] sm:$0xff] %v7149
        %7438 = vst [vmem:[#allocation8 + $0x6c8] sm:$0xff] %v7150
        %7439 = vst [vmem:[#allocation8 + $0x6d0] sm:$0xff] %v7151
        %7440 = vst [vmem:[#allocation8 + $0x6d8] sm:$0xff] %v7152
        %7441 = vst [vmem:[#allocation8 + $0x6e0] sm:$0xff] %v7153
        %7442 = vst [vmem:[#allocation8 + $0x6e8] sm:$0xff] %v7154
        %7443 = vst [vmem:[#allocation8 + $0x6f0] sm:$0xff] %v7155
        %7444 = vst [vmem:[#allocation8 + $0x6f8] sm:$0xff] %v7156
        %7445 = vst [vmem:[#allocation8 + $0x700] sm:$0xff] %v7157
        %7446 = vst [vmem:[#allocation8 + $0x708] sm:$0xff] %v7158
        %7447 = vst [vmem:[#allocation8 + $0x710] sm:$0xff] %v7159
        %7448 = vst [vmem:[#allocation8 + $0x718] sm:$0xff] %v7160
        %7449 = vst [vmem:[#allocation8 + $0x720] sm:$0xff] %v7161
        %7450 = vst [vmem:[#allocation8 + $0x728] sm:$0xff] %v7162
        %7451 = vst [vmem:[#allocation8 + $0x730] sm:$0xff] %v7163
        %7452 = vst [vmem:[#allocation8 + $0x738] sm:$0xff] %v7164
        %7453 = vst [vmem:[#allocation8 + $0x740] sm:$0xff] %v7165
        %7454 = vst [vmem:[#allocation8 + $0x748] sm:$0xff] %v7166
        %7455 = vst [vmem:[#allocation8 + $0x750] sm:$0xff] %v7167
        %7456 = vst [vmem:[#allocation8 + $0x758] sm:$0xff] %v7168
        %7457 = vst [vmem:[#allocation8 + $0x760] sm:$0xff] %v7169
        %7458 = vst [vmem:[#allocation8 + $0x768] sm:$0xff] %v7170
        %7459 = vst [vmem:[#allocation8 + $0x770] sm:$0xff] %v7171
        %7460 = vst [vmem:[#allocation8 + $0x778] sm:$0xff] %v7172
        %7461 = vst [vmem:[#allocation8 + $0x780] sm:$0xff] %v7173
        %7462 = vst [vmem:[#allocation8 + $0x788] sm:$0xff] %v7174
        %7463 = vst [vmem:[#allocation8 + $0x790] sm:$0xff] %v7175
        %7464 = vst [vmem:[#allocation8 + $0x798] sm:$0xff] %v7176
        %7465 = vst [vmem:[#allocation8 + $0x7a0] sm:$0xff] %v7177
        %7466 = vst [vmem:[#allocation8 + $0x7a8] sm:$0xff] %v7178
        %7467 = vst [vmem:[#allocation8 + $0x7b0] sm:$0xff] %v7179
        %7468 = vst [vmem:[#allocation8 + $0x7b8] sm:$0xff] %v7180
        %7469 = vst [vmem:[#allocation8 + $0x7c0] sm:$0xff] %v7181
        %7470 = vst [vmem:[#allocation8 + $0x7c8] sm:$0xff] %v7182
        %7471 = vst [vmem:[#allocation8 + $0x7d0] sm:$0xff] %v7183
        %7472 = vst [vmem:[#allocation8 + $0x7d8] sm:$0xff] %v7184
        %7473 = vst [vmem:[#allocation8 + $0x7e0] sm:$0xff] %v7185
        %7474 = vst [vmem:[#allocation8 + $0x7e8] sm:$0xff] %v7186
        %7475 = vst [vmem:[#allocation8 + $0x7f0] sm:$0xff] %v7187
        %7476 = vst [vmem:[#allocation8 + $0x7f8] sm:$0xff] %v7188
        %7477 = vst [vmem:[#allocation8 + $0x800] sm:$0xff] %v7189
        %7478 = vst [vmem:[#allocation8 + $0x808] sm:$0xff] %v7190
        %7479 = vst [vmem:[#allocation8 + $0x810] sm:$0xff] %v7191
        %7480 = vst [vmem:[#allocation8 + $0x818] sm:$0xff] %v7192
        %7481 = vst [vmem:[#allocation8 + $0x820] sm:$0xff] %v7193
        %7482 = vst [vmem:[#allocation8 + $0x828] sm:$0xff] %v7194
        %7483 = vst [vmem:[#allocation8 + $0x830] sm:$0xff] %v7195
        %7484 = vst [vmem:[#allocation8 + $0x838] sm:$0xff] %v7196
        %7485 = vst [vmem:[#allocation8 + $0x840] sm:$0xff] %v7197
        %7486 = vst [vmem:[#allocation8 + $0x848] sm:$0xff] %v7198
        %7487 = vst [vmem:[#allocation8 + $0x850] sm:$0xff] %v7199
        %7488 = vst [vmem:[#allocation8 + $0x858] sm:$0xff] %v7200
        %7489 = vst [vmem:[#allocation8 + $0x860] sm:$0xff] %v7201
        %7490 = vst [vmem:[#allocation8 + $0x868] sm:$0xff] %v7202
        %7491 = vst [vmem:[#allocation8 + $0x870] sm:$0xff] %v7203
        %7492 = vst [vmem:[#allocation8 + $0x878] sm:$0xff] %v7204
        %7493 = vst [vmem:[#allocation8 + $0x880] sm:$0xff] %v7205
        %7494 = vst [vmem:[#allocation8 + $0x888] sm:$0xff] %v7206
        %7495 = vst [vmem:[#allocation8 + $0x890] sm:$0xff] %v7207
        %7496 = vst [vmem:[#allocation8 + $0x898] sm:$0xff] %v7208
        %7497 = vst [vmem:[#allocation8 + $0x8a0] sm:$0xff] %v7209
        %7498 = vst [vmem:[#allocation8 + $0x8a8] sm:$0xff] %v7210
        %7499 = vst [vmem:[#allocation8 + $0x8b0] sm:$0xff] %v7211
        %7500 = vst [vmem:[#allocation8 + $0x8b8] sm:$0xff] %v7212
        %7501 = vst [vmem:[#allocation8 + $0x8c0] sm:$0xff] %v7213
        %7502 = vst [vmem:[#allocation8 + $0x8c8] sm:$0xff] %v7214
        %7503 = vst [vmem:[#allocation8 + $0x8d0] sm:$0xff] %v7215
        %7504 = vst [vmem:[#allocation8 + $0x8d8] sm:$0xff] %v7216
        %7505 = vst [vmem:[#allocation8 + $0x8e0] sm:$0xff] %v7217
        %7506 = vst [vmem:[#allocation8 + $0x8e8] sm:$0xff] %v7218
        %7507 = vst [vmem:[#allocation8 + $0x8f0] sm:$0xff] %v7219
        %7508 = vst [vmem:[#allocation8 + $0x8f8] sm:$0xff] %v7220
        // Predicated region
        $region49: #{_fused_fwd.1} parent=31 // pred_check
          %p7509 = pneg %p131
        $region50: #{_fused_fwd.1} parent=31 // pred_check_branch
          %7511 = sbr.rel (%p7509) target = $region52
        $region51: #{_fused_fwd.1} parent=31 // pred_region
          %s7512 = smul.u32 6, %s25
          %s7514 = ssub.s32 36864, 36864
          %7515 = vsyncadd [#allocation4], %s7514
          %s7516 = smul.addr %s7512, 128
          %s7517 = scalar_lea.hbm %s3, %s7516
          %s7518 = sshll.u32 [#allocation8], 4
          %s7519 = int_to_ptr.vmem [resolvable:$true] %s7518
          %7524 = dma.vmem_to_hbm [thread:$0]  %s7519, 36864, %s7517, [#allocation4], 768, 768, 48
        $region52: #{_fused_fwd.1} parent=31 // pred_fallthru
          _
        // Predicated region
        $region53: #{_fused_fwd.1} parent=31 // pred_check
          %p7525 = pneg %p131
        $region54: #{_fused_fwd.1} parent=31 // pred_check_branch
          %7527 = sbr.rel (%p7525) target = $region56
        $region55: #{_fused_fwd.1} parent=31 // pred_region
          %7528 = dma.done [#allocation4], 36864
        $region56: #{_fused_fwd.1} parent=31 // pred_fallthru
          _
      $region32: #{_fused_fwd.1} parent=5 // pred_fallthru
        _
      %p7529 = scmp.le.s32.totalorder 2, %s16
      // Predicated region
      $region57: #{_fused_fwd.1} parent=5 // pred_check
        %p7530 = pneg %p7529
      $region58: #{_fused_fwd.1} parent=5 // pred_check_branch
        %7532 = sbr.rel (%p7530) target = $region60
      $region59: #{_fused_fwd.1} parent=5 // pred_region
        %s7533 = ssub.s32 %s16, 2
      $region60: #{_fused_fwd.1} parent=5 // pred_fallthru
        _
    $region6: #{_fused_fwd.1} parent=1 // loop_footer
      %s20 = sadd.s32 1, %s16
    $region7: #{_fused_fwd.1} parent=1 // loop_footer_branch
      %15 = sbr.rel target = $region3
    $region8: #{_fused_fwd.1} parent=1 // loop_exit
      _
    %7534 = vsyncpa [#allocation3], 1
    %s7535 = scalar_lea.sflag [#allocation3], 1
    %7536 = vsyncpa %s7535, 1
    %7537 = vsyncpa [#allocation6], 1
    %s7538 = scalar_lea.sflag [#allocation6], 1
    %7539 = vsyncpa %s7538, 1
    %7540 = vsyncpa [#allocation4], 1
    %s7541 = scalar_lea.sflag [#allocation4], 1
    %7542 = vsyncpa %s7541, 1

</llo_original>
